<compile_context>
chip_gen: v5e
topology: v5e:2x2
jax: 0.10.0
libtpu: 0.0.40
codegen_flags: <defaults>
</compile_context>

<pallas_src>
import numpy as np
import jax
import jax.numpy as jnp
from jax.experimental import pallas as pl
from jax.experimental.pallas import tpu as pltpu

EPS = 1e-5

B = 2              # batch (folded into one kernel program)
H = 9              # feature rows
W = 30             # time steps
P_ = 6             # pair count
GRU_IN = 9
GH = 30            # GRU hidden

PAIR_A = [0, 0, 1, 3, 5, 7]     # "num"
PAIR_B = [1, 2, 2, 4, 6, 8]     # "num_rev"

STRIDE1, STRIDE2 = 10, 3        # Inception1: 3 windows of 10; Inception2: 10 windows of 3
T1, T2 = W // STRIDE1, W // STRIDE2             # 3, 10 (pooling covers all windows -> T_out == 1)

FC2_NUM = 32
NFEAT = 3 * P_ + 4 * H          # 54 feature rows per branch  [cov6,corr6,dec9,std9,mean9,zsc9,mul6]
BR = 3 * NFEAT                  # 162 pooled features per branch (max/avg/min)
FC1_NUM = 2 * BR + GH           # 354
GRP = H + 3 * P_                # 27 lanes per sample in the packed stats operand

STAT_WIDTHS = [P_, P_, H, H, H, H, P_]          # cov, corr, dec, std, mean, zscore, mul


# ---------------------------------------------------------------------------------------------
# host-side constants
# ---------------------------------------------------------------------------------------------
def _reduction_consts():
    def mats(stride):
        T = W // stride
        mavg = np.zeros((T, W), np.float32)
        mdec = np.zeros((T, W), np.float32)
        mexp = np.zeros((W, T), np.float32)
        dw = np.arange(1, stride + 1, dtype=np.float64)
        dw = (dw / dw.sum()).astype(np.float32)
        for t in range(T):
            mavg[t, t * stride:(t + 1) * stride] = 1.0 / stride
            mdec[t, t * stride:(t + 1) * stride] = dw
            mexp[t * stride:(t + 1) * stride, t] = 1.0
        return mavg, mdec, mexp

    a1, d1, e1 = mats(STRIDE1)
    a2, d2, e2 = mats(STRIDE2)
    mstack = np.concatenate([a1, d1, a2, d2], axis=0)     # (26, 30): [MAVG1;MDEC1;MAVG2;MDEC2]
    mexpc = np.concatenate([e1, e2], axis=1)              # (30, 13): [MEXP1 | MEXP2]
    return mstack, mexpc


def _scramble_src(stride):
    # Reference ts_mean stacks window means as (T,B,H) then C-order reshapes straight to
    # (B,1,H,T) (no transpose). Map each destination (b',t',h') back to its source (b,h,t).
    T = W // stride
    bp = np.arange(B)[:, None, None]
    tp = np.arange(T)[None, :, None]
    hp = np.arange(H)[None, None, :]
    f = bp * (H * T) + hp * T + tp
    t_src = f // (B * H)
    rem = f % (B * H)
    return rem // H, rem % H, t_src                        # b_src, h_src, t_src — each (B,T,H)


_MSTACK, _MEXPC = _reduction_consts()
_SRC1 = _scramble_src(STRIDE1)
_SRC2 = _scramble_src(STRIDE2)
_IDX_A = np.asarray(PAIR_A)
_IDX_B = np.asarray(PAIR_B)


# ---------------------------------------------------------------------------------------------
# fused kernel: both inception branches + GRU + fc1/relu/fc2, batch folded into one program
# ---------------------------------------------------------------------------------------------
def alphanet_kernel(xcat_ref, xgru_ref, scr1_ref, scr2_ref,
                    mstack_ref, mexpc_ref, gruw_ref, w1_ref, misc_ref,
                    out_ref,
                    prods_ref, feat_ref, pool_ref):
    f32 = jnp.float32

    def mm(a, b):
        return jnp.dot(a, b, preferred_element_type=f32)

    xc = xcat_ref[...]                                   # (30, B*27) = [x|xa|xb|xa*xb] per sample

    # ---- stage 1: every window mean / decay-linear for BOTH branches in ONE matmul -----------
    s1 = mm(mstack_ref[...], xc)                         # (26, 54)
    mean1 = s1[0:T1, :]
    dec1 = s1[T1:2 * T1, :]
    mean2 = s1[2 * T1:2 * T1 + T2, :]
    dec2 = s1[2 * T1 + T2:, :]

    # ---- stage 2: centered second moments (var / cov), 2 broadcast + 2 reduce matmuls --------
    mexpc = mexpc_ref[...]                               # (30, 13)
    c1 = xc - mm(mexpc[:, 0:T1], mean1)                  # (30, 54) centered vs window mean (br 1)
    c2 = xc - mm(mexpc[:, T1:T1 + T2], mean2)            # (30, 54) centered vs window mean (br 2)

    def second_moments(c):
        # per-sample lane block: [cx^2(9) | ca*cb(6) | ca^2(6) | cb^2(6)]
        for s in range(B):
            o = GRP * s
            cx = c[:, o:o + H]
            ca = c[:, o + H:o + H + P_]
            cb = c[:, o + H + P_:o + H + 2 * P_]
            prods_ref[:, o:o + H] = cx * cx
            prods_ref[:, o + H:o + H + P_] = ca * cb
            prods_ref[:, o + H + P_:o + H + 2 * P_] = ca * ca
            prods_ref[:, o + H + 2 * P_:o + GRP] = cb * cb
        return prods_ref[...]

    v1 = mm(mstack_ref[0:T1, :], second_moments(c1))                 # (3, 54)
    v2 = mm(mstack_ref[2 * T1:2 * T1 + T2, :], second_moments(c2))   # (10, 54)

    # ---- per (branch, sample): assemble 54-wide feature block, feat-BN, 3 pools ---------------
    def inception_branch(mean, dec, v, scr_ref, stride, t_win, br_idx, bn_row):
        fsc = misc_ref[bn_row:bn_row + 1, 0:NFEAT]       # feature BatchNorm (eval) lane vectors
        fsh = misc_ref[bn_row + 1:bn_row + 2, 0:NFEAT]
        ddof = stride / (stride - 1.0)
        for s in range(B):
            o = GRP * s
            mean_x = mean[:, o:o + H]
            mul = mean[:, o + H + 2 * P_:o + GRP]                    # ts_mul = window mean of xa*xb
            dec_x = dec[:, o:o + H]                                  # ts_decaylinear
            var_x = v[:, o:o + H]
            cov = v[:, o + H:o + H + P_] * ddof                      # ts_cov4d (ddof=1)
            std_a = jnp.sqrt(v[:, o + H + P_:o + H + 2 * P_])        # ddof=0 (reference semantics)
            std_b = jnp.sqrt(v[:, o + H + 2 * P_:o + GRP])
            std = jnp.sqrt(var_x)                                    # ts_std (ddof=0)
            corr = cov / (std_a * std_b + 0.01)                      # ts_corr4d
            zsc = mean_x / (std + 0.01)                              # ts_zcore
            feat_ref[0:t_win, 0:P_] = cov
            feat_ref[0:t_win, P_:2 * P_] = corr
            feat_ref[0:t_win, 2 * P_:2 * P_ + H] = dec_x
            feat_ref[0:t_win, 2 * P_ + H:2 * P_ + 2 * H] = std
            feat_ref[0:t_win, 2 * P_ + 2 * H:2 * P_ + 3 * H] = scr_ref[s]   # ts_mean reshape quirk
            feat_ref[0:t_win, 2 * P_ + 3 * H:2 * P_ + 4 * H] = zsc
            feat_ref[0:t_win, 2 * P_ + 4 * H:NFEAT] = mul
            feat = feat_ref[0:t_win, :] * fsc + fsh
            base = br_idx * BR
            pool_ref[s:s + 1, base:base + NFEAT] = jnp.max(feat, axis=0, keepdims=True)
            pool_ref[s:s + 1, base + NFEAT:base + 2 * NFEAT] = jnp.mean(feat, axis=0, keepdims=True)
            pool_ref[s:s + 1, base + 2 * NFEAT:base + 3 * NFEAT] = -jnp.max(-feat, axis=0, keepdims=True)

    inception_branch(mean1, dec1, v1, scr1_ref, float(STRIDE1), T1, 0, 0)
    inception_branch(mean2, dec2, v2, scr2_ref, float(STRIDE2), T2, 1, 2)

    # ---- Embedding: 2-layer GRU, batch on sublanes, 2 matmuls per step ------------------------
    w_i1h0 = gruw_ref[0:GH, :]                           # (30, 180) = [Wih1^T | Whh0^T]
    whh1 = gruw_ref[32:32 + GH, 0:3 * GH]                # (30, 90)
    wih0 = gruw_ref[64:64 + GRU_IN, 0:3 * GH]            # (9, 90)
    bih0 = gruw_ref[80:81, 0:3 * GH]
    bhh0 = gruw_ref[81:82, 0:3 * GH]
    bih1 = gruw_ref[82:83, 0:3 * GH]
    bhh1 = gruw_ref[83:84, 0:3 * GH]

    gi0_all = mm(xgru_ref[...], wih0) + bih0             # (W*B, 90), hoisted layer-0 projection
    h0 = jnp.zeros((B, GH), f32)
    h1 = jnp.zeros((B, GH), f32)
    gh0 = jnp.zeros((B, 3 * GH), f32) + bhh0             # Whh0 @ 0 + bhh0
    for t in range(W):                                   # static unroll, T = 30
        gh1 = mm(h1, whh1) + bhh1
        gi0 = gi0_all[t * B:(t + 1) * B, :]
        r0 = jax.nn.sigmoid(gi0[:, :GH] + gh0[:, :GH])
        z0 = jax.nn.sigmoid(gi0[:, GH:2 * GH] + gh0[:, GH:2 * GH])
        n0 = jnp.tanh(gi0[:, 2 * GH:] + r0 * gh0[:, 2 * GH:])
        h0 = (1.0 - z0) * n0 + z0 * h0
        fused = mm(h0, w_i1h0)                           # [gi1 for this step | gh0 for next step]
        gi1 = fused[:, 0:3 * GH] + bih1
        gh0 = fused[:, 3 * GH:] + bhh0
        r1 = jax.nn.sigmoid(gi1[:, :GH] + gh1[:, :GH])
        z1 = jax.nn.sigmoid(gi1[:, GH:2 * GH] + gh1[:, GH:2 * GH])
        n1 = jnp.tanh(gi1[:, 2 * GH:] + r1 * gh1[:, 2 * GH:])
        h1 = (1.0 - z1) * n1 + z1 * h1

    # ---- head: pool-BN as one (1,354) lane vector, single fc1 matmul, relu, fc2 ---------------
    pool_ref[:, 2 * BR:FC1_NUM] = h1                     # GRU hidden appended to pool_cat
    pscale = misc_ref[4:5, :]                            # (1, 354): pool BN scale (1.0 on GRU cols)
    pshift = misc_ref[5:6, :]                            # (1, 354): pool BN shift (0.0 on GRU cols)
    full = pool_ref[...] * pscale + pshift               # (B, 354) == reference pool_cat
    b1 = misc_ref[6:7, 0:FC2_NUM]
    w2 = misc_ref[7:8, 0:FC2_NUM]
    b2 = misc_ref[8:9, 0:1]
    # TODO(synk): nn.Dropout is stochastic in train mode; eval-mode (identity) semantics used.
    hidden = jnp.maximum(mm(full, w1_ref[...]) + b1, 0.0)            # (B, 32)
    out_ref[...] = jnp.sum(hidden * w2, axis=1, keepdims=True) + b2  # fc2 as a 32-lane reduce


# ---------------------------------------------------------------------------------------------
# wrapper
# ---------------------------------------------------------------------------------------------
def _full_spec(shape):
    nd = len(shape)
    return pl.BlockSpec(shape, lambda i, _nd=nd: (0,) * _nd)


@jax.jit
def alphanet_forward(data, packed):
    x = data[:, 0, :, :].astype(jnp.float32)                     # (B, H, W)
    xt = jnp.transpose(x, (0, 2, 1))                             # (B, W, H)
    xa = xt[..., _IDX_A]                                         # (B, W, P) pair rows "num"
    xb = xt[..., _IDX_B]                                         # (B, W, P) pair rows "num_rev"
    xcat = jnp.concatenate([xt, xa, xb, xa * xb], axis=-1)       # (B, W, 27)
    xcat = jnp.transpose(xcat, (1, 0, 2)).reshape(W, B * GRP)    # (30, 54): per-sample lane blocks
    xgru = jnp.transpose(x, (2, 0, 1)).reshape(W * B, H)         # (60, 9): row index t*B + b

    # ts_mean reshape quirk computed host-side (fused into the gather, per review)
    m1 = jnp.mean(x.reshape(B, H, T1, STRIDE1), axis=-1)         # (B, H, T1) natural window means
    m2 = jnp.mean(x.reshape(B, H, T2, STRIDE2), axis=-1)
    scr1 = m1[_SRC1[0], _SRC1[1], _SRC1[2]]                      # (B, T1, H)
    scr2 = m2[_SRC2[0], _SRC2[1], _SRC2[2]]                      # (B, T2, H)

    ops = (xcat, xgru, scr1, scr2,
           packed["mstack"], packed["mexpc"], packed["gruw"], packed["w1t"], packed["misc"])

    out = pl.pallas_call(
        alphanet_kernel,
        grid=(1,),
        out_shape=jax.ShapeDtypeStruct((B, 1), jnp.float32),
        in_specs=[_full_spec(op.shape) for op in ops],
        out_specs=pl.BlockSpec((B, 1), lambda i: (0, 0)),
        scratch_shapes=[
            pltpu.VMEM((W, B * GRP), jnp.float32),               # centered second-moment products
            pltpu.VMEM((T2, NFEAT), jnp.float32),                # per-(branch,sample) feature block
            pltpu.VMEM((B, FC1_NUM), jnp.float32),               # assembled pool_cat
        ],
        compiler_params=pltpu.CompilerParams(dimension_semantics=("arbitrary",)),
    )(*ops)

    # TODO(synk): reference forward also np.save()s pool_cat and computes an unused Conv2d
    # "residual" branch; neither affects the returned value, so they are omitted.
    return out                                                   # (B, 1)


# ---------------------------------------------------------------------------------------------
# deterministic parameter init (eval-mode BatchNorm folded to scale/shift) + operand packing
# ---------------------------------------------------------------------------------------------
def fold_bn(key, n):
    k1, k2, k3, k4 = jax.random.split(key, 4)
    gamma = jax.random.uniform(k1, (n,), minval=0.5, maxval=1.5)
    beta = 0.1 * jax.random.normal(k2, (n,))
    r_mean = 0.1 * jax.random.normal(k3, (n,))
    r_var = jax.random.uniform(k4, (n,), minval=0.5, maxval=1.5)
    scale = gamma / jnp.sqrt(r_var + EPS)
    shift = beta - r_mean * scale
    return np.asarray(jnp.stack([scale, shift], axis=1), dtype=np.float32)      # (n, 2)


def init_gru(key):
    std = 1.0 / np.sqrt(GH)
    ks = jax.random.split(key, 8)

    def u(k, shape):
        return np.asarray(jax.random.uniform(k, shape, minval=-std, maxval=std, dtype=jnp.float32))

    return dict(
        wih0=u(ks[0], (3 * GH, GRU_IN)), whh0=u(ks[1], (3 * GH, GH)),
        bih0=u(ks[2], (3 * GH,)), bhh0=u(ks[3], (3 * GH,)),
        wih1=u(ks[4], (3 * GH, GH)), whh1=u(ks[5], (3 * GH, GH)),
        bih1=u(ks[6], (3 * GH,)), bhh1=u(ks[7], (3 * GH,)),
    )


def init_fc(key):
    k1, k2, k3, k4 = jax.random.split(key, 4)
    lim1 = float(np.sqrt(6.0 / (FC1_NUM + FC2_NUM)))             # xavier_uniform_
    w1 = np.asarray(jax.random.uniform(k1, (FC2_NUM, FC1_NUM), minval=-lim1, maxval=lim1,
                                       dtype=jnp.float32))
    b1 = np.asarray(1e-6 * jax.random.normal(k2, (FC2_NUM,), dtype=jnp.float32))
    lim2 = float(np.sqrt(6.0 / (FC2_NUM + 1)))
    w2 = np.asarray(jax.random.uniform(k3, (1, FC2_NUM), minval=-lim2, maxval=lim2,
                                       dtype=jnp.float32))
    b2 = np.asarray(1e-6 * jax.random.normal(k4, (1,), dtype=jnp.float32))
    return dict(w1=w1, b1=b1, w2=w2, b2=b2)


def pack_params(bn_feat1, bn_pool1, bn_feat2, bn_pool2, gru, fc):
    # GRU slab: 8-row aligned sections, lanes padded to 180
    gruw = np.zeros((88, 6 * GH), np.float32)
    gruw[0:GH, 0:3 * GH] = gru["wih1"].T                 # (30, 90)
    gruw[0:GH, 3 * GH:6 * GH] = gru["whh0"].T            # fused RHS: [Wih1^T | Whh0^T]
    gruw[32:32 + GH, 0:3 * GH] = gru["whh1"].T
    gruw[64:64 + GRU_IN, 0:3 * GH] = gru["wih0"].T
    gruw[80, 0:3 * GH] = gru["bih0"]
    gruw[81, 0:3 * GH] = gru["bhh0"]
    gruw[82, 0:3 * GH] = gru["bih1"]
    gruw[83, 0:3 * GH] = gru["bhh1"]

    # misc slab: BN lane-vectors + fc1 bias + fc2 row + fc2 bias
    misc = np.zeros((9, FC1_NUM), np.float32)
    misc[0, 0:NFEAT] = np.repeat(bn_feat1[:, 0], STAT_WIDTHS)
    misc[1, 0:NFEAT] = np.repeat(bn_feat1[:, 1], STAT_WIDTHS)
    misc[2, 0:NFEAT] = np.repeat(bn_feat2[:, 0], STAT_WIDTHS)
    misc[3, 0:NFEAT] = np.repeat(bn_feat2[:, 1], STAT_WIDTHS)
    misc[4, :] = np.concatenate([np.repeat(bn_pool1[:, 0], NFEAT),
                                 np.repeat(bn_pool2[:, 0], NFEAT),
                                 np.ones(GH, np.float32)])
    misc[5, :] = np.concatenate([np.repeat(bn_pool1[:, 1], NFEAT),
                                 np.repeat(bn_pool2[:, 1], NFEAT),
                                 np.zeros(GH, np.float32)])
    misc[6, 0:FC2_NUM] = fc["b1"]
    misc[7, 0:FC2_NUM] = fc["w2"][0]
    misc[8, 0] = fc["b2"][0]

    return dict(
        mstack=jnp.asarray(_MSTACK),
        mexpc=jnp.asarray(_MEXPC),
        gruw=jnp.asarray(gruw),
        w1t=jnp.asarray(np.ascontiguousarray(fc["w1"].T)),       # (354, 32), pool_cat row order
        misc=jnp.asarray(misc),
    )


if __name__ == "__main__":
    key = jax.random.PRNGKey(0)
    k_data, k_bn1, k_bn2, k_p1, k_p2, k_gru, k_fc = jax.random.split(key, 7)

    data = jax.random.normal(k_data, (B, 1, H, W), dtype=jnp.float32)   # NCHW, like PyTorch
    packed = pack_params(
        fold_bn(k_bn1, 7), fold_bn(k_p1, 3),
        fold_bn(k_bn2, 7), fold_bn(k_p2, 3),
        init_gru(k_gru), init_fc(k_fc),
    )

    out = alphanet_forward(data, packed)
    out = jax.block_until_ready(out)
    assert out.shape == (B, 1) and out.dtype == jnp.float32
    assert bool(jnp.all(jnp.isfinite(out)))
    print("KERNEL_OK")
</pallas_src>

<mosaic_0001>
module attributes {stable_mosaic.version = 11 : i64} {
  func.func @alphanet_kernel(%arg0: i32, %arg1: memref<30x54xf32, #tpu.memory_space<vmem>>, %arg2: memref<60x9xf32, #tpu.memory_space<vmem>>, %arg3: memref<2x3x9xf32, #tpu.memory_space<vmem>>, %arg4: memref<2x10x9xf32, #tpu.memory_space<vmem>>, %arg5: memref<26x30xf32, #tpu.memory_space<vmem>>, %arg6: memref<30x13xf32, #tpu.memory_space<vmem>>, %arg7: memref<88x180xf32, #tpu.memory_space<vmem>>, %arg8: memref<354x32xf32, #tpu.memory_space<vmem>>, %arg9: memref<9x354xf32, #tpu.memory_space<vmem>>, %arg10: memref<2x1xf32, #tpu.memory_space<vmem>>, %arg11: memref<30x54xf32, #tpu.memory_space<vmem>>, %arg12: memref<10x54xf32, #tpu.memory_space<vmem>>, %arg13: memref<2x354xf32, #tpu.memory_space<vmem>>) attributes {dimension_semantics = [#tpu.dimension_semantics<arbitrary>], iteration_bounds = array<i64: 1>, scalar_prefetch = 0 : i64, scratch_operands = 3 : i64, tpu.core_type = #tpu.core_type<tc>, window_params = [{pipeline_mode = #tpu.pipeline_mode<synchronous>, transform_indices = @transform_0, window_bounds = array<i64: 30, 54>}, {pipeline_mode = #tpu.pipeline_mode<synchronous>, transform_indices = @transform_1, window_bounds = array<i64: 60, 9>}, {pipeline_mode = #tpu.pipeline_mode<synchronous>, transform_indices = @transform_2, window_bounds = array<i64: 2, 3, 9>}, {pipeline_mode = #tpu.pipeline_mode<synchronous>, transform_indices = @transform_3, window_bounds = array<i64: 2, 10, 9>}, {pipeline_mode = #tpu.pipeline_mode<synchronous>, transform_indices = @transform_4, window_bounds = array<i64: 26, 30>}, {pipeline_mode = #tpu.pipeline_mode<synchronous>, transform_indices = @transform_5, window_bounds = array<i64: 30, 13>}, {pipeline_mode = #tpu.pipeline_mode<synchronous>, transform_indices = @transform_6, window_bounds = array<i64: 88, 180>}, {pipeline_mode = #tpu.pipeline_mode<synchronous>, transform_indices = @transform_7, window_bounds = array<i64: 354, 32>}, {pipeline_mode = #tpu.pipeline_mode<synchronous>, transform_indices = @transform_8, window_bounds = array<i64: 9, 354>}, {pipeline_mode = #tpu.pipeline_mode<synchronous>, transform_indices = @transform_9, window_bounds = array<i64: 2, 1>}]} {
    %c0 = arith.constant 0 : index
    %c0_0 = arith.constant 0 : index
    %0 = vector.load %arg1[%c0, %c0_0] : memref<30x54xf32, #tpu.memory_space<vmem>>, vector<30x54xf32>
    %c0_1 = arith.constant 0 : index
    %c0_2 = arith.constant 0 : index
    %1 = vector.load %arg5[%c0_1, %c0_2] : memref<26x30xf32, #tpu.memory_space<vmem>>, vector<26x30xf32>
    %cst = arith.constant dense<0.000000e+00> : vector<26x54xf32>
    %2 = tpu.matmul %1, %0, %cst {dimension_numbers = #tpu.dot_dimension_numbers<[1], [0], [0], [1], [0, 0, 1, 1], [], []>} : vector<26x30xf32>, vector<30x54xf32>, vector<26x54xf32> -> vector<26x54xf32>
    %3 = vector.extract_strided_slice %2 {offsets = [0, 0], sizes = [3, 54], strides = [1, 1]} : vector<26x54xf32> to vector<3x54xf32>
    %4 = vector.extract_strided_slice %2 {offsets = [3, 0], sizes = [3, 54], strides = [1, 1]} : vector<26x54xf32> to vector<3x54xf32>
    %5 = vector.extract_strided_slice %2 {offsets = [6, 0], sizes = [10, 54], strides = [1, 1]} : vector<26x54xf32> to vector<10x54xf32>
    %6 = vector.extract_strided_slice %2 {offsets = [16, 0], sizes = [10, 54], strides = [1, 1]} : vector<26x54xf32> to vector<10x54xf32>
    %c0_3 = arith.constant 0 : index
    %c0_4 = arith.constant 0 : index
    %7 = vector.load %arg6[%c0_3, %c0_4] : memref<30x13xf32, #tpu.memory_space<vmem>>, vector<30x13xf32>
    %8 = vector.extract_strided_slice %7 {offsets = [0, 0], sizes = [30, 3], strides = [1, 1]} : vector<30x13xf32> to vector<30x3xf32>
    %cst_5 = arith.constant dense<0.000000e+00> : vector<30x54xf32>
    %9 = tpu.matmul %8, %3, %cst_5 {dimension_numbers = #tpu.dot_dimension_numbers<[1], [0], [0], [1], [0, 0, 1, 1], [], []>} : vector<30x3xf32>, vector<3x54xf32>, vector<30x54xf32> -> vector<30x54xf32>
    %10 = arith.subf %0, %9 : vector<30x54xf32>
    %11 = vector.extract_strided_slice %7 {offsets = [0, 3], sizes = [30, 10], strides = [1, 1]} : vector<30x13xf32> to vector<30x10xf32>
    %cst_6 = arith.constant dense<0.000000e+00> : vector<30x54xf32>
    %12 = tpu.matmul %11, %5, %cst_6 {dimension_numbers = #tpu.dot_dimension_numbers<[1], [0], [0], [1], [0, 0, 1, 1], [], []>} : vector<30x10xf32>, vector<10x54xf32>, vector<30x54xf32> -> vector<30x54xf32>
    %13 = arith.subf %0, %12 : vector<30x54xf32>
    %c0_7 = arith.constant 0 : index
    %c0_8 = arith.constant 0 : index
    %14 = vector.load %arg5[%c0_7, %c0_8] : memref<26x30xf32, #tpu.memory_space<vmem>>, vector<3x30xf32>
    %15 = vector.extract_strided_slice %10 {offsets = [0, 0], sizes = [30, 9], strides = [1, 1]} : vector<30x54xf32> to vector<30x9xf32>
    %16 = vector.extract_strided_slice %10 {offsets = [0, 9], sizes = [30, 6], strides = [1, 1]} : vector<30x54xf32> to vector<30x6xf32>
    %17 = vector.extract_strided_slice %10 {offsets = [0, 15], sizes = [30, 6], strides = [1, 1]} : vector<30x54xf32> to vector<30x6xf32>
    %18 = arith.mulf %15, %15 : vector<30x9xf32>
    %c0_9 = arith.constant 0 : index
    %c0_10 = arith.constant 0 : index
    %19 = vector.load %arg11[%c0_9, %c0_10] : memref<30x54xf32, #tpu.memory_space<vmem>>, vector<30x9xf32>
    tpu.vector_store %arg11[%c0_9, %c0_10], %18 {strides = array<i32>} : memref<30x54xf32, #tpu.memory_space<vmem>>, vector<30x9xf32>,
    %20 = arith.mulf %16, %17 : vector<30x6xf32>
    %c0_11 = arith.constant 0 : index
    %c9 = arith.constant 9 : index
    %21 = vector.load %arg11[%c0_11, %c9] : memref<30x54xf32, #tpu.memory_space<vmem>>, vector<30x6xf32>
    tpu.vector_store %arg11[%c0_11, %c9], %20 {strides = array<i32>} : memref<30x54xf32, #tpu.memory_space<vmem>>, vector<30x6xf32>,
    %22 = arith.mulf %16, %16 : vector<30x6xf32>
    %c0_12 = arith.constant 0 : index
    %c15 = arith.constant 15 : index
    %23 = vector.load %arg11[%c0_12, %c15] : memref<30x54xf32, #tpu.memory_space<vmem>>, vector<30x6xf32>
    tpu.vector_store %arg11[%c0_12, %c15], %22 {strides = array<i32>} : memref<30x54xf32, #tpu.memory_space<vmem>>, vector<30x6xf32>,
    %24 = arith.mulf %17, %17 : vector<30x6xf32>
    %c0_13 = arith.constant 0 : index
    %c21 = arith.constant 21 : index
    %25 = vector.load %arg11[%c0_13, %c21] : memref<30x54xf32, #tpu.memory_space<vmem>>, vector<30x6xf32>
    tpu.vector_store %arg11[%c0_13, %c21], %24 {strides = array<i32>} : memref<30x54xf32, #tpu.memory_space<vmem>>, vector<30x6xf32>,
    %26 = vector.extract_strided_slice %10 {offsets = [0, 27], sizes = [30, 9], strides = [1, 1]} : vector<30x54xf32> to vector<30x9xf32>
    %27 = vector.extract_strided_slice %10 {offsets = [0, 36], sizes = [30, 6], strides = [1, 1]} : vector<30x54xf32> to vector<30x6xf32>
    %28 = vector.extract_strided_slice %10 {offsets = [0, 42], sizes = [30, 6], strides = [1, 1]} : vector<30x54xf32> to vector<30x6xf32>
    %29 = arith.mulf %26, %26 : vector<30x9xf32>
    %c0_14 = arith.constant 0 : index
    %c27 = arith.constant 27 : index
    %30 = vector.load %arg11[%c0_14, %c27] : memref<30x54xf32, #tpu.memory_space<vmem>>, vector<30x9xf32>
    tpu.vector_store %arg11[%c0_14, %c27], %29 {strides = array<i32>} : memref<30x54xf32, #tpu.memory_space<vmem>>, vector<30x9xf32>,
    %31 = arith.mulf %27, %28 : vector<30x6xf32>
    %c0_15 = arith.constant 0 : index
    %c36 = arith.constant 36 : index
    %32 = vector.load %arg11[%c0_15, %c36] : memref<30x54xf32, #tpu.memory_space<vmem>>, vector<30x6xf32>
    tpu.vector_store %arg11[%c0_15, %c36], %31 {strides = array<i32>} : memref<30x54xf32, #tpu.memory_space<vmem>>, vector<30x6xf32>,
    %33 = arith.mulf %27, %27 : vector<30x6xf32>
    %c0_16 = arith.constant 0 : index
    %c42 = arith.constant 42 : index
    %34 = vector.load %arg11[%c0_16, %c42] : memref<30x54xf32, #tpu.memory_space<vmem>>, vector<30x6xf32>
    tpu.vector_store %arg11[%c0_16, %c42], %33 {strides = array<i32>} : memref<30x54xf32, #tpu.memory_space<vmem>>, vector<30x6xf32>,
    %35 = arith.mulf %28, %28 : vector<30x6xf32>
    %c0_17 = arith.constant 0 : index
    %c48 = arith.constant 48 : index
    %36 = vector.load %arg11[%c0_17, %c48] : memref<30x54xf32, #tpu.memory_space<vmem>>, vector<30x6xf32>
    tpu.vector_store %arg11[%c0_17, %c48], %35 {strides = array<i32>} : memref<30x54xf32, #tpu.memory_space<vmem>>, vector<30x6xf32>,
    %c0_18 = arith.constant 0 : index
    %c0_19 = arith.constant 0 : index
    %37 = vector.load %arg11[%c0_18, %c0_19] : memref<30x54xf32, #tpu.memory_space<vmem>>, vector<30x54xf32>
    %cst_20 = arith.constant dense<0.000000e+00> : vector<3x54xf32>
    %38 = tpu.matmul %14, %37, %cst_20 {dimension_numbers = #tpu.dot_dimension_numbers<[1], [0], [0], [1], [0, 0, 1, 1], [], []>} : vector<3x30xf32>, vector<30x54xf32>, vector<3x54xf32> -> vector<3x54xf32>
    %c6 = arith.constant 6 : index
    %c0_21 = arith.constant 0 : index
    %39 = vector.load %arg5[%c6, %c0_21] : memref<26x30xf32, #tpu.memory_space<vmem>>, vector<10x30xf32>
    %40 = vector.extract_strided_slice %13 {offsets = [0, 0], sizes = [30, 9], strides = [1, 1]} : vector<30x54xf32> to vector<30x9xf32>
    %41 = vector.extract_strided_slice %13 {offsets = [0, 9], sizes = [30, 6], strides = [1, 1]} : vector<30x54xf32> to vector<30x6xf32>
    %42 = vector.extract_strided_slice %13 {offsets = [0, 15], sizes = [30, 6], strides = [1, 1]} : vector<30x54xf32> to vector<30x6xf32>
    %43 = arith.mulf %40, %40 : vector<30x9xf32>
    %c0_22 = arith.constant 0 : index
    %c0_23 = arith.constant 0 : index
    %44 = vector.load %arg11[%c0_22, %c0_23] : memref<30x54xf32, #tpu.memory_space<vmem>>, vector<30x9xf32>
    tpu.vector_store %arg11[%c0_22, %c0_23], %43 {strides = array<i32>} : memref<30x54xf32, #tpu.memory_space<vmem>>, vector<30x9xf32>,
    %45 = arith.mulf %41, %42 : vector<30x6xf32>
    %c0_24 = arith.constant 0 : index
    %c9_25 = arith.constant 9 : index
    %46 = vector.load %arg11[%c0_24, %c9_25] : memref<30x54xf32, #tpu.memory_space<vmem>>, vector<30x6xf32>
    tpu.vector_store %arg11[%c0_24, %c9_25], %45 {strides = array<i32>} : memref<30x54xf32, #tpu.memory_space<vmem>>, vector<30x6xf32>,
    %47 = arith.mulf %41, %41 : vector<30x6xf32>
    %c0_26 = arith.constant 0 : index
    %c15_27 = arith.constant 15 : index
    %48 = vector.load %arg11[%c0_26, %c15_27] : memref<30x54xf32, #tpu.memory_space<vmem>>, vector<30x6xf32>
    tpu.vector_store %arg11[%c0_26, %c15_27], %47 {strides = array<i32>} : memref<30x54xf32, #tpu.memory_space<vmem>>, vector<30x6xf32>,
    %49 = arith.mulf %42, %42 : vector<30x6xf32>
    %c0_28 = arith.constant 0 : index
    %c21_29 = arith.constant 21 : index
    %50 = vector.load %arg11[%c0_28, %c21_29] : memref<30x54xf32, #tpu.memory_space<vmem>>, vector<30x6xf32>
    tpu.vector_store %arg11[%c0_28, %c21_29], %49 {strides = array<i32>} : memref<30x54xf32, #tpu.memory_space<vmem>>, vector<30x6xf32>,
    %51 = vector.extract_strided_slice %13 {offsets = [0, 27], sizes = [30, 9], strides = [1, 1]} : vector<30x54xf32> to vector<30x9xf32>
    %52 = vector.extract_strided_slice %13 {offsets = [0, 36], sizes = [30, 6], strides = [1, 1]} : vector<30x54xf32> to vector<30x6xf32>
    %53 = vector.extract_strided_slice %13 {offsets = [0, 42], sizes = [30, 6], strides = [1, 1]} : vector<30x54xf32> to vector<30x6xf32>
    %54 = arith.mulf %51, %51 : vector<30x9xf32>
    %c0_30 = arith.constant 0 : index
    %c27_31 = arith.constant 27 : index
    %55 = vector.load %arg11[%c0_30, %c27_31] : memref<30x54xf32, #tpu.memory_space<vmem>>, vector<30x9xf32>
    tpu.vector_store %arg11[%c0_30, %c27_31], %54 {strides = array<i32>} : memref<30x54xf32, #tpu.memory_space<vmem>>, vector<30x9xf32>,
    %56 = arith.mulf %52, %53 : vector<30x6xf32>
    %c0_32 = arith.constant 0 : index
    %c36_33 = arith.constant 36 : index
    %57 = vector.load %arg11[%c0_32, %c36_33] : memref<30x54xf32, #tpu.memory_space<vmem>>, vector<30x6xf32>
    tpu.vector_store %arg11[%c0_32, %c36_33], %56 {strides = array<i32>} : memref<30x54xf32, #tpu.memory_space<vmem>>, vector<30x6xf32>,
    %58 = arith.mulf %52, %52 : vector<30x6xf32>
    %c0_34 = arith.constant 0 : index
    %c42_35 = arith.constant 42 : index
    %59 = vector.load %arg11[%c0_34, %c42_35] : memref<30x54xf32, #tpu.memory_space<vmem>>, vector<30x6xf32>
    tpu.vector_store %arg11[%c0_34, %c42_35], %58 {strides = array<i32>} : memref<30x54xf32, #tpu.memory_space<vmem>>, vector<30x6xf32>,
    %60 = arith.mulf %53, %53 : vector<30x6xf32>
    %c0_36 = arith.constant 0 : index
    %c48_37 = arith.constant 48 : index
    %61 = vector.load %arg11[%c0_36, %c48_37] : memref<30x54xf32, #tpu.memory_space<vmem>>, vector<30x6xf32>
    tpu.vector_store %arg11[%c0_36, %c48_37], %60 {strides = array<i32>} : memref<30x54xf32, #tpu.memory_space<vmem>>, vector<30x6xf32>,
    %c0_38 = arith.constant 0 : index
    %c0_39 = arith.constant 0 : index
    %62 = vector.load %arg11[%c0_38, %c0_39] : memref<30x54xf32, #tpu.memory_space<vmem>>, vector<30x54xf32>
    %cst_40 = arith.constant dense<0.000000e+00> : vector<10x54xf32>
    %63 = tpu.matmul %39, %62, %cst_40 {dimension_numbers = #tpu.dot_dimension_numbers<[1], [0], [0], [1], [0, 0, 1, 1], [], []>} : vector<10x30xf32>, vector<30x54xf32>, vector<10x54xf32> -> vector<10x54xf32>
    %c0_41 = arith.constant 0 : index
    %c0_42 = arith.constant 0 : index
    %64 = vector.load %arg9[%c0_41, %c0_42] : memref<9x354xf32, #tpu.memory_space<vmem>>, vector<1x54xf32>
    %c1 = arith.constant 1 : index
    %c0_43 = arith.constant 0 : index
    %65 = vector.load %arg9[%c1, %c0_43] : memref<9x354xf32, #tpu.memory_space<vmem>>, vector<1x54xf32>
    %66 = vector.extract_strided_slice %3 {offsets = [0, 0], sizes = [3, 9], strides = [1, 1]} : vector<3x54xf32> to vector<3x9xf32>
    %67 = vector.extract_strided_slice %3 {offsets = [0, 21], sizes = [3, 6], strides = [1, 1]} : vector<3x54xf32> to vector<3x6xf32>
    %68 = vector.extract_strided_slice %4 {offsets = [0, 0], sizes = [3, 9], strides = [1, 1]} : vector<3x54xf32> to vector<3x9xf32>
    %69 = vector.extract_strided_slice %38 {offsets = [0, 0], sizes = [3, 9], strides = [1, 1]} : vector<3x54xf32> to vector<3x9xf32>
    %70 = vector.extract_strided_slice %38 {offsets = [0, 9], sizes = [3, 6], strides = [1, 1]} : vector<3x54xf32> to vector<3x6xf32>
    %cst_44 = arith.constant 1.11111116 : f32
    %71 = vector.broadcast %cst_44 : f32 to vector<3x6xf32>
    %72 = arith.mulf %70, %71 : vector<3x6xf32>
    %73 = vector.extract_strided_slice %38 {offsets = [0, 15], sizes = [3, 6], strides = [1, 1]} : vector<3x54xf32> to vector<3x6xf32>
    %74 = math.sqrt %73 : vector<3x6xf32>
    %75 = vector.extract_strided_slice %38 {offsets = [0, 21], sizes = [3, 6], strides = [1, 1]} : vector<3x54xf32> to vector<3x6xf32>
    %76 = math.sqrt %75 : vector<3x6xf32>
    %77 = math.sqrt %69 : vector<3x9xf32>
    %78 = arith.mulf %74, %76 : vector<3x6xf32>
    %cst_45 = arith.constant 0.00999999977 : f32
    %79 = vector.broadcast %cst_45 : f32 to vector<3x6xf32>
    %80 = arith.addf %78, %79 : vector<3x6xf32>
    %81 = arith.divf %72, %80 : vector<3x6xf32>
    %cst_46 = arith.constant 0.00999999977 : f32
    %82 = vector.broadcast %cst_46 : f32 to vector<3x9xf32>
    %83 = arith.addf %77, %82 : vector<3x9xf32>
    %84 = arith.divf %66, %83 : vector<3x9xf32>
    %c0_47 = arith.constant 0 : index
    %c0_48 = arith.constant 0 : index
    %85 = vector.load %arg12[%c0_47, %c0_48] : memref<10x54xf32, #tpu.memory_space<vmem>>, vector<3x6xf32>
    tpu.vector_store %arg12[%c0_47, %c0_48], %72 {strides = array<i32>} : memref<10x54xf32, #tpu.memory_space<vmem>>, vector<3x6xf32>,
    %c0_49 = arith.constant 0 : index
    %c6_50 = arith.constant 6 : index
    %86 = vector.load %arg12[%c0_49, %c6_50] : memref<10x54xf32, #tpu.memory_space<vmem>>, vector<3x6xf32>
    tpu.vector_store %arg12[%c0_49, %c6_50], %81 {strides = array<i32>} : memref<10x54xf32, #tpu.memory_space<vmem>>, vector<3x6xf32>,
    %c0_51 = arith.constant 0 : index
    %c12 = arith.constant 12 : index
    %87 = vector.load %arg12[%c0_51, %c12] : memref<10x54xf32, #tpu.memory_space<vmem>>, vector<3x9xf32>
    tpu.vector_store %arg12[%c0_51, %c12], %68 {strides = array<i32>} : memref<10x54xf32, #tpu.memory_space<vmem>>, vector<3x9xf32>,
    %c0_52 = arith.constant 0 : index
    %c21_53 = arith.constant 21 : index
    %88 = vector.load %arg12[%c0_52, %c21_53] : memref<10x54xf32, #tpu.memory_space<vmem>>, vector<3x9xf32>
    tpu.vector_store %arg12[%c0_52, %c21_53], %77 {strides = array<i32>} : memref<10x54xf32, #tpu.memory_space<vmem>>, vector<3x9xf32>,
    %c0_54 = arith.constant 0 : index
    %c0_55 = arith.constant 0 : index
    %c0_56 = arith.constant 0 : index
    %89 = vector.load %arg3[%c0_54, %c0_55, %c0_56] : memref<2x3x9xf32, #tpu.memory_space<vmem>>, vector<1x3x9xf32>
    %90 = vector.shape_cast %89 : vector<1x3x9xf32> to vector<3x9xf32>
    %c0_57 = arith.constant 0 : index
    %c30 = arith.constant 30 : index
    %91 = vector.load %arg12[%c0_57, %c30] : memref<10x54xf32, #tpu.memory_space<vmem>>, vector<3x9xf32>
    tpu.vector_store %arg12[%c0_57, %c30], %90 {strides = array<i32>} : memref<10x54xf32, #tpu.memory_space<vmem>>, vector<3x9xf32>,
    %c0_58 = arith.constant 0 : index
    %c39 = arith.constant 39 : index
    %92 = vector.load %arg12[%c0_58, %c39] : memref<10x54xf32, #tpu.memory_space<vmem>>, vector<3x9xf32>
    tpu.vector_store %arg12[%c0_58, %c39], %84 {strides = array<i32>} : memref<10x54xf32, #tpu.memory_space<vmem>>, vector<3x9xf32>,
    %c0_59 = arith.constant 0 : index
    %c48_60 = arith.constant 48 : index
    %93 = vector.load %arg12[%c0_59, %c48_60] : memref<10x54xf32, #tpu.memory_space<vmem>>, vector<3x6xf32>
    tpu.vector_store %arg12[%c0_59, %c48_60], %67 {strides = array<i32>} : memref<10x54xf32, #tpu.memory_space<vmem>>, vector<3x6xf32>,
    %c0_61 = arith.constant 0 : index
    %c0_62 = arith.constant 0 : index
    %94 = vector.load %arg12[%c0_61, %c0_62] : memref<10x54xf32, #tpu.memory_space<vmem>>, vector<3x54xf32>
    %95 = vector.broadcast %64 : vector<1x54xf32> to vector<3x54xf32>
    %96 = arith.mulf %94, %95 : vector<3x54xf32>
    %97 = vector.broadcast %65 : vector<1x54xf32> to vector<3x54xf32>
    %98 = arith.addf %96, %97 : vector<3x54xf32>
    %cst_63 = arith.constant dense<0xFF800000> : vector<54xf32>
    %99 = vector.multi_reduction <maximumf>, %98, %cst_63 [0] : vector<3x54xf32> to vector<54xf32>
    %100 = vector.shape_cast %99 : vector<54xf32> to vector<1x54xf32>
    %c0_64 = arith.constant 0 : index
    %c0_65 = arith.constant 0 : index
    %101 = vector.load %arg13[%c0_64, %c0_65] : memref<2x354xf32, #tpu.memory_space<vmem>>, vector<1x54xf32>
    tpu.vector_store %arg13[%c0_64, %c0_65], %100 {strides = array<i32>} : memref<2x354xf32, #tpu.memory_space<vmem>>, vector<1x54xf32>,
    %cst_66 = arith.constant dense<0.000000e+00> : vector<54xf32>
    %102 = vector.multi_reduction <add>, %98, %cst_66 [0] : vector<3x54xf32> to vector<54xf32>
    %103 = vector.shape_cast %102 : vector<54xf32> to vector<1x54xf32>
    %cst_67 = arith.constant 3.000000e+00 : f32
    %104 = vector.broadcast %cst_67 : f32 to vector<1x54xf32>
    %105 = arith.divf %103, %104 : vector<1x54xf32>
    %c0_68 = arith.constant 0 : index
    %c54 = arith.constant 54 : index
    %106 = vector.load %arg13[%c0_68, %c54] : memref<2x354xf32, #tpu.memory_space<vmem>>, vector<1x54xf32>
    tpu.vector_store %arg13[%c0_68, %c54], %105 {strides = array<i32>} : memref<2x354xf32, #tpu.memory_space<vmem>>, vector<1x54xf32>,
    %cst_69 = arith.constant 0.000000e+00 : f32
    %107 = vector.broadcast %cst_69 : f32 to vector<3x54xf32>
    %108 = arith.subf %107, %98 : vector<3x54xf32>
    %cst_70 = arith.constant dense<0xFF800000> : vector<54xf32>
    %109 = vector.multi_reduction <maximumf>, %108, %cst_70 [0] : vector<3x54xf32> to vector<54xf32>
    %110 = vector.shape_cast %109 : vector<54xf32> to vector<1x54xf32>
    %cst_71 = arith.constant 0.000000e+00 : f32
    %111 = vector.broadcast %cst_71 : f32 to vector<1x54xf32>
    %112 = arith.subf %111, %110 : vector<1x54xf32>
    %c0_72 = arith.constant 0 : index
    %c108 = arith.constant 108 : index
    %113 = vector.load %arg13[%c0_72, %c108] : memref<2x354xf32, #tpu.memory_space<vmem>>, vector<1x54xf32>
    tpu.vector_store %arg13[%c0_72, %c108], %112 {strides = array<i32>} : memref<2x354xf32, #tpu.memory_space<vmem>>, vector<1x54xf32>,
    %114 = vector.extract_strided_slice %3 {offsets = [0, 27], sizes = [3, 9], strides = [1, 1]} : vector<3x54xf32> to vector<3x9xf32>
    %115 = vector.extract_strided_slice %3 {offsets = [0, 48], sizes = [3, 6], strides = [1, 1]} : vector<3x54xf32> to vector<3x6xf32>
    %116 = vector.extract_strided_slice %4 {offsets = [0, 27], sizes = [3, 9], strides = [1, 1]} : vector<3x54xf32> to vector<3x9xf32>
    %117 = vector.extract_strided_slice %38 {offsets = [0, 27], sizes = [3, 9], strides = [1, 1]} : vector<3x54xf32> to vector<3x9xf32>
    %118 = vector.extract_strided_slice %38 {offsets = [0, 36], sizes = [3, 6], strides = [1, 1]} : vector<3x54xf32> to vector<3x6xf32>
    %cst_73 = arith.constant 1.11111116 : f32
    %119 = vector.broadcast %cst_73 : f32 to vector<3x6xf32>
    %120 = arith.mulf %118, %119 : vector<3x6xf32>
    %121 = vector.extract_strided_slice %38 {offsets = [0, 42], sizes = [3, 6], strides = [1, 1]} : vector<3x54xf32> to vector<3x6xf32>
    %122 = math.sqrt %121 : vector<3x6xf32>
    %123 = vector.extract_strided_slice %38 {offsets = [0, 48], sizes = [3, 6], strides = [1, 1]} : vector<3x54xf32> to vector<3x6xf32>
    %124 = math.sqrt %123 : vector<3x6xf32>
    %125 = math.sqrt %117 : vector<3x9xf32>
    %126 = arith.mulf %122, %124 : vector<3x6xf32>
    %cst_74 = arith.constant 0.00999999977 : f32
    %127 = vector.broadcast %cst_74 : f32 to vector<3x6xf32>
    %128 = arith.addf %126, %127 : vector<3x6xf32>
    %129 = arith.divf %120, %128 : vector<3x6xf32>
    %cst_75 = arith.constant 0.00999999977 : f32
    %130 = vector.broadcast %cst_75 : f32 to vector<3x9xf32>
    %131 = arith.addf %125, %130 : vector<3x9xf32>
    %132 = arith.divf %114, %131 : vector<3x9xf32>
    %c0_76 = arith.constant 0 : index
    %c0_77 = arith.constant 0 : index
    %133 = vector.load %arg12[%c0_76, %c0_77] : memref<10x54xf32, #tpu.memory_space<vmem>>, vector<3x6xf32>
    tpu.vector_store %arg12[%c0_76, %c0_77], %120 {strides = array<i32>} : memref<10x54xf32, #tpu.memory_space<vmem>>, vector<3x6xf32>,
    %c0_78 = arith.constant 0 : index
    %c6_79 = arith.constant 6 : index
    %134 = vector.load %arg12[%c0_78, %c6_79] : memref<10x54xf32, #tpu.memory_space<vmem>>, vector<3x6xf32>
    tpu.vector_store %arg12[%c0_78, %c6_79], %129 {strides = array<i32>} : memref<10x54xf32, #tpu.memory_space<vmem>>, vector<3x6xf32>,
    %c0_80 = arith.constant 0 : index
    %c12_81 = arith.constant 12 : index
    %135 = vector.load %arg12[%c0_80, %c12_81] : memref<10x54xf32, #tpu.memory_space<vmem>>, vector<3x9xf32>
    tpu.vector_store %arg12[%c0_80, %c12_81], %116 {strides = array<i32>} : memref<10x54xf32, #tpu.memory_space<vmem>>, vector<3x9xf32>,
    %c0_82 = arith.constant 0 : index
    %c21_83 = arith.constant 21 : index
    %136 = vector.load %arg12[%c0_82, %c21_83] : memref<10x54xf32, #tpu.memory_space<vmem>>, vector<3x9xf32>
    tpu.vector_store %arg12[%c0_82, %c21_83], %125 {strides = array<i32>} : memref<10x54xf32, #tpu.memory_space<vmem>>, vector<3x9xf32>,
    %c1_84 = arith.constant 1 : index
    %c0_85 = arith.constant 0 : index
    %c0_86 = arith.constant 0 : index
    %137 = vector.load %arg3[%c1_84, %c0_85, %c0_86] : memref<2x3x9xf32, #tpu.memory_space<vmem>>, vector<1x3x9xf32>
    %138 = vector.shape_cast %137 : vector<1x3x9xf32> to vector<3x9xf32>
    %c0_87 = arith.constant 0 : index
    %c30_88 = arith.constant 30 : index
    %139 = vector.load %arg12[%c0_87, %c30_88] : memref<10x54xf32, #tpu.memory_space<vmem>>, vector<3x9xf32>
    tpu.vector_store %arg12[%c0_87, %c30_88], %138 {strides = array<i32>} : memref<10x54xf32, #tpu.memory_space<vmem>>, vector<3x9xf32>,
    %c0_89 = arith.constant 0 : index
    %c39_90 = arith.constant 39 : index
    %140 = vector.load %arg12[%c0_89, %c39_90] : memref<10x54xf32, #tpu.memory_space<vmem>>, vector<3x9xf32>
    tpu.vector_store %arg12[%c0_89, %c39_90], %132 {strides = array<i32>} : memref<10x54xf32, #tpu.memory_space<vmem>>, vector<3x9xf32>,
    %c0_91 = arith.constant 0 : index
    %c48_92 = arith.constant 48 : index
    %141 = vector.load %arg12[%c0_91, %c48_92] : memref<10x54xf32, #tpu.memory_space<vmem>>, vector<3x6xf32>
    tpu.vector_store %arg12[%c0_91, %c48_92], %115 {strides = array<i32>} : memref<10x54xf32, #tpu.memory_space<vmem>>, vector<3x6xf32>,
    %c0_93 = arith.constant 0 : index
    %c0_94 = arith.constant 0 : index
    %142 = vector.load %arg12[%c0_93, %c0_94] : memref<10x54xf32, #tpu.memory_space<vmem>>, vector<3x54xf32>
    %143 = vector.broadcast %64 : vector<1x54xf32> to vector<3x54xf32>
    %144 = arith.mulf %142, %143 : vector<3x54xf32>
    %145 = vector.broadcast %65 : vector<1x54xf32> to vector<3x54xf32>
    %146 = arith.addf %144, %145 : vector<3x54xf32>
    %cst_95 = arith.constant dense<0xFF800000> : vector<54xf32>
    %147 = vector.multi_reduction <maximumf>, %146, %cst_95 [0] : vector<3x54xf32> to vector<54xf32>
    %148 = vector.shape_cast %147 : vector<54xf32> to vector<1x54xf32>
    %c1_96 = arith.constant 1 : index
    %c0_97 = arith.constant 0 : index
    %149 = vector.load %arg13[%c1_96, %c0_97] : memref<2x354xf32, #tpu.memory_space<vmem>>, vector<1x54xf32>
    tpu.vector_store %arg13[%c1_96, %c0_97], %148 {strides = array<i32>} : memref<2x354xf32, #tpu.memory_space<vmem>>, vector<1x54xf32>,
    %cst_98 = arith.constant dense<0.000000e+00> : vector<54xf32>
    %150 = vector.multi_reduction <add>, %146, %cst_98 [0] : vector<3x54xf32> to vector<54xf32>
    %151 = vector.shape_cast %150 : vector<54xf32> to vector<1x54xf32>
    %cst_99 = arith.constant 3.000000e+00 : f32
    %152 = vector.broadcast %cst_99 : f32 to vector<1x54xf32>
    %153 = arith.divf %151, %152 : vector<1x54xf32>
    %c1_100 = arith.constant 1 : index
    %c54_101 = arith.constant 54 : index
    %154 = vector.load %arg13[%c1_100, %c54_101] : memref<2x354xf32, #tpu.memory_space<vmem>>, vector<1x54xf32>
    tpu.vector_store %arg13[%c1_100, %c54_101], %153 {strides = array<i32>} : memref<2x354xf32, #tpu.memory_space<vmem>>, vector<1x54xf32>,
    %cst_102 = arith.constant 0.000000e+00 : f32
    %155 = vector.broadcast %cst_102 : f32 to vector<3x54xf32>
    %156 = arith.subf %155, %146 : vector<3x54xf32>
    %cst_103 = arith.constant dense<0xFF800000> : vector<54xf32>
    %157 = vector.multi_reduction <maximumf>, %156, %cst_103 [0] : vector<3x54xf32> to vector<54xf32>
    %158 = vector.shape_cast %157 : vector<54xf32> to vector<1x54xf32>
    %cst_104 = arith.constant 0.000000e+00 : f32
    %159 = vector.broadcast %cst_104 : f32 to vector<1x54xf32>
    %160 = arith.subf %159, %158 : vector<1x54xf32>
    %c1_105 = arith.constant 1 : index
    %c108_106 = arith.constant 108 : index
    %161 = vector.load %arg13[%c1_105, %c108_106] : memref<2x354xf32, #tpu.memory_space<vmem>>, vector<1x54xf32>
    tpu.vector_store %arg13[%c1_105, %c108_106], %160 {strides = array<i32>} : memref<2x354xf32, #tpu.memory_space<vmem>>, vector<1x54xf32>,
    %c2 = arith.constant 2 : index
    %c0_107 = arith.constant 0 : index
    %162 = vector.load %arg9[%c2, %c0_107] : memref<9x354xf32, #tpu.memory_space<vmem>>, vector<1x54xf32>
    %c3 = arith.constant 3 : index
    %c0_108 = arith.constant 0 : index
    %163 = vector.load %arg9[%c3, %c0_108] : memref<9x354xf32, #tpu.memory_space<vmem>>, vector<1x54xf32>
    %164 = vector.extract_strided_slice %5 {offsets = [0, 0], sizes = [10, 9], strides = [1, 1]} : vector<10x54xf32> to vector<10x9xf32>
    %165 = vector.extract_strided_slice %5 {offsets = [0, 21], sizes = [10, 6], strides = [1, 1]} : vector<10x54xf32> to vector<10x6xf32>
    %166 = vector.extract_strided_slice %6 {offsets = [0, 0], sizes = [10, 9], strides = [1, 1]} : vector<10x54xf32> to vector<10x9xf32>
    %167 = vector.extract_strided_slice %63 {offsets = [0, 0], sizes = [10, 9], strides = [1, 1]} : vector<10x54xf32> to vector<10x9xf32>
    %168 = vector.extract_strided_slice %63 {offsets = [0, 9], sizes = [10, 6], strides = [1, 1]} : vector<10x54xf32> to vector<10x6xf32>
    %cst_109 = arith.constant 1.500000e+00 : f32
    %169 = vector.broadcast %cst_109 : f32 to vector<10x6xf32>
    %170 = arith.mulf %168, %169 : vector<10x6xf32>
    %171 = vector.extract_strided_slice %63 {offsets = [0, 15], sizes = [10, 6], strides = [1, 1]} : vector<10x54xf32> to vector<10x6xf32>
    %172 = math.sqrt %171 : vector<10x6xf32>
    %173 = vector.extract_strided_slice %63 {offsets = [0, 21], sizes = [10, 6], strides = [1, 1]} : vector<10x54xf32> to vector<10x6xf32>
    %174 = math.sqrt %173 : vector<10x6xf32>
    %175 = math.sqrt %167 : vector<10x9xf32>
    %176 = arith.mulf %172, %174 : vector<10x6xf32>
    %cst_110 = arith.constant 0.00999999977 : f32
    %177 = vector.broadcast %cst_110 : f32 to vector<10x6xf32>
    %178 = arith.addf %176, %177 : vector<10x6xf32>
    %179 = arith.divf %170, %178 : vector<10x6xf32>
    %cst_111 = arith.constant 0.00999999977 : f32
    %180 = vector.broadcast %cst_111 : f32 to vector<10x9xf32>
    %181 = arith.addf %175, %180 : vector<10x9xf32>
    %182 = arith.divf %164, %181 : vector<10x9xf32>
    %c0_112 = arith.constant 0 : index
    %c0_113 = arith.constant 0 : index
    %183 = vector.load %arg12[%c0_112, %c0_113] : memref<10x54xf32, #tpu.memory_space<vmem>>, vector<10x6xf32>
    tpu.vector_store %arg12[%c0_112, %c0_113], %170 {strides = array<i32>} : memref<10x54xf32, #tpu.memory_space<vmem>>, vector<10x6xf32>,
    %c0_114 = arith.constant 0 : index
    %c6_115 = arith.constant 6 : index
    %184 = vector.load %arg12[%c0_114, %c6_115] : memref<10x54xf32, #tpu.memory_space<vmem>>, vector<10x6xf32>
    tpu.vector_store %arg12[%c0_114, %c6_115], %179 {strides = array<i32>} : memref<10x54xf32, #tpu.memory_space<vmem>>, vector<10x6xf32>,
    %c0_116 = arith.constant 0 : index
    %c12_117 = arith.constant 12 : index
    %185 = vector.load %arg12[%c0_116, %c12_117] : memref<10x54xf32, #tpu.memory_space<vmem>>, vector<10x9xf32>
    tpu.vector_store %arg12[%c0_116, %c12_117], %166 {strides = array<i32>} : memref<10x54xf32, #tpu.memory_space<vmem>>, vector<10x9xf32>,
    %c0_118 = arith.constant 0 : index
    %c21_119 = arith.constant 21 : index
    %186 = vector.load %arg12[%c0_118, %c21_119] : memref<10x54xf32, #tpu.memory_space<vmem>>, vector<10x9xf32>
    tpu.vector_store %arg12[%c0_118, %c21_119], %175 {strides = array<i32>} : memref<10x54xf32, #tpu.memory_space<vmem>>, vector<10x9xf32>,
    %c0_120 = arith.constant 0 : index
    %c0_121 = arith.constant 0 : index
    %c0_122 = arith.constant 0 : index
    %187 = vector.load %arg4[%c0_120, %c0_121, %c0_122] : memref<2x10x9xf32, #tpu.memory_space<vmem>>, vector<1x10x9xf32>
    %188 = vector.shape_cast %187 : vector<1x10x9xf32> to vector<10x9xf32>
    %c0_123 = arith.constant 0 : index
    %c30_124 = arith.constant 30 : index
    %189 = vector.load %arg12[%c0_123, %c30_124] : memref<10x54xf32, #tpu.memory_space<vmem>>, vector<10x9xf32>
    tpu.vector_store %arg12[%c0_123, %c30_124], %188 {strides = array<i32>} : memref<10x54xf32, #tpu.memory_space<vmem>>, vector<10x9xf32>,
    %c0_125 = arith.constant 0 : index
    %c39_126 = arith.constant 39 : index
    %190 = vector.load %arg12[%c0_125, %c39_126] : memref<10x54xf32, #tpu.memory_space<vmem>>, vector<10x9xf32>
    tpu.vector_store %arg12[%c0_125, %c39_126], %182 {strides = array<i32>} : memref<10x54xf32, #tpu.memory_space<vmem>>, vector<10x9xf32>,
    %c0_127 = arith.constant 0 : index
    %c48_128 = arith.constant 48 : index
    %191 = vector.load %arg12[%c0_127, %c48_128] : memref<10x54xf32, #tpu.memory_space<vmem>>, vector<10x6xf32>
    tpu.vector_store %arg12[%c0_127, %c48_128], %165 {strides = array<i32>} : memref<10x54xf32, #tpu.memory_space<vmem>>, vector<10x6xf32>,
    %c0_129 = arith.constant 0 : index
    %c0_130 = arith.constant 0 : index
    %192 = vector.load %arg12[%c0_129, %c0_130] : memref<10x54xf32, #tpu.memory_space<vmem>>, vector<10x54xf32>
    %193 = vector.broadcast %162 : vector<1x54xf32> to vector<10x54xf32>
    %194 = arith.mulf %192, %193 : vector<10x54xf32>
    %195 = vector.broadcast %163 : vector<1x54xf32> to vector<10x54xf32>
    %196 = arith.addf %194, %195 : vector<10x54xf32>
    %cst_131 = arith.constant dense<0xFF800000> : vector<54xf32>
    %197 = vector.multi_reduction <maximumf>, %196, %cst_131 [0] : vector<10x54xf32> to vector<54xf32>
    %198 = vector.shape_cast %197 : vector<54xf32> to vector<1x54xf32>
    %c0_132 = arith.constant 0 : index
    %c162 = arith.constant 162 : index
    %199 = vector.load %arg13[%c0_132, %c162] : memref<2x354xf32, #tpu.memory_space<vmem>>, vector<1x54xf32>
    tpu.vector_store %arg13[%c0_132, %c162], %198 {strides = array<i32>} : memref<2x354xf32, #tpu.memory_space<vmem>>, vector<1x54xf32>,
    %cst_133 = arith.constant dense<0.000000e+00> : vector<54xf32>
    %200 = vector.multi_reduction <add>, %196, %cst_133 [0] : vector<10x54xf32> to vector<54xf32>
    %201 = vector.shape_cast %200 : vector<54xf32> to vector<1x54xf32>
    %cst_134 = arith.constant 1.000000e+01 : f32
    %202 = vector.broadcast %cst_134 : f32 to vector<1x54xf32>
    %203 = arith.divf %201, %202 : vector<1x54xf32>
    %c0_135 = arith.constant 0 : index
    %c216 = arith.constant 216 : index
    %204 = vector.load %arg13[%c0_135, %c216] : memref<2x354xf32, #tpu.memory_space<vmem>>, vector<1x54xf32>
    tpu.vector_store %arg13[%c0_135, %c216], %203 {strides = array<i32>} : memref<2x354xf32, #tpu.memory_space<vmem>>, vector<1x54xf32>,
    %cst_136 = arith.constant 0.000000e+00 : f32
    %205 = vector.broadcast %cst_136 : f32 to vector<10x54xf32>
    %206 = arith.subf %205, %196 : vector<10x54xf32>
    %cst_137 = arith.constant dense<0xFF800000> : vector<54xf32>
    %207 = vector.multi_reduction <maximumf>, %206, %cst_137 [0] : vector<10x54xf32> to vector<54xf32>
    %208 = vector.shape_cast %207 : vector<54xf32> to vector<1x54xf32>
    %cst_138 = arith.constant 0.000000e+00 : f32
    %209 = vector.broadcast %cst_138 : f32 to vector<1x54xf32>
    %210 = arith.subf %209, %208 : vector<1x54xf32>
    %c0_139 = arith.constant 0 : index
    %c270 = arith.constant 270 : index
    %211 = vector.load %arg13[%c0_139, %c270] : memref<2x354xf32, #tpu.memory_space<vmem>>, vector<1x54xf32>
    tpu.vector_store %arg13[%c0_139, %c270], %210 {strides = array<i32>} : memref<2x354xf32, #tpu.memory_space<vmem>>, vector<1x54xf32>,
    %212 = vector.extract_strided_slice %5 {offsets = [0, 27], sizes = [10, 9], strides = [1, 1]} : vector<10x54xf32> to vector<10x9xf32>
    %213 = vector.extract_strided_slice %5 {offsets = [0, 48], sizes = [10, 6], strides = [1, 1]} : vector<10x54xf32> to vector<10x6xf32>
    %214 = vector.extract_strided_slice %6 {offsets = [0, 27], sizes = [10, 9], strides = [1, 1]} : vector<10x54xf32> to vector<10x9xf32>
    %215 = vector.extract_strided_slice %63 {offsets = [0, 27], sizes = [10, 9], strides = [1, 1]} : vector<10x54xf32> to vector<10x9xf32>
    %216 = vector.extract_strided_slice %63 {offsets = [0, 36], sizes = [10, 6], strides = [1, 1]} : vector<10x54xf32> to vector<10x6xf32>
    %cst_140 = arith.constant 1.500000e+00 : f32
    %217 = vector.broadcast %cst_140 : f32 to vector<10x6xf32>
    %218 = arith.mulf %216, %217 : vector<10x6xf32>
    %219 = vector.extract_strided_slice %63 {offsets = [0, 42], sizes = [10, 6], strides = [1, 1]} : vector<10x54xf32> to vector<10x6xf32>
    %220 = math.sqrt %219 : vector<10x6xf32>
    %221 = vector.extract_strided_slice %63 {offsets = [0, 48], sizes = [10, 6], strides = [1, 1]} : vector<10x54xf32> to vector<10x6xf32>
    %222 = math.sqrt %221 : vector<10x6xf32>
    %223 = math.sqrt %215 : vector<10x9xf32>
    %224 = arith.mulf %220, %222 : vector<10x6xf32>
    %cst_141 = arith.constant 0.00999999977 : f32
    %225 = vector.broadcast %cst_141 : f32 to vector<10x6xf32>
    %226 = arith.addf %224, %225 : vector<10x6xf32>
    %227 = arith.divf %218, %226 : vector<10x6xf32>
    %cst_142 = arith.constant 0.00999999977 : f32
    %228 = vector.broadcast %cst_142 : f32 to vector<10x9xf32>
    %229 = arith.addf %223, %228 : vector<10x9xf32>
    %230 = arith.divf %212, %229 : vector<10x9xf32>
    %c0_143 = arith.constant 0 : index
    %c0_144 = arith.constant 0 : index
    %231 = vector.load %arg12[%c0_143, %c0_144] : memref<10x54xf32, #tpu.memory_space<vmem>>, vector<10x6xf32>
    tpu.vector_store %arg12[%c0_143, %c0_144], %218 {strides = array<i32>} : memref<10x54xf32, #tpu.memory_space<vmem>>, vector<10x6xf32>,
    %c0_145 = arith.constant 0 : index
    %c6_146 = arith.constant 6 : index
    %232 = vector.load %arg12[%c0_145, %c6_146] : memref<10x54xf32, #tpu.memory_space<vmem>>, vector<10x6xf32>
    tpu.vector_store %arg12[%c0_145, %c6_146], %227 {strides = array<i32>} : memref<10x54xf32, #tpu.memory_space<vmem>>, vector<10x6xf32>,
    %c0_147 = arith.constant 0 : index
    %c12_148 = arith.constant 12 : index
    %233 = vector.load %arg12[%c0_147, %c12_148] : memref<10x54xf32, #tpu.memory_space<vmem>>, vector<10x9xf32>
    tpu.vector_store %arg12[%c0_147, %c12_148], %214 {strides = array<i32>} : memref<10x54xf32, #tpu.memory_space<vmem>>, vector<10x9xf32>,
    %c0_149 = arith.constant 0 : index
    %c21_150 = arith.constant 21 : index
    %234 = vector.load %arg12[%c0_149, %c21_150] : memref<10x54xf32, #tpu.memory_space<vmem>>, vector<10x9xf32>
    tpu.vector_store %arg12[%c0_149, %c21_150], %223 {strides = array<i32>} : memref<10x54xf32, #tpu.memory_space<vmem>>, vector<10x9xf32>,
    %c1_151 = arith.constant 1 : index
    %c0_152 = arith.constant 0 : index
    %c0_153 = arith.constant 0 : index
    %235 = vector.load %arg4[%c1_151, %c0_152, %c0_153] : memref<2x10x9xf32, #tpu.memory_space<vmem>>, vector<1x10x9xf32>
    %236 = vector.shape_cast %235 : vector<1x10x9xf32> to vector<10x9xf32>
    %c0_154 = arith.constant 0 : index
    %c30_155 = arith.constant 30 : index
    %237 = vector.load %arg12[%c0_154, %c30_155] : memref<10x54xf32, #tpu.memory_space<vmem>>, vector<10x9xf32>
    tpu.vector_store %arg12[%c0_154, %c30_155], %236 {strides = array<i32>} : memref<10x54xf32, #tpu.memory_space<vmem>>, vector<10x9xf32>,
    %c0_156 = arith.constant 0 : index
    %c39_157 = arith.constant 39 : index
    %238 = vector.load %arg12[%c0_156, %c39_157] : memref<10x54xf32, #tpu.memory_space<vmem>>, vector<10x9xf32>
    tpu.vector_store %arg12[%c0_156, %c39_157], %230 {strides = array<i32>} : memref<10x54xf32, #tpu.memory_space<vmem>>, vector<10x9xf32>,
    %c0_158 = arith.constant 0 : index
    %c48_159 = arith.constant 48 : index
    %239 = vector.load %arg12[%c0_158, %c48_159] : memref<10x54xf32, #tpu.memory_space<vmem>>, vector<10x6xf32>
    tpu.vector_store %arg12[%c0_158, %c48_159], %213 {strides = array<i32>} : memref<10x54xf32, #tpu.memory_space<vmem>>, vector<10x6xf32>,
    %c0_160 = arith.constant 0 : index
    %c0_161 = arith.constant 0 : index
    %240 = vector.load %arg12[%c0_160, %c0_161] : memref<10x54xf32, #tpu.memory_space<vmem>>, vector<10x54xf32>
    %241 = vector.broadcast %162 : vector<1x54xf32> to vector<10x54xf32>
    %242 = arith.mulf %240, %241 : vector<10x54xf32>
    %243 = vector.broadcast %163 : vector<1x54xf32> to vector<10x54xf32>
    %244 = arith.addf %242, %243 : vector<10x54xf32>
    %cst_162 = arith.constant dense<0xFF800000> : vector<54xf32>
    %245 = vector.multi_reduction <maximumf>, %244, %cst_162 [0] : vector<10x54xf32> to vector<54xf32>
    %246 = vector.shape_cast %245 : vector<54xf32> to vector<1x54xf32>
    %c1_163 = arith.constant 1 : index
    %c162_164 = arith.constant 162 : index
    %247 = vector.load %arg13[%c1_163, %c162_164] : memref<2x354xf32, #tpu.memory_space<vmem>>, vector<1x54xf32>
    tpu.vector_store %arg13[%c1_163, %c162_164], %246 {strides = array<i32>} : memref<2x354xf32, #tpu.memory_space<vmem>>, vector<1x54xf32>,
    %cst_165 = arith.constant dense<0.000000e+00> : vector<54xf32>
    %248 = vector.multi_reduction <add>, %244, %cst_165 [0] : vector<10x54xf32> to vector<54xf32>
    %249 = vector.shape_cast %248 : vector<54xf32> to vector<1x54xf32>
    %cst_166 = arith.constant 1.000000e+01 : f32
    %250 = vector.broadcast %cst_166 : f32 to vector<1x54xf32>
    %251 = arith.divf %249, %250 : vector<1x54xf32>
    %c1_167 = arith.constant 1 : index
    %c216_168 = arith.constant 216 : index
    %252 = vector.load %arg13[%c1_167, %c216_168] : memref<2x354xf32, #tpu.memory_space<vmem>>, vector<1x54xf32>
    tpu.vector_store %arg13[%c1_167, %c216_168], %251 {strides = array<i32>} : memref<2x354xf32, #tpu.memory_space<vmem>>, vector<1x54xf32>,
    %cst_169 = arith.constant 0.000000e+00 : f32
    %253 = vector.broadcast %cst_169 : f32 to vector<10x54xf32>
    %254 = arith.subf %253, %244 : vector<10x54xf32>
    %cst_170 = arith.constant dense<0xFF800000> : vector<54xf32>
    %255 = vector.multi_reduction <maximumf>, %254, %cst_170 [0] : vector<10x54xf32> to vector<54xf32>
    %256 = vector.shape_cast %255 : vector<54xf32> to vector<1x54xf32>
    %cst_171 = arith.constant 0.000000e+00 : f32
    %257 = vector.broadcast %cst_171 : f32 to vector<1x54xf32>
    %258 = arith.subf %257, %256 : vector<1x54xf32>
    %c1_172 = arith.constant 1 : index
    %c270_173 = arith.constant 270 : index
    %259 = vector.load %arg13[%c1_172, %c270_173] : memref<2x354xf32, #tpu.memory_space<vmem>>, vector<1x54xf32>
    tpu.vector_store %arg13[%c1_172, %c270_173], %258 {strides = array<i32>} : memref<2x354xf32, #tpu.memory_space<vmem>>, vector<1x54xf32>,
    %c0_174 = arith.constant 0 : index
    %c0_175 = arith.constant 0 : index
    %260 = vector.load %arg7[%c0_174, %c0_175] : memref<88x180xf32, #tpu.memory_space<vmem>>, vector<30x180xf32>
    %c32 = arith.constant 32 : index
    %c0_176 = arith.constant 0 : index
    %261 = vector.load %arg7[%c32, %c0_176] : memref<88x180xf32, #tpu.memory_space<vmem>>, vector<30x90xf32>
    %c64 = arith.constant 64 : index
    %c0_177 = arith.constant 0 : index
    %262 = vector.load %arg7[%c64, %c0_177] : memref<88x180xf32, #tpu.memory_space<vmem>>, vector<9x90xf32>
    %c80 = arith.constant 80 : index
    %c0_178 = arith.constant 0 : index
    %263 = vector.load %arg7[%c80, %c0_178] : memref<88x180xf32, #tpu.memory_space<vmem>>, vector<1x90xf32>
    %c81 = arith.constant 81 : index
    %c0_179 = arith.constant 0 : index
    %264 = vector.load %arg7[%c81, %c0_179] : memref<88x180xf32, #tpu.memory_space<vmem>>, vector<1x90xf32>
    %c82 = arith.constant 82 : index
    %c0_180 = arith.constant 0 : index
    %265 = vector.load %arg7[%c82, %c0_180] : memref<88x180xf32, #tpu.memory_space<vmem>>, vector<1x90xf32>
    %c83 = arith.constant 83 : index
    %c0_181 = arith.constant 0 : index
    %266 = vector.load %arg7[%c83, %c0_181] : memref<88x180xf32, #tpu.memory_space<vmem>>, vector<1x90xf32>
    %c0_182 = arith.constant 0 : index
    %c0_183 = arith.constant 0 : index
    %267 = vector.load %arg2[%c0_182, %c0_183] : memref<60x9xf32, #tpu.memory_space<vmem>>, vector<60x9xf32>
    %cst_184 = arith.constant dense<0.000000e+00> : vector<60x90xf32>
    %268 = tpu.matmul %267, %262, %cst_184 {dimension_numbers = #tpu.dot_dimension_numbers<[1], [0], [0], [1], [0, 0, 1, 1], [], []>} : vector<60x9xf32>, vector<9x90xf32>, vector<60x90xf32> -> vector<60x90xf32>
    %269 = vector.broadcast %263 : vector<1x90xf32> to vector<60x90xf32>
    %270 = arith.addf %268, %269 : vector<60x90xf32>
    %cst_185 = arith.constant 0.000000e+00 : f32
    %271 = vector.broadcast %cst_185 : f32 to vector<2x30xf32>
    %cst_186 = arith.constant 0.000000e+00 : f32
    %272 = vector.broadcast %cst_186 : f32 to vector<2x30xf32>
    %cst_187 = arith.constant 0.000000e+00 : f32
    %273 = vector.broadcast %cst_187 : f32 to vector<2x90xf32>
    %274 = vector.broadcast %264 : vector<1x90xf32> to vector<2x90xf32>
    %275 = arith.addf %273, %274 : vector<2x90xf32>
    %cst_188 = arith.constant dense<0.000000e+00> : vector<2x90xf32>
    %276 = tpu.matmul %272, %261, %cst_188 {dimension_numbers = #tpu.dot_dimension_numbers<[1], [0], [0], [1], [0, 0, 1, 1], [], []>} : vector<2x30xf32>, vector<30x90xf32>, vector<2x90xf32> -> vector<2x90xf32>
    %277 = vector.broadcast %266 : vector<1x90xf32> to vector<2x90xf32>
    %278 = arith.addf %276, %277 : vector<2x90xf32>
    %279 = vector.extract_strided_slice %270 {offsets = [0, 0], sizes = [2, 90], strides = [1, 1]} : vector<60x90xf32> to vector<2x90xf32>
    %280 = vector.extract_strided_slice %279 {offsets = [0, 0], sizes = [2, 30], strides = [1, 1]} : vector<2x90xf32> to vector<2x30xf32>
    %281 = vector.extract_strided_slice %275 {offsets = [0, 0], sizes = [2, 30], strides = [1, 1]} : vector<2x90xf32> to vector<2x30xf32>
    %282 = arith.addf %280, %281 : vector<2x30xf32>
    %283 = arith.negf %282 : vector<2x30xf32>
    %284 = math.exp %283 : vector<2x30xf32>
    %cst_189 = arith.constant 1.000000e+00 : f32
    %285 = vector.broadcast %cst_189 : f32 to vector<2x30xf32>
    %286 = arith.addf %285, %284 : vector<2x30xf32>
    %287 = arith.divf %285, %286 : vector<2x30xf32>
    %288 = vector.extract_strided_slice %279 {offsets = [0, 30], sizes = [2, 30], strides = [1, 1]} : vector<2x90xf32> to vector<2x30xf32>
    %289 = vector.extract_strided_slice %275 {offsets = [0, 30], sizes = [2, 30], strides = [1, 1]} : vector<2x90xf32> to vector<2x30xf32>
    %290 = arith.addf %288, %289 : vector<2x30xf32>
    %291 = arith.negf %290 : vector<2x30xf32>
    %292 = math.exp %291 : vector<2x30xf32>
    %cst_190 = arith.constant 1.000000e+00 : f32
    %293 = vector.broadcast %cst_190 : f32 to vector<2x30xf32>
    %294 = arith.addf %293, %292 : vector<2x30xf32>
    %295 = arith.divf %293, %294 : vector<2x30xf32>
    %296 = vector.extract_strided_slice %279 {offsets = [0, 60], sizes = [2, 30], strides = [1, 1]} : vector<2x90xf32> to vector<2x30xf32>
    %297 = vector.extract_strided_slice %275 {offsets = [0, 60], sizes = [2, 30], strides = [1, 1]} : vector<2x90xf32> to vector<2x30xf32>
    %298 = arith.mulf %287, %297 : vector<2x30xf32>
    %299 = arith.addf %296, %298 : vector<2x30xf32>
    %300 = math.tanh %299 : vector<2x30xf32>
    %cst_191 = arith.constant 1.000000e+00 : f32
    %301 = vector.broadcast %cst_191 : f32 to vector<2x30xf32>
    %302 = arith.subf %301, %295 : vector<2x30xf32>
    %303 = arith.mulf %302, %300 : vector<2x30xf32>
    %304 = arith.mulf %295, %271 : vector<2x30xf32>
    %305 = arith.addf %303, %304 : vector<2x30xf32>
    %cst_192 = arith.constant dense<0.000000e+00> : vector<2x180xf32>
    %306 = tpu.matmul %305, %260, %cst_192 {dimension_numbers = #tpu.dot_dimension_numbers<[1], [0], [0], [1], [0, 0, 1, 1], [], []>} : vector<2x30xf32>, vector<30x180xf32>, vector<2x180xf32> -> vector<2x180xf32>
    %307 = vector.extract_strided_slice %306 {offsets = [0, 0], sizes = [2, 90], strides = [1, 1]} : vector<2x180xf32> to vector<2x90xf32>
    %308 = vector.broadcast %265 : vector<1x90xf32> to vector<2x90xf32>
    %309 = arith.addf %307, %308 : vector<2x90xf32>
    %310 = vector.extract_strided_slice %306 {offsets = [0, 90], sizes = [2, 90], strides = [1, 1]} : vector<2x180xf32> to vector<2x90xf32>
    %311 = vector.broadcast %264 : vector<1x90xf32> to vector<2x90xf32>
    %312 = arith.addf %310, %311 : vector<2x90xf32>
    %313 = vector.extract_strided_slice %309 {offsets = [0, 0], sizes = [2, 30], strides = [1, 1]} : vector<2x90xf32> to vector<2x30xf32>
    %314 = vector.extract_strided_slice %278 {offsets = [0, 0], sizes = [2, 30], strides = [1, 1]} : vector<2x90xf32> to vector<2x30xf32>
    %315 = arith.addf %313, %314 : vector<2x30xf32>
    %316 = arith.negf %315 : vector<2x30xf32>
    %317 = math.exp %316 : vector<2x30xf32>
    %cst_193 = arith.constant 1.000000e+00 : f32
    %318 = vector.broadcast %cst_193 : f32 to vector<2x30xf32>
    %319 = arith.addf %318, %317 : vector<2x30xf32>
    %320 = arith.divf %318, %319 : vector<2x30xf32>
    %321 = vector.extract_strided_slice %309 {offsets = [0, 30], sizes = [2, 30], strides = [1, 1]} : vector<2x90xf32> to vector<2x30xf32>
    %322 = vector.extract_strided_slice %278 {offsets = [0, 30], sizes = [2, 30], strides = [1, 1]} : vector<2x90xf32> to vector<2x30xf32>
    %323 = arith.addf %321, %322 : vector<2x30xf32>
    %324 = arith.negf %323 : vector<2x30xf32>
    %325 = math.exp %324 : vector<2x30xf32>
    %cst_194 = arith.constant 1.000000e+00 : f32
    %326 = vector.broadcast %cst_194 : f32 to vector<2x30xf32>
    %327 = arith.addf %326, %325 : vector<2x30xf32>
    %328 = arith.divf %326, %327 : vector<2x30xf32>
    %329 = vector.extract_strided_slice %309 {offsets = [0, 60], sizes = [2, 30], strides = [1, 1]} : vector<2x90xf32> to vector<2x30xf32>
    %330 = vector.extract_strided_slice %278 {offsets = [0, 60], sizes = [2, 30], strides = [1, 1]} : vector<2x90xf32> to vector<2x30xf32>
    %331 = arith.mulf %320, %330 : vector<2x30xf32>
    %332 = arith.addf %329, %331 : vector<2x30xf32>
    %333 = math.tanh %332 : vector<2x30xf32>
    %cst_195 = arith.constant 1.000000e+00 : f32
    %334 = vector.broadcast %cst_195 : f32 to vector<2x30xf32>
    %335 = arith.subf %334, %328 : vector<2x30xf32>
    %336 = arith.mulf %335, %333 : vector<2x30xf32>
    %337 = arith.mulf %328, %272 : vector<2x30xf32>
    %338 = arith.addf %336, %337 : vector<2x30xf32>
    %cst_196 = arith.constant dense<0.000000e+00> : vector<2x90xf32>
    %339 = tpu.matmul %338, %261, %cst_196 {dimension_numbers = #tpu.dot_dimension_numbers<[1], [0], [0], [1], [0, 0, 1, 1], [], []>} : vector<2x30xf32>, vector<30x90xf32>, vector<2x90xf32> -> vector<2x90xf32>
    %340 = vector.broadcast %266 : vector<1x90xf32> to vector<2x90xf32>
    %341 = arith.addf %339, %340 : vector<2x90xf32>
    %342 = vector.extract_strided_slice %270 {offsets = [2, 0], sizes = [2, 90], strides = [1, 1]} : vector<60x90xf32> to vector<2x90xf32>
    %343 = vector.extract_strided_slice %342 {offsets = [0, 0], sizes = [2, 30], strides = [1, 1]} : vector<2x90xf32> to vector<2x30xf32>
    %344 = vector.extract_strided_slice %312 {offsets = [0, 0], sizes = [2, 30], strides = [1, 1]} : vector<2x90xf32> to vector<2x30xf32>
    %345 = arith.addf %343, %344 : vector<2x30xf32>
    %346 = arith.negf %345 : vector<2x30xf32>
    %347 = math.exp %346 : vector<2x30xf32>
    %cst_197 = arith.constant 1.000000e+00 : f32
    %348 = vector.broadcast %cst_197 : f32 to vector<2x30xf32>
    %349 = arith.addf %348, %347 : vector<2x30xf32>
    %350 = arith.divf %348, %349 : vector<2x30xf32>
    %351 = vector.extract_strided_slice %342 {offsets = [0, 30], sizes = [2, 30], strides = [1, 1]} : vector<2x90xf32> to vector<2x30xf32>
    %352 = vector.extract_strided_slice %312 {offsets = [0, 30], sizes = [2, 30], strides = [1, 1]} : vector<2x90xf32> to vector<2x30xf32>
    %353 = arith.addf %351, %352 : vector<2x30xf32>
    %354 = arith.negf %353 : vector<2x30xf32>
    %355 = math.exp %354 : vector<2x30xf32>
    %cst_198 = arith.constant 1.000000e+00 : f32
    %356 = vector.broadcast %cst_198 : f32 to vector<2x30xf32>
    %357 = arith.addf %356, %355 : vector<2x30xf32>
    %358 = arith.divf %356, %357 : vector<2x30xf32>
    %359 = vector.extract_strided_slice %342 {offsets = [0, 60], sizes = [2, 30], strides = [1, 1]} : vector<2x90xf32> to vector<2x30xf32>
    %360 = vector.extract_strided_slice %312 {offsets = [0, 60], sizes = [2, 30], strides = [1, 1]} : vector<2x90xf32> to vector<2x30xf32>
    %361 = arith.mulf %350, %360 : vector<2x30xf32>
    %362 = arith.addf %359, %361 : vector<2x30xf32>
    %363 = math.tanh %362 : vector<2x30xf32>
    %cst_199 = arith.constant 1.000000e+00 : f32
    %364 = vector.broadcast %cst_199 : f32 to vector<2x30xf32>
    %365 = arith.subf %364, %358 : vector<2x30xf32>
    %366 = arith.mulf %365, %363 : vector<2x30xf32>
    %367 = arith.mulf %358, %305 : vector<2x30xf32>
    %368 = arith.addf %366, %367 : vector<2x30xf32>
    %cst_200 = arith.constant dense<0.000000e+00> : vector<2x180xf32>
    %369 = tpu.matmul %368, %260, %cst_200 {dimension_numbers = #tpu.dot_dimension_numbers<[1], [0], [0], [1], [0, 0, 1, 1], [], []>} : vector<2x30xf32>, vector<30x180xf32>, vector<2x180xf32> -> vector<2x180xf32>
    %370 = vector.extract_strided_slice %369 {offsets = [0, 0], sizes = [2, 90], strides = [1, 1]} : vector<2x180xf32> to vector<2x90xf32>
    %371 = vector.broadcast %265 : vector<1x90xf32> to vector<2x90xf32>
    %372 = arith.addf %370, %371 : vector<2x90xf32>
    %373 = vector.extract_strided_slice %369 {offsets = [0, 90], sizes = [2, 90], strides = [1, 1]} : vector<2x180xf32> to vector<2x90xf32>
    %374 = vector.broadcast %264 : vector<1x90xf32> to vector<2x90xf32>
    %375 = arith.addf %373, %374 : vector<2x90xf32>
    %376 = vector.extract_strided_slice %372 {offsets = [0, 0], sizes = [2, 30], strides = [1, 1]} : vector<2x90xf32> to vector<2x30xf32>
    %377 = vector.extract_strided_slice %341 {offsets = [0, 0], sizes = [2, 30], strides = [1, 1]} : vector<2x90xf32> to vector<2x30xf32>
    %378 = arith.addf %376, %377 : vector<2x30xf32>
    %379 = arith.negf %378 : vector<2x30xf32>
    %380 = math.exp %379 : vector<2x30xf32>
    %cst_201 = arith.constant 1.000000e+00 : f32
    %381 = vector.broadcast %cst_201 : f32 to vector<2x30xf32>
    %382 = arith.addf %381, %380 : vector<2x30xf32>
    %383 = arith.divf %381, %382 : vector<2x30xf32>
    %384 = vector.extract_strided_slice %372 {offsets = [0, 30], sizes = [2, 30], strides = [1, 1]} : vector<2x90xf32> to vector<2x30xf32>
    %385 = vector.extract_strided_slice %341 {offsets = [0, 30], sizes = [2, 30], strides = [1, 1]} : vector<2x90xf32> to vector<2x30xf32>
    %386 = arith.addf %384, %385 : vector<2x30xf32>
    %387 = arith.negf %386 : vector<2x30xf32>
    %388 = math.exp %387 : vector<2x30xf32>
    %cst_202 = arith.constant 1.000000e+00 : f32
    %389 = vector.broadcast %cst_202 : f32 to vector<2x30xf32>
    %390 = arith.addf %389, %388 : vector<2x30xf32>
    %391 = arith.divf %389, %390 : vector<2x30xf32>
    %392 = vector.extract_strided_slice %372 {offsets = [0, 60], sizes = [2, 30], strides = [1, 1]} : vector<2x90xf32> to vector<2x30xf32>
    %393 = vector.extract_strided_slice %341 {offsets = [0, 60], sizes = [2, 30], strides = [1, 1]} : vector<2x90xf32> to vector<2x30xf32>
    %394 = arith.mulf %383, %393 : vector<2x30xf32>
    %395 = arith.addf %392, %394 : vector<2x30xf32>
    %396 = math.tanh %395 : vector<2x30xf32>
    %cst_203 = arith.constant 1.000000e+00 : f32
    %397 = vector.broadcast %cst_203 : f32 to vector<2x30xf32>
    %398 = arith.subf %397, %391 : vector<2x30xf32>
    %399 = arith.mulf %398, %396 : vector<2x30xf32>
    %400 = arith.mulf %391, %338 : vector<2x30xf32>
    %401 = arith.addf %399, %400 : vector<2x30xf32>
    %cst_204 = arith.constant dense<0.000000e+00> : vector<2x90xf32>
    %402 = tpu.matmul %401, %261, %cst_204 {dimension_numbers = #tpu.dot_dimension_numbers<[1], [0], [0], [1], [0, 0, 1, 1], [], []>} : vector<2x30xf32>, vector<30x90xf32>, vector<2x90xf32> -> vector<2x90xf32>
    %403 = vector.broadcast %266 : vector<1x90xf32> to vector<2x90xf32>
    %404 = arith.addf %402, %403 : vector<2x90xf32>
    %405 = vector.extract_strided_slice %270 {offsets = [4, 0], sizes = [2, 90], strides = [1, 1]} : vector<60x90xf32> to vector<2x90xf32>
    %406 = vector.extract_strided_slice %405 {offsets = [0, 0], sizes = [2, 30], strides = [1, 1]} : vector<2x90xf32> to vector<2x30xf32>
    %407 = vector.extract_strided_slice %375 {offsets = [0, 0], sizes = [2, 30], strides = [1, 1]} : vector<2x90xf32> to vector<2x30xf32>
    %408 = arith.addf %406, %407 : vector<2x30xf32>
    %409 = arith.negf %408 : vector<2x30xf32>
    %410 = math.exp %409 : vector<2x30xf32>
    %cst_205 = arith.constant 1.000000e+00 : f32
    %411 = vector.broadcast %cst_205 : f32 to vector<2x30xf32>
    %412 = arith.addf %411, %410 : vector<2x30xf32>
    %413 = arith.divf %411, %412 : vector<2x30xf32>
    %414 = vector.extract_strided_slice %405 {offsets = [0, 30], sizes = [2, 30], strides = [1, 1]} : vector<2x90xf32> to vector<2x30xf32>
    %415 = vector.extract_strided_slice %375 {offsets = [0, 30], sizes = [2, 30], strides = [1, 1]} : vector<2x90xf32> to vector<2x30xf32>
    %416 = arith.addf %414, %415 : vector<2x30xf32>
    %417 = arith.negf %416 : vector<2x30xf32>
    %418 = math.exp %417 : vector<2x30xf32>
    %cst_206 = arith.constant 1.000000e+00 : f32
    %419 = vector.broadcast %cst_206 : f32 to vector<2x30xf32>
    %420 = arith.addf %419, %418 : vector<2x30xf32>
    %421 = arith.divf %419, %420 : vector<2x30xf32>
    %422 = vector.extract_strided_slice %405 {offsets = [0, 60], sizes = [2, 30], strides = [1, 1]} : vector<2x90xf32> to vector<2x30xf32>
    %423 = vector.extract_strided_slice %375 {offsets = [0, 60], sizes = [2, 30], strides = [1, 1]} : vector<2x90xf32> to vector<2x30xf32>
    %424 = arith.mulf %413, %423 : vector<2x30xf32>
    %425 = arith.addf %422, %424 : vector<2x30xf32>
    %426 = math.tanh %425 : vector<2x30xf32>
    %cst_207 = arith.constant 1.000000e+00 : f32
    %427 = vector.broadcast %cst_207 : f32 to vector<2x30xf32>
    %428 = arith.subf %427, %421 : vector<2x30xf32>
    %429 = arith.mulf %428, %426 : vector<2x30xf32>
    %430 = arith.mulf %421, %368 : vector<2x30xf32>
    %431 = arith.addf %429, %430 : vector<2x30xf32>
    %cst_208 = arith.constant dense<0.000000e+00> : vector<2x180xf32>
    %432 = tpu.matmul %431, %260, %cst_208 {dimension_numbers = #tpu.dot_dimension_numbers<[1], [0], [0], [1], [0, 0, 1, 1], [], []>} : vector<2x30xf32>, vector<30x180xf32>, vector<2x180xf32> -> vector<2x180xf32>
    %433 = vector.extract_strided_slice %432 {offsets = [0, 0], sizes = [2, 90], strides = [1, 1]} : vector<2x180xf32> to vector<2x90xf32>
    %434 = vector.broadcast %265 : vector<1x90xf32> to vector<2x90xf32>
    %435 = arith.addf %433, %434 : vector<2x90xf32>
    %436 = vector.extract_strided_slice %432 {offsets = [0, 90], sizes = [2, 90], strides = [1, 1]} : vector<2x180xf32> to vector<2x90xf32>
    %437 = vector.broadcast %264 : vector<1x90xf32> to vector<2x90xf32>
    %438 = arith.addf %436, %437 : vector<2x90xf32>
    %439 = vector.extract_strided_slice %435 {offsets = [0, 0], sizes = [2, 30], strides = [1, 1]} : vector<2x90xf32> to vector<2x30xf32>
    %440 = vector.extract_strided_slice %404 {offsets = [0, 0], sizes = [2, 30], strides = [1, 1]} : vector<2x90xf32> to vector<2x30xf32>
    %441 = arith.addf %439, %440 : vector<2x30xf32>
    %442 = arith.negf %441 : vector<2x30xf32>
    %443 = math.exp %442 : vector<2x30xf32>
    %cst_209 = arith.constant 1.000000e+00 : f32
    %444 = vector.broadcast %cst_209 : f32 to vector<2x30xf32>
    %445 = arith.addf %444, %443 : vector<2x30xf32>
    %446 = arith.divf %444, %445 : vector<2x30xf32>
    %447 = vector.extract_strided_slice %435 {offsets = [0, 30], sizes = [2, 30], strides = [1, 1]} : vector<2x90xf32> to vector<2x30xf32>
    %448 = vector.extract_strided_slice %404 {offsets = [0, 30], sizes = [2, 30], strides = [1, 1]} : vector<2x90xf32> to vector<2x30xf32>
    %449 = arith.addf %447, %448 : vector<2x30xf32>
    %450 = arith.negf %449 : vector<2x30xf32>
    %451 = math.exp %450 : vector<2x30xf32>
    %cst_210 = arith.constant 1.000000e+00 : f32
    %452 = vector.broadcast %cst_210 : f32 to vector<2x30xf32>
    %453 = arith.addf %452, %451 : vector<2x30xf32>
    %454 = arith.divf %452, %453 : vector<2x30xf32>
    %455 = vector.extract_strided_slice %435 {offsets = [0, 60], sizes = [2, 30], strides = [1, 1]} : vector<2x90xf32> to vector<2x30xf32>
    %456 = vector.extract_strided_slice %404 {offsets = [0, 60], sizes = [2, 30], strides = [1, 1]} : vector<2x90xf32> to vector<2x30xf32>
    %457 = arith.mulf %446, %456 : vector<2x30xf32>
    %458 = arith.addf %455, %457 : vector<2x30xf32>
    %459 = math.tanh %458 : vector<2x30xf32>
    %cst_211 = arith.constant 1.000000e+00 : f32
    %460 = vector.broadcast %cst_211 : f32 to vector<2x30xf32>
    %461 = arith.subf %460, %454 : vector<2x30xf32>
    %462 = arith.mulf %461, %459 : vector<2x30xf32>
    %463 = arith.mulf %454, %401 : vector<2x30xf32>
    %464 = arith.addf %462, %463 : vector<2x30xf32>
    %cst_212 = arith.constant dense<0.000000e+00> : vector<2x90xf32>
    %465 = tpu.matmul %464, %261, %cst_212 {dimension_numbers = #tpu.dot_dimension_numbers<[1], [0], [0], [1], [0, 0, 1, 1], [], []>} : vector<2x30xf32>, vector<30x90xf32>, vector<2x90xf32> -> vector<2x90xf32>
    %466 = vector.broadcast %266 : vector<1x90xf32> to vector<2x90xf32>
    %467 = arith.addf %465, %466 : vector<2x90xf32>
    %468 = vector.extract_strided_slice %270 {offsets = [6, 0], sizes = [2, 90], strides = [1, 1]} : vector<60x90xf32> to vector<2x90xf32>
    %469 = vector.extract_strided_slice %468 {offsets = [0, 0], sizes = [2, 30], strides = [1, 1]} : vector<2x90xf32> to vector<2x30xf32>
    %470 = vector.extract_strided_slice %438 {offsets = [0, 0], sizes = [2, 30], strides = [1, 1]} : vector<2x90xf32> to vector<2x30xf32>
    %471 = arith.addf %469, %470 : vector<2x30xf32>
    %472 = arith.negf %471 : vector<2x30xf32>
    %473 = math.exp %472 : vector<2x30xf32>
    %cst_213 = arith.constant 1.000000e+00 : f32
    %474 = vector.broadcast %cst_213 : f32 to vector<2x30xf32>
    %475 = arith.addf %474, %473 : vector<2x30xf32>
    %476 = arith.divf %474, %475 : vector<2x30xf32>
    %477 = vector.extract_strided_slice %468 {offsets = [0, 30], sizes = [2, 30], strides = [1, 1]} : vector<2x90xf32> to vector<2x30xf32>
    %478 = vector.extract_strided_slice %438 {offsets = [0, 30], sizes = [2, 30], strides = [1, 1]} : vector<2x90xf32> to vector<2x30xf32>
    %479 = arith.addf %477, %478 : vector<2x30xf32>
    %480 = arith.negf %479 : vector<2x30xf32>
    %481 = math.exp %480 : vector<2x30xf32>
    %cst_214 = arith.constant 1.000000e+00 : f32
    %482 = vector.broadcast %cst_214 : f32 to vector<2x30xf32>
    %483 = arith.addf %482, %481 : vector<2x30xf32>
    %484 = arith.divf %482, %483 : vector<2x30xf32>
    %485 = vector.extract_strided_slice %468 {offsets = [0, 60], sizes = [2, 30], strides = [1, 1]} : vector<2x90xf32> to vector<2x30xf32>
    %486 = vector.extract_strided_slice %438 {offsets = [0, 60], sizes = [2, 30], strides = [1, 1]} : vector<2x90xf32> to vector<2x30xf32>
    %487 = arith.mulf %476, %486 : vector<2x30xf32>
    %488 = arith.addf %485, %487 : vector<2x30xf32>
    %489 = math.tanh %488 : vector<2x30xf32>
    %cst_215 = arith.constant 1.000000e+00 : f32
    %490 = vector.broadcast %cst_215 : f32 to vector<2x30xf32>
    %491 = arith.subf %490, %484 : vector<2x30xf32>
    %492 = arith.mulf %491, %489 : vector<2x30xf32>
    %493 = arith.mulf %484, %431 : vector<2x30xf32>
    %494 = arith.addf %492, %493 : vector<2x30xf32>
    %cst_216 = arith.constant dense<0.000000e+00> : vector<2x180xf32>
    %495 = tpu.matmul %494, %260, %cst_216 {dimension_numbers = #tpu.dot_dimension_numbers<[1], [0], [0], [1], [0, 0, 1, 1], [], []>} : vector<2x30xf32>, vector<30x180xf32>, vector<2x180xf32> -> vector<2x180xf32>
    %496 = vector.extract_strided_slice %495 {offsets = [0, 0], sizes = [2, 90], strides = [1, 1]} : vector<2x180xf32> to vector<2x90xf32>
    %497 = vector.broadcast %265 : vector<1x90xf32> to vector<2x90xf32>
    %498 = arith.addf %496, %497 : vector<2x90xf32>
    %499 = vector.extract_strided_slice %495 {offsets = [0, 90], sizes = [2, 90], strides = [1, 1]} : vector<2x180xf32> to vector<2x90xf32>
    %500 = vector.broadcast %264 : vector<1x90xf32> to vector<2x90xf32>
    %501 = arith.addf %499, %500 : vector<2x90xf32>
    %502 = vector.extract_strided_slice %498 {offsets = [0, 0], sizes = [2, 30], strides = [1, 1]} : vector<2x90xf32> to vector<2x30xf32>
    %503 = vector.extract_strided_slice %467 {offsets = [0, 0], sizes = [2, 30], strides = [1, 1]} : vector<2x90xf32> to vector<2x30xf32>
    %504 = arith.addf %502, %503 : vector<2x30xf32>
    %505 = arith.negf %504 : vector<2x30xf32>
    %506 = math.exp %505 : vector<2x30xf32>
    %cst_217 = arith.constant 1.000000e+00 : f32
    %507 = vector.broadcast %cst_217 : f32 to vector<2x30xf32>
    %508 = arith.addf %507, %506 : vector<2x30xf32>
    %509 = arith.divf %507, %508 : vector<2x30xf32>
    %510 = vector.extract_strided_slice %498 {offsets = [0, 30], sizes = [2, 30], strides = [1, 1]} : vector<2x90xf32> to vector<2x30xf32>
    %511 = vector.extract_strided_slice %467 {offsets = [0, 30], sizes = [2, 30], strides = [1, 1]} : vector<2x90xf32> to vector<2x30xf32>
    %512 = arith.addf %510, %511 : vector<2x30xf32>
    %513 = arith.negf %512 : vector<2x30xf32>
    %514 = math.exp %513 : vector<2x30xf32>
    %cst_218 = arith.constant 1.000000e+00 : f32
    %515 = vector.broadcast %cst_218 : f32 to vector<2x30xf32>
    %516 = arith.addf %515, %514 : vector<2x30xf32>
    %517 = arith.divf %515, %516 : vector<2x30xf32>
    %518 = vector.extract_strided_slice %498 {offsets = [0, 60], sizes = [2, 30], strides = [1, 1]} : vector<2x90xf32> to vector<2x30xf32>
    %519 = vector.extract_strided_slice %467 {offsets = [0, 60], sizes = [2, 30], strides = [1, 1]} : vector<2x90xf32> to vector<2x30xf32>
    %520 = arith.mulf %509, %519 : vector<2x30xf32>
    %521 = arith.addf %518, %520 : vector<2x30xf32>
    %522 = math.tanh %521 : vector<2x30xf32>
    %cst_219 = arith.constant 1.000000e+00 : f32
    %523 = vector.broadcast %cst_219 : f32 to vector<2x30xf32>
    %524 = arith.subf %523, %517 : vector<2x30xf32>
    %525 = arith.mulf %524, %522 : vector<2x30xf32>
    %526 = arith.mulf %517, %464 : vector<2x30xf32>
    %527 = arith.addf %525, %526 : vector<2x30xf32>
    %cst_220 = arith.constant dense<0.000000e+00> : vector<2x90xf32>
    %528 = tpu.matmul %527, %261, %cst_220 {dimension_numbers = #tpu.dot_dimension_numbers<[1], [0], [0], [1], [0, 0, 1, 1], [], []>} : vector<2x30xf32>, vector<30x90xf32>, vector<2x90xf32> -> vector<2x90xf32>
    %529 = vector.broadcast %266 : vector<1x90xf32> to vector<2x90xf32>
    %530 = arith.addf %528, %529 : vector<2x90xf32>
    %531 = vector.extract_strided_slice %270 {offsets = [8, 0], sizes = [2, 90], strides = [1, 1]} : vector<60x90xf32> to vector<2x90xf32>
    %532 = vector.extract_strided_slice %531 {offsets = [0, 0], sizes = [2, 30], strides = [1, 1]} : vector<2x90xf32> to vector<2x30xf32>
    %533 = vector.extract_strided_slice %501 {offsets = [0, 0], sizes = [2, 30], strides = [1, 1]} : vector<2x90xf32> to vector<2x30xf32>
    %534 = arith.addf %532, %533 : vector<2x30xf32>
    %535 = arith.negf %534 : vector<2x30xf32>
    %536 = math.exp %535 : vector<2x30xf32>
    %cst_221 = arith.constant 1.000000e+00 : f32
    %537 = vector.broadcast %cst_221 : f32 to vector<2x30xf32>
    %538 = arith.addf %537, %536 : vector<2x30xf32>
    %539 = arith.divf %537, %538 : vector<2x30xf32>
    %540 = vector.extract_strided_slice %531 {offsets = [0, 30], sizes = [2, 30], strides = [1, 1]} : vector<2x90xf32> to vector<2x30xf32>
    %541 = vector.extract_strided_slice %501 {offsets = [0, 30], sizes = [2, 30], strides = [1, 1]} : vector<2x90xf32> to vector<2x30xf32>
    %542 = arith.addf %540, %541 : vector<2x30xf32>
    %543 = arith.negf %542 : vector<2x30xf32>
    %544 = math.exp %543 : vector<2x30xf32>
    %cst_222 = arith.constant 1.000000e+00 : f32
    %545 = vector.broadcast %cst_222 : f32 to vector<2x30xf32>
    %546 = arith.addf %545, %544 : vector<2x30xf32>
    %547 = arith.divf %545, %546 : vector<2x30xf32>
    %548 = vector.extract_strided_slice %531 {offsets = [0, 60], sizes = [2, 30], strides = [1, 1]} : vector<2x90xf32> to vector<2x30xf32>
    %549 = vector.extract_strided_slice %501 {offsets = [0, 60], sizes = [2, 30], strides = [1, 1]} : vector<2x90xf32> to vector<2x30xf32>
    %550 = arith.mulf %539, %549 : vector<2x30xf32>
    %551 = arith.addf %548, %550 : vector<2x30xf32>
    %552 = math.tanh %551 : vector<2x30xf32>
    %cst_223 = arith.constant 1.000000e+00 : f32
    %553 = vector.broadcast %cst_223 : f32 to vector<2x30xf32>
    %554 = arith.subf %553, %547 : vector<2x30xf32>
    %555 = arith.mulf %554, %552 : vector<2x30xf32>
    %556 = arith.mulf %547, %494 : vector<2x30xf32>
    %557 = arith.addf %555, %556 : vector<2x30xf32>
    %cst_224 = arith.constant dense<0.000000e+00> : vector<2x180xf32>
    %558 = tpu.matmul %557, %260, %cst_224 {dimension_numbers = #tpu.dot_dimension_numbers<[1], [0], [0], [1], [0, 0, 1, 1], [], []>} : vector<2x30xf32>, vector<30x180xf32>, vector<2x180xf32> -> vector<2x180xf32>
    %559 = vector.extract_strided_slice %558 {offsets = [0, 0], sizes = [2, 90], strides = [1, 1]} : vector<2x180xf32> to vector<2x90xf32>
    %560 = vector.broadcast %265 : vector<1x90xf32> to vector<2x90xf32>
    %561 = arith.addf %559, %560 : vector<2x90xf32>
    %562 = vector.extract_strided_slice %558 {offsets = [0, 90], sizes = [2, 90], strides = [1, 1]} : vector<2x180xf32> to vector<2x90xf32>
    %563 = vector.broadcast %264 : vector<1x90xf32> to vector<2x90xf32>
    %564 = arith.addf %562, %563 : vector<2x90xf32>
    %565 = vector.extract_strided_slice %561 {offsets = [0, 0], sizes = [2, 30], strides = [1, 1]} : vector<2x90xf32> to vector<2x30xf32>
    %566 = vector.extract_strided_slice %530 {offsets = [0, 0], sizes = [2, 30], strides = [1, 1]} : vector<2x90xf32> to vector<2x30xf32>
    %567 = arith.addf %565, %566 : vector<2x30xf32>
    %568 = arith.negf %567 : vector<2x30xf32>
    %569 = math.exp %568 : vector<2x30xf32>
    %cst_225 = arith.constant 1.000000e+00 : f32
    %570 = vector.broadcast %cst_225 : f32 to vector<2x30xf32>
    %571 = arith.addf %570, %569 : vector<2x30xf32>
    %572 = arith.divf %570, %571 : vector<2x30xf32>
    %573 = vector.extract_strided_slice %561 {offsets = [0, 30], sizes = [2, 30], strides = [1, 1]} : vector<2x90xf32> to vector<2x30xf32>
    %574 = vector.extract_strided_slice %530 {offsets = [0, 30], sizes = [2, 30], strides = [1, 1]} : vector<2x90xf32> to vector<2x30xf32>
    %575 = arith.addf %573, %574 : vector<2x30xf32>
    %576 = arith.negf %575 : vector<2x30xf32>
    %577 = math.exp %576 : vector<2x30xf32>
    %cst_226 = arith.constant 1.000000e+00 : f32
    %578 = vector.broadcast %cst_226 : f32 to vector<2x30xf32>
    %579 = arith.addf %578, %577 : vector<2x30xf32>
    %580 = arith.divf %578, %579 : vector<2x30xf32>
    %581 = vector.extract_strided_slice %561 {offsets = [0, 60], sizes = [2, 30], strides = [1, 1]} : vector<2x90xf32> to vector<2x30xf32>
    %582 = vector.extract_strided_slice %530 {offsets = [0, 60], sizes = [2, 30], strides = [1, 1]} : vector<2x90xf32> to vector<2x30xf32>
    %583 = arith.mulf %572, %582 : vector<2x30xf32>
    %584 = arith.addf %581, %583 : vector<2x30xf32>
    %585 = math.tanh %584 : vector<2x30xf32>
    %cst_227 = arith.constant 1.000000e+00 : f32
    %586 = vector.broadcast %cst_227 : f32 to vector<2x30xf32>
    %587 = arith.subf %586, %580 : vector<2x30xf32>
    %588 = arith.mulf %587, %585 : vector<2x30xf32>
    %589 = arith.mulf %580, %527 : vector<2x30xf32>
    %590 = arith.addf %588, %589 : vector<2x30xf32>
    %cst_228 = arith.constant dense<0.000000e+00> : vector<2x90xf32>
    %591 = tpu.matmul %590, %261, %cst_228 {dimension_numbers = #tpu.dot_dimension_numbers<[1], [0], [0], [1], [0, 0, 1, 1], [], []>} : vector<2x30xf32>, vector<30x90xf32>, vector<2x90xf32> -> vector<2x90xf32>
    %592 = vector.broadcast %266 : vector<1x90xf32> to vector<2x90xf32>
    %593 = arith.addf %591, %592 : vector<2x90xf32>
    %594 = vector.extract_strided_slice %270 {offsets = [10, 0], sizes = [2, 90], strides = [1, 1]} : vector<60x90xf32> to vector<2x90xf32>
    %595 = vector.extract_strided_slice %594 {offsets = [0, 0], sizes = [2, 30], strides = [1, 1]} : vector<2x90xf32> to vector<2x30xf32>
    %596 = vector.extract_strided_slice %564 {offsets = [0, 0], sizes = [2, 30], strides = [1, 1]} : vector<2x90xf32> to vector<2x30xf32>
    %597 = arith.addf %595, %596 : vector<2x30xf32>
    %598 = arith.negf %597 : vector<2x30xf32>
    %599 = math.exp %598 : vector<2x30xf32>
    %cst_229 = arith.constant 1.000000e+00 : f32
    %600 = vector.broadcast %cst_229 : f32 to vector<2x30xf32>
    %601 = arith.addf %600, %599 : vector<2x30xf32>
    %602 = arith.divf %600, %601 : vector<2x30xf32>
    %603 = vector.extract_strided_slice %594 {offsets = [0, 30], sizes = [2, 30], strides = [1, 1]} : vector<2x90xf32> to vector<2x30xf32>
    %604 = vector.extract_strided_slice %564 {offsets = [0, 30], sizes = [2, 30], strides = [1, 1]} : vector<2x90xf32> to vector<2x30xf32>
    %605 = arith.addf %603, %604 : vector<2x30xf32>
    %606 = arith.negf %605 : vector<2x30xf32>
    %607 = math.exp %606 : vector<2x30xf32>
    %cst_230 = arith.constant 1.000000e+00 : f32
    %608 = vector.broadcast %cst_230 : f32 to vector<2x30xf32>
    %609 = arith.addf %608, %607 : vector<2x30xf32>
    %610 = arith.divf %608, %609 : vector<2x30xf32>
    %611 = vector.extract_strided_slice %594 {offsets = [0, 60], sizes = [2, 30], strides = [1, 1]} : vector<2x90xf32> to vector<2x30xf32>
    %612 = vector.extract_strided_slice %564 {offsets = [0, 60], sizes = [2, 30], strides = [1, 1]} : vector<2x90xf32> to vector<2x30xf32>
    %613 = arith.mulf %602, %612 : vector<2x30xf32>
    %614 = arith.addf %611, %613 : vector<2x30xf32>
    %615 = math.tanh %614 : vector<2x30xf32>
    %cst_231 = arith.constant 1.000000e+00 : f32
    %616 = vector.broadcast %cst_231 : f32 to vector<2x30xf32>
    %617 = arith.subf %616, %610 : vector<2x30xf32>
    %618 = arith.mulf %617, %615 : vector<2x30xf32>
    %619 = arith.mulf %610, %557 : vector<2x30xf32>
    %620 = arith.addf %618, %619 : vector<2x30xf32>
    %cst_232 = arith.constant dense<0.000000e+00> : vector<2x180xf32>
    %621 = tpu.matmul %620, %260, %cst_232 {dimension_numbers = #tpu.dot_dimension_numbers<[1], [0], [0], [1], [0, 0, 1, 1], [], []>} : vector<2x30xf32>, vector<30x180xf32>, vector<2x180xf32> -> vector<2x180xf32>
    %622 = vector.extract_strided_slice %621 {offsets = [0, 0], sizes = [2, 90], strides = [1, 1]} : vector<2x180xf32> to vector<2x90xf32>
    %623 = vector.broadcast %265 : vector<1x90xf32> to vector<2x90xf32>
    %624 = arith.addf %622, %623 : vector<2x90xf32>
    %625 = vector.extract_strided_slice %621 {offsets = [0, 90], sizes = [2, 90], strides = [1, 1]} : vector<2x180xf32> to vector<2x90xf32>
    %626 = vector.broadcast %264 : vector<1x90xf32> to vector<2x90xf32>
    %627 = arith.addf %625, %626 : vector<2x90xf32>
    %628 = vector.extract_strided_slice %624 {offsets = [0, 0], sizes = [2, 30], strides = [1, 1]} : vector<2x90xf32> to vector<2x30xf32>
    %629 = vector.extract_strided_slice %593 {offsets = [0, 0], sizes = [2, 30], strides = [1, 1]} : vector<2x90xf32> to vector<2x30xf32>
    %630 = arith.addf %628, %629 : vector<2x30xf32>
    %631 = arith.negf %630 : vector<2x30xf32>
    %632 = math.exp %631 : vector<2x30xf32>
    %cst_233 = arith.constant 1.000000e+00 : f32
    %633 = vector.broadcast %cst_233 : f32 to vector<2x30xf32>
    %634 = arith.addf %633, %632 : vector<2x30xf32>
    %635 = arith.divf %633, %634 : vector<2x30xf32>
    %636 = vector.extract_strided_slice %624 {offsets = [0, 30], sizes = [2, 30], strides = [1, 1]} : vector<2x90xf32> to vector<2x30xf32>
    %637 = vector.extract_strided_slice %593 {offsets = [0, 30], sizes = [2, 30], strides = [1, 1]} : vector<2x90xf32> to vector<2x30xf32>
    %638 = arith.addf %636, %637 : vector<2x30xf32>
    %639 = arith.negf %638 : vector<2x30xf32>
    %640 = math.exp %639 : vector<2x30xf32>
    %cst_234 = arith.constant 1.000000e+00 : f32
    %641 = vector.broadcast %cst_234 : f32 to vector<2x30xf32>
    %642 = arith.addf %641, %640 : vector<2x30xf32>
    %643 = arith.divf %641, %642 : vector<2x30xf32>
    %644 = vector.extract_strided_slice %624 {offsets = [0, 60], sizes = [2, 30], strides = [1, 1]} : vector<2x90xf32> to vector<2x30xf32>
    %645 = vector.extract_strided_slice %593 {offsets = [0, 60], sizes = [2, 30], strides = [1, 1]} : vector<2x90xf32> to vector<2x30xf32>
    %646 = arith.mulf %635, %645 : vector<2x30xf32>
    %647 = arith.addf %644, %646 : vector<2x30xf32>
    %648 = math.tanh %647 : vector<2x30xf32>
    %cst_235 = arith.constant 1.000000e+00 : f32
    %649 = vector.broadcast %cst_235 : f32 to vector<2x30xf32>
    %650 = arith.subf %649, %643 : vector<2x30xf32>
    %651 = arith.mulf %650, %648 : vector<2x30xf32>
    %652 = arith.mulf %643, %590 : vector<2x30xf32>
    %653 = arith.addf %651, %652 : vector<2x30xf32>
    %cst_236 = arith.constant dense<0.000000e+00> : vector<2x90xf32>
    %654 = tpu.matmul %653, %261, %cst_236 {dimension_numbers = #tpu.dot_dimension_numbers<[1], [0], [0], [1], [0, 0, 1, 1], [], []>} : vector<2x30xf32>, vector<30x90xf32>, vector<2x90xf32> -> vector<2x90xf32>
    %655 = vector.broadcast %266 : vector<1x90xf32> to vector<2x90xf32>
    %656 = arith.addf %654, %655 : vector<2x90xf32>
    %657 = vector.extract_strided_slice %270 {offsets = [12, 0], sizes = [2, 90], strides = [1, 1]} : vector<60x90xf32> to vector<2x90xf32>
    %658 = vector.extract_strided_slice %657 {offsets = [0, 0], sizes = [2, 30], strides = [1, 1]} : vector<2x90xf32> to vector<2x30xf32>
    %659 = vector.extract_strided_slice %627 {offsets = [0, 0], sizes = [2, 30], strides = [1, 1]} : vector<2x90xf32> to vector<2x30xf32>
    %660 = arith.addf %658, %659 : vector<2x30xf32>
    %661 = arith.negf %660 : vector<2x30xf32>
    %662 = math.exp %661 : vector<2x30xf32>
    %cst_237 = arith.constant 1.000000e+00 : f32
    %663 = vector.broadcast %cst_237 : f32 to vector<2x30xf32>
    %664 = arith.addf %663, %662 : vector<2x30xf32>
    %665 = arith.divf %663, %664 : vector<2x30xf32>
    %666 = vector.extract_strided_slice %657 {offsets = [0, 30], sizes = [2, 30], strides = [1, 1]} : vector<2x90xf32> to vector<2x30xf32>
    %667 = vector.extract_strided_slice %627 {offsets = [0, 30], sizes = [2, 30], strides = [1, 1]} : vector<2x90xf32> to vector<2x30xf32>
    %668 = arith.addf %666, %667 : vector<2x30xf32>
    %669 = arith.negf %668 : vector<2x30xf32>
    %670 = math.exp %669 : vector<2x30xf32>
    %cst_238 = arith.constant 1.000000e+00 : f32
    %671 = vector.broadcast %cst_238 : f32 to vector<2x30xf32>
    %672 = arith.addf %671, %670 : vector<2x30xf32>
    %673 = arith.divf %671, %672 : vector<2x30xf32>
    %674 = vector.extract_strided_slice %657 {offsets = [0, 60], sizes = [2, 30], strides = [1, 1]} : vector<2x90xf32> to vector<2x30xf32>
    %675 = vector.extract_strided_slice %627 {offsets = [0, 60], sizes = [2, 30], strides = [1, 1]} : vector<2x90xf32> to vector<2x30xf32>
    %676 = arith.mulf %665, %675 : vector<2x30xf32>
    %677 = arith.addf %674, %676 : vector<2x30xf32>
    %678 = math.tanh %677 : vector<2x30xf32>
    %cst_239 = arith.constant 1.000000e+00 : f32
    %679 = vector.broadcast %cst_239 : f32 to vector<2x30xf32>
    %680 = arith.subf %679, %673 : vector<2x30xf32>
    %681 = arith.mulf %680, %678 : vector<2x30xf32>
    %682 = arith.mulf %673, %620 : vector<2x30xf32>
    %683 = arith.addf %681, %682 : vector<2x30xf32>
    %cst_240 = arith.constant dense<0.000000e+00> : vector<2x180xf32>
    %684 = tpu.matmul %683, %260, %cst_240 {dimension_numbers = #tpu.dot_dimension_numbers<[1], [0], [0], [1], [0, 0, 1, 1], [], []>} : vector<2x30xf32>, vector<30x180xf32>, vector<2x180xf32> -> vector<2x180xf32>
    %685 = vector.extract_strided_slice %684 {offsets = [0, 0], sizes = [2, 90], strides = [1, 1]} : vector<2x180xf32> to vector<2x90xf32>
    %686 = vector.broadcast %265 : vector<1x90xf32> to vector<2x90xf32>
    %687 = arith.addf %685, %686 : vector<2x90xf32>
    %688 = vector.extract_strided_slice %684 {offsets = [0, 90], sizes = [2, 90], strides = [1, 1]} : vector<2x180xf32> to vector<2x90xf32>
    %689 = vector.broadcast %264 : vector<1x90xf32> to vector<2x90xf32>
    %690 = arith.addf %688, %689 : vector<2x90xf32>
    %691 = vector.extract_strided_slice %687 {offsets = [0, 0], sizes = [2, 30], strides = [1, 1]} : vector<2x90xf32> to vector<2x30xf32>
    %692 = vector.extract_strided_slice %656 {offsets = [0, 0], sizes = [2, 30], strides = [1, 1]} : vector<2x90xf32> to vector<2x30xf32>
    %693 = arith.addf %691, %692 : vector<2x30xf32>
    %694 = arith.negf %693 : vector<2x30xf32>
    %695 = math.exp %694 : vector<2x30xf32>
    %cst_241 = arith.constant 1.000000e+00 : f32
    %696 = vector.broadcast %cst_241 : f32 to vector<2x30xf32>
    %697 = arith.addf %696, %695 : vector<2x30xf32>
    %698 = arith.divf %696, %697 : vector<2x30xf32>
    %699 = vector.extract_strided_slice %687 {offsets = [0, 30], sizes = [2, 30], strides = [1, 1]} : vector<2x90xf32> to vector<2x30xf32>
    %700 = vector.extract_strided_slice %656 {offsets = [0, 30], sizes = [2, 30], strides = [1, 1]} : vector<2x90xf32> to vector<2x30xf32>
    %701 = arith.addf %699, %700 : vector<2x30xf32>
    %702 = arith.negf %701 : vector<2x30xf32>
    %703 = math.exp %702 : vector<2x30xf32>
    %cst_242 = arith.constant 1.000000e+00 : f32
    %704 = vector.broadcast %cst_242 : f32 to vector<2x30xf32>
    %705 = arith.addf %704, %703 : vector<2x30xf32>
    %706 = arith.divf %704, %705 : vector<2x30xf32>
    %707 = vector.extract_strided_slice %687 {offsets = [0, 60], sizes = [2, 30], strides = [1, 1]} : vector<2x90xf32> to vector<2x30xf32>
    %708 = vector.extract_strided_slice %656 {offsets = [0, 60], sizes = [2, 30], strides = [1, 1]} : vector<2x90xf32> to vector<2x30xf32>
    %709 = arith.mulf %698, %708 : vector<2x30xf32>
    %710 = arith.addf %707, %709 : vector<2x30xf32>
    %711 = math.tanh %710 : vector<2x30xf32>
    %cst_243 = arith.constant 1.000000e+00 : f32
    %712 = vector.broadcast %cst_243 : f32 to vector<2x30xf32>
    %713 = arith.subf %712, %706 : vector<2x30xf32>
    %714 = arith.mulf %713, %711 : vector<2x30xf32>
    %715 = arith.mulf %706, %653 : vector<2x30xf32>
    %716 = arith.addf %714, %715 : vector<2x30xf32>
    %cst_244 = arith.constant dense<0.000000e+00> : vector<2x90xf32>
    %717 = tpu.matmul %716, %261, %cst_244 {dimension_numbers = #tpu.dot_dimension_numbers<[1], [0], [0], [1], [0, 0, 1, 1], [], []>} : vector<2x30xf32>, vector<30x90xf32>, vector<2x90xf32> -> vector<2x90xf32>
    %718 = vector.broadcast %266 : vector<1x90xf32> to vector<2x90xf32>
    %719 = arith.addf %717, %718 : vector<2x90xf32>
    %720 = vector.extract_strided_slice %270 {offsets = [14, 0], sizes = [2, 90], strides = [1, 1]} : vector<60x90xf32> to vector<2x90xf32>
    %721 = vector.extract_strided_slice %720 {offsets = [0, 0], sizes = [2, 30], strides = [1, 1]} : vector<2x90xf32> to vector<2x30xf32>
    %722 = vector.extract_strided_slice %690 {offsets = [0, 0], sizes = [2, 30], strides = [1, 1]} : vector<2x90xf32> to vector<2x30xf32>
    %723 = arith.addf %721, %722 : vector<2x30xf32>
    %724 = arith.negf %723 : vector<2x30xf32>
    %725 = math.exp %724 : vector<2x30xf32>
    %cst_245 = arith.constant 1.000000e+00 : f32
    %726 = vector.broadcast %cst_245 : f32 to vector<2x30xf32>
    %727 = arith.addf %726, %725 : vector<2x30xf32>
    %728 = arith.divf %726, %727 : vector<2x30xf32>
    %729 = vector.extract_strided_slice %720 {offsets = [0, 30], sizes = [2, 30], strides = [1, 1]} : vector<2x90xf32> to vector<2x30xf32>
    %730 = vector.extract_strided_slice %690 {offsets = [0, 30], sizes = [2, 30], strides = [1, 1]} : vector<2x90xf32> to vector<2x30xf32>
    %731 = arith.addf %729, %730 : vector<2x30xf32>
    %732 = arith.negf %731 : vector<2x30xf32>
    %733 = math.exp %732 : vector<2x30xf32>
    %cst_246 = arith.constant 1.000000e+00 : f32
    %734 = vector.broadcast %cst_246 : f32 to vector<2x30xf32>
    %735 = arith.addf %734, %733 : vector<2x30xf32>
    %736 = arith.divf %734, %735 : vector<2x30xf32>
    %737 = vector.extract_strided_slice %720 {offsets = [0, 60], sizes = [2, 30], strides = [1, 1]} : vector<2x90xf32> to vector<2x30xf32>
    %738 = vector.extract_strided_slice %690 {offsets = [0, 60], sizes = [2, 30], strides = [1, 1]} : vector<2x90xf32> to vector<2x30xf32>
    %739 = arith.mulf %728, %738 : vector<2x30xf32>
    %740 = arith.addf %737, %739 : vector<2x30xf32>
    %741 = math.tanh %740 : vector<2x30xf32>
    %cst_247 = arith.constant 1.000000e+00 : f32
    %742 = vector.broadcast %cst_247 : f32 to vector<2x30xf32>
    %743 = arith.subf %742, %736 : vector<2x30xf32>
    %744 = arith.mulf %743, %741 : vector<2x30xf32>
    %745 = arith.mulf %736, %683 : vector<2x30xf32>
    %746 = arith.addf %744, %745 : vector<2x30xf32>
    %cst_248 = arith.constant dense<0.000000e+00> : vector<2x180xf32>
    %747 = tpu.matmul %746, %260, %cst_248 {dimension_numbers = #tpu.dot_dimension_numbers<[1], [0], [0], [1], [0, 0, 1, 1], [], []>} : vector<2x30xf32>, vector<30x180xf32>, vector<2x180xf32> -> vector<2x180xf32>
    %748 = vector.extract_strided_slice %747 {offsets = [0, 0], sizes = [2, 90], strides = [1, 1]} : vector<2x180xf32> to vector<2x90xf32>
    %749 = vector.broadcast %265 : vector<1x90xf32> to vector<2x90xf32>
    %750 = arith.addf %748, %749 : vector<2x90xf32>
    %751 = vector.extract_strided_slice %747 {offsets = [0, 90], sizes = [2, 90], strides = [1, 1]} : vector<2x180xf32> to vector<2x90xf32>
    %752 = vector.broadcast %264 : vector<1x90xf32> to vector<2x90xf32>
    %753 = arith.addf %751, %752 : vector<2x90xf32>
    %754 = vector.extract_strided_slice %750 {offsets = [0, 0], sizes = [2, 30], strides = [1, 1]} : vector<2x90xf32> to vector<2x30xf32>
    %755 = vector.extract_strided_slice %719 {offsets = [0, 0], sizes = [2, 30], strides = [1, 1]} : vector<2x90xf32> to vector<2x30xf32>
    %756 = arith.addf %754, %755 : vector<2x30xf32>
    %757 = arith.negf %756 : vector<2x30xf32>
    %758 = math.exp %757 : vector<2x30xf32>
    %cst_249 = arith.constant 1.000000e+00 : f32
    %759 = vector.broadcast %cst_249 : f32 to vector<2x30xf32>
    %760 = arith.addf %759, %758 : vector<2x30xf32>
    %761 = arith.divf %759, %760 : vector<2x30xf32>
    %762 = vector.extract_strided_slice %750 {offsets = [0, 30], sizes = [2, 30], strides = [1, 1]} : vector<2x90xf32> to vector<2x30xf32>
    %763 = vector.extract_strided_slice %719 {offsets = [0, 30], sizes = [2, 30], strides = [1, 1]} : vector<2x90xf32> to vector<2x30xf32>
    %764 = arith.addf %762, %763 : vector<2x30xf32>
    %765 = arith.negf %764 : vector<2x30xf32>
    %766 = math.exp %765 : vector<2x30xf32>
    %cst_250 = arith.constant 1.000000e+00 : f32
    %767 = vector.broadcast %cst_250 : f32 to vector<2x30xf32>
    %768 = arith.addf %767, %766 : vector<2x30xf32>
    %769 = arith.divf %767, %768 : vector<2x30xf32>
    %770 = vector.extract_strided_slice %750 {offsets = [0, 60], sizes = [2, 30], strides = [1, 1]} : vector<2x90xf32> to vector<2x30xf32>
    %771 = vector.extract_strided_slice %719 {offsets = [0, 60], sizes = [2, 30], strides = [1, 1]} : vector<2x90xf32> to vector<2x30xf32>
    %772 = arith.mulf %761, %771 : vector<2x30xf32>
    %773 = arith.addf %770, %772 : vector<2x30xf32>
    %774 = math.tanh %773 : vector<2x30xf32>
    %cst_251 = arith.constant 1.000000e+00 : f32
    %775 = vector.broadcast %cst_251 : f32 to vector<2x30xf32>
    %776 = arith.subf %775, %769 : vector<2x30xf32>
    %777 = arith.mulf %776, %774 : vector<2x30xf32>
    %778 = arith.mulf %769, %716 : vector<2x30xf32>
    %779 = arith.addf %777, %778 : vector<2x30xf32>
    %cst_252 = arith.constant dense<0.000000e+00> : vector<2x90xf32>
    %780 = tpu.matmul %779, %261, %cst_252 {dimension_numbers = #tpu.dot_dimension_numbers<[1], [0], [0], [1], [0, 0, 1, 1], [], []>} : vector<2x30xf32>, vector<30x90xf32>, vector<2x90xf32> -> vector<2x90xf32>
    %781 = vector.broadcast %266 : vector<1x90xf32> to vector<2x90xf32>
    %782 = arith.addf %780, %781 : vector<2x90xf32>
    %783 = vector.extract_strided_slice %270 {offsets = [16, 0], sizes = [2, 90], strides = [1, 1]} : vector<60x90xf32> to vector<2x90xf32>
    %784 = vector.extract_strided_slice %783 {offsets = [0, 0], sizes = [2, 30], strides = [1, 1]} : vector<2x90xf32> to vector<2x30xf32>
    %785 = vector.extract_strided_slice %753 {offsets = [0, 0], sizes = [2, 30], strides = [1, 1]} : vector<2x90xf32> to vector<2x30xf32>
    %786 = arith.addf %784, %785 : vector<2x30xf32>
    %787 = arith.negf %786 : vector<2x30xf32>
    %788 = math.exp %787 : vector<2x30xf32>
    %cst_253 = arith.constant 1.000000e+00 : f32
    %789 = vector.broadcast %cst_253 : f32 to vector<2x30xf32>
    %790 = arith.addf %789, %788 : vector<2x30xf32>
    %791 = arith.divf %789, %790 : vector<2x30xf32>
    %792 = vector.extract_strided_slice %783 {offsets = [0, 30], sizes = [2, 30], strides = [1, 1]} : vector<2x90xf32> to vector<2x30xf32>
    %793 = vector.extract_strided_slice %753 {offsets = [0, 30], sizes = [2, 30], strides = [1, 1]} : vector<2x90xf32> to vector<2x30xf32>
    %794 = arith.addf %792, %793 : vector<2x30xf32>
    %795 = arith.negf %794 : vector<2x30xf32>
    %796 = math.exp %795 : vector<2x30xf32>
    %cst_254 = arith.constant 1.000000e+00 : f32
    %797 = vector.broadcast %cst_254 : f32 to vector<2x30xf32>
    %798 = arith.addf %797, %796 : vector<2x30xf32>
    %799 = arith.divf %797, %798 : vector<2x30xf32>
    %800 = vector.extract_strided_slice %783 {offsets = [0, 60], sizes = [2, 30], strides = [1, 1]} : vector<2x90xf32> to vector<2x30xf32>
    %801 = vector.extract_strided_slice %753 {offsets = [0, 60], sizes = [2, 30], strides = [1, 1]} : vector<2x90xf32> to vector<2x30xf32>
    %802 = arith.mulf %791, %801 : vector<2x30xf32>
    %803 = arith.addf %800, %802 : vector<2x30xf32>
    %804 = math.tanh %803 : vector<2x30xf32>
    %cst_255 = arith.constant 1.000000e+00 : f32
    %805 = vector.broadcast %cst_255 : f32 to vector<2x30xf32>
    %806 = arith.subf %805, %799 : vector<2x30xf32>
    %807 = arith.mulf %806, %804 : vector<2x30xf32>
    %808 = arith.mulf %799, %746 : vector<2x30xf32>
    %809 = arith.addf %807, %808 : vector<2x30xf32>
    %cst_256 = arith.constant dense<0.000000e+00> : vector<2x180xf32>
    %810 = tpu.matmul %809, %260, %cst_256 {dimension_numbers = #tpu.dot_dimension_numbers<[1], [0], [0], [1], [0, 0, 1, 1], [], []>} : vector<2x30xf32>, vector<30x180xf32>, vector<2x180xf32> -> vector<2x180xf32>
    %811 = vector.extract_strided_slice %810 {offsets = [0, 0], sizes = [2, 90], strides = [1, 1]} : vector<2x180xf32> to vector<2x90xf32>
    %812 = vector.broadcast %265 : vector<1x90xf32> to vector<2x90xf32>
    %813 = arith.addf %811, %812 : vector<2x90xf32>
    %814 = vector.extract_strided_slice %810 {offsets = [0, 90], sizes = [2, 90], strides = [1, 1]} : vector<2x180xf32> to vector<2x90xf32>
    %815 = vector.broadcast %264 : vector<1x90xf32> to vector<2x90xf32>
    %816 = arith.addf %814, %815 : vector<2x90xf32>
    %817 = vector.extract_strided_slice %813 {offsets = [0, 0], sizes = [2, 30], strides = [1, 1]} : vector<2x90xf32> to vector<2x30xf32>
    %818 = vector.extract_strided_slice %782 {offsets = [0, 0], sizes = [2, 30], strides = [1, 1]} : vector<2x90xf32> to vector<2x30xf32>
    %819 = arith.addf %817, %818 : vector<2x30xf32>
    %820 = arith.negf %819 : vector<2x30xf32>
    %821 = math.exp %820 : vector<2x30xf32>
    %cst_257 = arith.constant 1.000000e+00 : f32
    %822 = vector.broadcast %cst_257 : f32 to vector<2x30xf32>
    %823 = arith.addf %822, %821 : vector<2x30xf32>
    %824 = arith.divf %822, %823 : vector<2x30xf32>
    %825 = vector.extract_strided_slice %813 {offsets = [0, 30], sizes = [2, 30], strides = [1, 1]} : vector<2x90xf32> to vector<2x30xf32>
    %826 = vector.extract_strided_slice %782 {offsets = [0, 30], sizes = [2, 30], strides = [1, 1]} : vector<2x90xf32> to vector<2x30xf32>
    %827 = arith.addf %825, %826 : vector<2x30xf32>
    %828 = arith.negf %827 : vector<2x30xf32>
    %829 = math.exp %828 : vector<2x30xf32>
    %cst_258 = arith.constant 1.000000e+00 : f32
    %830 = vector.broadcast %cst_258 : f32 to vector<2x30xf32>
    %831 = arith.addf %830, %829 : vector<2x30xf32>
    %832 = arith.divf %830, %831 : vector<2x30xf32>
    %833 = vector.extract_strided_slice %813 {offsets = [0, 60], sizes = [2, 30], strides = [1, 1]} : vector<2x90xf32> to vector<2x30xf32>
    %834 = vector.extract_strided_slice %782 {offsets = [0, 60], sizes = [2, 30], strides = [1, 1]} : vector<2x90xf32> to vector<2x30xf32>
    %835 = arith.mulf %824, %834 : vector<2x30xf32>
    %836 = arith.addf %833, %835 : vector<2x30xf32>
    %837 = math.tanh %836 : vector<2x30xf32>
    %cst_259 = arith.constant 1.000000e+00 : f32
    %838 = vector.broadcast %cst_259 : f32 to vector<2x30xf32>
    %839 = arith.subf %838, %832 : vector<2x30xf32>
    %840 = arith.mulf %839, %837 : vector<2x30xf32>
    %841 = arith.mulf %832, %779 : vector<2x30xf32>
    %842 = arith.addf %840, %841 : vector<2x30xf32>
    %cst_260 = arith.constant dense<0.000000e+00> : vector<2x90xf32>
    %843 = tpu.matmul %842, %261, %cst_260 {dimension_numbers = #tpu.dot_dimension_numbers<[1], [0], [0], [1], [0, 0, 1, 1], [], []>} : vector<2x30xf32>, vector<30x90xf32>, vector<2x90xf32> -> vector<2x90xf32>
    %844 = vector.broadcast %266 : vector<1x90xf32> to vector<2x90xf32>
    %845 = arith.addf %843, %844 : vector<2x90xf32>
    %846 = vector.extract_strided_slice %270 {offsets = [18, 0], sizes = [2, 90], strides = [1, 1]} : vector<60x90xf32> to vector<2x90xf32>
    %847 = vector.extract_strided_slice %846 {offsets = [0, 0], sizes = [2, 30], strides = [1, 1]} : vector<2x90xf32> to vector<2x30xf32>
    %848 = vector.extract_strided_slice %816 {offsets = [0, 0], sizes = [2, 30], strides = [1, 1]} : vector<2x90xf32> to vector<2x30xf32>
    %849 = arith.addf %847, %848 : vector<2x30xf32>
    %850 = arith.negf %849 : vector<2x30xf32>
    %851 = math.exp %850 : vector<2x30xf32>
    %cst_261 = arith.constant 1.000000e+00 : f32
    %852 = vector.broadcast %cst_261 : f32 to vector<2x30xf32>
    %853 = arith.addf %852, %851 : vector<2x30xf32>
    %854 = arith.divf %852, %853 : vector<2x30xf32>
    %855 = vector.extract_strided_slice %846 {offsets = [0, 30], sizes = [2, 30], strides = [1, 1]} : vector<2x90xf32> to vector<2x30xf32>
    %856 = vector.extract_strided_slice %816 {offsets = [0, 30], sizes = [2, 30], strides = [1, 1]} : vector<2x90xf32> to vector<2x30xf32>
    %857 = arith.addf %855, %856 : vector<2x30xf32>
    %858 = arith.negf %857 : vector<2x30xf32>
    %859 = math.exp %858 : vector<2x30xf32>
    %cst_262 = arith.constant 1.000000e+00 : f32
    %860 = vector.broadcast %cst_262 : f32 to vector<2x30xf32>
    %861 = arith.addf %860, %859 : vector<2x30xf32>
    %862 = arith.divf %860, %861 : vector<2x30xf32>
    %863 = vector.extract_strided_slice %846 {offsets = [0, 60], sizes = [2, 30], strides = [1, 1]} : vector<2x90xf32> to vector<2x30xf32>
    %864 = vector.extract_strided_slice %816 {offsets = [0, 60], sizes = [2, 30], strides = [1, 1]} : vector<2x90xf32> to vector<2x30xf32>
    %865 = arith.mulf %854, %864 : vector<2x30xf32>
    %866 = arith.addf %863, %865 : vector<2x30xf32>
    %867 = math.tanh %866 : vector<2x30xf32>
    %cst_263 = arith.constant 1.000000e+00 : f32
    %868 = vector.broadcast %cst_263 : f32 to vector<2x30xf32>
    %869 = arith.subf %868, %862 : vector<2x30xf32>
    %870 = arith.mulf %869, %867 : vector<2x30xf32>
    %871 = arith.mulf %862, %809 : vector<2x30xf32>
    %872 = arith.addf %870, %871 : vector<2x30xf32>
    %cst_264 = arith.constant dense<0.000000e+00> : vector<2x180xf32>
    %873 = tpu.matmul %872, %260, %cst_264 {dimension_numbers = #tpu.dot_dimension_numbers<[1], [0], [0], [1], [0, 0, 1, 1], [], []>} : vector<2x30xf32>, vector<30x180xf32>, vector<2x180xf32> -> vector<2x180xf32>
    %874 = vector.extract_strided_slice %873 {offsets = [0, 0], sizes = [2, 90], strides = [1, 1]} : vector<2x180xf32> to vector<2x90xf32>
    %875 = vector.broadcast %265 : vector<1x90xf32> to vector<2x90xf32>
    %876 = arith.addf %874, %875 : vector<2x90xf32>
    %877 = vector.extract_strided_slice %873 {offsets = [0, 90], sizes = [2, 90], strides = [1, 1]} : vector<2x180xf32> to vector<2x90xf32>
    %878 = vector.broadcast %264 : vector<1x90xf32> to vector<2x90xf32>
    %879 = arith.addf %877, %878 : vector<2x90xf32>
    %880 = vector.extract_strided_slice %876 {offsets = [0, 0], sizes = [2, 30], strides = [1, 1]} : vector<2x90xf32> to vector<2x30xf32>
    %881 = vector.extract_strided_slice %845 {offsets = [0, 0], sizes = [2, 30], strides = [1, 1]} : vector<2x90xf32> to vector<2x30xf32>
    %882 = arith.addf %880, %881 : vector<2x30xf32>
    %883 = arith.negf %882 : vector<2x30xf32>
    %884 = math.exp %883 : vector<2x30xf32>
    %cst_265 = arith.constant 1.000000e+00 : f32
    %885 = vector.broadcast %cst_265 : f32 to vector<2x30xf32>
    %886 = arith.addf %885, %884 : vector<2x30xf32>
    %887 = arith.divf %885, %886 : vector<2x30xf32>
    %888 = vector.extract_strided_slice %876 {offsets = [0, 30], sizes = [2, 30], strides = [1, 1]} : vector<2x90xf32> to vector<2x30xf32>
    %889 = vector.extract_strided_slice %845 {offsets = [0, 30], sizes = [2, 30], strides = [1, 1]} : vector<2x90xf32> to vector<2x30xf32>
    %890 = arith.addf %888, %889 : vector<2x30xf32>
    %891 = arith.negf %890 : vector<2x30xf32>
    %892 = math.exp %891 : vector<2x30xf32>
    %cst_266 = arith.constant 1.000000e+00 : f32
    %893 = vector.broadcast %cst_266 : f32 to vector<2x30xf32>
    %894 = arith.addf %893, %892 : vector<2x30xf32>
    %895 = arith.divf %893, %894 : vector<2x30xf32>
    %896 = vector.extract_strided_slice %876 {offsets = [0, 60], sizes = [2, 30], strides = [1, 1]} : vector<2x90xf32> to vector<2x30xf32>
    %897 = vector.extract_strided_slice %845 {offsets = [0, 60], sizes = [2, 30], strides = [1, 1]} : vector<2x90xf32> to vector<2x30xf32>
    %898 = arith.mulf %887, %897 : vector<2x30xf32>
    %899 = arith.addf %896, %898 : vector<2x30xf32>
    %900 = math.tanh %899 : vector<2x30xf32>
    %cst_267 = arith.constant 1.000000e+00 : f32
    %901 = vector.broadcast %cst_267 : f32 to vector<2x30xf32>
    %902 = arith.subf %901, %895 : vector<2x30xf32>
    %903 = arith.mulf %902, %900 : vector<2x30xf32>
    %904 = arith.mulf %895, %842 : vector<2x30xf32>
    %905 = arith.addf %903, %904 : vector<2x30xf32>
    %cst_268 = arith.constant dense<0.000000e+00> : vector<2x90xf32>
    %906 = tpu.matmul %905, %261, %cst_268 {dimension_numbers = #tpu.dot_dimension_numbers<[1], [0], [0], [1], [0, 0, 1, 1], [], []>} : vector<2x30xf32>, vector<30x90xf32>, vector<2x90xf32> -> vector<2x90xf32>
    %907 = vector.broadcast %266 : vector<1x90xf32> to vector<2x90xf32>
    %908 = arith.addf %906, %907 : vector<2x90xf32>
    %909 = vector.extract_strided_slice %270 {offsets = [20, 0], sizes = [2, 90], strides = [1, 1]} : vector<60x90xf32> to vector<2x90xf32>
    %910 = vector.extract_strided_slice %909 {offsets = [0, 0], sizes = [2, 30], strides = [1, 1]} : vector<2x90xf32> to vector<2x30xf32>
    %911 = vector.extract_strided_slice %879 {offsets = [0, 0], sizes = [2, 30], strides = [1, 1]} : vector<2x90xf32> to vector<2x30xf32>
    %912 = arith.addf %910, %911 : vector<2x30xf32>
    %913 = arith.negf %912 : vector<2x30xf32>
    %914 = math.exp %913 : vector<2x30xf32>
    %cst_269 = arith.constant 1.000000e+00 : f32
    %915 = vector.broadcast %cst_269 : f32 to vector<2x30xf32>
    %916 = arith.addf %915, %914 : vector<2x30xf32>
    %917 = arith.divf %915, %916 : vector<2x30xf32>
    %918 = vector.extract_strided_slice %909 {offsets = [0, 30], sizes = [2, 30], strides = [1, 1]} : vector<2x90xf32> to vector<2x30xf32>
    %919 = vector.extract_strided_slice %879 {offsets = [0, 30], sizes = [2, 30], strides = [1, 1]} : vector<2x90xf32> to vector<2x30xf32>
    %920 = arith.addf %918, %919 : vector<2x30xf32>
    %921 = arith.negf %920 : vector<2x30xf32>
    %922 = math.exp %921 : vector<2x30xf32>
    %cst_270 = arith.constant 1.000000e+00 : f32
    %923 = vector.broadcast %cst_270 : f32 to vector<2x30xf32>
    %924 = arith.addf %923, %922 : vector<2x30xf32>
    %925 = arith.divf %923, %924 : vector<2x30xf32>
    %926 = vector.extract_strided_slice %909 {offsets = [0, 60], sizes = [2, 30], strides = [1, 1]} : vector<2x90xf32> to vector<2x30xf32>
    %927 = vector.extract_strided_slice %879 {offsets = [0, 60], sizes = [2, 30], strides = [1, 1]} : vector<2x90xf32> to vector<2x30xf32>
    %928 = arith.mulf %917, %927 : vector<2x30xf32>
    %929 = arith.addf %926, %928 : vector<2x30xf32>
    %930 = math.tanh %929 : vector<2x30xf32>
    %cst_271 = arith.constant 1.000000e+00 : f32
    %931 = vector.broadcast %cst_271 : f32 to vector<2x30xf32>
    %932 = arith.subf %931, %925 : vector<2x30xf32>
    %933 = arith.mulf %932, %930 : vector<2x30xf32>
    %934 = arith.mulf %925, %872 : vector<2x30xf32>
    %935 = arith.addf %933, %934 : vector<2x30xf32>
    %cst_272 = arith.constant dense<0.000000e+00> : vector<2x180xf32>
    %936 = tpu.matmul %935, %260, %cst_272 {dimension_numbers = #tpu.dot_dimension_numbers<[1], [0], [0], [1], [0, 0, 1, 1], [], []>} : vector<2x30xf32>, vector<30x180xf32>, vector<2x180xf32> -> vector<2x180xf32>
    %937 = vector.extract_strided_slice %936 {offsets = [0, 0], sizes = [2, 90], strides = [1, 1]} : vector<2x180xf32> to vector<2x90xf32>
    %938 = vector.broadcast %265 : vector<1x90xf32> to vector<2x90xf32>
    %939 = arith.addf %937, %938 : vector<2x90xf32>
    %940 = vector.extract_strided_slice %936 {offsets = [0, 90], sizes = [2, 90], strides = [1, 1]} : vector<2x180xf32> to vector<2x90xf32>
    %941 = vector.broadcast %264 : vector<1x90xf32> to vector<2x90xf32>
    %942 = arith.addf %940, %941 : vector<2x90xf32>
    %943 = vector.extract_strided_slice %939 {offsets = [0, 0], sizes = [2, 30], strides = [1, 1]} : vector<2x90xf32> to vector<2x30xf32>
    %944 = vector.extract_strided_slice %908 {offsets = [0, 0], sizes = [2, 30], strides = [1, 1]} : vector<2x90xf32> to vector<2x30xf32>
    %945 = arith.addf %943, %944 : vector<2x30xf32>
    %946 = arith.negf %945 : vector<2x30xf32>
    %947 = math.exp %946 : vector<2x30xf32>
    %cst_273 = arith.constant 1.000000e+00 : f32
    %948 = vector.broadcast %cst_273 : f32 to vector<2x30xf32>
    %949 = arith.addf %948, %947 : vector<2x30xf32>
    %950 = arith.divf %948, %949 : vector<2x30xf32>
    %951 = vector.extract_strided_slice %939 {offsets = [0, 30], sizes = [2, 30], strides = [1, 1]} : vector<2x90xf32> to vector<2x30xf32>
    %952 = vector.extract_strided_slice %908 {offsets = [0, 30], sizes = [2, 30], strides = [1, 1]} : vector<2x90xf32> to vector<2x30xf32>
    %953 = arith.addf %951, %952 : vector<2x30xf32>
    %954 = arith.negf %953 : vector<2x30xf32>
    %955 = math.exp %954 : vector<2x30xf32>
    %cst_274 = arith.constant 1.000000e+00 : f32
    %956 = vector.broadcast %cst_274 : f32 to vector<2x30xf32>
    %957 = arith.addf %956, %955 : vector<2x30xf32>
    %958 = arith.divf %956, %957 : vector<2x30xf32>
    %959 = vector.extract_strided_slice %939 {offsets = [0, 60], sizes = [2, 30], strides = [1, 1]} : vector<2x90xf32> to vector<2x30xf32>
    %960 = vector.extract_strided_slice %908 {offsets = [0, 60], sizes = [2, 30], strides = [1, 1]} : vector<2x90xf32> to vector<2x30xf32>
    %961 = arith.mulf %950, %960 : vector<2x30xf32>
    %962 = arith.addf %959, %961 : vector<2x30xf32>
    %963 = math.tanh %962 : vector<2x30xf32>
    %cst_275 = arith.constant 1.000000e+00 : f32
    %964 = vector.broadcast %cst_275 : f32 to vector<2x30xf32>
    %965 = arith.subf %964, %958 : vector<2x30xf32>
    %966 = arith.mulf %965, %963 : vector<2x30xf32>
    %967 = arith.mulf %958, %905 : vector<2x30xf32>
    %968 = arith.addf %966, %967 : vector<2x30xf32>
    %cst_276 = arith.constant dense<0.000000e+00> : vector<2x90xf32>
    %969 = tpu.matmul %968, %261, %cst_276 {dimension_numbers = #tpu.dot_dimension_numbers<[1], [0], [0], [1], [0, 0, 1, 1], [], []>} : vector<2x30xf32>, vector<30x90xf32>, vector<2x90xf32> -> vector<2x90xf32>
    %970 = vector.broadcast %266 : vector<1x90xf32> to vector<2x90xf32>
    %971 = arith.addf %969, %970 : vector<2x90xf32>
    %972 = vector.extract_strided_slice %270 {offsets = [22, 0], sizes = [2, 90], strides = [1, 1]} : vector<60x90xf32> to vector<2x90xf32>
    %973 = vector.extract_strided_slice %972 {offsets = [0, 0], sizes = [2, 30], strides = [1, 1]} : vector<2x90xf32> to vector<2x30xf32>
    %974 = vector.extract_strided_slice %942 {offsets = [0, 0], sizes = [2, 30], strides = [1, 1]} : vector<2x90xf32> to vector<2x30xf32>
    %975 = arith.addf %973, %974 : vector<2x30xf32>
    %976 = arith.negf %975 : vector<2x30xf32>
    %977 = math.exp %976 : vector<2x30xf32>
    %cst_277 = arith.constant 1.000000e+00 : f32
    %978 = vector.broadcast %cst_277 : f32 to vector<2x30xf32>
    %979 = arith.addf %978, %977 : vector<2x30xf32>
    %980 = arith.divf %978, %979 : vector<2x30xf32>
    %981 = vector.extract_strided_slice %972 {offsets = [0, 30], sizes = [2, 30], strides = [1, 1]} : vector<2x90xf32> to vector<2x30xf32>
    %982 = vector.extract_strided_slice %942 {offsets = [0, 30], sizes = [2, 30], strides = [1, 1]} : vector<2x90xf32> to vector<2x30xf32>
    %983 = arith.addf %981, %982 : vector<2x30xf32>
    %984 = arith.negf %983 : vector<2x30xf32>
    %985 = math.exp %984 : vector<2x30xf32>
    %cst_278 = arith.constant 1.000000e+00 : f32
    %986 = vector.broadcast %cst_278 : f32 to vector<2x30xf32>
    %987 = arith.addf %986, %985 : vector<2x30xf32>
    %988 = arith.divf %986, %987 : vector<2x30xf32>
    %989 = vector.extract_strided_slice %972 {offsets = [0, 60], sizes = [2, 30], strides = [1, 1]} : vector<2x90xf32> to vector<2x30xf32>
    %990 = vector.extract_strided_slice %942 {offsets = [0, 60], sizes = [2, 30], strides = [1, 1]} : vector<2x90xf32> to vector<2x30xf32>
    %991 = arith.mulf %980, %990 : vector<2x30xf32>
    %992 = arith.addf %989, %991 : vector<2x30xf32>
    %993 = math.tanh %992 : vector<2x30xf32>
    %cst_279 = arith.constant 1.000000e+00 : f32
    %994 = vector.broadcast %cst_279 : f32 to vector<2x30xf32>
    %995 = arith.subf %994, %988 : vector<2x30xf32>
    %996 = arith.mulf %995, %993 : vector<2x30xf32>
    %997 = arith.mulf %988, %935 : vector<2x30xf32>
    %998 = arith.addf %996, %997 : vector<2x30xf32>
    %cst_280 = arith.constant dense<0.000000e+00> : vector<2x180xf32>
    %999 = tpu.matmul %998, %260, %cst_280 {dimension_numbers = #tpu.dot_dimension_numbers<[1], [0], [0], [1], [0, 0, 1, 1], [], []>} : vector<2x30xf32>, vector<30x180xf32>, vector<2x180xf32> -> vector<2x180xf32>
    %1000 = vector.extract_strided_slice %999 {offsets = [0, 0], sizes = [2, 90], strides = [1, 1]} : vector<2x180xf32> to vector<2x90xf32>
    %1001 = vector.broadcast %265 : vector<1x90xf32> to vector<2x90xf32>
    %1002 = arith.addf %1000, %1001 : vector<2x90xf32>
    %1003 = vector.extract_strided_slice %999 {offsets = [0, 90], sizes = [2, 90], strides = [1, 1]} : vector<2x180xf32> to vector<2x90xf32>
    %1004 = vector.broadcast %264 : vector<1x90xf32> to vector<2x90xf32>
    %1005 = arith.addf %1003, %1004 : vector<2x90xf32>
    %1006 = vector.extract_strided_slice %1002 {offsets = [0, 0], sizes = [2, 30], strides = [1, 1]} : vector<2x90xf32> to vector<2x30xf32>
    %1007 = vector.extract_strided_slice %971 {offsets = [0, 0], sizes = [2, 30], strides = [1, 1]} : vector<2x90xf32> to vector<2x30xf32>
    %1008 = arith.addf %1006, %1007 : vector<2x30xf32>
    %1009 = arith.negf %1008 : vector<2x30xf32>
    %1010 = math.exp %1009 : vector<2x30xf32>
    %cst_281 = arith.constant 1.000000e+00 : f32
    %1011 = vector.broadcast %cst_281 : f32 to vector<2x30xf32>
    %1012 = arith.addf %1011, %1010 : vector<2x30xf32>
    %1013 = arith.divf %1011, %1012 : vector<2x30xf32>
    %1014 = vector.extract_strided_slice %1002 {offsets = [0, 30], sizes = [2, 30], strides = [1, 1]} : vector<2x90xf32> to vector<2x30xf32>
    %1015 = vector.extract_strided_slice %971 {offsets = [0, 30], sizes = [2, 30], strides = [1, 1]} : vector<2x90xf32> to vector<2x30xf32>
    %1016 = arith.addf %1014, %1015 : vector<2x30xf32>
    %1017 = arith.negf %1016 : vector<2x30xf32>
    %1018 = math.exp %1017 : vector<2x30xf32>
    %cst_282 = arith.constant 1.000000e+00 : f32
    %1019 = vector.broadcast %cst_282 : f32 to vector<2x30xf32>
    %1020 = arith.addf %1019, %1018 : vector<2x30xf32>
    %1021 = arith.divf %1019, %1020 : vector<2x30xf32>
    %1022 = vector.extract_strided_slice %1002 {offsets = [0, 60], sizes = [2, 30], strides = [1, 1]} : vector<2x90xf32> to vector<2x30xf32>
    %1023 = vector.extract_strided_slice %971 {offsets = [0, 60], sizes = [2, 30], strides = [1, 1]} : vector<2x90xf32> to vector<2x30xf32>
    %1024 = arith.mulf %1013, %1023 : vector<2x30xf32>
    %1025 = arith.addf %1022, %1024 : vector<2x30xf32>
    %1026 = math.tanh %1025 : vector<2x30xf32>
    %cst_283 = arith.constant 1.000000e+00 : f32
    %1027 = vector.broadcast %cst_283 : f32 to vector<2x30xf32>
    %1028 = arith.subf %1027, %1021 : vector<2x30xf32>
    %1029 = arith.mulf %1028, %1026 : vector<2x30xf32>
    %1030 = arith.mulf %1021, %968 : vector<2x30xf32>
    %1031 = arith.addf %1029, %1030 : vector<2x30xf32>
    %cst_284 = arith.constant dense<0.000000e+00> : vector<2x90xf32>
    %1032 = tpu.matmul %1031, %261, %cst_284 {dimension_numbers = #tpu.dot_dimension_numbers<[1], [0], [0], [1], [0, 0, 1, 1], [], []>} : vector<2x30xf32>, vector<30x90xf32>, vector<2x90xf32> -> vector<2x90xf32>
    %1033 = vector.broadcast %266 : vector<1x90xf32> to vector<2x90xf32>
    %1034 = arith.addf %1032, %1033 : vector<2x90xf32>
    %1035 = vector.extract_strided_slice %270 {offsets = [24, 0], sizes = [2, 90], strides = [1, 1]} : vector<60x90xf32> to vector<2x90xf32>
    %1036 = vector.extract_strided_slice %1035 {offsets = [0, 0], sizes = [2, 30], strides = [1, 1]} : vector<2x90xf32> to vector<2x30xf32>
    %1037 = vector.extract_strided_slice %1005 {offsets = [0, 0], sizes = [2, 30], strides = [1, 1]} : vector<2x90xf32> to vector<2x30xf32>
    %1038 = arith.addf %1036, %1037 : vector<2x30xf32>
    %1039 = arith.negf %1038 : vector<2x30xf32>
    %1040 = math.exp %1039 : vector<2x30xf32>
    %cst_285 = arith.constant 1.000000e+00 : f32
    %1041 = vector.broadcast %cst_285 : f32 to vector<2x30xf32>
    %1042 = arith.addf %1041, %1040 : vector<2x30xf32>
    %1043 = arith.divf %1041, %1042 : vector<2x30xf32>
    %1044 = vector.extract_strided_slice %1035 {offsets = [0, 30], sizes = [2, 30], strides = [1, 1]} : vector<2x90xf32> to vector<2x30xf32>
    %1045 = vector.extract_strided_slice %1005 {offsets = [0, 30], sizes = [2, 30], strides = [1, 1]} : vector<2x90xf32> to vector<2x30xf32>
    %1046 = arith.addf %1044, %1045 : vector<2x30xf32>
    %1047 = arith.negf %1046 : vector<2x30xf32>
    %1048 = math.exp %1047 : vector<2x30xf32>
    %cst_286 = arith.constant 1.000000e+00 : f32
    %1049 = vector.broadcast %cst_286 : f32 to vector<2x30xf32>
    %1050 = arith.addf %1049, %1048 : vector<2x30xf32>
    %1051 = arith.divf %1049, %1050 : vector<2x30xf32>
    %1052 = vector.extract_strided_slice %1035 {offsets = [0, 60], sizes = [2, 30], strides = [1, 1]} : vector<2x90xf32> to vector<2x30xf32>
    %1053 = vector.extract_strided_slice %1005 {offsets = [0, 60], sizes = [2, 30], strides = [1, 1]} : vector<2x90xf32> to vector<2x30xf32>
    %1054 = arith.mulf %1043, %1053 : vector<2x30xf32>
    %1055 = arith.addf %1052, %1054 : vector<2x30xf32>
    %1056 = math.tanh %1055 : vector<2x30xf32>
    %cst_287 = arith.constant 1.000000e+00 : f32
    %1057 = vector.broadcast %cst_287 : f32 to vector<2x30xf32>
    %1058 = arith.subf %1057, %1051 : vector<2x30xf32>
    %1059 = arith.mulf %1058, %1056 : vector<2x30xf32>
    %1060 = arith.mulf %1051, %998 : vector<2x30xf32>
    %1061 = arith.addf %1059, %1060 : vector<2x30xf32>
    %cst_288 = arith.constant dense<0.000000e+00> : vector<2x180xf32>
    %1062 = tpu.matmul %1061, %260, %cst_288 {dimension_numbers = #tpu.dot_dimension_numbers<[1], [0], [0], [1], [0, 0, 1, 1], [], []>} : vector<2x30xf32>, vector<30x180xf32>, vector<2x180xf32> -> vector<2x180xf32>
    %1063 = vector.extract_strided_slice %1062 {offsets = [0, 0], sizes = [2, 90], strides = [1, 1]} : vector<2x180xf32> to vector<2x90xf32>
    %1064 = vector.broadcast %265 : vector<1x90xf32> to vector<2x90xf32>
    %1065 = arith.addf %1063, %1064 : vector<2x90xf32>
    %1066 = vector.extract_strided_slice %1062 {offsets = [0, 90], sizes = [2, 90], strides = [1, 1]} : vector<2x180xf32> to vector<2x90xf32>
    %1067 = vector.broadcast %264 : vector<1x90xf32> to vector<2x90xf32>
    %1068 = arith.addf %1066, %1067 : vector<2x90xf32>
    %1069 = vector.extract_strided_slice %1065 {offsets = [0, 0], sizes = [2, 30], strides = [1, 1]} : vector<2x90xf32> to vector<2x30xf32>
    %1070 = vector.extract_strided_slice %1034 {offsets = [0, 0], sizes = [2, 30], strides = [1, 1]} : vector<2x90xf32> to vector<2x30xf32>
    %1071 = arith.addf %1069, %1070 : vector<2x30xf32>
    %1072 = arith.negf %1071 : vector<2x30xf32>
    %1073 = math.exp %1072 : vector<2x30xf32>
    %cst_289 = arith.constant 1.000000e+00 : f32
    %1074 = vector.broadcast %cst_289 : f32 to vector<2x30xf32>
    %1075 = arith.addf %1074, %1073 : vector<2x30xf32>
    %1076 = arith.divf %1074, %1075 : vector<2x30xf32>
    %1077 = vector.extract_strided_slice %1065 {offsets = [0, 30], sizes = [2, 30], strides = [1, 1]} : vector<2x90xf32> to vector<2x30xf32>
    %1078 = vector.extract_strided_slice %1034 {offsets = [0, 30], sizes = [2, 30], strides = [1, 1]} : vector<2x90xf32> to vector<2x30xf32>
    %1079 = arith.addf %1077, %1078 : vector<2x30xf32>
    %1080 = arith.negf %1079 : vector<2x30xf32>
    %1081 = math.exp %1080 : vector<2x30xf32>
    %cst_290 = arith.constant 1.000000e+00 : f32
    %1082 = vector.broadcast %cst_290 : f32 to vector<2x30xf32>
    %1083 = arith.addf %1082, %1081 : vector<2x30xf32>
    %1084 = arith.divf %1082, %1083 : vector<2x30xf32>
    %1085 = vector.extract_strided_slice %1065 {offsets = [0, 60], sizes = [2, 30], strides = [1, 1]} : vector<2x90xf32> to vector<2x30xf32>
    %1086 = vector.extract_strided_slice %1034 {offsets = [0, 60], sizes = [2, 30], strides = [1, 1]} : vector<2x90xf32> to vector<2x30xf32>
    %1087 = arith.mulf %1076, %1086 : vector<2x30xf32>
    %1088 = arith.addf %1085, %1087 : vector<2x30xf32>
    %1089 = math.tanh %1088 : vector<2x30xf32>
    %cst_291 = arith.constant 1.000000e+00 : f32
    %1090 = vector.broadcast %cst_291 : f32 to vector<2x30xf32>
    %1091 = arith.subf %1090, %1084 : vector<2x30xf32>
    %1092 = arith.mulf %1091, %1089 : vector<2x30xf32>
    %1093 = arith.mulf %1084, %1031 : vector<2x30xf32>
    %1094 = arith.addf %1092, %1093 : vector<2x30xf32>
    %cst_292 = arith.constant dense<0.000000e+00> : vector<2x90xf32>
    %1095 = tpu.matmul %1094, %261, %cst_292 {dimension_numbers = #tpu.dot_dimension_numbers<[1], [0], [0], [1], [0, 0, 1, 1], [], []>} : vector<2x30xf32>, vector<30x90xf32>, vector<2x90xf32> -> vector<2x90xf32>
    %1096 = vector.broadcast %266 : vector<1x90xf32> to vector<2x90xf32>
    %1097 = arith.addf %1095, %1096 : vector<2x90xf32>
    %1098 = vector.extract_strided_slice %270 {offsets = [26, 0], sizes = [2, 90], strides = [1, 1]} : vector<60x90xf32> to vector<2x90xf32>
    %1099 = vector.extract_strided_slice %1098 {offsets = [0, 0], sizes = [2, 30], strides = [1, 1]} : vector<2x90xf32> to vector<2x30xf32>
    %1100 = vector.extract_strided_slice %1068 {offsets = [0, 0], sizes = [2, 30], strides = [1, 1]} : vector<2x90xf32> to vector<2x30xf32>
    %1101 = arith.addf %1099, %1100 : vector<2x30xf32>
    %1102 = arith.negf %1101 : vector<2x30xf32>
    %1103 = math.exp %1102 : vector<2x30xf32>
    %cst_293 = arith.constant 1.000000e+00 : f32
    %1104 = vector.broadcast %cst_293 : f32 to vector<2x30xf32>
    %1105 = arith.addf %1104, %1103 : vector<2x30xf32>
    %1106 = arith.divf %1104, %1105 : vector<2x30xf32>
    %1107 = vector.extract_strided_slice %1098 {offsets = [0, 30], sizes = [2, 30], strides = [1, 1]} : vector<2x90xf32> to vector<2x30xf32>
    %1108 = vector.extract_strided_slice %1068 {offsets = [0, 30], sizes = [2, 30], strides = [1, 1]} : vector<2x90xf32> to vector<2x30xf32>
    %1109 = arith.addf %1107, %1108 : vector<2x30xf32>
    %1110 = arith.negf %1109 : vector<2x30xf32>
    %1111 = math.exp %1110 : vector<2x30xf32>
    %cst_294 = arith.constant 1.000000e+00 : f32
    %1112 = vector.broadcast %cst_294 : f32 to vector<2x30xf32>
    %1113 = arith.addf %1112, %1111 : vector<2x30xf32>
    %1114 = arith.divf %1112, %1113 : vector<2x30xf32>
    %1115 = vector.extract_strided_slice %1098 {offsets = [0, 60], sizes = [2, 30], strides = [1, 1]} : vector<2x90xf32> to vector<2x30xf32>
    %1116 = vector.extract_strided_slice %1068 {offsets = [0, 60], sizes = [2, 30], strides = [1, 1]} : vector<2x90xf32> to vector<2x30xf32>
    %1117 = arith.mulf %1106, %1116 : vector<2x30xf32>
    %1118 = arith.addf %1115, %1117 : vector<2x30xf32>
    %1119 = math.tanh %1118 : vector<2x30xf32>
    %cst_295 = arith.constant 1.000000e+00 : f32
    %1120 = vector.broadcast %cst_295 : f32 to vector<2x30xf32>
    %1121 = arith.subf %1120, %1114 : vector<2x30xf32>
    %1122 = arith.mulf %1121, %1119 : vector<2x30xf32>
    %1123 = arith.mulf %1114, %1061 : vector<2x30xf32>
    %1124 = arith.addf %1122, %1123 : vector<2x30xf32>
    %cst_296 = arith.constant dense<0.000000e+00> : vector<2x180xf32>
    %1125 = tpu.matmul %1124, %260, %cst_296 {dimension_numbers = #tpu.dot_dimension_numbers<[1], [0], [0], [1], [0, 0, 1, 1], [], []>} : vector<2x30xf32>, vector<30x180xf32>, vector<2x180xf32> -> vector<2x180xf32>
    %1126 = vector.extract_strided_slice %1125 {offsets = [0, 0], sizes = [2, 90], strides = [1, 1]} : vector<2x180xf32> to vector<2x90xf32>
    %1127 = vector.broadcast %265 : vector<1x90xf32> to vector<2x90xf32>
    %1128 = arith.addf %1126, %1127 : vector<2x90xf32>
    %1129 = vector.extract_strided_slice %1125 {offsets = [0, 90], sizes = [2, 90], strides = [1, 1]} : vector<2x180xf32> to vector<2x90xf32>
    %1130 = vector.broadcast %264 : vector<1x90xf32> to vector<2x90xf32>
    %1131 = arith.addf %1129, %1130 : vector<2x90xf32>
    %1132 = vector.extract_strided_slice %1128 {offsets = [0, 0], sizes = [2, 30], strides = [1, 1]} : vector<2x90xf32> to vector<2x30xf32>
    %1133 = vector.extract_strided_slice %1097 {offsets = [0, 0], sizes = [2, 30], strides = [1, 1]} : vector<2x90xf32> to vector<2x30xf32>
    %1134 = arith.addf %1132, %1133 : vector<2x30xf32>
    %1135 = arith.negf %1134 : vector<2x30xf32>
    %1136 = math.exp %1135 : vector<2x30xf32>
    %cst_297 = arith.constant 1.000000e+00 : f32
    %1137 = vector.broadcast %cst_297 : f32 to vector<2x30xf32>
    %1138 = arith.addf %1137, %1136 : vector<2x30xf32>
    %1139 = arith.divf %1137, %1138 : vector<2x30xf32>
    %1140 = vector.extract_strided_slice %1128 {offsets = [0, 30], sizes = [2, 30], strides = [1, 1]} : vector<2x90xf32> to vector<2x30xf32>
    %1141 = vector.extract_strided_slice %1097 {offsets = [0, 30], sizes = [2, 30], strides = [1, 1]} : vector<2x90xf32> to vector<2x30xf32>
    %1142 = arith.addf %1140, %1141 : vector<2x30xf32>
    %1143 = arith.negf %1142 : vector<2x30xf32>
    %1144 = math.exp %1143 : vector<2x30xf32>
    %cst_298 = arith.constant 1.000000e+00 : f32
    %1145 = vector.broadcast %cst_298 : f32 to vector<2x30xf32>
    %1146 = arith.addf %1145, %1144 : vector<2x30xf32>
    %1147 = arith.divf %1145, %1146 : vector<2x30xf32>
    %1148 = vector.extract_strided_slice %1128 {offsets = [0, 60], sizes = [2, 30], strides = [1, 1]} : vector<2x90xf32> to vector<2x30xf32>
    %1149 = vector.extract_strided_slice %1097 {offsets = [0, 60], sizes = [2, 30], strides = [1, 1]} : vector<2x90xf32> to vector<2x30xf32>
    %1150 = arith.mulf %1139, %1149 : vector<2x30xf32>
    %1151 = arith.addf %1148, %1150 : vector<2x30xf32>
    %1152 = math.tanh %1151 : vector<2x30xf32>
    %cst_299 = arith.constant 1.000000e+00 : f32
    %1153 = vector.broadcast %cst_299 : f32 to vector<2x30xf32>
    %1154 = arith.subf %1153, %1147 : vector<2x30xf32>
    %1155 = arith.mulf %1154, %1152 : vector<2x30xf32>
    %1156 = arith.mulf %1147, %1094 : vector<2x30xf32>
    %1157 = arith.addf %1155, %1156 : vector<2x30xf32>
    %cst_300 = arith.constant dense<0.000000e+00> : vector<2x90xf32>
    %1158 = tpu.matmul %1157, %261, %cst_300 {dimension_numbers = #tpu.dot_dimension_numbers<[1], [0], [0], [1], [0, 0, 1, 1], [], []>} : vector<2x30xf32>, vector<30x90xf32>, vector<2x90xf32> -> vector<2x90xf32>
    %1159 = vector.broadcast %266 : vector<1x90xf32> to vector<2x90xf32>
    %1160 = arith.addf %1158, %1159 : vector<2x90xf32>
    %1161 = vector.extract_strided_slice %270 {offsets = [28, 0], sizes = [2, 90], strides = [1, 1]} : vector<60x90xf32> to vector<2x90xf32>
    %1162 = vector.extract_strided_slice %1161 {offsets = [0, 0], sizes = [2, 30], strides = [1, 1]} : vector<2x90xf32> to vector<2x30xf32>
    %1163 = vector.extract_strided_slice %1131 {offsets = [0, 0], sizes = [2, 30], strides = [1, 1]} : vector<2x90xf32> to vector<2x30xf32>
    %1164 = arith.addf %1162, %1163 : vector<2x30xf32>
    %1165 = arith.negf %1164 : vector<2x30xf32>
    %1166 = math.exp %1165 : vector<2x30xf32>
    %cst_301 = arith.constant 1.000000e+00 : f32
    %1167 = vector.broadcast %cst_301 : f32 to vector<2x30xf32>
    %1168 = arith.addf %1167, %1166 : vector<2x30xf32>
    %1169 = arith.divf %1167, %1168 : vector<2x30xf32>
    %1170 = vector.extract_strided_slice %1161 {offsets = [0, 30], sizes = [2, 30], strides = [1, 1]} : vector<2x90xf32> to vector<2x30xf32>
    %1171 = vector.extract_strided_slice %1131 {offsets = [0, 30], sizes = [2, 30], strides = [1, 1]} : vector<2x90xf32> to vector<2x30xf32>
    %1172 = arith.addf %1170, %1171 : vector<2x30xf32>
    %1173 = arith.negf %1172 : vector<2x30xf32>
    %1174 = math.exp %1173 : vector<2x30xf32>
    %cst_302 = arith.constant 1.000000e+00 : f32
    %1175 = vector.broadcast %cst_302 : f32 to vector<2x30xf32>
    %1176 = arith.addf %1175, %1174 : vector<2x30xf32>
    %1177 = arith.divf %1175, %1176 : vector<2x30xf32>
    %1178 = vector.extract_strided_slice %1161 {offsets = [0, 60], sizes = [2, 30], strides = [1, 1]} : vector<2x90xf32> to vector<2x30xf32>
    %1179 = vector.extract_strided_slice %1131 {offsets = [0, 60], sizes = [2, 30], strides = [1, 1]} : vector<2x90xf32> to vector<2x30xf32>
    %1180 = arith.mulf %1169, %1179 : vector<2x30xf32>
    %1181 = arith.addf %1178, %1180 : vector<2x30xf32>
    %1182 = math.tanh %1181 : vector<2x30xf32>
    %cst_303 = arith.constant 1.000000e+00 : f32
    %1183 = vector.broadcast %cst_303 : f32 to vector<2x30xf32>
    %1184 = arith.subf %1183, %1177 : vector<2x30xf32>
    %1185 = arith.mulf %1184, %1182 : vector<2x30xf32>
    %1186 = arith.mulf %1177, %1124 : vector<2x30xf32>
    %1187 = arith.addf %1185, %1186 : vector<2x30xf32>
    %cst_304 = arith.constant dense<0.000000e+00> : vector<2x180xf32>
    %1188 = tpu.matmul %1187, %260, %cst_304 {dimension_numbers = #tpu.dot_dimension_numbers<[1], [0], [0], [1], [0, 0, 1, 1], [], []>} : vector<2x30xf32>, vector<30x180xf32>, vector<2x180xf32> -> vector<2x180xf32>
    %1189 = vector.extract_strided_slice %1188 {offsets = [0, 0], sizes = [2, 90], strides = [1, 1]} : vector<2x180xf32> to vector<2x90xf32>
    %1190 = vector.broadcast %265 : vector<1x90xf32> to vector<2x90xf32>
    %1191 = arith.addf %1189, %1190 : vector<2x90xf32>
    %1192 = vector.extract_strided_slice %1188 {offsets = [0, 90], sizes = [2, 90], strides = [1, 1]} : vector<2x180xf32> to vector<2x90xf32>
    %1193 = vector.broadcast %264 : vector<1x90xf32> to vector<2x90xf32>
    %1194 = arith.addf %1192, %1193 : vector<2x90xf32>
    %1195 = vector.extract_strided_slice %1191 {offsets = [0, 0], sizes = [2, 30], strides = [1, 1]} : vector<2x90xf32> to vector<2x30xf32>
    %1196 = vector.extract_strided_slice %1160 {offsets = [0, 0], sizes = [2, 30], strides = [1, 1]} : vector<2x90xf32> to vector<2x30xf32>
    %1197 = arith.addf %1195, %1196 : vector<2x30xf32>
    %1198 = arith.negf %1197 : vector<2x30xf32>
    %1199 = math.exp %1198 : vector<2x30xf32>
    %cst_305 = arith.constant 1.000000e+00 : f32
    %1200 = vector.broadcast %cst_305 : f32 to vector<2x30xf32>
    %1201 = arith.addf %1200, %1199 : vector<2x30xf32>
    %1202 = arith.divf %1200, %1201 : vector<2x30xf32>
    %1203 = vector.extract_strided_slice %1191 {offsets = [0, 30], sizes = [2, 30], strides = [1, 1]} : vector<2x90xf32> to vector<2x30xf32>
    %1204 = vector.extract_strided_slice %1160 {offsets = [0, 30], sizes = [2, 30], strides = [1, 1]} : vector<2x90xf32> to vector<2x30xf32>
    %1205 = arith.addf %1203, %1204 : vector<2x30xf32>
    %1206 = arith.negf %1205 : vector<2x30xf32>
    %1207 = math.exp %1206 : vector<2x30xf32>
    %cst_306 = arith.constant 1.000000e+00 : f32
    %1208 = vector.broadcast %cst_306 : f32 to vector<2x30xf32>
    %1209 = arith.addf %1208, %1207 : vector<2x30xf32>
    %1210 = arith.divf %1208, %1209 : vector<2x30xf32>
    %1211 = vector.extract_strided_slice %1191 {offsets = [0, 60], sizes = [2, 30], strides = [1, 1]} : vector<2x90xf32> to vector<2x30xf32>
    %1212 = vector.extract_strided_slice %1160 {offsets = [0, 60], sizes = [2, 30], strides = [1, 1]} : vector<2x90xf32> to vector<2x30xf32>
    %1213 = arith.mulf %1202, %1212 : vector<2x30xf32>
    %1214 = arith.addf %1211, %1213 : vector<2x30xf32>
    %1215 = math.tanh %1214 : vector<2x30xf32>
    %cst_307 = arith.constant 1.000000e+00 : f32
    %1216 = vector.broadcast %cst_307 : f32 to vector<2x30xf32>
    %1217 = arith.subf %1216, %1210 : vector<2x30xf32>
    %1218 = arith.mulf %1217, %1215 : vector<2x30xf32>
    %1219 = arith.mulf %1210, %1157 : vector<2x30xf32>
    %1220 = arith.addf %1218, %1219 : vector<2x30xf32>
    %cst_308 = arith.constant dense<0.000000e+00> : vector<2x90xf32>
    %1221 = tpu.matmul %1220, %261, %cst_308 {dimension_numbers = #tpu.dot_dimension_numbers<[1], [0], [0], [1], [0, 0, 1, 1], [], []>} : vector<2x30xf32>, vector<30x90xf32>, vector<2x90xf32> -> vector<2x90xf32>
    %1222 = vector.broadcast %266 : vector<1x90xf32> to vector<2x90xf32>
    %1223 = arith.addf %1221, %1222 : vector<2x90xf32>
    %1224 = vector.extract_strided_slice %270 {offsets = [30, 0], sizes = [2, 90], strides = [1, 1]} : vector<60x90xf32> to vector<2x90xf32>
    %1225 = vector.extract_strided_slice %1224 {offsets = [0, 0], sizes = [2, 30], strides = [1, 1]} : vector<2x90xf32> to vector<2x30xf32>
    %1226 = vector.extract_strided_slice %1194 {offsets = [0, 0], sizes = [2, 30], strides = [1, 1]} : vector<2x90xf32> to vector<2x30xf32>
    %1227 = arith.addf %1225, %1226 : vector<2x30xf32>
    %1228 = arith.negf %1227 : vector<2x30xf32>
    %1229 = math.exp %1228 : vector<2x30xf32>
    %cst_309 = arith.constant 1.000000e+00 : f32
    %1230 = vector.broadcast %cst_309 : f32 to vector<2x30xf32>
    %1231 = arith.addf %1230, %1229 : vector<2x30xf32>
    %1232 = arith.divf %1230, %1231 : vector<2x30xf32>
    %1233 = vector.extract_strided_slice %1224 {offsets = [0, 30], sizes = [2, 30], strides = [1, 1]} : vector<2x90xf32> to vector<2x30xf32>
    %1234 = vector.extract_strided_slice %1194 {offsets = [0, 30], sizes = [2, 30], strides = [1, 1]} : vector<2x90xf32> to vector<2x30xf32>
    %1235 = arith.addf %1233, %1234 : vector<2x30xf32>
    %1236 = arith.negf %1235 : vector<2x30xf32>
    %1237 = math.exp %1236 : vector<2x30xf32>
    %cst_310 = arith.constant 1.000000e+00 : f32
    %1238 = vector.broadcast %cst_310 : f32 to vector<2x30xf32>
    %1239 = arith.addf %1238, %1237 : vector<2x30xf32>
    %1240 = arith.divf %1238, %1239 : vector<2x30xf32>
    %1241 = vector.extract_strided_slice %1224 {offsets = [0, 60], sizes = [2, 30], strides = [1, 1]} : vector<2x90xf32> to vector<2x30xf32>
    %1242 = vector.extract_strided_slice %1194 {offsets = [0, 60], sizes = [2, 30], strides = [1, 1]} : vector<2x90xf32> to vector<2x30xf32>
    %1243 = arith.mulf %1232, %1242 : vector<2x30xf32>
    %1244 = arith.addf %1241, %1243 : vector<2x30xf32>
    %1245 = math.tanh %1244 : vector<2x30xf32>
    %cst_311 = arith.constant 1.000000e+00 : f32
    %1246 = vector.broadcast %cst_311 : f32 to vector<2x30xf32>
    %1247 = arith.subf %1246, %1240 : vector<2x30xf32>
    %1248 = arith.mulf %1247, %1245 : vector<2x30xf32>
    %1249 = arith.mulf %1240, %1187 : vector<2x30xf32>
    %1250 = arith.addf %1248, %1249 : vector<2x30xf32>
    %cst_312 = arith.constant dense<0.000000e+00> : vector<2x180xf32>
    %1251 = tpu.matmul %1250, %260, %cst_312 {dimension_numbers = #tpu.dot_dimension_numbers<[1], [0], [0], [1], [0, 0, 1, 1], [], []>} : vector<2x30xf32>, vector<30x180xf32>, vector<2x180xf32> -> vector<2x180xf32>
    %1252 = vector.extract_strided_slice %1251 {offsets = [0, 0], sizes = [2, 90], strides = [1, 1]} : vector<2x180xf32> to vector<2x90xf32>
    %1253 = vector.broadcast %265 : vector<1x90xf32> to vector<2x90xf32>
    %1254 = arith.addf %1252, %1253 : vector<2x90xf32>
    %1255 = vector.extract_strided_slice %1251 {offsets = [0, 90], sizes = [2, 90], strides = [1, 1]} : vector<2x180xf32> to vector<2x90xf32>
    %1256 = vector.broadcast %264 : vector<1x90xf32> to vector<2x90xf32>
    %1257 = arith.addf %1255, %1256 : vector<2x90xf32>
    %1258 = vector.extract_strided_slice %1254 {offsets = [0, 0], sizes = [2, 30], strides = [1, 1]} : vector<2x90xf32> to vector<2x30xf32>
    %1259 = vector.extract_strided_slice %1223 {offsets = [0, 0], sizes = [2, 30], strides = [1, 1]} : vector<2x90xf32> to vector<2x30xf32>
    %1260 = arith.addf %1258, %1259 : vector<2x30xf32>
    %1261 = arith.negf %1260 : vector<2x30xf32>
    %1262 = math.exp %1261 : vector<2x30xf32>
    %cst_313 = arith.constant 1.000000e+00 : f32
    %1263 = vector.broadcast %cst_313 : f32 to vector<2x30xf32>
    %1264 = arith.addf %1263, %1262 : vector<2x30xf32>
    %1265 = arith.divf %1263, %1264 : vector<2x30xf32>
    %1266 = vector.extract_strided_slice %1254 {offsets = [0, 30], sizes = [2, 30], strides = [1, 1]} : vector<2x90xf32> to vector<2x30xf32>
    %1267 = vector.extract_strided_slice %1223 {offsets = [0, 30], sizes = [2, 30], strides = [1, 1]} : vector<2x90xf32> to vector<2x30xf32>
    %1268 = arith.addf %1266, %1267 : vector<2x30xf32>
    %1269 = arith.negf %1268 : vector<2x30xf32>
    %1270 = math.exp %1269 : vector<2x30xf32>
    %cst_314 = arith.constant 1.000000e+00 : f32
    %1271 = vector.broadcast %cst_314 : f32 to vector<2x30xf32>
    %1272 = arith.addf %1271, %1270 : vector<2x30xf32>
    %1273 = arith.divf %1271, %1272 : vector<2x30xf32>
    %1274 = vector.extract_strided_slice %1254 {offsets = [0, 60], sizes = [2, 30], strides = [1, 1]} : vector<2x90xf32> to vector<2x30xf32>
    %1275 = vector.extract_strided_slice %1223 {offsets = [0, 60], sizes = [2, 30], strides = [1, 1]} : vector<2x90xf32> to vector<2x30xf32>
    %1276 = arith.mulf %1265, %1275 : vector<2x30xf32>
    %1277 = arith.addf %1274, %1276 : vector<2x30xf32>
    %1278 = math.tanh %1277 : vector<2x30xf32>
    %cst_315 = arith.constant 1.000000e+00 : f32
    %1279 = vector.broadcast %cst_315 : f32 to vector<2x30xf32>
    %1280 = arith.subf %1279, %1273 : vector<2x30xf32>
    %1281 = arith.mulf %1280, %1278 : vector<2x30xf32>
    %1282 = arith.mulf %1273, %1220 : vector<2x30xf32>
    %1283 = arith.addf %1281, %1282 : vector<2x30xf32>
    %cst_316 = arith.constant dense<0.000000e+00> : vector<2x90xf32>
    %1284 = tpu.matmul %1283, %261, %cst_316 {dimension_numbers = #tpu.dot_dimension_numbers<[1], [0], [0], [1], [0, 0, 1, 1], [], []>} : vector<2x30xf32>, vector<30x90xf32>, vector<2x90xf32> -> vector<2x90xf32>
    %1285 = vector.broadcast %266 : vector<1x90xf32> to vector<2x90xf32>
    %1286 = arith.addf %1284, %1285 : vector<2x90xf32>
    %1287 = vector.extract_strided_slice %270 {offsets = [32, 0], sizes = [2, 90], strides = [1, 1]} : vector<60x90xf32> to vector<2x90xf32>
    %1288 = vector.extract_strided_slice %1287 {offsets = [0, 0], sizes = [2, 30], strides = [1, 1]} : vector<2x90xf32> to vector<2x30xf32>
    %1289 = vector.extract_strided_slice %1257 {offsets = [0, 0], sizes = [2, 30], strides = [1, 1]} : vector<2x90xf32> to vector<2x30xf32>
    %1290 = arith.addf %1288, %1289 : vector<2x30xf32>
    %1291 = arith.negf %1290 : vector<2x30xf32>
    %1292 = math.exp %1291 : vector<2x30xf32>
    %cst_317 = arith.constant 1.000000e+00 : f32
    %1293 = vector.broadcast %cst_317 : f32 to vector<2x30xf32>
    %1294 = arith.addf %1293, %1292 : vector<2x30xf32>
    %1295 = arith.divf %1293, %1294 : vector<2x30xf32>
    %1296 = vector.extract_strided_slice %1287 {offsets = [0, 30], sizes = [2, 30], strides = [1, 1]} : vector<2x90xf32> to vector<2x30xf32>
    %1297 = vector.extract_strided_slice %1257 {offsets = [0, 30], sizes = [2, 30], strides = [1, 1]} : vector<2x90xf32> to vector<2x30xf32>
    %1298 = arith.addf %1296, %1297 : vector<2x30xf32>
    %1299 = arith.negf %1298 : vector<2x30xf32>
    %1300 = math.exp %1299 : vector<2x30xf32>
    %cst_318 = arith.constant 1.000000e+00 : f32
    %1301 = vector.broadcast %cst_318 : f32 to vector<2x30xf32>
    %1302 = arith.addf %1301, %1300 : vector<2x30xf32>
    %1303 = arith.divf %1301, %1302 : vector<2x30xf32>
    %1304 = vector.extract_strided_slice %1287 {offsets = [0, 60], sizes = [2, 30], strides = [1, 1]} : vector<2x90xf32> to vector<2x30xf32>
    %1305 = vector.extract_strided_slice %1257 {offsets = [0, 60], sizes = [2, 30], strides = [1, 1]} : vector<2x90xf32> to vector<2x30xf32>
    %1306 = arith.mulf %1295, %1305 : vector<2x30xf32>
    %1307 = arith.addf %1304, %1306 : vector<2x30xf32>
    %1308 = math.tanh %1307 : vector<2x30xf32>
    %cst_319 = arith.constant 1.000000e+00 : f32
    %1309 = vector.broadcast %cst_319 : f32 to vector<2x30xf32>
    %1310 = arith.subf %1309, %1303 : vector<2x30xf32>
    %1311 = arith.mulf %1310, %1308 : vector<2x30xf32>
    %1312 = arith.mulf %1303, %1250 : vector<2x30xf32>
    %1313 = arith.addf %1311, %1312 : vector<2x30xf32>
    %cst_320 = arith.constant dense<0.000000e+00> : vector<2x180xf32>
    %1314 = tpu.matmul %1313, %260, %cst_320 {dimension_numbers = #tpu.dot_dimension_numbers<[1], [0], [0], [1], [0, 0, 1, 1], [], []>} : vector<2x30xf32>, vector<30x180xf32>, vector<2x180xf32> -> vector<2x180xf32>
    %1315 = vector.extract_strided_slice %1314 {offsets = [0, 0], sizes = [2, 90], strides = [1, 1]} : vector<2x180xf32> to vector<2x90xf32>
    %1316 = vector.broadcast %265 : vector<1x90xf32> to vector<2x90xf32>
    %1317 = arith.addf %1315, %1316 : vector<2x90xf32>
    %1318 = vector.extract_strided_slice %1314 {offsets = [0, 90], sizes = [2, 90], strides = [1, 1]} : vector<2x180xf32> to vector<2x90xf32>
    %1319 = vector.broadcast %264 : vector<1x90xf32> to vector<2x90xf32>
    %1320 = arith.addf %1318, %1319 : vector<2x90xf32>
    %1321 = vector.extract_strided_slice %1317 {offsets = [0, 0], sizes = [2, 30], strides = [1, 1]} : vector<2x90xf32> to vector<2x30xf32>
    %1322 = vector.extract_strided_slice %1286 {offsets = [0, 0], sizes = [2, 30], strides = [1, 1]} : vector<2x90xf32> to vector<2x30xf32>
    %1323 = arith.addf %1321, %1322 : vector<2x30xf32>
    %1324 = arith.negf %1323 : vector<2x30xf32>
    %1325 = math.exp %1324 : vector<2x30xf32>
    %cst_321 = arith.constant 1.000000e+00 : f32
    %1326 = vector.broadcast %cst_321 : f32 to vector<2x30xf32>
    %1327 = arith.addf %1326, %1325 : vector<2x30xf32>
    %1328 = arith.divf %1326, %1327 : vector<2x30xf32>
    %1329 = vector.extract_strided_slice %1317 {offsets = [0, 30], sizes = [2, 30], strides = [1, 1]} : vector<2x90xf32> to vector<2x30xf32>
    %1330 = vector.extract_strided_slice %1286 {offsets = [0, 30], sizes = [2, 30], strides = [1, 1]} : vector<2x90xf32> to vector<2x30xf32>
    %1331 = arith.addf %1329, %1330 : vector<2x30xf32>
    %1332 = arith.negf %1331 : vector<2x30xf32>
    %1333 = math.exp %1332 : vector<2x30xf32>
    %cst_322 = arith.constant 1.000000e+00 : f32
    %1334 = vector.broadcast %cst_322 : f32 to vector<2x30xf32>
    %1335 = arith.addf %1334, %1333 : vector<2x30xf32>
    %1336 = arith.divf %1334, %1335 : vector<2x30xf32>
    %1337 = vector.extract_strided_slice %1317 {offsets = [0, 60], sizes = [2, 30], strides = [1, 1]} : vector<2x90xf32> to vector<2x30xf32>
    %1338 = vector.extract_strided_slice %1286 {offsets = [0, 60], sizes = [2, 30], strides = [1, 1]} : vector<2x90xf32> to vector<2x30xf32>
    %1339 = arith.mulf %1328, %1338 : vector<2x30xf32>
    %1340 = arith.addf %1337, %1339 : vector<2x30xf32>
    %1341 = math.tanh %1340 : vector<2x30xf32>
    %cst_323 = arith.constant 1.000000e+00 : f32
    %1342 = vector.broadcast %cst_323 : f32 to vector<2x30xf32>
    %1343 = arith.subf %1342, %1336 : vector<2x30xf32>
    %1344 = arith.mulf %1343, %1341 : vector<2x30xf32>
    %1345 = arith.mulf %1336, %1283 : vector<2x30xf32>
    %1346 = arith.addf %1344, %1345 : vector<2x30xf32>
    %cst_324 = arith.constant dense<0.000000e+00> : vector<2x90xf32>
    %1347 = tpu.matmul %1346, %261, %cst_324 {dimension_numbers = #tpu.dot_dimension_numbers<[1], [0], [0], [1], [0, 0, 1, 1], [], []>} : vector<2x30xf32>, vector<30x90xf32>, vector<2x90xf32> -> vector<2x90xf32>
    %1348 = vector.broadcast %266 : vector<1x90xf32> to vector<2x90xf32>
    %1349 = arith.addf %1347, %1348 : vector<2x90xf32>
    %1350 = vector.extract_strided_slice %270 {offsets = [34, 0], sizes = [2, 90], strides = [1, 1]} : vector<60x90xf32> to vector<2x90xf32>
    %1351 = vector.extract_strided_slice %1350 {offsets = [0, 0], sizes = [2, 30], strides = [1, 1]} : vector<2x90xf32> to vector<2x30xf32>
    %1352 = vector.extract_strided_slice %1320 {offsets = [0, 0], sizes = [2, 30], strides = [1, 1]} : vector<2x90xf32> to vector<2x30xf32>
    %1353 = arith.addf %1351, %1352 : vector<2x30xf32>
    %1354 = arith.negf %1353 : vector<2x30xf32>
    %1355 = math.exp %1354 : vector<2x30xf32>
    %cst_325 = arith.constant 1.000000e+00 : f32
    %1356 = vector.broadcast %cst_325 : f32 to vector<2x30xf32>
    %1357 = arith.addf %1356, %1355 : vector<2x30xf32>
    %1358 = arith.divf %1356, %1357 : vector<2x30xf32>
    %1359 = vector.extract_strided_slice %1350 {offsets = [0, 30], sizes = [2, 30], strides = [1, 1]} : vector<2x90xf32> to vector<2x30xf32>
    %1360 = vector.extract_strided_slice %1320 {offsets = [0, 30], sizes = [2, 30], strides = [1, 1]} : vector<2x90xf32> to vector<2x30xf32>
    %1361 = arith.addf %1359, %1360 : vector<2x30xf32>
    %1362 = arith.negf %1361 : vector<2x30xf32>
    %1363 = math.exp %1362 : vector<2x30xf32>
    %cst_326 = arith.constant 1.000000e+00 : f32
    %1364 = vector.broadcast %cst_326 : f32 to vector<2x30xf32>
    %1365 = arith.addf %1364, %1363 : vector<2x30xf32>
    %1366 = arith.divf %1364, %1365 : vector<2x30xf32>
    %1367 = vector.extract_strided_slice %1350 {offsets = [0, 60], sizes = [2, 30], strides = [1, 1]} : vector<2x90xf32> to vector<2x30xf32>
    %1368 = vector.extract_strided_slice %1320 {offsets = [0, 60], sizes = [2, 30], strides = [1, 1]} : vector<2x90xf32> to vector<2x30xf32>
    %1369 = arith.mulf %1358, %1368 : vector<2x30xf32>
    %1370 = arith.addf %1367, %1369 : vector<2x30xf32>
    %1371 = math.tanh %1370 : vector<2x30xf32>
    %cst_327 = arith.constant 1.000000e+00 : f32
    %1372 = vector.broadcast %cst_327 : f32 to vector<2x30xf32>
    %1373 = arith.subf %1372, %1366 : vector<2x30xf32>
    %1374 = arith.mulf %1373, %1371 : vector<2x30xf32>
    %1375 = arith.mulf %1366, %1313 : vector<2x30xf32>
    %1376 = arith.addf %1374, %1375 : vector<2x30xf32>
    %cst_328 = arith.constant dense<0.000000e+00> : vector<2x180xf32>
    %1377 = tpu.matmul %1376, %260, %cst_328 {dimension_numbers = #tpu.dot_dimension_numbers<[1], [0], [0], [1], [0, 0, 1, 1], [], []>} : vector<2x30xf32>, vector<30x180xf32>, vector<2x180xf32> -> vector<2x180xf32>
    %1378 = vector.extract_strided_slice %1377 {offsets = [0, 0], sizes = [2, 90], strides = [1, 1]} : vector<2x180xf32> to vector<2x90xf32>
    %1379 = vector.broadcast %265 : vector<1x90xf32> to vector<2x90xf32>
    %1380 = arith.addf %1378, %1379 : vector<2x90xf32>
    %1381 = vector.extract_strided_slice %1377 {offsets = [0, 90], sizes = [2, 90], strides = [1, 1]} : vector<2x180xf32> to vector<2x90xf32>
    %1382 = vector.broadcast %264 : vector<1x90xf32> to vector<2x90xf32>
    %1383 = arith.addf %1381, %1382 : vector<2x90xf32>
    %1384 = vector.extract_strided_slice %1380 {offsets = [0, 0], sizes = [2, 30], strides = [1, 1]} : vector<2x90xf32> to vector<2x30xf32>
    %1385 = vector.extract_strided_slice %1349 {offsets = [0, 0], sizes = [2, 30], strides = [1, 1]} : vector<2x90xf32> to vector<2x30xf32>
    %1386 = arith.addf %1384, %1385 : vector<2x30xf32>
    %1387 = arith.negf %1386 : vector<2x30xf32>
    %1388 = math.exp %1387 : vector<2x30xf32>
    %cst_329 = arith.constant 1.000000e+00 : f32
    %1389 = vector.broadcast %cst_329 : f32 to vector<2x30xf32>
    %1390 = arith.addf %1389, %1388 : vector<2x30xf32>
    %1391 = arith.divf %1389, %1390 : vector<2x30xf32>
    %1392 = vector.extract_strided_slice %1380 {offsets = [0, 30], sizes = [2, 30], strides = [1, 1]} : vector<2x90xf32> to vector<2x30xf32>
    %1393 = vector.extract_strided_slice %1349 {offsets = [0, 30], sizes = [2, 30], strides = [1, 1]} : vector<2x90xf32> to vector<2x30xf32>
    %1394 = arith.addf %1392, %1393 : vector<2x30xf32>
    %1395 = arith.negf %1394 : vector<2x30xf32>
    %1396 = math.exp %1395 : vector<2x30xf32>
    %cst_330 = arith.constant 1.000000e+00 : f32
    %1397 = vector.broadcast %cst_330 : f32 to vector<2x30xf32>
    %1398 = arith.addf %1397, %1396 : vector<2x30xf32>
    %1399 = arith.divf %1397, %1398 : vector<2x30xf32>
    %1400 = vector.extract_strided_slice %1380 {offsets = [0, 60], sizes = [2, 30], strides = [1, 1]} : vector<2x90xf32> to vector<2x30xf32>
    %1401 = vector.extract_strided_slice %1349 {offsets = [0, 60], sizes = [2, 30], strides = [1, 1]} : vector<2x90xf32> to vector<2x30xf32>
    %1402 = arith.mulf %1391, %1401 : vector<2x30xf32>
    %1403 = arith.addf %1400, %1402 : vector<2x30xf32>
    %1404 = math.tanh %1403 : vector<2x30xf32>
    %cst_331 = arith.constant 1.000000e+00 : f32
    %1405 = vector.broadcast %cst_331 : f32 to vector<2x30xf32>
    %1406 = arith.subf %1405, %1399 : vector<2x30xf32>
    %1407 = arith.mulf %1406, %1404 : vector<2x30xf32>
    %1408 = arith.mulf %1399, %1346 : vector<2x30xf32>
    %1409 = arith.addf %1407, %1408 : vector<2x30xf32>
    %cst_332 = arith.constant dense<0.000000e+00> : vector<2x90xf32>
    %1410 = tpu.matmul %1409, %261, %cst_332 {dimension_numbers = #tpu.dot_dimension_numbers<[1], [0], [0], [1], [0, 0, 1, 1], [], []>} : vector<2x30xf32>, vector<30x90xf32>, vector<2x90xf32> -> vector<2x90xf32>
    %1411 = vector.broadcast %266 : vector<1x90xf32> to vector<2x90xf32>
    %1412 = arith.addf %1410, %1411 : vector<2x90xf32>
    %1413 = vector.extract_strided_slice %270 {offsets = [36, 0], sizes = [2, 90], strides = [1, 1]} : vector<60x90xf32> to vector<2x90xf32>
    %1414 = vector.extract_strided_slice %1413 {offsets = [0, 0], sizes = [2, 30], strides = [1, 1]} : vector<2x90xf32> to vector<2x30xf32>
    %1415 = vector.extract_strided_slice %1383 {offsets = [0, 0], sizes = [2, 30], strides = [1, 1]} : vector<2x90xf32> to vector<2x30xf32>
    %1416 = arith.addf %1414, %1415 : vector<2x30xf32>
    %1417 = arith.negf %1416 : vector<2x30xf32>
    %1418 = math.exp %1417 : vector<2x30xf32>
    %cst_333 = arith.constant 1.000000e+00 : f32
    %1419 = vector.broadcast %cst_333 : f32 to vector<2x30xf32>
    %1420 = arith.addf %1419, %1418 : vector<2x30xf32>
    %1421 = arith.divf %1419, %1420 : vector<2x30xf32>
    %1422 = vector.extract_strided_slice %1413 {offsets = [0, 30], sizes = [2, 30], strides = [1, 1]} : vector<2x90xf32> to vector<2x30xf32>
    %1423 = vector.extract_strided_slice %1383 {offsets = [0, 30], sizes = [2, 30], strides = [1, 1]} : vector<2x90xf32> to vector<2x30xf32>
    %1424 = arith.addf %1422, %1423 : vector<2x30xf32>
    %1425 = arith.negf %1424 : vector<2x30xf32>
    %1426 = math.exp %1425 : vector<2x30xf32>
    %cst_334 = arith.constant 1.000000e+00 : f32
    %1427 = vector.broadcast %cst_334 : f32 to vector<2x30xf32>
    %1428 = arith.addf %1427, %1426 : vector<2x30xf32>
    %1429 = arith.divf %1427, %1428 : vector<2x30xf32>
    %1430 = vector.extract_strided_slice %1413 {offsets = [0, 60], sizes = [2, 30], strides = [1, 1]} : vector<2x90xf32> to vector<2x30xf32>
    %1431 = vector.extract_strided_slice %1383 {offsets = [0, 60], sizes = [2, 30], strides = [1, 1]} : vector<2x90xf32> to vector<2x30xf32>
    %1432 = arith.mulf %1421, %1431 : vector<2x30xf32>
    %1433 = arith.addf %1430, %1432 : vector<2x30xf32>
    %1434 = math.tanh %1433 : vector<2x30xf32>
    %cst_335 = arith.constant 1.000000e+00 : f32
    %1435 = vector.broadcast %cst_335 : f32 to vector<2x30xf32>
    %1436 = arith.subf %1435, %1429 : vector<2x30xf32>
    %1437 = arith.mulf %1436, %1434 : vector<2x30xf32>
    %1438 = arith.mulf %1429, %1376 : vector<2x30xf32>
    %1439 = arith.addf %1437, %1438 : vector<2x30xf32>
    %cst_336 = arith.constant dense<0.000000e+00> : vector<2x180xf32>
    %1440 = tpu.matmul %1439, %260, %cst_336 {dimension_numbers = #tpu.dot_dimension_numbers<[1], [0], [0], [1], [0, 0, 1, 1], [], []>} : vector<2x30xf32>, vector<30x180xf32>, vector<2x180xf32> -> vector<2x180xf32>
    %1441 = vector.extract_strided_slice %1440 {offsets = [0, 0], sizes = [2, 90], strides = [1, 1]} : vector<2x180xf32> to vector<2x90xf32>
    %1442 = vector.broadcast %265 : vector<1x90xf32> to vector<2x90xf32>
    %1443 = arith.addf %1441, %1442 : vector<2x90xf32>
    %1444 = vector.extract_strided_slice %1440 {offsets = [0, 90], sizes = [2, 90], strides = [1, 1]} : vector<2x180xf32> to vector<2x90xf32>
    %1445 = vector.broadcast %264 : vector<1x90xf32> to vector<2x90xf32>
    %1446 = arith.addf %1444, %1445 : vector<2x90xf32>
    %1447 = vector.extract_strided_slice %1443 {offsets = [0, 0], sizes = [2, 30], strides = [1, 1]} : vector<2x90xf32> to vector<2x30xf32>
    %1448 = vector.extract_strided_slice %1412 {offsets = [0, 0], sizes = [2, 30], strides = [1, 1]} : vector<2x90xf32> to vector<2x30xf32>
    %1449 = arith.addf %1447, %1448 : vector<2x30xf32>
    %1450 = arith.negf %1449 : vector<2x30xf32>
    %1451 = math.exp %1450 : vector<2x30xf32>
    %cst_337 = arith.constant 1.000000e+00 : f32
    %1452 = vector.broadcast %cst_337 : f32 to vector<2x30xf32>
    %1453 = arith.addf %1452, %1451 : vector<2x30xf32>
    %1454 = arith.divf %1452, %1453 : vector<2x30xf32>
    %1455 = vector.extract_strided_slice %1443 {offsets = [0, 30], sizes = [2, 30], strides = [1, 1]} : vector<2x90xf32> to vector<2x30xf32>
    %1456 = vector.extract_strided_slice %1412 {offsets = [0, 30], sizes = [2, 30], strides = [1, 1]} : vector<2x90xf32> to vector<2x30xf32>
    %1457 = arith.addf %1455, %1456 : vector<2x30xf32>
    %1458 = arith.negf %1457 : vector<2x30xf32>
    %1459 = math.exp %1458 : vector<2x30xf32>
    %cst_338 = arith.constant 1.000000e+00 : f32
    %1460 = vector.broadcast %cst_338 : f32 to vector<2x30xf32>
    %1461 = arith.addf %1460, %1459 : vector<2x30xf32>
    %1462 = arith.divf %1460, %1461 : vector<2x30xf32>
    %1463 = vector.extract_strided_slice %1443 {offsets = [0, 60], sizes = [2, 30], strides = [1, 1]} : vector<2x90xf32> to vector<2x30xf32>
    %1464 = vector.extract_strided_slice %1412 {offsets = [0, 60], sizes = [2, 30], strides = [1, 1]} : vector<2x90xf32> to vector<2x30xf32>
    %1465 = arith.mulf %1454, %1464 : vector<2x30xf32>
    %1466 = arith.addf %1463, %1465 : vector<2x30xf32>
    %1467 = math.tanh %1466 : vector<2x30xf32>
    %cst_339 = arith.constant 1.000000e+00 : f32
    %1468 = vector.broadcast %cst_339 : f32 to vector<2x30xf32>
    %1469 = arith.subf %1468, %1462 : vector<2x30xf32>
    %1470 = arith.mulf %1469, %1467 : vector<2x30xf32>
    %1471 = arith.mulf %1462, %1409 : vector<2x30xf32>
    %1472 = arith.addf %1470, %1471 : vector<2x30xf32>
    %cst_340 = arith.constant dense<0.000000e+00> : vector<2x90xf32>
    %1473 = tpu.matmul %1472, %261, %cst_340 {dimension_numbers = #tpu.dot_dimension_numbers<[1], [0], [0], [1], [0, 0, 1, 1], [], []>} : vector<2x30xf32>, vector<30x90xf32>, vector<2x90xf32> -> vector<2x90xf32>
    %1474 = vector.broadcast %266 : vector<1x90xf32> to vector<2x90xf32>
    %1475 = arith.addf %1473, %1474 : vector<2x90xf32>
    %1476 = vector.extract_strided_slice %270 {offsets = [38, 0], sizes = [2, 90], strides = [1, 1]} : vector<60x90xf32> to vector<2x90xf32>
    %1477 = vector.extract_strided_slice %1476 {offsets = [0, 0], sizes = [2, 30], strides = [1, 1]} : vector<2x90xf32> to vector<2x30xf32>
    %1478 = vector.extract_strided_slice %1446 {offsets = [0, 0], sizes = [2, 30], strides = [1, 1]} : vector<2x90xf32> to vector<2x30xf32>
    %1479 = arith.addf %1477, %1478 : vector<2x30xf32>
    %1480 = arith.negf %1479 : vector<2x30xf32>
    %1481 = math.exp %1480 : vector<2x30xf32>
    %cst_341 = arith.constant 1.000000e+00 : f32
    %1482 = vector.broadcast %cst_341 : f32 to vector<2x30xf32>
    %1483 = arith.addf %1482, %1481 : vector<2x30xf32>
    %1484 = arith.divf %1482, %1483 : vector<2x30xf32>
    %1485 = vector.extract_strided_slice %1476 {offsets = [0, 30], sizes = [2, 30], strides = [1, 1]} : vector<2x90xf32> to vector<2x30xf32>
    %1486 = vector.extract_strided_slice %1446 {offsets = [0, 30], sizes = [2, 30], strides = [1, 1]} : vector<2x90xf32> to vector<2x30xf32>
    %1487 = arith.addf %1485, %1486 : vector<2x30xf32>
    %1488 = arith.negf %1487 : vector<2x30xf32>
    %1489 = math.exp %1488 : vector<2x30xf32>
    %cst_342 = arith.constant 1.000000e+00 : f32
    %1490 = vector.broadcast %cst_342 : f32 to vector<2x30xf32>
    %1491 = arith.addf %1490, %1489 : vector<2x30xf32>
    %1492 = arith.divf %1490, %1491 : vector<2x30xf32>
    %1493 = vector.extract_strided_slice %1476 {offsets = [0, 60], sizes = [2, 30], strides = [1, 1]} : vector<2x90xf32> to vector<2x30xf32>
    %1494 = vector.extract_strided_slice %1446 {offsets = [0, 60], sizes = [2, 30], strides = [1, 1]} : vector<2x90xf32> to vector<2x30xf32>
    %1495 = arith.mulf %1484, %1494 : vector<2x30xf32>
    %1496 = arith.addf %1493, %1495 : vector<2x30xf32>
    %1497 = math.tanh %1496 : vector<2x30xf32>
    %cst_343 = arith.constant 1.000000e+00 : f32
    %1498 = vector.broadcast %cst_343 : f32 to vector<2x30xf32>
    %1499 = arith.subf %1498, %1492 : vector<2x30xf32>
    %1500 = arith.mulf %1499, %1497 : vector<2x30xf32>
    %1501 = arith.mulf %1492, %1439 : vector<2x30xf32>
    %1502 = arith.addf %1500, %1501 : vector<2x30xf32>
    %cst_344 = arith.constant dense<0.000000e+00> : vector<2x180xf32>
    %1503 = tpu.matmul %1502, %260, %cst_344 {dimension_numbers = #tpu.dot_dimension_numbers<[1], [0], [0], [1], [0, 0, 1, 1], [], []>} : vector<2x30xf32>, vector<30x180xf32>, vector<2x180xf32> -> vector<2x180xf32>
    %1504 = vector.extract_strided_slice %1503 {offsets = [0, 0], sizes = [2, 90], strides = [1, 1]} : vector<2x180xf32> to vector<2x90xf32>
    %1505 = vector.broadcast %265 : vector<1x90xf32> to vector<2x90xf32>
    %1506 = arith.addf %1504, %1505 : vector<2x90xf32>
    %1507 = vector.extract_strided_slice %1503 {offsets = [0, 90], sizes = [2, 90], strides = [1, 1]} : vector<2x180xf32> to vector<2x90xf32>
    %1508 = vector.broadcast %264 : vector<1x90xf32> to vector<2x90xf32>
    %1509 = arith.addf %1507, %1508 : vector<2x90xf32>
    %1510 = vector.extract_strided_slice %1506 {offsets = [0, 0], sizes = [2, 30], strides = [1, 1]} : vector<2x90xf32> to vector<2x30xf32>
    %1511 = vector.extract_strided_slice %1475 {offsets = [0, 0], sizes = [2, 30], strides = [1, 1]} : vector<2x90xf32> to vector<2x30xf32>
    %1512 = arith.addf %1510, %1511 : vector<2x30xf32>
    %1513 = arith.negf %1512 : vector<2x30xf32>
    %1514 = math.exp %1513 : vector<2x30xf32>
    %cst_345 = arith.constant 1.000000e+00 : f32
    %1515 = vector.broadcast %cst_345 : f32 to vector<2x30xf32>
    %1516 = arith.addf %1515, %1514 : vector<2x30xf32>
    %1517 = arith.divf %1515, %1516 : vector<2x30xf32>
    %1518 = vector.extract_strided_slice %1506 {offsets = [0, 30], sizes = [2, 30], strides = [1, 1]} : vector<2x90xf32> to vector<2x30xf32>
    %1519 = vector.extract_strided_slice %1475 {offsets = [0, 30], sizes = [2, 30], strides = [1, 1]} : vector<2x90xf32> to vector<2x30xf32>
    %1520 = arith.addf %1518, %1519 : vector<2x30xf32>
    %1521 = arith.negf %1520 : vector<2x30xf32>
    %1522 = math.exp %1521 : vector<2x30xf32>
    %cst_346 = arith.constant 1.000000e+00 : f32
    %1523 = vector.broadcast %cst_346 : f32 to vector<2x30xf32>
    %1524 = arith.addf %1523, %1522 : vector<2x30xf32>
    %1525 = arith.divf %1523, %1524 : vector<2x30xf32>
    %1526 = vector.extract_strided_slice %1506 {offsets = [0, 60], sizes = [2, 30], strides = [1, 1]} : vector<2x90xf32> to vector<2x30xf32>
    %1527 = vector.extract_strided_slice %1475 {offsets = [0, 60], sizes = [2, 30], strides = [1, 1]} : vector<2x90xf32> to vector<2x30xf32>
    %1528 = arith.mulf %1517, %1527 : vector<2x30xf32>
    %1529 = arith.addf %1526, %1528 : vector<2x30xf32>
    %1530 = math.tanh %1529 : vector<2x30xf32>
    %cst_347 = arith.constant 1.000000e+00 : f32
    %1531 = vector.broadcast %cst_347 : f32 to vector<2x30xf32>
    %1532 = arith.subf %1531, %1525 : vector<2x30xf32>
    %1533 = arith.mulf %1532, %1530 : vector<2x30xf32>
    %1534 = arith.mulf %1525, %1472 : vector<2x30xf32>
    %1535 = arith.addf %1533, %1534 : vector<2x30xf32>
    %cst_348 = arith.constant dense<0.000000e+00> : vector<2x90xf32>
    %1536 = tpu.matmul %1535, %261, %cst_348 {dimension_numbers = #tpu.dot_dimension_numbers<[1], [0], [0], [1], [0, 0, 1, 1], [], []>} : vector<2x30xf32>, vector<30x90xf32>, vector<2x90xf32> -> vector<2x90xf32>
    %1537 = vector.broadcast %266 : vector<1x90xf32> to vector<2x90xf32>
    %1538 = arith.addf %1536, %1537 : vector<2x90xf32>
    %1539 = vector.extract_strided_slice %270 {offsets = [40, 0], sizes = [2, 90], strides = [1, 1]} : vector<60x90xf32> to vector<2x90xf32>
    %1540 = vector.extract_strided_slice %1539 {offsets = [0, 0], sizes = [2, 30], strides = [1, 1]} : vector<2x90xf32> to vector<2x30xf32>
    %1541 = vector.extract_strided_slice %1509 {offsets = [0, 0], sizes = [2, 30], strides = [1, 1]} : vector<2x90xf32> to vector<2x30xf32>
    %1542 = arith.addf %1540, %1541 : vector<2x30xf32>
    %1543 = arith.negf %1542 : vector<2x30xf32>
    %1544 = math.exp %1543 : vector<2x30xf32>
    %cst_349 = arith.constant 1.000000e+00 : f32
    %1545 = vector.broadcast %cst_349 : f32 to vector<2x30xf32>
    %1546 = arith.addf %1545, %1544 : vector<2x30xf32>
    %1547 = arith.divf %1545, %1546 : vector<2x30xf32>
    %1548 = vector.extract_strided_slice %1539 {offsets = [0, 30], sizes = [2, 30], strides = [1, 1]} : vector<2x90xf32> to vector<2x30xf32>
    %1549 = vector.extract_strided_slice %1509 {offsets = [0, 30], sizes = [2, 30], strides = [1, 1]} : vector<2x90xf32> to vector<2x30xf32>
    %1550 = arith.addf %1548, %1549 : vector<2x30xf32>
    %1551 = arith.negf %1550 : vector<2x30xf32>
    %1552 = math.exp %1551 : vector<2x30xf32>
    %cst_350 = arith.constant 1.000000e+00 : f32
    %1553 = vector.broadcast %cst_350 : f32 to vector<2x30xf32>
    %1554 = arith.addf %1553, %1552 : vector<2x30xf32>
    %1555 = arith.divf %1553, %1554 : vector<2x30xf32>
    %1556 = vector.extract_strided_slice %1539 {offsets = [0, 60], sizes = [2, 30], strides = [1, 1]} : vector<2x90xf32> to vector<2x30xf32>
    %1557 = vector.extract_strided_slice %1509 {offsets = [0, 60], sizes = [2, 30], strides = [1, 1]} : vector<2x90xf32> to vector<2x30xf32>
    %1558 = arith.mulf %1547, %1557 : vector<2x30xf32>
    %1559 = arith.addf %1556, %1558 : vector<2x30xf32>
    %1560 = math.tanh %1559 : vector<2x30xf32>
    %cst_351 = arith.constant 1.000000e+00 : f32
    %1561 = vector.broadcast %cst_351 : f32 to vector<2x30xf32>
    %1562 = arith.subf %1561, %1555 : vector<2x30xf32>
    %1563 = arith.mulf %1562, %1560 : vector<2x30xf32>
    %1564 = arith.mulf %1555, %1502 : vector<2x30xf32>
    %1565 = arith.addf %1563, %1564 : vector<2x30xf32>
    %cst_352 = arith.constant dense<0.000000e+00> : vector<2x180xf32>
    %1566 = tpu.matmul %1565, %260, %cst_352 {dimension_numbers = #tpu.dot_dimension_numbers<[1], [0], [0], [1], [0, 0, 1, 1], [], []>} : vector<2x30xf32>, vector<30x180xf32>, vector<2x180xf32> -> vector<2x180xf32>
    %1567 = vector.extract_strided_slice %1566 {offsets = [0, 0], sizes = [2, 90], strides = [1, 1]} : vector<2x180xf32> to vector<2x90xf32>
    %1568 = vector.broadcast %265 : vector<1x90xf32> to vector<2x90xf32>
    %1569 = arith.addf %1567, %1568 : vector<2x90xf32>
    %1570 = vector.extract_strided_slice %1566 {offsets = [0, 90], sizes = [2, 90], strides = [1, 1]} : vector<2x180xf32> to vector<2x90xf32>
    %1571 = vector.broadcast %264 : vector<1x90xf32> to vector<2x90xf32>
    %1572 = arith.addf %1570, %1571 : vector<2x90xf32>
    %1573 = vector.extract_strided_slice %1569 {offsets = [0, 0], sizes = [2, 30], strides = [1, 1]} : vector<2x90xf32> to vector<2x30xf32>
    %1574 = vector.extract_strided_slice %1538 {offsets = [0, 0], sizes = [2, 30], strides = [1, 1]} : vector<2x90xf32> to vector<2x30xf32>
    %1575 = arith.addf %1573, %1574 : vector<2x30xf32>
    %1576 = arith.negf %1575 : vector<2x30xf32>
    %1577 = math.exp %1576 : vector<2x30xf32>
    %cst_353 = arith.constant 1.000000e+00 : f32
    %1578 = vector.broadcast %cst_353 : f32 to vector<2x30xf32>
    %1579 = arith.addf %1578, %1577 : vector<2x30xf32>
    %1580 = arith.divf %1578, %1579 : vector<2x30xf32>
    %1581 = vector.extract_strided_slice %1569 {offsets = [0, 30], sizes = [2, 30], strides = [1, 1]} : vector<2x90xf32> to vector<2x30xf32>
    %1582 = vector.extract_strided_slice %1538 {offsets = [0, 30], sizes = [2, 30], strides = [1, 1]} : vector<2x90xf32> to vector<2x30xf32>
    %1583 = arith.addf %1581, %1582 : vector<2x30xf32>
    %1584 = arith.negf %1583 : vector<2x30xf32>
    %1585 = math.exp %1584 : vector<2x30xf32>
    %cst_354 = arith.constant 1.000000e+00 : f32
    %1586 = vector.broadcast %cst_354 : f32 to vector<2x30xf32>
    %1587 = arith.addf %1586, %1585 : vector<2x30xf32>
    %1588 = arith.divf %1586, %1587 : vector<2x30xf32>
    %1589 = vector.extract_strided_slice %1569 {offsets = [0, 60], sizes = [2, 30], strides = [1, 1]} : vector<2x90xf32> to vector<2x30xf32>
    %1590 = vector.extract_strided_slice %1538 {offsets = [0, 60], sizes = [2, 30], strides = [1, 1]} : vector<2x90xf32> to vector<2x30xf32>
    %1591 = arith.mulf %1580, %1590 : vector<2x30xf32>
    %1592 = arith.addf %1589, %1591 : vector<2x30xf32>
    %1593 = math.tanh %1592 : vector<2x30xf32>
    %cst_355 = arith.constant 1.000000e+00 : f32
    %1594 = vector.broadcast %cst_355 : f32 to vector<2x30xf32>
    %1595 = arith.subf %1594, %1588 : vector<2x30xf32>
    %1596 = arith.mulf %1595, %1593 : vector<2x30xf32>
    %1597 = arith.mulf %1588, %1535 : vector<2x30xf32>
    %1598 = arith.addf %1596, %1597 : vector<2x30xf32>
    %cst_356 = arith.constant dense<0.000000e+00> : vector<2x90xf32>
    %1599 = tpu.matmul %1598, %261, %cst_356 {dimension_numbers = #tpu.dot_dimension_numbers<[1], [0], [0], [1], [0, 0, 1, 1], [], []>} : vector<2x30xf32>, vector<30x90xf32>, vector<2x90xf32> -> vector<2x90xf32>
    %1600 = vector.broadcast %266 : vector<1x90xf32> to vector<2x90xf32>
    %1601 = arith.addf %1599, %1600 : vector<2x90xf32>
    %1602 = vector.extract_strided_slice %270 {offsets = [42, 0], sizes = [2, 90], strides = [1, 1]} : vector<60x90xf32> to vector<2x90xf32>
    %1603 = vector.extract_strided_slice %1602 {offsets = [0, 0], sizes = [2, 30], strides = [1, 1]} : vector<2x90xf32> to vector<2x30xf32>
    %1604 = vector.extract_strided_slice %1572 {offsets = [0, 0], sizes = [2, 30], strides = [1, 1]} : vector<2x90xf32> to vector<2x30xf32>
    %1605 = arith.addf %1603, %1604 : vector<2x30xf32>
    %1606 = arith.negf %1605 : vector<2x30xf32>
    %1607 = math.exp %1606 : vector<2x30xf32>
    %cst_357 = arith.constant 1.000000e+00 : f32
    %1608 = vector.broadcast %cst_357 : f32 to vector<2x30xf32>
    %1609 = arith.addf %1608, %1607 : vector<2x30xf32>
    %1610 = arith.divf %1608, %1609 : vector<2x30xf32>
    %1611 = vector.extract_strided_slice %1602 {offsets = [0, 30], sizes = [2, 30], strides = [1, 1]} : vector<2x90xf32> to vector<2x30xf32>
    %1612 = vector.extract_strided_slice %1572 {offsets = [0, 30], sizes = [2, 30], strides = [1, 1]} : vector<2x90xf32> to vector<2x30xf32>
    %1613 = arith.addf %1611, %1612 : vector<2x30xf32>
    %1614 = arith.negf %1613 : vector<2x30xf32>
    %1615 = math.exp %1614 : vector<2x30xf32>
    %cst_358 = arith.constant 1.000000e+00 : f32
    %1616 = vector.broadcast %cst_358 : f32 to vector<2x30xf32>
    %1617 = arith.addf %1616, %1615 : vector<2x30xf32>
    %1618 = arith.divf %1616, %1617 : vector<2x30xf32>
    %1619 = vector.extract_strided_slice %1602 {offsets = [0, 60], sizes = [2, 30], strides = [1, 1]} : vector<2x90xf32> to vector<2x30xf32>
    %1620 = vector.extract_strided_slice %1572 {offsets = [0, 60], sizes = [2, 30], strides = [1, 1]} : vector<2x90xf32> to vector<2x30xf32>
    %1621 = arith.mulf %1610, %1620 : vector<2x30xf32>
    %1622 = arith.addf %1619, %1621 : vector<2x30xf32>
    %1623 = math.tanh %1622 : vector<2x30xf32>
    %cst_359 = arith.constant 1.000000e+00 : f32
    %1624 = vector.broadcast %cst_359 : f32 to vector<2x30xf32>
    %1625 = arith.subf %1624, %1618 : vector<2x30xf32>
    %1626 = arith.mulf %1625, %1623 : vector<2x30xf32>
    %1627 = arith.mulf %1618, %1565 : vector<2x30xf32>
    %1628 = arith.addf %1626, %1627 : vector<2x30xf32>
    %cst_360 = arith.constant dense<0.000000e+00> : vector<2x180xf32>
    %1629 = tpu.matmul %1628, %260, %cst_360 {dimension_numbers = #tpu.dot_dimension_numbers<[1], [0], [0], [1], [0, 0, 1, 1], [], []>} : vector<2x30xf32>, vector<30x180xf32>, vector<2x180xf32> -> vector<2x180xf32>
    %1630 = vector.extract_strided_slice %1629 {offsets = [0, 0], sizes = [2, 90], strides = [1, 1]} : vector<2x180xf32> to vector<2x90xf32>
    %1631 = vector.broadcast %265 : vector<1x90xf32> to vector<2x90xf32>
    %1632 = arith.addf %1630, %1631 : vector<2x90xf32>
    %1633 = vector.extract_strided_slice %1629 {offsets = [0, 90], sizes = [2, 90], strides = [1, 1]} : vector<2x180xf32> to vector<2x90xf32>
    %1634 = vector.broadcast %264 : vector<1x90xf32> to vector<2x90xf32>
    %1635 = arith.addf %1633, %1634 : vector<2x90xf32>
    %1636 = vector.extract_strided_slice %1632 {offsets = [0, 0], sizes = [2, 30], strides = [1, 1]} : vector<2x90xf32> to vector<2x30xf32>
    %1637 = vector.extract_strided_slice %1601 {offsets = [0, 0], sizes = [2, 30], strides = [1, 1]} : vector<2x90xf32> to vector<2x30xf32>
    %1638 = arith.addf %1636, %1637 : vector<2x30xf32>
    %1639 = arith.negf %1638 : vector<2x30xf32>
    %1640 = math.exp %1639 : vector<2x30xf32>
    %cst_361 = arith.constant 1.000000e+00 : f32
    %1641 = vector.broadcast %cst_361 : f32 to vector<2x30xf32>
    %1642 = arith.addf %1641, %1640 : vector<2x30xf32>
    %1643 = arith.divf %1641, %1642 : vector<2x30xf32>
    %1644 = vector.extract_strided_slice %1632 {offsets = [0, 30], sizes = [2, 30], strides = [1, 1]} : vector<2x90xf32> to vector<2x30xf32>
    %1645 = vector.extract_strided_slice %1601 {offsets = [0, 30], sizes = [2, 30], strides = [1, 1]} : vector<2x90xf32> to vector<2x30xf32>
    %1646 = arith.addf %1644, %1645 : vector<2x30xf32>
    %1647 = arith.negf %1646 : vector<2x30xf32>
    %1648 = math.exp %1647 : vector<2x30xf32>
    %cst_362 = arith.constant 1.000000e+00 : f32
    %1649 = vector.broadcast %cst_362 : f32 to vector<2x30xf32>
    %1650 = arith.addf %1649, %1648 : vector<2x30xf32>
    %1651 = arith.divf %1649, %1650 : vector<2x30xf32>
    %1652 = vector.extract_strided_slice %1632 {offsets = [0, 60], sizes = [2, 30], strides = [1, 1]} : vector<2x90xf32> to vector<2x30xf32>
    %1653 = vector.extract_strided_slice %1601 {offsets = [0, 60], sizes = [2, 30], strides = [1, 1]} : vector<2x90xf32> to vector<2x30xf32>
    %1654 = arith.mulf %1643, %1653 : vector<2x30xf32>
    %1655 = arith.addf %1652, %1654 : vector<2x30xf32>
    %1656 = math.tanh %1655 : vector<2x30xf32>
    %cst_363 = arith.constant 1.000000e+00 : f32
    %1657 = vector.broadcast %cst_363 : f32 to vector<2x30xf32>
    %1658 = arith.subf %1657, %1651 : vector<2x30xf32>
    %1659 = arith.mulf %1658, %1656 : vector<2x30xf32>
    %1660 = arith.mulf %1651, %1598 : vector<2x30xf32>
    %1661 = arith.addf %1659, %1660 : vector<2x30xf32>
    %cst_364 = arith.constant dense<0.000000e+00> : vector<2x90xf32>
    %1662 = tpu.matmul %1661, %261, %cst_364 {dimension_numbers = #tpu.dot_dimension_numbers<[1], [0], [0], [1], [0, 0, 1, 1], [], []>} : vector<2x30xf32>, vector<30x90xf32>, vector<2x90xf32> -> vector<2x90xf32>
    %1663 = vector.broadcast %266 : vector<1x90xf32> to vector<2x90xf32>
    %1664 = arith.addf %1662, %1663 : vector<2x90xf32>
    %1665 = vector.extract_strided_slice %270 {offsets = [44, 0], sizes = [2, 90], strides = [1, 1]} : vector<60x90xf32> to vector<2x90xf32>
    %1666 = vector.extract_strided_slice %1665 {offsets = [0, 0], sizes = [2, 30], strides = [1, 1]} : vector<2x90xf32> to vector<2x30xf32>
    %1667 = vector.extract_strided_slice %1635 {offsets = [0, 0], sizes = [2, 30], strides = [1, 1]} : vector<2x90xf32> to vector<2x30xf32>
    %1668 = arith.addf %1666, %1667 : vector<2x30xf32>
    %1669 = arith.negf %1668 : vector<2x30xf32>
    %1670 = math.exp %1669 : vector<2x30xf32>
    %cst_365 = arith.constant 1.000000e+00 : f32
    %1671 = vector.broadcast %cst_365 : f32 to vector<2x30xf32>
    %1672 = arith.addf %1671, %1670 : vector<2x30xf32>
    %1673 = arith.divf %1671, %1672 : vector<2x30xf32>
    %1674 = vector.extract_strided_slice %1665 {offsets = [0, 30], sizes = [2, 30], strides = [1, 1]} : vector<2x90xf32> to vector<2x30xf32>
    %1675 = vector.extract_strided_slice %1635 {offsets = [0, 30], sizes = [2, 30], strides = [1, 1]} : vector<2x90xf32> to vector<2x30xf32>
    %1676 = arith.addf %1674, %1675 : vector<2x30xf32>
    %1677 = arith.negf %1676 : vector<2x30xf32>
    %1678 = math.exp %1677 : vector<2x30xf32>
    %cst_366 = arith.constant 1.000000e+00 : f32
    %1679 = vector.broadcast %cst_366 : f32 to vector<2x30xf32>
    %1680 = arith.addf %1679, %1678 : vector<2x30xf32>
    %1681 = arith.divf %1679, %1680 : vector<2x30xf32>
    %1682 = vector.extract_strided_slice %1665 {offsets = [0, 60], sizes = [2, 30], strides = [1, 1]} : vector<2x90xf32> to vector<2x30xf32>
    %1683 = vector.extract_strided_slice %1635 {offsets = [0, 60], sizes = [2, 30], strides = [1, 1]} : vector<2x90xf32> to vector<2x30xf32>
    %1684 = arith.mulf %1673, %1683 : vector<2x30xf32>
    %1685 = arith.addf %1682, %1684 : vector<2x30xf32>
    %1686 = math.tanh %1685 : vector<2x30xf32>
    %cst_367 = arith.constant 1.000000e+00 : f32
    %1687 = vector.broadcast %cst_367 : f32 to vector<2x30xf32>
    %1688 = arith.subf %1687, %1681 : vector<2x30xf32>
    %1689 = arith.mulf %1688, %1686 : vector<2x30xf32>
    %1690 = arith.mulf %1681, %1628 : vector<2x30xf32>
    %1691 = arith.addf %1689, %1690 : vector<2x30xf32>
    %cst_368 = arith.constant dense<0.000000e+00> : vector<2x180xf32>
    %1692 = tpu.matmul %1691, %260, %cst_368 {dimension_numbers = #tpu.dot_dimension_numbers<[1], [0], [0], [1], [0, 0, 1, 1], [], []>} : vector<2x30xf32>, vector<30x180xf32>, vector<2x180xf32> -> vector<2x180xf32>
    %1693 = vector.extract_strided_slice %1692 {offsets = [0, 0], sizes = [2, 90], strides = [1, 1]} : vector<2x180xf32> to vector<2x90xf32>
    %1694 = vector.broadcast %265 : vector<1x90xf32> to vector<2x90xf32>
    %1695 = arith.addf %1693, %1694 : vector<2x90xf32>
    %1696 = vector.extract_strided_slice %1692 {offsets = [0, 90], sizes = [2, 90], strides = [1, 1]} : vector<2x180xf32> to vector<2x90xf32>
    %1697 = vector.broadcast %264 : vector<1x90xf32> to vector<2x90xf32>
    %1698 = arith.addf %1696, %1697 : vector<2x90xf32>
    %1699 = vector.extract_strided_slice %1695 {offsets = [0, 0], sizes = [2, 30], strides = [1, 1]} : vector<2x90xf32> to vector<2x30xf32>
    %1700 = vector.extract_strided_slice %1664 {offsets = [0, 0], sizes = [2, 30], strides = [1, 1]} : vector<2x90xf32> to vector<2x30xf32>
    %1701 = arith.addf %1699, %1700 : vector<2x30xf32>
    %1702 = arith.negf %1701 : vector<2x30xf32>
    %1703 = math.exp %1702 : vector<2x30xf32>
    %cst_369 = arith.constant 1.000000e+00 : f32
    %1704 = vector.broadcast %cst_369 : f32 to vector<2x30xf32>
    %1705 = arith.addf %1704, %1703 : vector<2x30xf32>
    %1706 = arith.divf %1704, %1705 : vector<2x30xf32>
    %1707 = vector.extract_strided_slice %1695 {offsets = [0, 30], sizes = [2, 30], strides = [1, 1]} : vector<2x90xf32> to vector<2x30xf32>
    %1708 = vector.extract_strided_slice %1664 {offsets = [0, 30], sizes = [2, 30], strides = [1, 1]} : vector<2x90xf32> to vector<2x30xf32>
    %1709 = arith.addf %1707, %1708 : vector<2x30xf32>
    %1710 = arith.negf %1709 : vector<2x30xf32>
    %1711 = math.exp %1710 : vector<2x30xf32>
    %cst_370 = arith.constant 1.000000e+00 : f32
    %1712 = vector.broadcast %cst_370 : f32 to vector<2x30xf32>
    %1713 = arith.addf %1712, %1711 : vector<2x30xf32>
    %1714 = arith.divf %1712, %1713 : vector<2x30xf32>
    %1715 = vector.extract_strided_slice %1695 {offsets = [0, 60], sizes = [2, 30], strides = [1, 1]} : vector<2x90xf32> to vector<2x30xf32>
    %1716 = vector.extract_strided_slice %1664 {offsets = [0, 60], sizes = [2, 30], strides = [1, 1]} : vector<2x90xf32> to vector<2x30xf32>
    %1717 = arith.mulf %1706, %1716 : vector<2x30xf32>
    %1718 = arith.addf %1715, %1717 : vector<2x30xf32>
    %1719 = math.tanh %1718 : vector<2x30xf32>
    %cst_371 = arith.constant 1.000000e+00 : f32
    %1720 = vector.broadcast %cst_371 : f32 to vector<2x30xf32>
    %1721 = arith.subf %1720, %1714 : vector<2x30xf32>
    %1722 = arith.mulf %1721, %1719 : vector<2x30xf32>
    %1723 = arith.mulf %1714, %1661 : vector<2x30xf32>
    %1724 = arith.addf %1722, %1723 : vector<2x30xf32>
    %cst_372 = arith.constant dense<0.000000e+00> : vector<2x90xf32>
    %1725 = tpu.matmul %1724, %261, %cst_372 {dimension_numbers = #tpu.dot_dimension_numbers<[1], [0], [0], [1], [0, 0, 1, 1], [], []>} : vector<2x30xf32>, vector<30x90xf32>, vector<2x90xf32> -> vector<2x90xf32>
    %1726 = vector.broadcast %266 : vector<1x90xf32> to vector<2x90xf32>
    %1727 = arith.addf %1725, %1726 : vector<2x90xf32>
    %1728 = vector.extract_strided_slice %270 {offsets = [46, 0], sizes = [2, 90], strides = [1, 1]} : vector<60x90xf32> to vector<2x90xf32>
    %1729 = vector.extract_strided_slice %1728 {offsets = [0, 0], sizes = [2, 30], strides = [1, 1]} : vector<2x90xf32> to vector<2x30xf32>
    %1730 = vector.extract_strided_slice %1698 {offsets = [0, 0], sizes = [2, 30], strides = [1, 1]} : vector<2x90xf32> to vector<2x30xf32>
    %1731 = arith.addf %1729, %1730 : vector<2x30xf32>
    %1732 = arith.negf %1731 : vector<2x30xf32>
    %1733 = math.exp %1732 : vector<2x30xf32>
    %cst_373 = arith.constant 1.000000e+00 : f32
    %1734 = vector.broadcast %cst_373 : f32 to vector<2x30xf32>
    %1735 = arith.addf %1734, %1733 : vector<2x30xf32>
    %1736 = arith.divf %1734, %1735 : vector<2x30xf32>
    %1737 = vector.extract_strided_slice %1728 {offsets = [0, 30], sizes = [2, 30], strides = [1, 1]} : vector<2x90xf32> to vector<2x30xf32>
    %1738 = vector.extract_strided_slice %1698 {offsets = [0, 30], sizes = [2, 30], strides = [1, 1]} : vector<2x90xf32> to vector<2x30xf32>
    %1739 = arith.addf %1737, %1738 : vector<2x30xf32>
    %1740 = arith.negf %1739 : vector<2x30xf32>
    %1741 = math.exp %1740 : vector<2x30xf32>
    %cst_374 = arith.constant 1.000000e+00 : f32
    %1742 = vector.broadcast %cst_374 : f32 to vector<2x30xf32>
    %1743 = arith.addf %1742, %1741 : vector<2x30xf32>
    %1744 = arith.divf %1742, %1743 : vector<2x30xf32>
    %1745 = vector.extract_strided_slice %1728 {offsets = [0, 60], sizes = [2, 30], strides = [1, 1]} : vector<2x90xf32> to vector<2x30xf32>
    %1746 = vector.extract_strided_slice %1698 {offsets = [0, 60], sizes = [2, 30], strides = [1, 1]} : vector<2x90xf32> to vector<2x30xf32>
    %1747 = arith.mulf %1736, %1746 : vector<2x30xf32>
    %1748 = arith.addf %1745, %1747 : vector<2x30xf32>
    %1749 = math.tanh %1748 : vector<2x30xf32>
    %cst_375 = arith.constant 1.000000e+00 : f32
    %1750 = vector.broadcast %cst_375 : f32 to vector<2x30xf32>
    %1751 = arith.subf %1750, %1744 : vector<2x30xf32>
    %1752 = arith.mulf %1751, %1749 : vector<2x30xf32>
    %1753 = arith.mulf %1744, %1691 : vector<2x30xf32>
    %1754 = arith.addf %1752, %1753 : vector<2x30xf32>
    %cst_376 = arith.constant dense<0.000000e+00> : vector<2x180xf32>
    %1755 = tpu.matmul %1754, %260, %cst_376 {dimension_numbers = #tpu.dot_dimension_numbers<[1], [0], [0], [1], [0, 0, 1, 1], [], []>} : vector<2x30xf32>, vector<30x180xf32>, vector<2x180xf32> -> vector<2x180xf32>
    %1756 = vector.extract_strided_slice %1755 {offsets = [0, 0], sizes = [2, 90], strides = [1, 1]} : vector<2x180xf32> to vector<2x90xf32>
    %1757 = vector.broadcast %265 : vector<1x90xf32> to vector<2x90xf32>
    %1758 = arith.addf %1756, %1757 : vector<2x90xf32>
    %1759 = vector.extract_strided_slice %1755 {offsets = [0, 90], sizes = [2, 90], strides = [1, 1]} : vector<2x180xf32> to vector<2x90xf32>
    %1760 = vector.broadcast %264 : vector<1x90xf32> to vector<2x90xf32>
    %1761 = arith.addf %1759, %1760 : vector<2x90xf32>
    %1762 = vector.extract_strided_slice %1758 {offsets = [0, 0], sizes = [2, 30], strides = [1, 1]} : vector<2x90xf32> to vector<2x30xf32>
    %1763 = vector.extract_strided_slice %1727 {offsets = [0, 0], sizes = [2, 30], strides = [1, 1]} : vector<2x90xf32> to vector<2x30xf32>
    %1764 = arith.addf %1762, %1763 : vector<2x30xf32>
    %1765 = arith.negf %1764 : vector<2x30xf32>
    %1766 = math.exp %1765 : vector<2x30xf32>
    %cst_377 = arith.constant 1.000000e+00 : f32
    %1767 = vector.broadcast %cst_377 : f32 to vector<2x30xf32>
    %1768 = arith.addf %1767, %1766 : vector<2x30xf32>
    %1769 = arith.divf %1767, %1768 : vector<2x30xf32>
    %1770 = vector.extract_strided_slice %1758 {offsets = [0, 30], sizes = [2, 30], strides = [1, 1]} : vector<2x90xf32> to vector<2x30xf32>
    %1771 = vector.extract_strided_slice %1727 {offsets = [0, 30], sizes = [2, 30], strides = [1, 1]} : vector<2x90xf32> to vector<2x30xf32>
    %1772 = arith.addf %1770, %1771 : vector<2x30xf32>
    %1773 = arith.negf %1772 : vector<2x30xf32>
    %1774 = math.exp %1773 : vector<2x30xf32>
    %cst_378 = arith.constant 1.000000e+00 : f32
    %1775 = vector.broadcast %cst_378 : f32 to vector<2x30xf32>
    %1776 = arith.addf %1775, %1774 : vector<2x30xf32>
    %1777 = arith.divf %1775, %1776 : vector<2x30xf32>
    %1778 = vector.extract_strided_slice %1758 {offsets = [0, 60], sizes = [2, 30], strides = [1, 1]} : vector<2x90xf32> to vector<2x30xf32>
    %1779 = vector.extract_strided_slice %1727 {offsets = [0, 60], sizes = [2, 30], strides = [1, 1]} : vector<2x90xf32> to vector<2x30xf32>
    %1780 = arith.mulf %1769, %1779 : vector<2x30xf32>
    %1781 = arith.addf %1778, %1780 : vector<2x30xf32>
    %1782 = math.tanh %1781 : vector<2x30xf32>
    %cst_379 = arith.constant 1.000000e+00 : f32
    %1783 = vector.broadcast %cst_379 : f32 to vector<2x30xf32>
    %1784 = arith.subf %1783, %1777 : vector<2x30xf32>
    %1785 = arith.mulf %1784, %1782 : vector<2x30xf32>
    %1786 = arith.mulf %1777, %1724 : vector<2x30xf32>
    %1787 = arith.addf %1785, %1786 : vector<2x30xf32>
    %cst_380 = arith.constant dense<0.000000e+00> : vector<2x90xf32>
    %1788 = tpu.matmul %1787, %261, %cst_380 {dimension_numbers = #tpu.dot_dimension_numbers<[1], [0], [0], [1], [0, 0, 1, 1], [], []>} : vector<2x30xf32>, vector<30x90xf32>, vector<2x90xf32> -> vector<2x90xf32>
    %1789 = vector.broadcast %266 : vector<1x90xf32> to vector<2x90xf32>
    %1790 = arith.addf %1788, %1789 : vector<2x90xf32>
    %1791 = vector.extract_strided_slice %270 {offsets = [48, 0], sizes = [2, 90], strides = [1, 1]} : vector<60x90xf32> to vector<2x90xf32>
    %1792 = vector.extract_strided_slice %1791 {offsets = [0, 0], sizes = [2, 30], strides = [1, 1]} : vector<2x90xf32> to vector<2x30xf32>
    %1793 = vector.extract_strided_slice %1761 {offsets = [0, 0], sizes = [2, 30], strides = [1, 1]} : vector<2x90xf32> to vector<2x30xf32>
    %1794 = arith.addf %1792, %1793 : vector<2x30xf32>
    %1795 = arith.negf %1794 : vector<2x30xf32>
    %1796 = math.exp %1795 : vector<2x30xf32>
    %cst_381 = arith.constant 1.000000e+00 : f32
    %1797 = vector.broadcast %cst_381 : f32 to vector<2x30xf32>
    %1798 = arith.addf %1797, %1796 : vector<2x30xf32>
    %1799 = arith.divf %1797, %1798 : vector<2x30xf32>
    %1800 = vector.extract_strided_slice %1791 {offsets = [0, 30], sizes = [2, 30], strides = [1, 1]} : vector<2x90xf32> to vector<2x30xf32>
    %1801 = vector.extract_strided_slice %1761 {offsets = [0, 30], sizes = [2, 30], strides = [1, 1]} : vector<2x90xf32> to vector<2x30xf32>
    %1802 = arith.addf %1800, %1801 : vector<2x30xf32>
    %1803 = arith.negf %1802 : vector<2x30xf32>
    %1804 = math.exp %1803 : vector<2x30xf32>
    %cst_382 = arith.constant 1.000000e+00 : f32
    %1805 = vector.broadcast %cst_382 : f32 to vector<2x30xf32>
    %1806 = arith.addf %1805, %1804 : vector<2x30xf32>
    %1807 = arith.divf %1805, %1806 : vector<2x30xf32>
    %1808 = vector.extract_strided_slice %1791 {offsets = [0, 60], sizes = [2, 30], strides = [1, 1]} : vector<2x90xf32> to vector<2x30xf32>
    %1809 = vector.extract_strided_slice %1761 {offsets = [0, 60], sizes = [2, 30], strides = [1, 1]} : vector<2x90xf32> to vector<2x30xf32>
    %1810 = arith.mulf %1799, %1809 : vector<2x30xf32>
    %1811 = arith.addf %1808, %1810 : vector<2x30xf32>
    %1812 = math.tanh %1811 : vector<2x30xf32>
    %cst_383 = arith.constant 1.000000e+00 : f32
    %1813 = vector.broadcast %cst_383 : f32 to vector<2x30xf32>
    %1814 = arith.subf %1813, %1807 : vector<2x30xf32>
    %1815 = arith.mulf %1814, %1812 : vector<2x30xf32>
    %1816 = arith.mulf %1807, %1754 : vector<2x30xf32>
    %1817 = arith.addf %1815, %1816 : vector<2x30xf32>
    %cst_384 = arith.constant dense<0.000000e+00> : vector<2x180xf32>
    %1818 = tpu.matmul %1817, %260, %cst_384 {dimension_numbers = #tpu.dot_dimension_numbers<[1], [0], [0], [1], [0, 0, 1, 1], [], []>} : vector<2x30xf32>, vector<30x180xf32>, vector<2x180xf32> -> vector<2x180xf32>
    %1819 = vector.extract_strided_slice %1818 {offsets = [0, 0], sizes = [2, 90], strides = [1, 1]} : vector<2x180xf32> to vector<2x90xf32>
    %1820 = vector.broadcast %265 : vector<1x90xf32> to vector<2x90xf32>
    %1821 = arith.addf %1819, %1820 : vector<2x90xf32>
    %1822 = vector.extract_strided_slice %1818 {offsets = [0, 90], sizes = [2, 90], strides = [1, 1]} : vector<2x180xf32> to vector<2x90xf32>
    %1823 = vector.broadcast %264 : vector<1x90xf32> to vector<2x90xf32>
    %1824 = arith.addf %1822, %1823 : vector<2x90xf32>
    %1825 = vector.extract_strided_slice %1821 {offsets = [0, 0], sizes = [2, 30], strides = [1, 1]} : vector<2x90xf32> to vector<2x30xf32>
    %1826 = vector.extract_strided_slice %1790 {offsets = [0, 0], sizes = [2, 30], strides = [1, 1]} : vector<2x90xf32> to vector<2x30xf32>
    %1827 = arith.addf %1825, %1826 : vector<2x30xf32>
    %1828 = arith.negf %1827 : vector<2x30xf32>
    %1829 = math.exp %1828 : vector<2x30xf32>
    %cst_385 = arith.constant 1.000000e+00 : f32
    %1830 = vector.broadcast %cst_385 : f32 to vector<2x30xf32>
    %1831 = arith.addf %1830, %1829 : vector<2x30xf32>
    %1832 = arith.divf %1830, %1831 : vector<2x30xf32>
    %1833 = vector.extract_strided_slice %1821 {offsets = [0, 30], sizes = [2, 30], strides = [1, 1]} : vector<2x90xf32> to vector<2x30xf32>
    %1834 = vector.extract_strided_slice %1790 {offsets = [0, 30], sizes = [2, 30], strides = [1, 1]} : vector<2x90xf32> to vector<2x30xf32>
    %1835 = arith.addf %1833, %1834 : vector<2x30xf32>
    %1836 = arith.negf %1835 : vector<2x30xf32>
    %1837 = math.exp %1836 : vector<2x30xf32>
    %cst_386 = arith.constant 1.000000e+00 : f32
    %1838 = vector.broadcast %cst_386 : f32 to vector<2x30xf32>
    %1839 = arith.addf %1838, %1837 : vector<2x30xf32>
    %1840 = arith.divf %1838, %1839 : vector<2x30xf32>
    %1841 = vector.extract_strided_slice %1821 {offsets = [0, 60], sizes = [2, 30], strides = [1, 1]} : vector<2x90xf32> to vector<2x30xf32>
    %1842 = vector.extract_strided_slice %1790 {offsets = [0, 60], sizes = [2, 30], strides = [1, 1]} : vector<2x90xf32> to vector<2x30xf32>
    %1843 = arith.mulf %1832, %1842 : vector<2x30xf32>
    %1844 = arith.addf %1841, %1843 : vector<2x30xf32>
    %1845 = math.tanh %1844 : vector<2x30xf32>
    %cst_387 = arith.constant 1.000000e+00 : f32
    %1846 = vector.broadcast %cst_387 : f32 to vector<2x30xf32>
    %1847 = arith.subf %1846, %1840 : vector<2x30xf32>
    %1848 = arith.mulf %1847, %1845 : vector<2x30xf32>
    %1849 = arith.mulf %1840, %1787 : vector<2x30xf32>
    %1850 = arith.addf %1848, %1849 : vector<2x30xf32>
    %cst_388 = arith.constant dense<0.000000e+00> : vector<2x90xf32>
    %1851 = tpu.matmul %1850, %261, %cst_388 {dimension_numbers = #tpu.dot_dimension_numbers<[1], [0], [0], [1], [0, 0, 1, 1], [], []>} : vector<2x30xf32>, vector<30x90xf32>, vector<2x90xf32> -> vector<2x90xf32>
    %1852 = vector.broadcast %266 : vector<1x90xf32> to vector<2x90xf32>
    %1853 = arith.addf %1851, %1852 : vector<2x90xf32>
    %1854 = vector.extract_strided_slice %270 {offsets = [50, 0], sizes = [2, 90], strides = [1, 1]} : vector<60x90xf32> to vector<2x90xf32>
    %1855 = vector.extract_strided_slice %1854 {offsets = [0, 0], sizes = [2, 30], strides = [1, 1]} : vector<2x90xf32> to vector<2x30xf32>
    %1856 = vector.extract_strided_slice %1824 {offsets = [0, 0], sizes = [2, 30], strides = [1, 1]} : vector<2x90xf32> to vector<2x30xf32>
    %1857 = arith.addf %1855, %1856 : vector<2x30xf32>
    %1858 = arith.negf %1857 : vector<2x30xf32>
    %1859 = math.exp %1858 : vector<2x30xf32>
    %cst_389 = arith.constant 1.000000e+00 : f32
    %1860 = vector.broadcast %cst_389 : f32 to vector<2x30xf32>
    %1861 = arith.addf %1860, %1859 : vector<2x30xf32>
    %1862 = arith.divf %1860, %1861 : vector<2x30xf32>
    %1863 = vector.extract_strided_slice %1854 {offsets = [0, 30], sizes = [2, 30], strides = [1, 1]} : vector<2x90xf32> to vector<2x30xf32>
    %1864 = vector.extract_strided_slice %1824 {offsets = [0, 30], sizes = [2, 30], strides = [1, 1]} : vector<2x90xf32> to vector<2x30xf32>
    %1865 = arith.addf %1863, %1864 : vector<2x30xf32>
    %1866 = arith.negf %1865 : vector<2x30xf32>
    %1867 = math.exp %1866 : vector<2x30xf32>
    %cst_390 = arith.constant 1.000000e+00 : f32
    %1868 = vector.broadcast %cst_390 : f32 to vector<2x30xf32>
    %1869 = arith.addf %1868, %1867 : vector<2x30xf32>
    %1870 = arith.divf %1868, %1869 : vector<2x30xf32>
    %1871 = vector.extract_strided_slice %1854 {offsets = [0, 60], sizes = [2, 30], strides = [1, 1]} : vector<2x90xf32> to vector<2x30xf32>
    %1872 = vector.extract_strided_slice %1824 {offsets = [0, 60], sizes = [2, 30], strides = [1, 1]} : vector<2x90xf32> to vector<2x30xf32>
    %1873 = arith.mulf %1862, %1872 : vector<2x30xf32>
    %1874 = arith.addf %1871, %1873 : vector<2x30xf32>
    %1875 = math.tanh %1874 : vector<2x30xf32>
    %cst_391 = arith.constant 1.000000e+00 : f32
    %1876 = vector.broadcast %cst_391 : f32 to vector<2x30xf32>
    %1877 = arith.subf %1876, %1870 : vector<2x30xf32>
    %1878 = arith.mulf %1877, %1875 : vector<2x30xf32>
    %1879 = arith.mulf %1870, %1817 : vector<2x30xf32>
    %1880 = arith.addf %1878, %1879 : vector<2x30xf32>
    %cst_392 = arith.constant dense<0.000000e+00> : vector<2x180xf32>
    %1881 = tpu.matmul %1880, %260, %cst_392 {dimension_numbers = #tpu.dot_dimension_numbers<[1], [0], [0], [1], [0, 0, 1, 1], [], []>} : vector<2x30xf32>, vector<30x180xf32>, vector<2x180xf32> -> vector<2x180xf32>
    %1882 = vector.extract_strided_slice %1881 {offsets = [0, 0], sizes = [2, 90], strides = [1, 1]} : vector<2x180xf32> to vector<2x90xf32>
    %1883 = vector.broadcast %265 : vector<1x90xf32> to vector<2x90xf32>
    %1884 = arith.addf %1882, %1883 : vector<2x90xf32>
    %1885 = vector.extract_strided_slice %1881 {offsets = [0, 90], sizes = [2, 90], strides = [1, 1]} : vector<2x180xf32> to vector<2x90xf32>
    %1886 = vector.broadcast %264 : vector<1x90xf32> to vector<2x90xf32>
    %1887 = arith.addf %1885, %1886 : vector<2x90xf32>
    %1888 = vector.extract_strided_slice %1884 {offsets = [0, 0], sizes = [2, 30], strides = [1, 1]} : vector<2x90xf32> to vector<2x30xf32>
    %1889 = vector.extract_strided_slice %1853 {offsets = [0, 0], sizes = [2, 30], strides = [1, 1]} : vector<2x90xf32> to vector<2x30xf32>
    %1890 = arith.addf %1888, %1889 : vector<2x30xf32>
    %1891 = arith.negf %1890 : vector<2x30xf32>
    %1892 = math.exp %1891 : vector<2x30xf32>
    %cst_393 = arith.constant 1.000000e+00 : f32
    %1893 = vector.broadcast %cst_393 : f32 to vector<2x30xf32>
    %1894 = arith.addf %1893, %1892 : vector<2x30xf32>
    %1895 = arith.divf %1893, %1894 : vector<2x30xf32>
    %1896 = vector.extract_strided_slice %1884 {offsets = [0, 30], sizes = [2, 30], strides = [1, 1]} : vector<2x90xf32> to vector<2x30xf32>
    %1897 = vector.extract_strided_slice %1853 {offsets = [0, 30], sizes = [2, 30], strides = [1, 1]} : vector<2x90xf32> to vector<2x30xf32>
    %1898 = arith.addf %1896, %1897 : vector<2x30xf32>
    %1899 = arith.negf %1898 : vector<2x30xf32>
    %1900 = math.exp %1899 : vector<2x30xf32>
    %cst_394 = arith.constant 1.000000e+00 : f32
    %1901 = vector.broadcast %cst_394 : f32 to vector<2x30xf32>
    %1902 = arith.addf %1901, %1900 : vector<2x30xf32>
    %1903 = arith.divf %1901, %1902 : vector<2x30xf32>
    %1904 = vector.extract_strided_slice %1884 {offsets = [0, 60], sizes = [2, 30], strides = [1, 1]} : vector<2x90xf32> to vector<2x30xf32>
    %1905 = vector.extract_strided_slice %1853 {offsets = [0, 60], sizes = [2, 30], strides = [1, 1]} : vector<2x90xf32> to vector<2x30xf32>
    %1906 = arith.mulf %1895, %1905 : vector<2x30xf32>
    %1907 = arith.addf %1904, %1906 : vector<2x30xf32>
    %1908 = math.tanh %1907 : vector<2x30xf32>
    %cst_395 = arith.constant 1.000000e+00 : f32
    %1909 = vector.broadcast %cst_395 : f32 to vector<2x30xf32>
    %1910 = arith.subf %1909, %1903 : vector<2x30xf32>
    %1911 = arith.mulf %1910, %1908 : vector<2x30xf32>
    %1912 = arith.mulf %1903, %1850 : vector<2x30xf32>
    %1913 = arith.addf %1911, %1912 : vector<2x30xf32>
    %cst_396 = arith.constant dense<0.000000e+00> : vector<2x90xf32>
    %1914 = tpu.matmul %1913, %261, %cst_396 {dimension_numbers = #tpu.dot_dimension_numbers<[1], [0], [0], [1], [0, 0, 1, 1], [], []>} : vector<2x30xf32>, vector<30x90xf32>, vector<2x90xf32> -> vector<2x90xf32>
    %1915 = vector.broadcast %266 : vector<1x90xf32> to vector<2x90xf32>
    %1916 = arith.addf %1914, %1915 : vector<2x90xf32>
    %1917 = vector.extract_strided_slice %270 {offsets = [52, 0], sizes = [2, 90], strides = [1, 1]} : vector<60x90xf32> to vector<2x90xf32>
    %1918 = vector.extract_strided_slice %1917 {offsets = [0, 0], sizes = [2, 30], strides = [1, 1]} : vector<2x90xf32> to vector<2x30xf32>
    %1919 = vector.extract_strided_slice %1887 {offsets = [0, 0], sizes = [2, 30], strides = [1, 1]} : vector<2x90xf32> to vector<2x30xf32>
    %1920 = arith.addf %1918, %1919 : vector<2x30xf32>
    %1921 = arith.negf %1920 : vector<2x30xf32>
    %1922 = math.exp %1921 : vector<2x30xf32>
    %cst_397 = arith.constant 1.000000e+00 : f32
    %1923 = vector.broadcast %cst_397 : f32 to vector<2x30xf32>
    %1924 = arith.addf %1923, %1922 : vector<2x30xf32>
    %1925 = arith.divf %1923, %1924 : vector<2x30xf32>
    %1926 = vector.extract_strided_slice %1917 {offsets = [0, 30], sizes = [2, 30], strides = [1, 1]} : vector<2x90xf32> to vector<2x30xf32>
    %1927 = vector.extract_strided_slice %1887 {offsets = [0, 30], sizes = [2, 30], strides = [1, 1]} : vector<2x90xf32> to vector<2x30xf32>
    %1928 = arith.addf %1926, %1927 : vector<2x30xf32>
    %1929 = arith.negf %1928 : vector<2x30xf32>
    %1930 = math.exp %1929 : vector<2x30xf32>
    %cst_398 = arith.constant 1.000000e+00 : f32
    %1931 = vector.broadcast %cst_398 : f32 to vector<2x30xf32>
    %1932 = arith.addf %1931, %1930 : vector<2x30xf32>
    %1933 = arith.divf %1931, %1932 : vector<2x30xf32>
    %1934 = vector.extract_strided_slice %1917 {offsets = [0, 60], sizes = [2, 30], strides = [1, 1]} : vector<2x90xf32> to vector<2x30xf32>
    %1935 = vector.extract_strided_slice %1887 {offsets = [0, 60], sizes = [2, 30], strides = [1, 1]} : vector<2x90xf32> to vector<2x30xf32>
    %1936 = arith.mulf %1925, %1935 : vector<2x30xf32>
    %1937 = arith.addf %1934, %1936 : vector<2x30xf32>
    %1938 = math.tanh %1937 : vector<2x30xf32>
    %cst_399 = arith.constant 1.000000e+00 : f32
    %1939 = vector.broadcast %cst_399 : f32 to vector<2x30xf32>
    %1940 = arith.subf %1939, %1933 : vector<2x30xf32>
    %1941 = arith.mulf %1940, %1938 : vector<2x30xf32>
    %1942 = arith.mulf %1933, %1880 : vector<2x30xf32>
    %1943 = arith.addf %1941, %1942 : vector<2x30xf32>
    %cst_400 = arith.constant dense<0.000000e+00> : vector<2x180xf32>
    %1944 = tpu.matmul %1943, %260, %cst_400 {dimension_numbers = #tpu.dot_dimension_numbers<[1], [0], [0], [1], [0, 0, 1, 1], [], []>} : vector<2x30xf32>, vector<30x180xf32>, vector<2x180xf32> -> vector<2x180xf32>
    %1945 = vector.extract_strided_slice %1944 {offsets = [0, 0], sizes = [2, 90], strides = [1, 1]} : vector<2x180xf32> to vector<2x90xf32>
    %1946 = vector.broadcast %265 : vector<1x90xf32> to vector<2x90xf32>
    %1947 = arith.addf %1945, %1946 : vector<2x90xf32>
    %1948 = vector.extract_strided_slice %1944 {offsets = [0, 90], sizes = [2, 90], strides = [1, 1]} : vector<2x180xf32> to vector<2x90xf32>
    %1949 = vector.broadcast %264 : vector<1x90xf32> to vector<2x90xf32>
    %1950 = arith.addf %1948, %1949 : vector<2x90xf32>
    %1951 = vector.extract_strided_slice %1947 {offsets = [0, 0], sizes = [2, 30], strides = [1, 1]} : vector<2x90xf32> to vector<2x30xf32>
    %1952 = vector.extract_strided_slice %1916 {offsets = [0, 0], sizes = [2, 30], strides = [1, 1]} : vector<2x90xf32> to vector<2x30xf32>
    %1953 = arith.addf %1951, %1952 : vector<2x30xf32>
    %1954 = arith.negf %1953 : vector<2x30xf32>
    %1955 = math.exp %1954 : vector<2x30xf32>
    %cst_401 = arith.constant 1.000000e+00 : f32
    %1956 = vector.broadcast %cst_401 : f32 to vector<2x30xf32>
    %1957 = arith.addf %1956, %1955 : vector<2x30xf32>
    %1958 = arith.divf %1956, %1957 : vector<2x30xf32>
    %1959 = vector.extract_strided_slice %1947 {offsets = [0, 30], sizes = [2, 30], strides = [1, 1]} : vector<2x90xf32> to vector<2x30xf32>
    %1960 = vector.extract_strided_slice %1916 {offsets = [0, 30], sizes = [2, 30], strides = [1, 1]} : vector<2x90xf32> to vector<2x30xf32>
    %1961 = arith.addf %1959, %1960 : vector<2x30xf32>
    %1962 = arith.negf %1961 : vector<2x30xf32>
    %1963 = math.exp %1962 : vector<2x30xf32>
    %cst_402 = arith.constant 1.000000e+00 : f32
    %1964 = vector.broadcast %cst_402 : f32 to vector<2x30xf32>
    %1965 = arith.addf %1964, %1963 : vector<2x30xf32>
    %1966 = arith.divf %1964, %1965 : vector<2x30xf32>
    %1967 = vector.extract_strided_slice %1947 {offsets = [0, 60], sizes = [2, 30], strides = [1, 1]} : vector<2x90xf32> to vector<2x30xf32>
    %1968 = vector.extract_strided_slice %1916 {offsets = [0, 60], sizes = [2, 30], strides = [1, 1]} : vector<2x90xf32> to vector<2x30xf32>
    %1969 = arith.mulf %1958, %1968 : vector<2x30xf32>
    %1970 = arith.addf %1967, %1969 : vector<2x30xf32>
    %1971 = math.tanh %1970 : vector<2x30xf32>
    %cst_403 = arith.constant 1.000000e+00 : f32
    %1972 = vector.broadcast %cst_403 : f32 to vector<2x30xf32>
    %1973 = arith.subf %1972, %1966 : vector<2x30xf32>
    %1974 = arith.mulf %1973, %1971 : vector<2x30xf32>
    %1975 = arith.mulf %1966, %1913 : vector<2x30xf32>
    %1976 = arith.addf %1974, %1975 : vector<2x30xf32>
    %cst_404 = arith.constant dense<0.000000e+00> : vector<2x90xf32>
    %1977 = tpu.matmul %1976, %261, %cst_404 {dimension_numbers = #tpu.dot_dimension_numbers<[1], [0], [0], [1], [0, 0, 1, 1], [], []>} : vector<2x30xf32>, vector<30x90xf32>, vector<2x90xf32> -> vector<2x90xf32>
    %1978 = vector.broadcast %266 : vector<1x90xf32> to vector<2x90xf32>
    %1979 = arith.addf %1977, %1978 : vector<2x90xf32>
    %1980 = vector.extract_strided_slice %270 {offsets = [54, 0], sizes = [2, 90], strides = [1, 1]} : vector<60x90xf32> to vector<2x90xf32>
    %1981 = vector.extract_strided_slice %1980 {offsets = [0, 0], sizes = [2, 30], strides = [1, 1]} : vector<2x90xf32> to vector<2x30xf32>
    %1982 = vector.extract_strided_slice %1950 {offsets = [0, 0], sizes = [2, 30], strides = [1, 1]} : vector<2x90xf32> to vector<2x30xf32>
    %1983 = arith.addf %1981, %1982 : vector<2x30xf32>
    %1984 = arith.negf %1983 : vector<2x30xf32>
    %1985 = math.exp %1984 : vector<2x30xf32>
    %cst_405 = arith.constant 1.000000e+00 : f32
    %1986 = vector.broadcast %cst_405 : f32 to vector<2x30xf32>
    %1987 = arith.addf %1986, %1985 : vector<2x30xf32>
    %1988 = arith.divf %1986, %1987 : vector<2x30xf32>
    %1989 = vector.extract_strided_slice %1980 {offsets = [0, 30], sizes = [2, 30], strides = [1, 1]} : vector<2x90xf32> to vector<2x30xf32>
    %1990 = vector.extract_strided_slice %1950 {offsets = [0, 30], sizes = [2, 30], strides = [1, 1]} : vector<2x90xf32> to vector<2x30xf32>
    %1991 = arith.addf %1989, %1990 : vector<2x30xf32>
    %1992 = arith.negf %1991 : vector<2x30xf32>
    %1993 = math.exp %1992 : vector<2x30xf32>
    %cst_406 = arith.constant 1.000000e+00 : f32
    %1994 = vector.broadcast %cst_406 : f32 to vector<2x30xf32>
    %1995 = arith.addf %1994, %1993 : vector<2x30xf32>
    %1996 = arith.divf %1994, %1995 : vector<2x30xf32>
    %1997 = vector.extract_strided_slice %1980 {offsets = [0, 60], sizes = [2, 30], strides = [1, 1]} : vector<2x90xf32> to vector<2x30xf32>
    %1998 = vector.extract_strided_slice %1950 {offsets = [0, 60], sizes = [2, 30], strides = [1, 1]} : vector<2x90xf32> to vector<2x30xf32>
    %1999 = arith.mulf %1988, %1998 : vector<2x30xf32>
    %2000 = arith.addf %1997, %1999 : vector<2x30xf32>
    %2001 = math.tanh %2000 : vector<2x30xf32>
    %cst_407 = arith.constant 1.000000e+00 : f32
    %2002 = vector.broadcast %cst_407 : f32 to vector<2x30xf32>
    %2003 = arith.subf %2002, %1996 : vector<2x30xf32>
    %2004 = arith.mulf %2003, %2001 : vector<2x30xf32>
    %2005 = arith.mulf %1996, %1943 : vector<2x30xf32>
    %2006 = arith.addf %2004, %2005 : vector<2x30xf32>
    %cst_408 = arith.constant dense<0.000000e+00> : vector<2x180xf32>
    %2007 = tpu.matmul %2006, %260, %cst_408 {dimension_numbers = #tpu.dot_dimension_numbers<[1], [0], [0], [1], [0, 0, 1, 1], [], []>} : vector<2x30xf32>, vector<30x180xf32>, vector<2x180xf32> -> vector<2x180xf32>
    %2008 = vector.extract_strided_slice %2007 {offsets = [0, 0], sizes = [2, 90], strides = [1, 1]} : vector<2x180xf32> to vector<2x90xf32>
    %2009 = vector.broadcast %265 : vector<1x90xf32> to vector<2x90xf32>
    %2010 = arith.addf %2008, %2009 : vector<2x90xf32>
    %2011 = vector.extract_strided_slice %2007 {offsets = [0, 90], sizes = [2, 90], strides = [1, 1]} : vector<2x180xf32> to vector<2x90xf32>
    %2012 = vector.broadcast %264 : vector<1x90xf32> to vector<2x90xf32>
    %2013 = arith.addf %2011, %2012 : vector<2x90xf32>
    %2014 = vector.extract_strided_slice %2010 {offsets = [0, 0], sizes = [2, 30], strides = [1, 1]} : vector<2x90xf32> to vector<2x30xf32>
    %2015 = vector.extract_strided_slice %1979 {offsets = [0, 0], sizes = [2, 30], strides = [1, 1]} : vector<2x90xf32> to vector<2x30xf32>
    %2016 = arith.addf %2014, %2015 : vector<2x30xf32>
    %2017 = arith.negf %2016 : vector<2x30xf32>
    %2018 = math.exp %2017 : vector<2x30xf32>
    %cst_409 = arith.constant 1.000000e+00 : f32
    %2019 = vector.broadcast %cst_409 : f32 to vector<2x30xf32>
    %2020 = arith.addf %2019, %2018 : vector<2x30xf32>
    %2021 = arith.divf %2019, %2020 : vector<2x30xf32>
    %2022 = vector.extract_strided_slice %2010 {offsets = [0, 30], sizes = [2, 30], strides = [1, 1]} : vector<2x90xf32> to vector<2x30xf32>
    %2023 = vector.extract_strided_slice %1979 {offsets = [0, 30], sizes = [2, 30], strides = [1, 1]} : vector<2x90xf32> to vector<2x30xf32>
    %2024 = arith.addf %2022, %2023 : vector<2x30xf32>
    %2025 = arith.negf %2024 : vector<2x30xf32>
    %2026 = math.exp %2025 : vector<2x30xf32>
    %cst_410 = arith.constant 1.000000e+00 : f32
    %2027 = vector.broadcast %cst_410 : f32 to vector<2x30xf32>
    %2028 = arith.addf %2027, %2026 : vector<2x30xf32>
    %2029 = arith.divf %2027, %2028 : vector<2x30xf32>
    %2030 = vector.extract_strided_slice %2010 {offsets = [0, 60], sizes = [2, 30], strides = [1, 1]} : vector<2x90xf32> to vector<2x30xf32>
    %2031 = vector.extract_strided_slice %1979 {offsets = [0, 60], sizes = [2, 30], strides = [1, 1]} : vector<2x90xf32> to vector<2x30xf32>
    %2032 = arith.mulf %2021, %2031 : vector<2x30xf32>
    %2033 = arith.addf %2030, %2032 : vector<2x30xf32>
    %2034 = math.tanh %2033 : vector<2x30xf32>
    %cst_411 = arith.constant 1.000000e+00 : f32
    %2035 = vector.broadcast %cst_411 : f32 to vector<2x30xf32>
    %2036 = arith.subf %2035, %2029 : vector<2x30xf32>
    %2037 = arith.mulf %2036, %2034 : vector<2x30xf32>
    %2038 = arith.mulf %2029, %1976 : vector<2x30xf32>
    %2039 = arith.addf %2037, %2038 : vector<2x30xf32>
    %cst_412 = arith.constant dense<0.000000e+00> : vector<2x90xf32>
    %2040 = tpu.matmul %2039, %261, %cst_412 {dimension_numbers = #tpu.dot_dimension_numbers<[1], [0], [0], [1], [0, 0, 1, 1], [], []>} : vector<2x30xf32>, vector<30x90xf32>, vector<2x90xf32> -> vector<2x90xf32>
    %2041 = vector.broadcast %266 : vector<1x90xf32> to vector<2x90xf32>
    %2042 = arith.addf %2040, %2041 : vector<2x90xf32>
    %2043 = vector.extract_strided_slice %270 {offsets = [56, 0], sizes = [2, 90], strides = [1, 1]} : vector<60x90xf32> to vector<2x90xf32>
    %2044 = vector.extract_strided_slice %2043 {offsets = [0, 0], sizes = [2, 30], strides = [1, 1]} : vector<2x90xf32> to vector<2x30xf32>
    %2045 = vector.extract_strided_slice %2013 {offsets = [0, 0], sizes = [2, 30], strides = [1, 1]} : vector<2x90xf32> to vector<2x30xf32>
    %2046 = arith.addf %2044, %2045 : vector<2x30xf32>
    %2047 = arith.negf %2046 : vector<2x30xf32>
    %2048 = math.exp %2047 : vector<2x30xf32>
    %cst_413 = arith.constant 1.000000e+00 : f32
    %2049 = vector.broadcast %cst_413 : f32 to vector<2x30xf32>
    %2050 = arith.addf %2049, %2048 : vector<2x30xf32>
    %2051 = arith.divf %2049, %2050 : vector<2x30xf32>
    %2052 = vector.extract_strided_slice %2043 {offsets = [0, 30], sizes = [2, 30], strides = [1, 1]} : vector<2x90xf32> to vector<2x30xf32>
    %2053 = vector.extract_strided_slice %2013 {offsets = [0, 30], sizes = [2, 30], strides = [1, 1]} : vector<2x90xf32> to vector<2x30xf32>
    %2054 = arith.addf %2052, %2053 : vector<2x30xf32>
    %2055 = arith.negf %2054 : vector<2x30xf32>
    %2056 = math.exp %2055 : vector<2x30xf32>
    %cst_414 = arith.constant 1.000000e+00 : f32
    %2057 = vector.broadcast %cst_414 : f32 to vector<2x30xf32>
    %2058 = arith.addf %2057, %2056 : vector<2x30xf32>
    %2059 = arith.divf %2057, %2058 : vector<2x30xf32>
    %2060 = vector.extract_strided_slice %2043 {offsets = [0, 60], sizes = [2, 30], strides = [1, 1]} : vector<2x90xf32> to vector<2x30xf32>
    %2061 = vector.extract_strided_slice %2013 {offsets = [0, 60], sizes = [2, 30], strides = [1, 1]} : vector<2x90xf32> to vector<2x30xf32>
    %2062 = arith.mulf %2051, %2061 : vector<2x30xf32>
    %2063 = arith.addf %2060, %2062 : vector<2x30xf32>
    %2064 = math.tanh %2063 : vector<2x30xf32>
    %cst_415 = arith.constant 1.000000e+00 : f32
    %2065 = vector.broadcast %cst_415 : f32 to vector<2x30xf32>
    %2066 = arith.subf %2065, %2059 : vector<2x30xf32>
    %2067 = arith.mulf %2066, %2064 : vector<2x30xf32>
    %2068 = arith.mulf %2059, %2006 : vector<2x30xf32>
    %2069 = arith.addf %2067, %2068 : vector<2x30xf32>
    %cst_416 = arith.constant dense<0.000000e+00> : vector<2x180xf32>
    %2070 = tpu.matmul %2069, %260, %cst_416 {dimension_numbers = #tpu.dot_dimension_numbers<[1], [0], [0], [1], [0, 0, 1, 1], [], []>} : vector<2x30xf32>, vector<30x180xf32>, vector<2x180xf32> -> vector<2x180xf32>
    %2071 = vector.extract_strided_slice %2070 {offsets = [0, 0], sizes = [2, 90], strides = [1, 1]} : vector<2x180xf32> to vector<2x90xf32>
    %2072 = vector.broadcast %265 : vector<1x90xf32> to vector<2x90xf32>
    %2073 = arith.addf %2071, %2072 : vector<2x90xf32>
    %2074 = vector.extract_strided_slice %2070 {offsets = [0, 90], sizes = [2, 90], strides = [1, 1]} : vector<2x180xf32> to vector<2x90xf32>
    %2075 = vector.broadcast %264 : vector<1x90xf32> to vector<2x90xf32>
    %2076 = arith.addf %2074, %2075 : vector<2x90xf32>
    %2077 = vector.extract_strided_slice %2073 {offsets = [0, 0], sizes = [2, 30], strides = [1, 1]} : vector<2x90xf32> to vector<2x30xf32>
    %2078 = vector.extract_strided_slice %2042 {offsets = [0, 0], sizes = [2, 30], strides = [1, 1]} : vector<2x90xf32> to vector<2x30xf32>
    %2079 = arith.addf %2077, %2078 : vector<2x30xf32>
    %2080 = arith.negf %2079 : vector<2x30xf32>
    %2081 = math.exp %2080 : vector<2x30xf32>
    %cst_417 = arith.constant 1.000000e+00 : f32
    %2082 = vector.broadcast %cst_417 : f32 to vector<2x30xf32>
    %2083 = arith.addf %2082, %2081 : vector<2x30xf32>
    %2084 = arith.divf %2082, %2083 : vector<2x30xf32>
    %2085 = vector.extract_strided_slice %2073 {offsets = [0, 30], sizes = [2, 30], strides = [1, 1]} : vector<2x90xf32> to vector<2x30xf32>
    %2086 = vector.extract_strided_slice %2042 {offsets = [0, 30], sizes = [2, 30], strides = [1, 1]} : vector<2x90xf32> to vector<2x30xf32>
    %2087 = arith.addf %2085, %2086 : vector<2x30xf32>
    %2088 = arith.negf %2087 : vector<2x30xf32>
    %2089 = math.exp %2088 : vector<2x30xf32>
    %cst_418 = arith.constant 1.000000e+00 : f32
    %2090 = vector.broadcast %cst_418 : f32 to vector<2x30xf32>
    %2091 = arith.addf %2090, %2089 : vector<2x30xf32>
    %2092 = arith.divf %2090, %2091 : vector<2x30xf32>
    %2093 = vector.extract_strided_slice %2073 {offsets = [0, 60], sizes = [2, 30], strides = [1, 1]} : vector<2x90xf32> to vector<2x30xf32>
    %2094 = vector.extract_strided_slice %2042 {offsets = [0, 60], sizes = [2, 30], strides = [1, 1]} : vector<2x90xf32> to vector<2x30xf32>
    %2095 = arith.mulf %2084, %2094 : vector<2x30xf32>
    %2096 = arith.addf %2093, %2095 : vector<2x30xf32>
    %2097 = math.tanh %2096 : vector<2x30xf32>
    %cst_419 = arith.constant 1.000000e+00 : f32
    %2098 = vector.broadcast %cst_419 : f32 to vector<2x30xf32>
    %2099 = arith.subf %2098, %2092 : vector<2x30xf32>
    %2100 = arith.mulf %2099, %2097 : vector<2x30xf32>
    %2101 = arith.mulf %2092, %2039 : vector<2x30xf32>
    %2102 = arith.addf %2100, %2101 : vector<2x30xf32>
    %cst_420 = arith.constant dense<0.000000e+00> : vector<2x90xf32>
    %2103 = tpu.matmul %2102, %261, %cst_420 {dimension_numbers = #tpu.dot_dimension_numbers<[1], [0], [0], [1], [0, 0, 1, 1], [], []>} : vector<2x30xf32>, vector<30x90xf32>, vector<2x90xf32> -> vector<2x90xf32>
    %2104 = vector.broadcast %266 : vector<1x90xf32> to vector<2x90xf32>
    %2105 = arith.addf %2103, %2104 : vector<2x90xf32>
    %2106 = vector.extract_strided_slice %270 {offsets = [58, 0], sizes = [2, 90], strides = [1, 1]} : vector<60x90xf32> to vector<2x90xf32>
    %2107 = vector.extract_strided_slice %2106 {offsets = [0, 0], sizes = [2, 30], strides = [1, 1]} : vector<2x90xf32> to vector<2x30xf32>
    %2108 = vector.extract_strided_slice %2076 {offsets = [0, 0], sizes = [2, 30], strides = [1, 1]} : vector<2x90xf32> to vector<2x30xf32>
    %2109 = arith.addf %2107, %2108 : vector<2x30xf32>
    %2110 = arith.negf %2109 : vector<2x30xf32>
    %2111 = math.exp %2110 : vector<2x30xf32>
    %cst_421 = arith.constant 1.000000e+00 : f32
    %2112 = vector.broadcast %cst_421 : f32 to vector<2x30xf32>
    %2113 = arith.addf %2112, %2111 : vector<2x30xf32>
    %2114 = arith.divf %2112, %2113 : vector<2x30xf32>
    %2115 = vector.extract_strided_slice %2106 {offsets = [0, 30], sizes = [2, 30], strides = [1, 1]} : vector<2x90xf32> to vector<2x30xf32>
    %2116 = vector.extract_strided_slice %2076 {offsets = [0, 30], sizes = [2, 30], strides = [1, 1]} : vector<2x90xf32> to vector<2x30xf32>
    %2117 = arith.addf %2115, %2116 : vector<2x30xf32>
    %2118 = arith.negf %2117 : vector<2x30xf32>
    %2119 = math.exp %2118 : vector<2x30xf32>
    %cst_422 = arith.constant 1.000000e+00 : f32
    %2120 = vector.broadcast %cst_422 : f32 to vector<2x30xf32>
    %2121 = arith.addf %2120, %2119 : vector<2x30xf32>
    %2122 = arith.divf %2120, %2121 : vector<2x30xf32>
    %2123 = vector.extract_strided_slice %2106 {offsets = [0, 60], sizes = [2, 30], strides = [1, 1]} : vector<2x90xf32> to vector<2x30xf32>
    %2124 = vector.extract_strided_slice %2076 {offsets = [0, 60], sizes = [2, 30], strides = [1, 1]} : vector<2x90xf32> to vector<2x30xf32>
    %2125 = arith.mulf %2114, %2124 : vector<2x30xf32>
    %2126 = arith.addf %2123, %2125 : vector<2x30xf32>
    %2127 = math.tanh %2126 : vector<2x30xf32>
    %cst_423 = arith.constant 1.000000e+00 : f32
    %2128 = vector.broadcast %cst_423 : f32 to vector<2x30xf32>
    %2129 = arith.subf %2128, %2122 : vector<2x30xf32>
    %2130 = arith.mulf %2129, %2127 : vector<2x30xf32>
    %2131 = arith.mulf %2122, %2069 : vector<2x30xf32>
    %2132 = arith.addf %2130, %2131 : vector<2x30xf32>
    %cst_424 = arith.constant dense<0.000000e+00> : vector<2x180xf32>
    %2133 = tpu.matmul %2132, %260, %cst_424 {dimension_numbers = #tpu.dot_dimension_numbers<[1], [0], [0], [1], [0, 0, 1, 1], [], []>} : vector<2x30xf32>, vector<30x180xf32>, vector<2x180xf32> -> vector<2x180xf32>
    %2134 = vector.extract_strided_slice %2133 {offsets = [0, 0], sizes = [2, 90], strides = [1, 1]} : vector<2x180xf32> to vector<2x90xf32>
    %2135 = vector.broadcast %265 : vector<1x90xf32> to vector<2x90xf32>
    %2136 = arith.addf %2134, %2135 : vector<2x90xf32>
    %2137 = vector.extract_strided_slice %2136 {offsets = [0, 0], sizes = [2, 30], strides = [1, 1]} : vector<2x90xf32> to vector<2x30xf32>
    %2138 = vector.extract_strided_slice %2105 {offsets = [0, 0], sizes = [2, 30], strides = [1, 1]} : vector<2x90xf32> to vector<2x30xf32>
    %2139 = arith.addf %2137, %2138 : vector<2x30xf32>
    %2140 = arith.negf %2139 : vector<2x30xf32>
    %2141 = math.exp %2140 : vector<2x30xf32>
    %cst_425 = arith.constant 1.000000e+00 : f32
    %2142 = vector.broadcast %cst_425 : f32 to vector<2x30xf32>
    %2143 = arith.addf %2142, %2141 : vector<2x30xf32>
    %2144 = arith.divf %2142, %2143 : vector<2x30xf32>
    %2145 = vector.extract_strided_slice %2136 {offsets = [0, 30], sizes = [2, 30], strides = [1, 1]} : vector<2x90xf32> to vector<2x30xf32>
    %2146 = vector.extract_strided_slice %2105 {offsets = [0, 30], sizes = [2, 30], strides = [1, 1]} : vector<2x90xf32> to vector<2x30xf32>
    %2147 = arith.addf %2145, %2146 : vector<2x30xf32>
    %2148 = arith.negf %2147 : vector<2x30xf32>
    %2149 = math.exp %2148 : vector<2x30xf32>
    %cst_426 = arith.constant 1.000000e+00 : f32
    %2150 = vector.broadcast %cst_426 : f32 to vector<2x30xf32>
    %2151 = arith.addf %2150, %2149 : vector<2x30xf32>
    %2152 = arith.divf %2150, %2151 : vector<2x30xf32>
    %2153 = vector.extract_strided_slice %2136 {offsets = [0, 60], sizes = [2, 30], strides = [1, 1]} : vector<2x90xf32> to vector<2x30xf32>
    %2154 = vector.extract_strided_slice %2105 {offsets = [0, 60], sizes = [2, 30], strides = [1, 1]} : vector<2x90xf32> to vector<2x30xf32>
    %2155 = arith.mulf %2144, %2154 : vector<2x30xf32>
    %2156 = arith.addf %2153, %2155 : vector<2x30xf32>
    %2157 = math.tanh %2156 : vector<2x30xf32>
    %cst_427 = arith.constant 1.000000e+00 : f32
    %2158 = vector.broadcast %cst_427 : f32 to vector<2x30xf32>
    %2159 = arith.subf %2158, %2152 : vector<2x30xf32>
    %2160 = arith.mulf %2159, %2157 : vector<2x30xf32>
    %2161 = arith.mulf %2152, %2102 : vector<2x30xf32>
    %2162 = arith.addf %2160, %2161 : vector<2x30xf32>
    %c0_428 = arith.constant 0 : index
    %c324 = arith.constant 324 : index
    %2163 = vector.load %arg13[%c0_428, %c324] : memref<2x354xf32, #tpu.memory_space<vmem>>, vector<2x30xf32>
    tpu.vector_store %arg13[%c0_428, %c324], %2162 {strides = array<i32>} : memref<2x354xf32, #tpu.memory_space<vmem>>, vector<2x30xf32>,
    %c4 = arith.constant 4 : index
    %c0_429 = arith.constant 0 : index
    %2164 = vector.load %arg9[%c4, %c0_429] : memref<9x354xf32, #tpu.memory_space<vmem>>, vector<1x354xf32>
    %c5 = arith.constant 5 : index
    %c0_430 = arith.constant 0 : index
    %2165 = vector.load %arg9[%c5, %c0_430] : memref<9x354xf32, #tpu.memory_space<vmem>>, vector<1x354xf32>
    %c0_431 = arith.constant 0 : index
    %c0_432 = arith.constant 0 : index
    %2166 = vector.load %arg13[%c0_431, %c0_432] : memref<2x354xf32, #tpu.memory_space<vmem>>, vector<2x354xf32>
    %2167 = vector.broadcast %2164 : vector<1x354xf32> to vector<2x354xf32>
    %2168 = arith.mulf %2166, %2167 : vector<2x354xf32>
    %2169 = vector.broadcast %2165 : vector<1x354xf32> to vector<2x354xf32>
    %2170 = arith.addf %2168, %2169 : vector<2x354xf32>
    %c6_433 = arith.constant 6 : index
    %c0_434 = arith.constant 0 : index
    %2171 = vector.load %arg9[%c6_433, %c0_434] : memref<9x354xf32, #tpu.memory_space<vmem>>, vector<1x32xf32>
    %c7 = arith.constant 7 : index
    %c0_435 = arith.constant 0 : index
    %2172 = vector.load %arg9[%c7, %c0_435] : memref<9x354xf32, #tpu.memory_space<vmem>>, vector<1x32xf32>
    %c8 = arith.constant 8 : index
    %c0_436 = arith.constant 0 : index
    %2173 = vector.load %arg9[%c8, %c0_436] : memref<9x354xf32, #tpu.memory_space<vmem>>, vector<1x1xf32>
    %c0_437 = arith.constant 0 : index
    %c0_438 = arith.constant 0 : index
    %2174 = vector.load %arg8[%c0_437, %c0_438] : memref<354x32xf32, #tpu.memory_space<vmem>>, vector<354x32xf32>
    %cst_439 = arith.constant dense<0.000000e+00> : vector<2x32xf32>
    %2175 = tpu.matmul %2170, %2174, %cst_439 {dimension_numbers = #tpu.dot_dimension_numbers<[1], [0], [0], [1], [0, 0, 1, 1], [], []>} : vector<2x354xf32>, vector<354x32xf32>, vector<2x32xf32> -> vector<2x32xf32>
    %2176 = vector.broadcast %2171 : vector<1x32xf32> to vector<2x32xf32>
    %2177 = arith.addf %2175, %2176 : vector<2x32xf32>
    %cst_440 = arith.constant 0.000000e+00 : f32
    %2178 = vector.broadcast %cst_440 : f32 to vector<2x32xf32>
    %2179 = arith.maximumf %2177, %2178 : vector<2x32xf32>
    %2180 = vector.broadcast %2172 : vector<1x32xf32> to vector<2x32xf32>
    %2181 = arith.mulf %2179, %2180 : vector<2x32xf32>
    %cst_441 = arith.constant dense<0.000000e+00> : vector<2xf32>
    %2182 = vector.multi_reduction <add>, %2181, %cst_441 [1] : vector<2x32xf32> to vector<2xf32>
    %2183 = vector.shape_cast %2182 : vector<2xf32> to vector<2x1xf32>
    %2184 = vector.broadcast %2173 : vector<1x1xf32> to vector<2x1xf32>
    %2185 = arith.addf %2183, %2184 : vector<2x1xf32>
    %c0_442 = arith.constant 0 : index
    %c0_443 = arith.constant 0 : index
    %2186 = vector.load %arg10[%c0_442, %c0_443] : memref<2x1xf32, #tpu.memory_space<vmem>>, vector<2x1xf32>
    tpu.vector_store %arg10[%c0_442, %c0_443], %2185 {strides = array<i32>} : memref<2x1xf32, #tpu.memory_space<vmem>>, vector<2x1xf32>,
    return
  }
  func.func @transform_0(%arg0: i32) -> (i32, i32) {
    %c0_i32 = arith.constant 0 : i32
    %c0_i32_0 = arith.constant 0 : i32
    %c0_i32_1 = arith.constant 0 : i32
    return %c0_i32, %c0_i32_0 : i32, i32
  }
  func.func @transform_1(%arg0: i32) -> (i32, i32) {
    %c0_i32 = arith.constant 0 : i32
    %c0_i32_0 = arith.constant 0 : i32
    %c0_i32_1 = arith.constant 0 : i32
    return %c0_i32, %c0_i32_0 : i32, i32
  }
  func.func @transform_2(%arg0: i32) -> (i32, i32, i32) {
    %c0_i32 = arith.constant 0 : i32
    %c0_i32_0 = arith.constant 0 : i32
    %c0_i32_1 = arith.constant 0 : i32
    %c0_i32_2 = arith.constant 0 : i32
    return %c0_i32, %c0_i32_0, %c0_i32_1 : i32, i32, i32
  }
  func.func @transform_3(%arg0: i32) -> (i32, i32, i32) {
    %c0_i32 = arith.constant 0 : i32
    %c0_i32_0 = arith.constant 0 : i32
    %c0_i32_1 = arith.constant 0 : i32
    %c0_i32_2 = arith.constant 0 : i32
    return %c0_i32, %c0_i32_0, %c0_i32_1 : i32, i32, i32
  }
  func.func @transform_4(%arg0: i32) -> (i32, i32) {
    %c0_i32 = arith.constant 0 : i32
    %c0_i32_0 = arith.constant 0 : i32
    %c0_i32_1 = arith.constant 0 : i32
    return %c0_i32, %c0_i32_0 : i32, i32
  }
  func.func @transform_5(%arg0: i32) -> (i32, i32) {
    %c0_i32 = arith.constant 0 : i32
    %c0_i32_0 = arith.constant 0 : i32
    %c0_i32_1 = arith.constant 0 : i32
    return %c0_i32, %c0_i32_0 : i32, i32
  }
  func.func @transform_6(%arg0: i32) -> (i32, i32) {
    %c0_i32 = arith.constant 0 : i32
    %c0_i32_0 = arith.constant 0 : i32
    %c0_i32_1 = arith.constant 0 : i32
    return %c0_i32, %c0_i32_0 : i32, i32
  }
  func.func @transform_7(%arg0: i32) -> (i32, i32) {
    %c0_i32 = arith.constant 0 : i32
    %c0_i32_0 = arith.constant 0 : i32
    %c0_i32_1 = arith.constant 0 : i32
    return %c0_i32, %c0_i32_0 : i32, i32
  }
  func.func @transform_8(%arg0: i32) -> (i32, i32) {
    %c0_i32 = arith.constant 0 : i32
    %c0_i32_0 = arith.constant 0 : i32
    %c0_i32_1 = arith.constant 0 : i32
    return %c0_i32, %c0_i32_0 : i32, i32
  }
  func.func @transform_9(%arg0: i32) -> (i32, i32) {
    %c0_i32 = arith.constant 0 : i32
    %c0_i32_0 = arith.constant 0 : i32
    %c0_i32_1 = arith.constant 0 : i32
    return %c0_i32, %c0_i32_0 : i32, i32
  }
}

</mosaic_0001>

<llo_original>
// kernel: squeeze.4
$region0: #{squeeze.4}
  %s0 = inlined_call_operand.vmem [shape: f32[2,1,9,30], index: 0, kind: input, shape index: {}]
  %s1 = inlined_call_operand.vmem [shape: f32[2,9,3,10], index: 1, kind: output, shape index: {}]
  $region1: #{squeeze.4} parent=0
    #allocation0 [shape = 'u8[73728]{0}', space=vmem, size = 0x12000, scoped, tag = 'scoped mem for output reshape']
    #allocation1 [shape = 'u8[36864]{0}', space=vmem, size = 0x9000, scoped, tag = 'scoped mem for input reshape']
    %s3 = ssub.s32 4, 1
    %s4 = scalar_lea.vmem %s0, 16
    %v5 = vld [vmem:[%s4] sm:%s3]
    %s6 = scalar_lea.vmem [#allocation1], 64
    %7 = vst [vmem:[%s6] sm:%s3] %v5
    %s8 = scalar_lea.vmem %s0, 14
    %v9 = vld [vmem:[%s8] sm:%s3]
    %s10 = scalar_lea.vmem [#allocation1], 56
    %11 = vst [vmem:[%s10] sm:%s3] %v9
    %s12 = scalar_lea.vmem %s0, 12
    %v13 = vld [vmem:[%s12] sm:%s3]
    %s14 = scalar_lea.vmem [#allocation1], 48
    %15 = vst [vmem:[%s14] sm:%s3] %v13
    %s16 = scalar_lea.vmem %s0, 10
    %v17 = vld [vmem:[%s16] sm:%s3]
    %s18 = scalar_lea.vmem [#allocation1], 40
    %19 = vst [vmem:[%s18] sm:%s3] %v17
    %s20 = scalar_lea.vmem %s0, 8
    %v21 = vld [vmem:[%s20] sm:%s3]
    %s22 = scalar_lea.vmem [#allocation1], 32
    %23 = vst [vmem:[%s22] sm:%s3] %v21
    %s24 = scalar_lea.vmem %s0, 6
    %v25 = vld [vmem:[%s24] sm:%s3]
    %s26 = scalar_lea.vmem [#allocation1], 24
    %27 = vst [vmem:[%s26] sm:%s3] %v25
    %s28 = scalar_lea.vmem %s0, 4
    %v29 = vld [vmem:[%s28] sm:%s3]
    %s30 = scalar_lea.vmem [#allocation1], 16
    %31 = vst [vmem:[%s30] sm:%s3] %v29
    %s32 = scalar_lea.vmem %s0, 2
    %v33 = vld [vmem:[%s32] sm:%s3]
    %s34 = scalar_lea.vmem [#allocation1], 8
    %35 = vst [vmem:[%s34] sm:%s3] %v33
    %v36 = vld [vmem:[%s0] sm:%s3]
    %37 = vst [vmem:[#allocation1] sm:%s3] %v36
    %v38 = vld [vmem:[#allocation1] sm:$0x3]
    %vm39 = vcmask 80896
    %40 = vst.msk [vmem:[#allocation0] ss:$8 sm:$0x3] %vm39, %v38
    %s41 = scalar_lea.vmem [#allocation1], 8
    %v42 = vld [vmem:[%s41] sm:$0x3]
    %vm43 = vcmask 80896
    %s44 = scalar_lea.vmem [#allocation0], 16
    %45 = vst.msk [vmem:[%s44] ss:$8 sm:$0x3] %vm43, %v42
    %s46 = scalar_lea.vmem [#allocation1], 16
    %v47 = vld [vmem:[%s46] sm:$0x3]
    %vm48 = vcmask 80896
    %s49 = scalar_lea.vmem [#allocation0], 32
    %50 = vst.msk [vmem:[%s49] ss:$8 sm:$0x3] %vm48, %v47
    %s51 = scalar_lea.vmem [#allocation1], 24
    %v52 = vld [vmem:[%s51] sm:$0x3]
    %vm53 = vcmask 80896
    %s54 = scalar_lea.vmem [#allocation0], 48
    %55 = vst.msk [vmem:[%s54] ss:$8 sm:$0x3] %vm53, %v52
    %s56 = scalar_lea.vmem [#allocation1], 32
    %v57 = vld [vmem:[%s56] sm:$0x3]
    %vm58 = vcmask 80896
    %s59 = scalar_lea.vmem [#allocation0], 64
    %60 = vst.msk [vmem:[%s59] ss:$8 sm:$0x3] %vm58, %v57
    %s61 = scalar_lea.vmem [#allocation1], 40
    %v62 = vld [vmem:[%s61] sm:$0x3]
    %vm63 = vcmask 80896
    %s64 = scalar_lea.vmem [#allocation0], 80
    %65 = vst.msk [vmem:[%s64] ss:$8 sm:$0x3] %vm63, %v62
    %s66 = scalar_lea.vmem [#allocation1], 48
    %v67 = vld [vmem:[%s66] sm:$0x3]
    %vm68 = vcmask 80896
    %s69 = scalar_lea.vmem [#allocation0], 96
    %70 = vst.msk [vmem:[%s69] ss:$8 sm:$0x3] %vm68, %v67
    %s71 = scalar_lea.vmem [#allocation1], 56
    %v72 = vld [vmem:[%s71] sm:$0x3]
    %vm73 = vcmask 80896
    %s74 = scalar_lea.vmem [#allocation0], 112
    %75 = vst.msk [vmem:[%s74] ss:$8 sm:$0x3] %vm73, %v72
    %s76 = scalar_lea.vmem [#allocation1], 64
    %v77 = vld [vmem:[%s76] sm:$0x3]
    %vm78 = vcmask 80896
    %s79 = scalar_lea.vmem [#allocation0], 128
    %80 = vst.msk [vmem:[%s79] ss:$8 sm:$0x3] %vm78, %v77
    %v81 = vld.sshfl [vmem:[#allocation1] sm:$0xff pattern:$0x99999810]
    %s82 = scalar_lea.vmem [#allocation1], 16
    %v83 = vld.sshfl [vmem:[%s82] sm:$0xff pattern:$0x98100000]
    %vm84 = vcmask 1047556
    %v85 = vsel %vm84, %v83, %v81
    %86 = vrot.lane.b32.xlu0 %v85, 118
    %v87 = vpop.permute.xlu0 %86
    %vm88 = vcmask 80896
    %s89 = scalar_lea.vmem [#allocation0], 1
    %90 = vst.msk [vmem:[%s89] ss:$8 sm:$0xf] %vm88, %v87
    %s91 = scalar_lea.vmem [#allocation0], 1
    %92 = vst.msk [vmem:[%s91] ss:$8 sm:$0xf0] %vm88, %v87
    %s93 = scalar_lea.vmem [#allocation1], 32
    %v94 = vld.sshfl [vmem:[%s93] sm:$0xff pattern:$0x99999810]
    %s95 = scalar_lea.vmem [#allocation1], 48
    %v96 = vld.sshfl [vmem:[%s95] sm:$0xff pattern:$0x98100000]
    %vm97 = vcmask 1047556
    %v98 = vsel %vm97, %v96, %v94
    %99 = vrot.lane.b32.xlu0 %v98, 118
    %v100 = vpop.permute.xlu0 %99
    %vm101 = vcmask 80896
    %s102 = scalar_lea.vmem [#allocation0], 65
    %103 = vst.msk [vmem:[%s102] ss:$8 sm:$0xf] %vm101, %v100
    %s104 = scalar_lea.vmem [#allocation0], 65
    %105 = vst.msk [vmem:[%s104] ss:$8 sm:$0xf0] %vm101, %v100
    %s106 = scalar_lea.vmem [#allocation1], 64
    %v107 = vld [vmem:[%s106] sm:$0x3]
    %108 = vrot.lane.b32.xlu0 %v107, 118
    %v109 = vpop.permute.xlu0 %108
    %vm110 = vcmask 80896
    %s111 = scalar_lea.vmem [#allocation0], 129
    %112 = vst.msk [vmem:[%s111] ss:$8 sm:$0x3] %vm110, %v109
    %v113 = vld.sshfl [vmem:[#allocation1] sm:$0xff pattern:$0x99999810]
    %s114 = scalar_lea.vmem [#allocation1], 16
    %v115 = vld.sshfl [vmem:[%s114] sm:$0xff pattern:$0x98100000]
    %vm116 = vcmask 1047556
    %v117 = vsel %vm116, %v115, %v113
    %118 = vrot.lane.b32.xlu0 %v117, 108
    %v119 = vpop.permute.xlu0 %118
    %vm120 = vcmask 80896
    %s121 = scalar_lea.vmem [#allocation0], 2
    %122 = vst.msk [vmem:[%s121] ss:$8 sm:$0xf] %vm120, %v119
    %s123 = scalar_lea.vmem [#allocation0], 2
    %124 = vst.msk [vmem:[%s123] ss:$8 sm:$0xf0] %vm120, %v119
    %s125 = scalar_lea.vmem [#allocation1], 32
    %v126 = vld.sshfl [vmem:[%s125] sm:$0xff pattern:$0x99999810]
    %s127 = scalar_lea.vmem [#allocation1], 48
    %v128 = vld.sshfl [vmem:[%s127] sm:$0xff pattern:$0x98100000]
    %vm129 = vcmask 1047556
    %v130 = vsel %vm129, %v128, %v126
    %131 = vrot.lane.b32.xlu0 %v130, 108
    %v132 = vpop.permute.xlu0 %131
    %vm133 = vcmask 80896
    %s134 = scalar_lea.vmem [#allocation0], 66
    %135 = vst.msk [vmem:[%s134] ss:$8 sm:$0xf] %vm133, %v132
    %s136 = scalar_lea.vmem [#allocation0], 66
    %137 = vst.msk [vmem:[%s136] ss:$8 sm:$0xf0] %vm133, %v132
    %s138 = scalar_lea.vmem [#allocation1], 64
    %v139 = vld [vmem:[%s138] sm:$0x3]
    %140 = vrot.lane.b32.xlu0 %v139, 108
    %v141 = vpop.permute.xlu0 %140
    %vm142 = vcmask 80896
    %s143 = scalar_lea.vmem [#allocation0], 130
    %144 = vst.msk [vmem:[%s143] ss:$8 sm:$0x3] %vm142, %v141
    %s146 = ssub.s32 16, 1
    %v147 = vld [vmem:[#allocation0] sm:%s146]
    %s149 = ssub.s32 16, 1
    %150 = vst [vmem:[%s1] sm:%s149] %v147
    %s151 = scalar_lea.vmem [#allocation0], 8
    %v152 = vld [vmem:[%s151] sm:%s146]
    %s154 = ssub.s32 16, 1
    %s155 = scalar_lea.vmem %s1, 4
    %156 = vst [vmem:[%s155] sm:%s154] %v152
    %s157 = scalar_lea.vmem [#allocation0], 16
    %v158 = vld [vmem:[%s157] sm:%s146]
    %s160 = ssub.s32 16, 1
    %s161 = scalar_lea.vmem %s1, 8
    %162 = vst [vmem:[%s161] sm:%s160] %v158
    %s163 = scalar_lea.vmem [#allocation0], 24
    %v164 = vld [vmem:[%s163] sm:%s146]
    %s166 = ssub.s32 16, 1
    %s167 = scalar_lea.vmem %s1, 12
    %168 = vst [vmem:[%s167] sm:%s166] %v164
    %s169 = scalar_lea.vmem [#allocation0], 32
    %v170 = vld [vmem:[%s169] sm:%s146]
    %s172 = ssub.s32 16, 1
    %s173 = scalar_lea.vmem %s1, 16
    %174 = vst [vmem:[%s173] sm:%s172] %v170
    %s175 = scalar_lea.vmem [#allocation0], 40
    %v176 = vld [vmem:[%s175] sm:%s146]
    %s178 = ssub.s32 16, 1
    %s179 = scalar_lea.vmem %s1, 20
    %180 = vst [vmem:[%s179] sm:%s178] %v176
    %s181 = scalar_lea.vmem [#allocation0], 48
    %v182 = vld [vmem:[%s181] sm:%s146]
    %s184 = ssub.s32 16, 1
    %s185 = scalar_lea.vmem %s1, 24
    %186 = vst [vmem:[%s185] sm:%s184] %v182
    %s187 = scalar_lea.vmem [#allocation0], 56
    %v188 = vld [vmem:[%s187] sm:%s146]
    %s190 = ssub.s32 16, 1
    %s191 = scalar_lea.vmem %s1, 28
    %192 = vst [vmem:[%s191] sm:%s190] %v188
    %s193 = scalar_lea.vmem [#allocation0], 64
    %v194 = vld [vmem:[%s193] sm:%s146]
    %s196 = ssub.s32 16, 1
    %s197 = scalar_lea.vmem %s1, 32
    %198 = vst [vmem:[%s197] sm:%s196] %v194
    %s199 = scalar_lea.vmem [#allocation0], 72
    %v200 = vld [vmem:[%s199] sm:%s146]
    %s202 = ssub.s32 16, 1
    %s203 = scalar_lea.vmem %s1, 36
    %204 = vst [vmem:[%s203] sm:%s202] %v200
    %s205 = scalar_lea.vmem [#allocation0], 80
    %v206 = vld [vmem:[%s205] sm:%s146]
    %s208 = ssub.s32 16, 1
    %s209 = scalar_lea.vmem %s1, 40
    %210 = vst [vmem:[%s209] sm:%s208] %v206
    %s211 = scalar_lea.vmem [#allocation0], 88
    %v212 = vld [vmem:[%s211] sm:%s146]
    %s214 = ssub.s32 16, 1
    %s215 = scalar_lea.vmem %s1, 44
    %216 = vst [vmem:[%s215] sm:%s214] %v212
    %s217 = scalar_lea.vmem [#allocation0], 96
    %v218 = vld [vmem:[%s217] sm:%s146]
    %s220 = ssub.s32 16, 1
    %s221 = scalar_lea.vmem %s1, 48
    %222 = vst [vmem:[%s221] sm:%s220] %v218
    %s223 = scalar_lea.vmem [#allocation0], 104
    %v224 = vld [vmem:[%s223] sm:%s146]
    %s226 = ssub.s32 16, 1
    %s227 = scalar_lea.vmem %s1, 52
    %228 = vst [vmem:[%s227] sm:%s226] %v224
    %s229 = scalar_lea.vmem [#allocation0], 112
    %v230 = vld [vmem:[%s229] sm:%s146]
    %s232 = ssub.s32 16, 1
    %s233 = scalar_lea.vmem %s1, 56
    %234 = vst [vmem:[%s233] sm:%s232] %v230
    %s235 = scalar_lea.vmem [#allocation0], 120
    %v236 = vld [vmem:[%s235] sm:%s146]
    %s238 = ssub.s32 16, 1
    %s239 = scalar_lea.vmem %s1, 60
    %240 = vst [vmem:[%s239] sm:%s238] %v236
    %s241 = scalar_lea.vmem [#allocation0], 128
    %v242 = vld [vmem:[%s241] sm:%s146]
    %s244 = ssub.s32 16, 1
    %s245 = scalar_lea.vmem %s1, 64
    %246 = vst [vmem:[%s245] sm:%s244] %v242
    %s247 = scalar_lea.vmem [#allocation0], 136
    %v248 = vld [vmem:[%s247] sm:%s146]
    %s250 = ssub.s32 16, 1
    %s251 = scalar_lea.vmem %s1, 68
    %252 = vst [vmem:[%s251] sm:%s250] %v248

// kernel: alphanet_forward.1
$region0: #{alphanet_forward.1}
  #allocation0 [shape = 'u32[]', space=smem, size = 0x4, offset = 0x4, fixed_abs, tag = 'smem constant byte address 0x4 - core index']
  #allocation1 [shape = 'u32[72,128]{1,0:T(1,128)}', space=vmem, size = 0x9000, scoped, tag = 'internal scratch']
  #allocation2 [shape = 'f32[30,54]{1,0:T(8,128)}', space=vmem, size = 0x4000, scoped, tag = 'scratch operand']
  #allocation3 [shape = 'f32[10,54]{1,0:T(8,128)}', space=vmem, size = 0x2000, scoped, tag = 'scratch operand']
  #allocation4 [shape = 'f32[2,354]{1,0:T(2,128)}', space=vmem, size = 0xc00, scoped, tag = 'scratch operand']
  %s0 = inlined_call_operand.vmem [shape: f32[30,54], index: 0, kind: input, shape index: {}]
  %s1 = inlined_call_operand.vmem [shape: f32[60,9], index: 1, kind: input, shape index: {}]
  %s2 = inlined_call_operand.vmem [shape: f32[2,3,9], index: 2, kind: input, shape index: {}]
  %s3 = inlined_call_operand.vmem [shape: f32[2,10,9], index: 3, kind: input, shape index: {}]
  %s4 = inlined_call_operand.vmem [shape: f32[26,30], index: 4, kind: input, shape index: {}]
  %s5 = inlined_call_operand.vmem [shape: f32[30,13], index: 5, kind: input, shape index: {}]
  %s6 = inlined_call_operand.vmem [shape: f32[88,180], index: 6, kind: input, shape index: {}]
  %s7 = inlined_call_operand.vmem [shape: f32[354,32], index: 7, kind: input, shape index: {}]
  %s8 = inlined_call_operand.vmem [shape: f32[9,354], index: 8, kind: input, shape index: {}]
  %s9 = inlined_call_operand.vmem [shape: f32[2,1], index: 9, kind: output, shape index: {}]
  %s10 = sld [smem:[#allocation0]]
  $region46: #{alphanet_forward.1} parent=0
    _
  %s12 = ssub.s32 1, %s10
  %s13 = scalar_select 0, %s12, %s10
  // Predicated region
  $region2: #{alphanet_forward.1} parent=0 // pred_check
    _
  $region3: #{alphanet_forward.1} parent=0 // pred_check_branch
    %15 = sbr.rel (0) target = $region5
  $region4: #{alphanet_forward.1} parent=0 // pred_region
    _
  $region5: #{alphanet_forward.1} parent=0 // pred_fallthru
    _
  // Predicated region
  $region6: #{alphanet_forward.1} parent=0 // pred_check
    _
  $region7: #{alphanet_forward.1} parent=0 // pred_check_branch
    %17 = sbr.rel (0) target = $region9
  $region8: #{alphanet_forward.1} parent=0 // pred_region
    _
  $region9: #{alphanet_forward.1} parent=0 // pred_fallthru
    _
  // Predicated region
  $region10: #{alphanet_forward.1} parent=0 // pred_check
    _
  $region11: #{alphanet_forward.1} parent=0 // pred_check_branch
    %19 = sbr.rel (0) target = $region13
  $region12: #{alphanet_forward.1} parent=0 // pred_region
    _
  $region13: #{alphanet_forward.1} parent=0 // pred_fallthru
    _
  // Predicated region
  $region14: #{alphanet_forward.1} parent=0 // pred_check
    _
  $region15: #{alphanet_forward.1} parent=0 // pred_check_branch
    %21 = sbr.rel (0) target = $region17
  $region16: #{alphanet_forward.1} parent=0 // pred_region
    _
  $region17: #{alphanet_forward.1} parent=0 // pred_fallthru
    _
  // Predicated region
  $region18: #{alphanet_forward.1} parent=0 // pred_check
    _
  $region19: #{alphanet_forward.1} parent=0 // pred_check_branch
    %23 = sbr.rel (0) target = $region21
  $region20: #{alphanet_forward.1} parent=0 // pred_region
    _
  $region21: #{alphanet_forward.1} parent=0 // pred_fallthru
    _
  // Predicated region
  $region22: #{alphanet_forward.1} parent=0 // pred_check
    _
  $region23: #{alphanet_forward.1} parent=0 // pred_check_branch
    %25 = sbr.rel (0) target = $region25
  $region24: #{alphanet_forward.1} parent=0 // pred_region
    _
  $region25: #{alphanet_forward.1} parent=0 // pred_fallthru
    _
  // Predicated region
  $region26: #{alphanet_forward.1} parent=0 // pred_check
    _
  $region27: #{alphanet_forward.1} parent=0 // pred_check_branch
    %27 = sbr.rel (0) target = $region29
  $region28: #{alphanet_forward.1} parent=0 // pred_region
    _
  $region29: #{alphanet_forward.1} parent=0 // pred_fallthru
    _
  // Predicated region
  $region30: #{alphanet_forward.1} parent=0 // pred_check
    _
  $region31: #{alphanet_forward.1} parent=0 // pred_check_branch
    %29 = sbr.rel (0) target = $region33
  $region32: #{alphanet_forward.1} parent=0 // pred_region
    _
  $region33: #{alphanet_forward.1} parent=0 // pred_fallthru
    _
  // Predicated region
  $region34: #{alphanet_forward.1} parent=0 // pred_check
    _
  $region35: #{alphanet_forward.1} parent=0 // pred_check_branch
    %31 = sbr.rel (0) target = $region37
  $region36: #{alphanet_forward.1} parent=0 // pred_region
    _
  $region37: #{alphanet_forward.1} parent=0 // pred_fallthru
    _
  %v32 = vld [vmem:[%s0] sm:$0xff]
  %v33 = vld [vmem:[%s0 + $0x8] sm:$0xff]
  %v34 = vld [vmem:[%s0 + $0x10] sm:$0xff]
  %v35 = vld [vmem:[%s0 + $0x18] sm:$0x3f]
  %v36 = vld [vmem:[%s4] sm:$0xff]
  %v37 = vld [vmem:[%s4 + $0x8] sm:$0xff]
  %v38 = vld [vmem:[%s4 + $0x10] sm:$0xff]
  %v39 = vld [vmem:[%s4 + $0x18] sm:$0x3]
  %vm40 = vcmask 244736
  %v42 = vsel %vm40, %v36, 0
  %v45 = vsel %vm40, %v37, 0
  %v48 = vsel %vm40, %v38, 0
  %v51 = vsel %vm40, %v39, 0
  %vm53 = vcmask 1045504
  %v55 = vsel %vm53, %v35, 0
  %57 = vmatpush.msra.mxu0 0.0
  %58 = vmatpush.msra.mxu0 0.0
  %59 = vmatpush.msra.mxu0 0.0
  %60 = vmatpush.msra.mxu0 0.0
  %61 = vmatpush.msra.mxu0 0.0
  %62 = vmatpush.msra.mxu0 0.0
  %63 = vmatpush.msra.mxu0 0.0
  %64 = vmatpush.msra.mxu0 0.0
  %65 = vmatpush.msra.mxu0 0.0
  %66 = vmatpush.msra.mxu0 0.0
  %67 = vmatpush.msra.mxu0 0.0
  %68 = vmatpush.msra.mxu0 0.0
  %69 = vmatpush.msra.mxu0 %v55
  %70 = vmatpush.msra.mxu0 %v34
  %71 = vmatpush.msra.mxu0 %v33
  %72 = vmatpush.msra.mxu0 %v32
  %73 = vmatmul.f32.gmra.mxu0 %v42
  %v74 = vpop.f32.mrf.mxu0
  %v75 = vadd.f32 0.0, %v74
  %76 = vmatmul.f32.gmra.mxu0 %v45
  %v77 = vpop.f32.mrf.mxu0
  %v78 = vadd.f32 0.0, %v77
  %79 = vmatmul.f32.gmra.mxu0 %v48
  %v80 = vpop.f32.mrf.mxu0
  %v81 = vadd.f32 0.0, %v80
  %82 = vmatmul.f32.gmra.mxu0 %v51
  %v83 = vpop.f32.mrf.mxu0
  %v84 = vadd.f32 0.0, %v83
  %85 = vdwg.mxu0
  %v86 = vld [vmem:[%s5] sm:$0xff]
  %v87 = vld [vmem:[%s5 + $0x8] sm:$0xff]
  %v88 = vld [vmem:[%s5 + $0x10] sm:$0xff]
  %v89 = vld [vmem:[%s5 + $0x18] sm:$0x3f]
  %vm90 = vcmask 23552
  %v92 = vsel %vm90, %v86, 0
  %v95 = vsel %vm90, %v87, 0
  %v98 = vsel %vm90, %v88, 0
  %v101 = vsel %vm90, %v89, 0
  %vm103 = vcmask 1042432
  %v105 = vsel %vm103, %v75, 0
  %107 = vmatpush.msra.mxu0 0.0
  %108 = vmatpush.msra.mxu0 0.0
  %109 = vmatpush.msra.mxu0 0.0
  %110 = vmatpush.msra.mxu0 0.0
  %111 = vmatpush.msra.mxu0 0.0
  %112 = vmatpush.msra.mxu0 0.0
  %113 = vmatpush.msra.mxu0 0.0
  %114 = vmatpush.msra.mxu0 0.0
  %115 = vmatpush.msra.mxu0 0.0
  %116 = vmatpush.msra.mxu0 0.0
  %117 = vmatpush.msra.mxu0 0.0
  %118 = vmatpush.msra.mxu0 0.0
  %119 = vmatpush.msra.mxu0 0.0
  %120 = vmatpush.msra.mxu0 0.0
  %121 = vmatpush.msra.mxu0 0.0
  %122 = vmatpush.msra.mxu0 %v105
  %123 = vmatmul.f32.gmra.mxu0 %v92
  %v124 = vpop.f32.mrf.mxu0
  %v125 = vadd.f32 0.0, %v124
  %126 = vmatmul.f32.gmra.mxu0 %v95
  %v127 = vpop.f32.mrf.mxu0
  %v128 = vadd.f32 0.0, %v127
  %129 = vmatmul.f32.gmra.mxu0 %v98
  %v130 = vpop.f32.mrf.mxu0
  %v131 = vadd.f32 0.0, %v130
  %132 = vmatmul.f32.gmra.mxu0 %v101
  %v133 = vpop.f32.mrf.mxu0
  %v134 = vadd.f32 0.0, %v133
  %135 = vdwg.mxu0
  %v136 = vsub.f32 %v32, %v125
  %v137 = vsub.f32 %v33, %v128
  %v138 = vsub.f32 %v34, %v131
  %v139 = vsub.f32 %v35, %v134
  %140 = vrot.lane.b32.xlu0 %v86, 125
  %v141 = vpop.permute.xlu0 %140
  %142 = vrot.lane.b32.xlu0 %v87, 125
  %v143 = vpop.permute.xlu0 %142
  %144 = vrot.lane.b32.xlu0 %v88, 125
  %v145 = vpop.permute.xlu0 %144
  %146 = vrot.lane.b32.xlu0 %v89, 125
  %v147 = vpop.permute.xlu0 %146
  %vm149 = vcmask 1041408
  %v150 = vrot.slane %v75, 6
  %v151 = vrot.slane %v78, 6
  %v152 = vsel %vm149, %v150, %v151
  %vm154 = vcmask 80896
  %v155 = vsel %vm154, %v141, 0
  %v157 = vsel %vm154, %v143, 0
  %v159 = vsel %vm154, %v145, 0
  %v161 = vsel %vm154, %v147, 0
  %v163 = vsel %vm149, %v151, 0
  %165 = vmatpush.msra.mxu0 0.0
  %166 = vmatpush.msra.mxu0 0.0
  %167 = vmatpush.msra.mxu0 0.0
  %168 = vmatpush.msra.mxu0 0.0
  %169 = vmatpush.msra.mxu0 0.0
  %170 = vmatpush.msra.mxu0 0.0
  %171 = vmatpush.msra.mxu0 0.0
  %172 = vmatpush.msra.mxu0 0.0
  %173 = vmatpush.msra.mxu0 0.0
  %174 = vmatpush.msra.mxu0 0.0
  %175 = vmatpush.msra.mxu0 0.0
  %176 = vmatpush.msra.mxu0 0.0
  %177 = vmatpush.msra.mxu0 0.0
  %178 = vmatpush.msra.mxu0 0.0
  %179 = vmatpush.msra.mxu0 %v163
  %180 = vmatpush.msra.mxu0 %v152
  %181 = vmatmul.f32.gmra.mxu0 %v155
  %v182 = vpop.f32.mrf.mxu0
  %v183 = vadd.f32 0.0, %v182
  %184 = vmatmul.f32.gmra.mxu0 %v157
  %v185 = vpop.f32.mrf.mxu0
  %v186 = vadd.f32 0.0, %v185
  %187 = vmatmul.f32.gmra.mxu0 %v159
  %v188 = vpop.f32.mrf.mxu0
  %v189 = vadd.f32 0.0, %v188
  %190 = vmatmul.f32.gmra.mxu0 %v161
  %v191 = vpop.f32.mrf.mxu0
  %v192 = vadd.f32 0.0, %v191
  %193 = vdwg.mxu0
  %v194 = vsub.f32 %v32, %v183
  %v195 = vsub.f32 %v33, %v186
  %v196 = vsub.f32 %v34, %v189
  %v197 = vsub.f32 %v35, %v192
  %v198 = vld [vmem:[%s4] sm:$0x7]
  %v199 = vmul.f32 %v136, %v136
  %v200 = vmul.f32 %v137, %v137
  %v201 = vmul.f32 %v138, %v138
  %v202 = vmul.f32 %v139, %v139
  %vm203 = vcmask 72704
  %204 = vst.msk [vmem:[#allocation2] sm:$0xff] %vm203, %v199
  %205 = vst.msk [vmem:[#allocation2 + $0x8] sm:$0xff] %vm203, %v200
  %206 = vst.msk [vmem:[#allocation2 + $0x10] sm:$0xff] %vm203, %v201
  %vm207 = vcmask 70656
  %208 = vst.msk [vmem:[#allocation2 + $0x18] sm:$0x3f] %vm207, %v202
  %213 = vrot.lane.b32.xlu0 %v136, 122
  %v214 = vpop.permute.xlu0 %213
  %215 = vrot.lane.b32.xlu0 %v137, 122
  %v216 = vpop.permute.xlu0 %215
  %217 = vrot.lane.b32.xlu0 %v138, 122
  %v218 = vpop.permute.xlu0 %217
  %219 = vrot.lane.b32.xlu0 %v139, 122
  %v220 = vpop.permute.xlu0 %219
  %v225 = vmul.f32 %v136, %v214
  %v226 = vmul.f32 %v137, %v216
  %v227 = vmul.f32 %v138, %v218
  %v228 = vmul.f32 %v139, %v220
  %vm229 = vcmask 121928
  %230 = vst.msk [vmem:[#allocation2] sm:$0xff] %vm229, %v225
  %231 = vst.msk [vmem:[#allocation2 + $0x8] sm:$0xff] %vm229, %v226
  %232 = vst.msk [vmem:[#allocation2 + $0x10] sm:$0xff] %vm229, %v227
  %vm233 = vcmask 119880
  %234 = vst.msk [vmem:[#allocation2 + $0x18] sm:$0x3f] %vm233, %v228
  %239 = vrot.lane.b32.xlu0 %v199, 6
  %v240 = vpop.permute.xlu0 %239
  %241 = vrot.lane.b32.xlu0 %v200, 6
  %v242 = vpop.permute.xlu0 %241
  %243 = vrot.lane.b32.xlu0 %v201, 6
  %v244 = vpop.permute.xlu0 %243
  %245 = vrot.lane.b32.xlu0 %v202, 6
  %v246 = vpop.permute.xlu0 %245
  %vm251 = vcmask 171128
  %252 = vst.msk [vmem:[#allocation2] sm:$0xff] %vm251, %v240
  %253 = vst.msk [vmem:[#allocation2 + $0x8] sm:$0xff] %vm251, %v242
  %254 = vst.msk [vmem:[#allocation2 + $0x10] sm:$0xff] %vm251, %v244
  %vm255 = vcmask 169080
  %256 = vst.msk [vmem:[#allocation2 + $0x18] sm:$0x3f] %vm255, %v246
  %vm257 = vcmask 220328
  %258 = vst.msk [vmem:[#allocation2] sm:$0xff] %vm257, %v240
  %259 = vst.msk [vmem:[#allocation2 + $0x8] sm:$0xff] %vm257, %v242
  %260 = vst.msk [vmem:[#allocation2 + $0x10] sm:$0xff] %vm257, %v244
  %vm261 = vcmask 218280
  %262 = vst.msk [vmem:[#allocation2 + $0x18] sm:$0x3f] %vm261, %v246
  %vm263 = vcmask 294104
  %264 = vst.msk [vmem:[#allocation2] sm:$0xff] %vm263, %v199
  %265 = vst.msk [vmem:[#allocation2 + $0x8] sm:$0xff] %vm263, %v200
  %266 = vst.msk [vmem:[#allocation2 + $0x10] sm:$0xff] %vm263, %v201
  %vm267 = vcmask 292056
  %268 = vst.msk [vmem:[#allocation2 + $0x18] sm:$0x3f] %vm267, %v202
  %vm269 = vcmask 343328
  %270 = vst.msk [vmem:[#allocation2] sm:$0xff] %vm269, %v225
  %271 = vst.msk [vmem:[#allocation2 + $0x8] sm:$0xff] %vm269, %v226
  %272 = vst.msk [vmem:[#allocation2 + $0x10] sm:$0xff] %vm269, %v227
  %vm273 = vcmask 341280
  %274 = vst.msk [vmem:[#allocation2 + $0x18] sm:$0x3f] %vm273, %v228
  %vm275 = vcmask 392528
  %276 = vst.msk [vmem:[#allocation2] sm:$0xff] %vm275, %v240
  %277 = vst.msk [vmem:[#allocation2 + $0x8] sm:$0xff] %vm275, %v242
  %278 = vst.msk [vmem:[#allocation2 + $0x10] sm:$0xff] %vm275, %v244
  %vm279 = vcmask 390480
  %280 = vst.msk [vmem:[#allocation2 + $0x18] sm:$0x3f] %vm279, %v246
  %vm281 = vcmask 441728
  %282 = vst.msk [vmem:[#allocation2] sm:$0xff] %vm281, %v240
  %283 = vst.msk [vmem:[#allocation2 + $0x8] sm:$0xff] %vm281, %v242
  %284 = vst.msk [vmem:[#allocation2 + $0x10] sm:$0xff] %vm281, %v244
  %vm285 = vcmask 439680
  %286 = vst.msk [vmem:[#allocation2 + $0x18] sm:$0x3f] %vm285, %v246
  %v287 = vld [vmem:[#allocation2] sm:$0xff]
  %v288 = vld [vmem:[#allocation2 + $0x8] sm:$0xff]
  %v289 = vld [vmem:[#allocation2 + $0x10] sm:$0xff]
  %v290 = vld [vmem:[#allocation2 + $0x18] sm:$0x3f]
  %v292 = vsel %vm40, %v198, 0
  %v295 = vsel %vm53, %v290, 0
  %297 = vmatpush.msra.mxu0 0.0
  %298 = vmatpush.msra.mxu0 0.0
  %299 = vmatpush.msra.mxu0 0.0
  %300 = vmatpush.msra.mxu0 0.0
  %301 = vmatpush.msra.mxu0 0.0
  %302 = vmatpush.msra.mxu0 0.0
  %303 = vmatpush.msra.mxu0 0.0
  %304 = vmatpush.msra.mxu0 0.0
  %305 = vmatpush.msra.mxu0 0.0
  %306 = vmatpush.msra.mxu0 0.0
  %307 = vmatpush.msra.mxu0 0.0
  %308 = vmatpush.msra.mxu0 0.0
  %309 = vmatpush.msra.mxu0 %v295
  %310 = vmatpush.msra.mxu0 %v289
  %311 = vmatpush.msra.mxu0 %v288
  %312 = vmatpush.msra.mxu0 %v287
  %313 = vmatmul.f32.gmra.mxu0 %v292
  %v314 = vpop.f32.mrf.mxu0
  %v315 = vadd.f32 0.0, %v314
  %316 = vdwg.mxu0
  %v317 = vld [vmem:[%s4 + $0x6] sm:$0xff]
  %v318 = vld [vmem:[%s4 + $0xe] sm:$0x3]
  %v319 = vmul.f32 %v194, %v194
  %v320 = vmul.f32 %v195, %v195
  %v321 = vmul.f32 %v196, %v196
  %v322 = vmul.f32 %v197, %v197
  %323 = vst.msk [vmem:[#allocation2] sm:$0xff] %vm203, %v319
  %324 = vst.msk [vmem:[#allocation2 + $0x8] sm:$0xff] %vm203, %v320
  %325 = vst.msk [vmem:[#allocation2 + $0x10] sm:$0xff] %vm203, %v321
  %326 = vst.msk [vmem:[#allocation2 + $0x18] sm:$0x3f] %vm207, %v322
  %331 = vrot.lane.b32.xlu0 %v194, 122
  %v332 = vpop.permute.xlu0 %331
  %333 = vrot.lane.b32.xlu0 %v195, 122
  %v334 = vpop.permute.xlu0 %333
  %335 = vrot.lane.b32.xlu0 %v196, 122
  %v336 = vpop.permute.xlu0 %335
  %337 = vrot.lane.b32.xlu0 %v197, 122
  %v338 = vpop.permute.xlu0 %337
  %v343 = vmul.f32 %v194, %v332
  %v344 = vmul.f32 %v195, %v334
  %v345 = vmul.f32 %v196, %v336
  %v346 = vmul.f32 %v197, %v338
  %347 = vst.msk [vmem:[#allocation2] sm:$0xff] %vm229, %v343
  %348 = vst.msk [vmem:[#allocation2 + $0x8] sm:$0xff] %vm229, %v344
  %349 = vst.msk [vmem:[#allocation2 + $0x10] sm:$0xff] %vm229, %v345
  %350 = vst.msk [vmem:[#allocation2 + $0x18] sm:$0x3f] %vm233, %v346
  %355 = vrot.lane.b32.xlu0 %v319, 6
  %v356 = vpop.permute.xlu0 %355
  %357 = vrot.lane.b32.xlu0 %v320, 6
  %v358 = vpop.permute.xlu0 %357
  %359 = vrot.lane.b32.xlu0 %v321, 6
  %v360 = vpop.permute.xlu0 %359
  %361 = vrot.lane.b32.xlu0 %v322, 6
  %v362 = vpop.permute.xlu0 %361
  %367 = vst.msk [vmem:[#allocation2] sm:$0xff] %vm251, %v356
  %368 = vst.msk [vmem:[#allocation2 + $0x8] sm:$0xff] %vm251, %v358
  %369 = vst.msk [vmem:[#allocation2 + $0x10] sm:$0xff] %vm251, %v360
  %370 = vst.msk [vmem:[#allocation2 + $0x18] sm:$0x3f] %vm255, %v362
  %371 = vst.msk [vmem:[#allocation2] sm:$0xff] %vm257, %v356
  %372 = vst.msk [vmem:[#allocation2 + $0x8] sm:$0xff] %vm257, %v358
  %373 = vst.msk [vmem:[#allocation2 + $0x10] sm:$0xff] %vm257, %v360
  %374 = vst.msk [vmem:[#allocation2 + $0x18] sm:$0x3f] %vm261, %v362
  %375 = vst.msk [vmem:[#allocation2] sm:$0xff] %vm263, %v319
  %376 = vst.msk [vmem:[#allocation2 + $0x8] sm:$0xff] %vm263, %v320
  %377 = vst.msk [vmem:[#allocation2 + $0x10] sm:$0xff] %vm263, %v321
  %378 = vst.msk [vmem:[#allocation2 + $0x18] sm:$0x3f] %vm267, %v322
  %379 = vst.msk [vmem:[#allocation2] sm:$0xff] %vm269, %v343
  %380 = vst.msk [vmem:[#allocation2 + $0x8] sm:$0xff] %vm269, %v344
  %381 = vst.msk [vmem:[#allocation2 + $0x10] sm:$0xff] %vm269, %v345
  %382 = vst.msk [vmem:[#allocation2 + $0x18] sm:$0x3f] %vm273, %v346
  %383 = vst.msk [vmem:[#allocation2] sm:$0xff] %vm275, %v356
  %384 = vst.msk [vmem:[#allocation2 + $0x8] sm:$0xff] %vm275, %v358
  %385 = vst.msk [vmem:[#allocation2 + $0x10] sm:$0xff] %vm275, %v360
  %386 = vst.msk [vmem:[#allocation2 + $0x18] sm:$0x3f] %vm279, %v362
  %387 = vst.msk [vmem:[#allocation2] sm:$0xff] %vm281, %v356
  %388 = vst.msk [vmem:[#allocation2 + $0x8] sm:$0xff] %vm281, %v358
  %389 = vst.msk [vmem:[#allocation2 + $0x10] sm:$0xff] %vm281, %v360
  %390 = vst.msk [vmem:[#allocation2 + $0x18] sm:$0x3f] %vm285, %v362
  %v391 = vld [vmem:[#allocation2] sm:$0xff]
  %v392 = vld [vmem:[#allocation2 + $0x8] sm:$0xff]
  %v393 = vld [vmem:[#allocation2 + $0x10] sm:$0xff]
  %v394 = vld [vmem:[#allocation2 + $0x18] sm:$0x3f]
  %v396 = vsel %vm40, %v317, 0
  %v399 = vsel %vm40, %v318, 0
  %v402 = vsel %vm53, %v394, 0
  %404 = vmatpush.msra.mxu0 0.0
  %405 = vmatpush.msra.mxu0 0.0
  %406 = vmatpush.msra.mxu0 0.0
  %407 = vmatpush.msra.mxu0 0.0
  %408 = vmatpush.msra.mxu0 0.0
  %409 = vmatpush.msra.mxu0 0.0
  %410 = vmatpush.msra.mxu0 0.0
  %411 = vmatpush.msra.mxu0 0.0
  %412 = vmatpush.msra.mxu0 0.0
  %413 = vmatpush.msra.mxu0 0.0
  %414 = vmatpush.msra.mxu0 0.0
  %415 = vmatpush.msra.mxu0 0.0
  %416 = vmatpush.msra.mxu0 %v402
  %417 = vmatpush.msra.mxu0 %v393
  %418 = vmatpush.msra.mxu0 %v392
  %419 = vmatpush.msra.mxu0 %v391
  %420 = vmatmul.f32.gmra.mxu0 %v396
  %v421 = vpop.f32.mrf.mxu0
  %v422 = vadd.f32 0.0, %v421
  %423 = vmatmul.f32.gmra.mxu0 %v399
  %v424 = vpop.f32.mrf.mxu0
  %v425 = vadd.f32 0.0, %v424
  %426 = vdwg.mxu0
  %v427 = vld [vmem:[%s8] ss:$0 sm:$0xff]
  %v428 = vld [vmem:[%s8 + $0x1] ss:$0 sm:$0xff]
  %v429 = vmul.f32 %v315, 1.1111112
  %v430 = vrsqrt.pop %v315
  %v431 = vmul.f32 %v430, %v315
  %v432 = vmul.f32 %v431, %v430
  %v433 = vmul.f32 0.5, %v432
  %v434 = vsub.f32 1.5, %v433
  %v435 = vmul.f32 %v430, %v434
  %v436 = vmul.f32 %v315, %v435
  %vm437 = vcmp.eq.f32.partialorder %v315, inf
  %v438 = vsel %vm437, %v315, %v436
  %vm439 = vcmp.eq.f32.partialorder %v315, 0.0
  %v440 = vand.u32 %v315, 2147483648
  %v441 = vsel %vm439, %v440, %v438
  %443 = vrot.lane.b32.xlu0 %v441, 122
  %v444 = vpop.permute.xlu0 %443
  %v446 = vmul.f32 %v441, %v444
  %v447 = vadd.f32 %v446, 0.01
  %449 = vrot.lane.b32.xlu0 %v447, 122
  %v450 = vpop.permute.xlu0 %449
  %v452 = vrcp.pop %v450
  %v453 = vmul.f32 %v450, %v452
  %v454 = vsub.f32 1.0, %v453
  %v455 = vmul.f32 %v452, %v454
  %v456 = vadd.f32 %v452, %v455
  %vm457 = vweird.f32 %v450
  %vm458 = vweird.f32 %v452
  %vm459 = vmor %vm457, %vm458
  %v460 = vsel %vm459, %v452, %v456
  %v461 = vand.u32 2147483647, %v450
  %vm462 = vcmp.eq.f32.partialorder %v461, 8.507059e+37
  %v463 = vand.u32 %v450, 2147483648
  %v464 = vor.u32 1.1754944e-38, %v463
  %v465 = vsel %vm462, %v464, %v460
  %v466 = vmul.f32 %v429, %v465
  %v467 = vadd.f32 %v441, 0.01
  %v468 = vrcp.pop %v467
  %v469 = vmul.f32 %v467, %v468
  %v470 = vsub.f32 1.0, %v469
  %v471 = vmul.f32 %v468, %v470
  %v472 = vadd.f32 %v468, %v471
  %vm473 = vweird.f32 %v467
  %vm474 = vweird.f32 %v468
  %vm475 = vmor %vm473, %vm474
  %v476 = vsel %vm475, %v468, %v472
  %v477 = vand.u32 2147483647, %v467
  %vm478 = vcmp.eq.f32.partialorder %v477, 8.507059e+37
  %v479 = vand.u32 %v467, 2147483648
  %v480 = vor.u32 1.1754944e-38, %v479
  %v481 = vsel %vm478, %v480, %v476
  %v482 = vmul.f32 %v75, %v481
  %484 = vrot.lane.b32.xlu0 %v429, 119
  %v485 = vpop.permute.xlu0 %484
  %vm487 = vcmask 43008
  %488 = vst.msk [vmem:[#allocation3] sm:$0x7] %vm487, %v485
  %490 = vrot.lane.b32.xlu0 %v466, 125
  %v491 = vpop.permute.xlu0 %490
  %vm493 = vcmask 92208
  %494 = vst.msk [vmem:[#allocation3] sm:$0x7] %vm493, %v491
  %495 = vrot.lane.b32.xlu0 %v75, 12
  %v496 = vpop.permute.xlu0 %495
  %vm498 = vcmask 169059
  %499 = vst.msk [vmem:[#allocation3 - $0x3] sm:$0x38] %vm498, %v496
  %500 = vrot.lane.b32.xlu0 %v441, 21
  %v501 = vpop.permute.xlu0 %500
  %vm503 = vcmask 239784
  %504 = vst.msk [vmem:[#allocation3] sm:$0x7] %vm503, %v501
  %v505 = vld [vmem:[%s2] sm:$0x7]
  %507 = vrot.lane.b32.xlu0 %v505, 30
  %v508 = vpop.permute.xlu0 %507
  %vm510 = vcmask 313584
  %511 = vst.msk [vmem:[#allocation3] sm:$0x7] %vm510, %v508
  %513 = vrot.lane.b32.xlu0 %v482, 39
  %v514 = vpop.permute.xlu0 %513
  %vm516 = vcmask 387384
  %517 = vst.msk [vmem:[#allocation3] sm:$0x7] %vm516, %v514
  %518 = vrot.lane.b32.xlu0 %v75, 27
  %v519 = vpop.permute.xlu0 %518
  %vm521 = vcmask 436608
  %522 = vst.msk [vmem:[#allocation3] sm:$0x7] %vm521, %v519
  %v523 = vld [vmem:[#allocation3] sm:$0x7]
  %v524 = vmul.f32 %v523, %v427
  %v525 = vadd.f32 %v524, %v428
  %vm526 = vcmask 436224
  %v527 = vsel %vm526, %v525, -inf
  %v528 = vrot.slane %v527, 4
  %v529 = vmax.f32 %v527, %v528
  %v530 = vrot.slane %v529, 2
  %v531 = vmax.f32 %v529, %v530
  %v532 = vrot.slane %v531, 1
  %v533 = vmax.f32 %v531, %v532
  %vm534 = vcmask 434176
  %535 = vst.msk [vmem:[#allocation4] sm:$0x1] %vm534, %v533
  %v536 = vsel %vm526, %v525, 0.0
  %v537 = vrot.slane %v536, 4
  %v538 = vadd.f32 %v536, %v537
  %v539 = vrot.slane %v538, 2
  %v540 = vadd.f32 %v538, %v539
  %v541 = vrot.slane %v540, 1
  %v542 = vadd.f32 %v540, %v541
  %v543 = vrcp.pop 3.0
  %v544 = vmul.f32 3.0, %v543
  %v545 = vsub.f32 1.0, %v544
  %v546 = vmul.f32 %v543, %v545
  %v547 = vadd.f32 %v543, %v546
  %vm548 = vweird.f32 %v543
  %v549 = vsel %vm548, %v543, %v547
  %v550 = vmul.f32 %v542, %v549
  %552 = vrot.lane.b32.xlu0 %v550, 54
  %v553 = vpop.permute.xlu0 %552
  %vm555 = vcmask 876976
  %556 = vst.msk [vmem:[#allocation4] sm:$0x1] %vm555, %v553
  %v557 = vsub.f32 0.0, %v525
  %v558 = vsel %vm526, %v557, -inf
  %v559 = vrot.slane %v558, 4
  %v560 = vmax.f32 %v558, %v559
  %v561 = vrot.slane %v560, 2
  %v562 = vmax.f32 %v560, %v561
  %v563 = vrot.slane %v562, 1
  %v564 = vmax.f32 %v562, %v563
  %v565 = vsub.f32 0.0, %v564
  %567 = vrot.lane.b32.xlu0 %v565, 108
  %v568 = vpop.permute.xlu0 %567
  %v569 = vrot.slane %v568, 6
  %vm570 = vcmask 883712
  %v571 = vsel %vm570, %v569, %v568
  %vm573 = vcmask 1041248
  %vm574 = vcmask 272386
  %vm575 = vmor %vm574, %vm573
  %576 = vst.msk [vmem:[#allocation4] sm:$0x5] %vm575, %v571
  %577 = vrot.lane.b32.xlu0 %v429, 92
  %v578 = vpop.permute.xlu0 %577
  %580 = vst.msk [vmem:[#allocation3] sm:$0x7] %vm487, %v578
  %581 = vrot.lane.b32.xlu0 %v466, 98
  %v582 = vpop.permute.xlu0 %581
  %584 = vst.msk [vmem:[#allocation3] sm:$0x7] %vm493, %v582
  %585 = vrot.lane.b32.xlu0 %v75, 113
  %v586 = vpop.permute.xlu0 %585
  %588 = vst.msk [vmem:[#allocation3 - $0x3] sm:$0x38] %vm498, %v586
  %589 = vst.msk [vmem:[#allocation3] sm:$0x7] %vm503, %v444
  %s590 = scalar_lea.vmem %s2, 4
  %v591 = vld [vmem:[%s590] sm:$0x7]
  %593 = vrot.lane.b32.xlu0 %v591, 30
  %v594 = vpop.permute.xlu0 %593
  %596 = vst.msk [vmem:[#allocation3] sm:$0x7] %vm510, %v594
  %597 = vrot.lane.b32.xlu0 %v482, 12
  %v598 = vpop.permute.xlu0 %597
  %600 = vst.msk [vmem:[#allocation3] sm:$0x7] %vm516, %v598
  %601 = vst.msk [vmem:[#allocation3] sm:$0x7] %vm521, %v75
  %v602 = vld [vmem:[#allocation3] sm:$0x7]
  %v603 = vmul.f32 %v602, %v427
  %v604 = vadd.f32 %v603, %v428
  %v605 = vsel %vm526, %v604, -inf
  %v606 = vrot.slane %v605, 4
  %v607 = vmax.f32 %v605, %v606
  %v608 = vrot.slane %v607, 2
  %v609 = vmax.f32 %v607, %v608
  %v610 = vrot.slane %v609, 1
  %v611 = vmax.f32 %v609, %v610
  %612 = vst.msk [vmem:[#allocation4 + $0x1] sm:$0x1] %vm534, %v611
  %v613 = vsel %vm526, %v604, 0.0
  %v614 = vrot.slane %v613, 4
  %v615 = vadd.f32 %v613, %v614
  %v616 = vrot.slane %v615, 2
  %v617 = vadd.f32 %v615, %v616
  %v618 = vrot.slane %v617, 1
  %v619 = vadd.f32 %v617, %v618
  %v620 = vmul.f32 %v619, %v549
  %622 = vrot.lane.b32.xlu0 %v620, 54
  %v623 = vpop.permute.xlu0 %622
  %625 = vst.msk [vmem:[#allocation4 + $0x1] sm:$0x1] %vm555, %v623
  %v626 = vsub.f32 0.0, %v604
  %v627 = vsel %vm526, %v626, -inf
  %v628 = vrot.slane %v627, 4
  %v629 = vmax.f32 %v627, %v628
  %v630 = vrot.slane %v629, 2
  %v631 = vmax.f32 %v629, %v630
  %v632 = vrot.slane %v631, 1
  %v633 = vmax.f32 %v631, %v632
  %v634 = vsub.f32 0.0, %v633
  %636 = vrot.lane.b32.xlu0 %v634, 108
  %v637 = vpop.permute.xlu0 %636
  %v638 = vrot.slane %v637, 6
  %v639 = vsel %vm570, %v638, %v637
  %641 = vst.msk [vmem:[#allocation4 + $0x1] sm:$0x5] %vm575, %v639
  %v642 = vld [vmem:[%s8 + $0x2] ss:$0 sm:$0xff]
  %v643 = vld [vmem:[%s8 + $0x3] ss:$0 sm:$0xff]
  %v644 = vmul.f32 %v422, 1.5
  %v645 = vmul.f32 %v425, 1.5
  %v646 = vrsqrt.pop %v422
  %v647 = vmul.f32 %v646, %v422
  %v648 = vmul.f32 %v647, %v646
  %v649 = vmul.f32 0.5, %v648
  %v650 = vsub.f32 1.5, %v649
  %v651 = vmul.f32 %v646, %v650
  %v652 = vmul.f32 %v422, %v651
  %vm653 = vcmp.eq.f32.partialorder %v422, inf
  %v654 = vsel %vm653, %v422, %v652
  %vm655 = vcmp.eq.f32.partialorder %v422, 0.0
  %v656 = vand.u32 %v422, 2147483648
  %v657 = vsel %vm655, %v656, %v654
  %v658 = vrsqrt.pop %v425
  %v659 = vmul.f32 %v658, %v425
  %v660 = vmul.f32 %v659, %v658
  %v661 = vmul.f32 0.5, %v660
  %v662 = vsub.f32 1.5, %v661
  %v663 = vmul.f32 %v658, %v662
  %v664 = vmul.f32 %v425, %v663
  %vm665 = vcmp.eq.f32.partialorder %v425, inf
  %v666 = vsel %vm665, %v425, %v664
  %vm667 = vcmp.eq.f32.partialorder %v425, 0.0
  %v668 = vand.u32 %v425, 2147483648
  %v669 = vsel %vm667, %v668, %v666
  %672 = vrot.lane.b32.xlu0 %v657, 122
  %v673 = vpop.permute.xlu0 %672
  %674 = vrot.lane.b32.xlu0 %v669, 122
  %v675 = vpop.permute.xlu0 %674
  %v678 = vmul.f32 %v657, %v673
  %v679 = vmul.f32 %v669, %v675
  %v680 = vadd.f32 %v678, 0.01
  %v681 = vadd.f32 %v679, 0.01
  %684 = vrot.lane.b32.xlu0 %v680, 122
  %v685 = vpop.permute.xlu0 %684
  %686 = vrot.lane.b32.xlu0 %v681, 122
  %v687 = vpop.permute.xlu0 %686
  %v690 = vrcp.pop %v685
  %v691 = vmul.f32 %v685, %v690
  %v692 = vsub.f32 1.0, %v691
  %v693 = vmul.f32 %v690, %v692
  %v694 = vadd.f32 %v690, %v693
  %vm695 = vweird.f32 %v685
  %vm696 = vweird.f32 %v690
  %vm697 = vmor %vm695, %vm696
  %v698 = vsel %vm697, %v690, %v694
  %v699 = vand.u32 2147483647, %v685
  %vm700 = vcmp.eq.f32.partialorder %v699, 8.507059e+37
  %v701 = vand.u32 %v685, 2147483648
  %v702 = vor.u32 1.1754944e-38, %v701
  %v703 = vsel %vm700, %v702, %v698
  %v704 = vmul.f32 %v644, %v703
  %v705 = vrcp.pop %v687
  %v706 = vmul.f32 %v687, %v705
  %v707 = vsub.f32 1.0, %v706
  %v708 = vmul.f32 %v705, %v707
  %v709 = vadd.f32 %v705, %v708
  %vm710 = vweird.f32 %v687
  %vm711 = vweird.f32 %v705
  %vm712 = vmor %vm710, %vm711
  %v713 = vsel %vm712, %v705, %v709
  %v714 = vand.u32 2147483647, %v687
  %vm715 = vcmp.eq.f32.partialorder %v714, 8.507059e+37
  %v716 = vand.u32 %v687, 2147483648
  %v717 = vor.u32 1.1754944e-38, %v716
  %v718 = vsel %vm715, %v717, %v713
  %v719 = vmul.f32 %v645, %v718
  %v720 = vadd.f32 %v657, 0.01
  %v721 = vadd.f32 %v669, 0.01
  %v724 = vrot.slane %v720, 2
  %v725 = vrot.slane %v721, 2
  %v726 = vsel %vm53, %v724, %v725
  %v729 = vrcp.pop %v724
  %v730 = vmul.f32 %v724, %v729
  %v731 = vsub.f32 1.0, %v730
  %v732 = vmul.f32 %v729, %v731
  %v733 = vadd.f32 %v729, %v732
  %vm734 = vweird.f32 %v724
  %vm735 = vweird.f32 %v729
  %vm736 = vmor %vm734, %vm735
  %v737 = vsel %vm736, %v729, %v733
  %v738 = vand.u32 2147483647, %v724
  %vm739 = vcmp.eq.f32.partialorder %v738, 8.507059e+37
  %v740 = vand.u32 %v724, 2147483648
  %v741 = vor.u32 1.1754944e-38, %v740
  %v742 = vsel %vm739, %v741, %v737
  %v743 = vmul.f32 %v75, %v742
  %v744 = vrcp.pop %v726
  %v745 = vmul.f32 %v726, %v744
  %v746 = vsub.f32 1.0, %v745
  %v747 = vmul.f32 %v744, %v746
  %v748 = vadd.f32 %v744, %v747
  %vm749 = vweird.f32 %v726
  %vm750 = vweird.f32 %v744
  %vm751 = vmor %vm749, %vm750
  %v752 = vsel %vm751, %v744, %v748
  %v753 = vand.u32 2147483647, %v726
  %vm754 = vcmp.eq.f32.partialorder %v753, 8.507059e+37
  %v755 = vand.u32 %v726, 2147483648
  %v756 = vor.u32 1.1754944e-38, %v755
  %v757 = vsel %vm754, %v756, %v752
  %v758 = vmul.f32 %v78, %v757
  %761 = vrot.lane.b32.xlu0 %v644, 119
  %v762 = vpop.permute.xlu0 %761
  %763 = vrot.lane.b32.xlu0 %v645, 119
  %v764 = vpop.permute.xlu0 %763
  %vm767 = vcmask 48128
  %768 = vst.msk [vmem:[#allocation3] sm:$0xff] %vm767, %v762
  %vm769 = vcmask 41984
  %770 = vst.msk [vmem:[#allocation3 + $0x8] sm:$0x3] %vm769, %v764
  %773 = vrot.lane.b32.xlu0 %v704, 125
  %v774 = vpop.permute.xlu0 %773
  %775 = vrot.lane.b32.xlu0 %v719, 125
  %v776 = vpop.permute.xlu0 %775
  %vm779 = vcmask 97328
  %780 = vst.msk [vmem:[#allocation3] sm:$0xff] %vm779, %v774
  %vm781 = vcmask 91184
  %782 = vst.msk [vmem:[#allocation3 + $0x8] sm:$0x3] %vm781, %v776
  %785 = vrot.lane.b32.xlu0 %v81, 12
  %v786 = vpop.permute.xlu0 %785
  %787 = vrot.lane.b32.xlu0 %v84, 12
  %v788 = vpop.permute.xlu0 %787
  %vm791 = vcmask 171104
  %792 = vst.msk [vmem:[#allocation3] sm:$0xff] %vm791, %v786
  %vm793 = vcmask 164960
  %794 = vst.msk [vmem:[#allocation3 + $0x8] sm:$0x3] %vm793, %v788
  %795 = vrot.lane.b32.xlu0 %v657, 21
  %v796 = vpop.permute.xlu0 %795
  %797 = vrot.lane.b32.xlu0 %v669, 21
  %v798 = vpop.permute.xlu0 %797
  %vm801 = vcmask 244904
  %802 = vst.msk [vmem:[#allocation3] sm:$0xff] %vm801, %v796
  %vm803 = vcmask 238760
  %804 = vst.msk [vmem:[#allocation3 + $0x8] sm:$0x3] %vm803, %v798
  %v805 = vld [vmem:[%s3] sm:$0xff]
  %v806 = vld [vmem:[%s3 + $0x8] sm:$0x3]
  %809 = vrot.lane.b32.xlu0 %v805, 30
  %v810 = vpop.permute.xlu0 %809
  %811 = vrot.lane.b32.xlu0 %v806, 30
  %v812 = vpop.permute.xlu0 %811
  %vm815 = vcmask 318704
  %816 = vst.msk [vmem:[#allocation3] sm:$0xff] %vm815, %v810
  %vm817 = vcmask 312560
  %818 = vst.msk [vmem:[#allocation3 + $0x8] sm:$0x3] %vm817, %v812
  %821 = vrot.lane.b32.xlu0 %v743, 39
  %v822 = vpop.permute.xlu0 %821
  %823 = vrot.lane.b32.xlu0 %v758, 39
  %v824 = vpop.permute.xlu0 %823
  %vm827 = vcmask 392510
  %828 = vst.msk [vmem:[#allocation3 - $0x6] sm:$0xc0] %vm827, %v822
  %vm829 = vcmask 392504
  %830 = vst.msk [vmem:[#allocation3 + $0x2] sm:$0xff] %vm829, %v824
  %831 = vrot.lane.b32.xlu0 %v78, 27
  %v832 = vpop.permute.xlu0 %831
  %vm834 = vcmask 441734
  %835 = vst.msk [vmem:[#allocation3 - $0x6] sm:$0xc0] %vm834, %v519
  %836 = vst.msk [vmem:[#allocation3 + $0x2] sm:$0xff] %vm281, %v832
  %v837 = vld [vmem:[#allocation3] sm:$0xff]
  %v838 = vld [vmem:[#allocation3 + $0x8] sm:$0x3]
  %v839 = vmul.f32 %v837, %v642
  %v840 = vmul.f32 %v838, %v642
  %v841 = vadd.f32 %v839, %v643
  %v842 = vadd.f32 %v840, %v643
  %vm843 = vcmask 441344
  %v844 = vsel %vm843, %v841, -inf
  %vm845 = vcmask 435200
  %v846 = vsel %vm845, %v842, -inf
  %v847 = vmax.f32 %v844, %v846
  %v848 = vrot.slane %v847, 4
  %v849 = vmax.f32 %v847, %v848
  %v850 = vrot.slane %v849, 2
  %v851 = vmax.f32 %v849, %v850
  %v852 = vrot.slane %v851, 1
  %v853 = vmax.f32 %v851, %v852
  %855 = vrot.lane.b32.xlu0 %v853, 34
  %v856 = vpop.permute.xlu0 %855
  %vm858 = vcmask 712976
  %859 = vst.msk [vmem:[#allocation4 + $0x2] sm:$0x1] %vm858, %v856
  %v860 = vsel %vm843, %v841, 0.0
  %v861 = vsel %vm845, %v842, 0.0
  %v862 = vadd.f32 %v860, %v861
  %v863 = vrot.slane %v862, 4
  %v864 = vadd.f32 %v862, %v863
  %v865 = vrot.slane %v864, 2
  %v866 = vadd.f32 %v864, %v865
  %v867 = vrot.slane %v866, 1
  %v868 = vadd.f32 %v866, %v867
  %v869 = vrcp.pop 10.0
  %v870 = vmul.f32 10.0, %v869
  %v871 = vsub.f32 1.0, %v870
  %v872 = vmul.f32 %v869, %v871
  %v873 = vadd.f32 %v869, %v872
  %vm874 = vweird.f32 %v869
  %v875 = vsel %vm874, %v869, %v873
  %v876 = vmul.f32 %v868, %v875
  %878 = vrot.lane.b32.xlu0 %v876, 88
  %v879 = vpop.permute.xlu0 %878
  %v880 = vrot.slane %v879, 6
  %vm881 = vcmask 719872
  %v882 = vsel %vm881, %v880, %v879
  %vm884 = vcmask 1041088
  %vm885 = vcmask 108546
  %vm886 = vmor %vm885, %vm884
  %887 = vst.msk [vmem:[#allocation4 + $0x2] sm:$0x5] %vm886, %v882
  %v888 = vsub.f32 0.0, %v841
  %v889 = vsub.f32 0.0, %v842
  %v890 = vsel %vm843, %v888, -inf
  %v891 = vsel %vm845, %v889, -inf
  %v892 = vmax.f32 %v890, %v891
  %v893 = vrot.slane %v892, 4
  %v894 = vmax.f32 %v892, %v893
  %v895 = vrot.slane %v894, 2
  %v896 = vmax.f32 %v894, %v895
  %v897 = vrot.slane %v896, 1
  %v898 = vmax.f32 %v896, %v897
  %v899 = vsub.f32 0.0, %v898
  %901 = vrot.lane.b32.xlu0 %v899, 14
  %v902 = vpop.permute.xlu0 %901
  %vm904 = vcmask 548976
  %905 = vst.msk [vmem:[#allocation4 + $0x4] sm:$0x1] %vm904, %v902
  %906 = vrot.lane.b32.xlu0 %v644, 92
  %v907 = vpop.permute.xlu0 %906
  %908 = vrot.lane.b32.xlu0 %v645, 92
  %v909 = vpop.permute.xlu0 %908
  %912 = vst.msk [vmem:[#allocation3] sm:$0xff] %vm767, %v907
  %913 = vst.msk [vmem:[#allocation3 + $0x8] sm:$0x3] %vm769, %v909
  %914 = vrot.lane.b32.xlu0 %v704, 98
  %v915 = vpop.permute.xlu0 %914
  %916 = vrot.lane.b32.xlu0 %v719, 98
  %v917 = vpop.permute.xlu0 %916
  %920 = vst.msk [vmem:[#allocation3] sm:$0xff] %vm779, %v915
  %921 = vst.msk [vmem:[#allocation3 + $0x8] sm:$0x3] %vm781, %v917
  %922 = vrot.lane.b32.xlu0 %v81, 113
  %v923 = vpop.permute.xlu0 %922
  %924 = vrot.lane.b32.xlu0 %v84, 113
  %v925 = vpop.permute.xlu0 %924
  %928 = vst.msk [vmem:[#allocation3] sm:$0xff] %vm791, %v923
  %929 = vst.msk [vmem:[#allocation3 + $0x8] sm:$0x3] %vm793, %v925
  %930 = vst.msk [vmem:[#allocation3] sm:$0xff] %vm801, %v673
  %931 = vst.msk [vmem:[#allocation3 + $0x8] sm:$0x3] %vm803, %v675
  %s932 = scalar_lea.vmem %s3, 16
  %v933 = vld [vmem:[%s932] sm:$0xff]
  %v934 = vld [vmem:[%s932 + $0x8] sm:$0x3]
  %937 = vrot.lane.b32.xlu0 %v933, 30
  %v938 = vpop.permute.xlu0 %937
  %939 = vrot.lane.b32.xlu0 %v934, 30
  %v940 = vpop.permute.xlu0 %939
  %943 = vst.msk [vmem:[#allocation3] sm:$0xff] %vm815, %v938
  %944 = vst.msk [vmem:[#allocation3 + $0x8] sm:$0x3] %vm817, %v940
  %945 = vrot.lane.b32.xlu0 %v743, 12
  %v946 = vpop.permute.xlu0 %945
  %947 = vrot.lane.b32.xlu0 %v758, 12
  %v948 = vpop.permute.xlu0 %947
  %951 = vst.msk [vmem:[#allocation3 - $0x6] sm:$0xc0] %vm827, %v946
  %952 = vst.msk [vmem:[#allocation3 + $0x2] sm:$0xff] %vm829, %v948
  %953 = vst.msk [vmem:[#allocation3 - $0x6] sm:$0xc0] %vm834, %v75
  %954 = vst.msk [vmem:[#allocation3 + $0x2] sm:$0xff] %vm281, %v78
  %v955 = vld [vmem:[#allocation3] sm:$0xff]
  %v956 = vld [vmem:[#allocation3 + $0x8] sm:$0x3]
  %v957 = vmul.f32 %v955, %v642
  %v958 = vmul.f32 %v956, %v642
  %v959 = vadd.f32 %v957, %v643
  %v960 = vadd.f32 %v958, %v643
  %v961 = vsel %vm843, %v959, -inf
  %v962 = vsel %vm845, %v960, -inf
  %v963 = vmax.f32 %v961, %v962
  %v964 = vrot.slane %v963, 4
  %v965 = vmax.f32 %v963, %v964
  %v966 = vrot.slane %v965, 2
  %v967 = vmax.f32 %v965, %v966
  %v968 = vrot.slane %v967, 1
  %v969 = vmax.f32 %v967, %v968
  %971 = vrot.lane.b32.xlu0 %v969, 34
  %v972 = vpop.permute.xlu0 %971
  %974 = vst.msk [vmem:[#allocation4 + $0x3] sm:$0x1] %vm858, %v972
  %v975 = vsel %vm843, %v959, 0.0
  %v976 = vsel %vm845, %v960, 0.0
  %v977 = vadd.f32 %v975, %v976
  %v978 = vrot.slane %v977, 4
  %v979 = vadd.f32 %v977, %v978
  %v980 = vrot.slane %v979, 2
  %v981 = vadd.f32 %v979, %v980
  %v982 = vrot.slane %v981, 1
  %v983 = vadd.f32 %v981, %v982
  %v984 = vmul.f32 %v983, %v875
  %986 = vrot.lane.b32.xlu0 %v984, 88
  %v987 = vpop.permute.xlu0 %986
  %v988 = vrot.slane %v987, 6
  %v989 = vsel %vm881, %v988, %v987
  %991 = vst.msk [vmem:[#allocation4 + $0x3] sm:$0x5] %vm886, %v989
  %v992 = vsub.f32 0.0, %v959
  %v993 = vsub.f32 0.0, %v960
  %v994 = vsel %vm843, %v992, -inf
  %v995 = vsel %vm845, %v993, -inf
  %v996 = vmax.f32 %v994, %v995
  %v997 = vrot.slane %v996, 4
  %v998 = vmax.f32 %v996, %v997
  %v999 = vrot.slane %v998, 2
  %v1000 = vmax.f32 %v998, %v999
  %v1001 = vrot.slane %v1000, 1
  %v1002 = vmax.f32 %v1000, %v1001
  %v1003 = vsub.f32 0.0, %v1002
  %1005 = vrot.lane.b32.xlu0 %v1003, 14
  %v1006 = vpop.permute.xlu0 %1005
  %1008 = vst.msk [vmem:[#allocation4 + $0x5] sm:$0x1] %vm904, %v1006
  %v1009 = vld [vmem:[%s6] sm:$0xff]
  %v1010 = vld [vmem:[%s6 + $0x8] sm:$0xff]
  %v1011 = vld [vmem:[%s6 + $0x10] sm:$0xff]
  %v1012 = vld [vmem:[%s6 + $0x18] sm:$0xff]
  %v1013 = vld [vmem:[%s6 + $0x20] sm:$0xff]
  %v1014 = vld [vmem:[%s6 + $0x28] sm:$0xff]
  %v1015 = vld [vmem:[%s6 + $0x30] sm:$0x3f]
  %v1016 = vld [vmem:[%s6 + $0x38] sm:$0x3f]
  %v1017 = vld [vmem:[%s6 + $0x40] sm:$0xff]
  %v1018 = vld [vmem:[%s6 + $0x50] sm:$0xff]
  %v1019 = vld [vmem:[%s6 + $0x60] sm:$0xff]
  %v1020 = vld [vmem:[%s6 + $0x70] sm:$0x3f]
  %v1021 = vld [vmem:[%s6 + $0x80] sm:$0xff]
  %v1022 = vld [vmem:[%s6 + $0x90] sm:$0x1]
  %v1023 = vld [vmem:[%s6 + $0xa0] ss:$0 sm:$0xff]
  %v1024 = vld [vmem:[%s6 + $0xa1] ss:$0 sm:$0xff]
  %v1025 = vld [vmem:[%s6 + $0xa2] ss:$0 sm:$0xff]
  %v1026 = vld [vmem:[%s6 + $0xa3] ss:$0 sm:$0xff]
  %v1027 = vld [vmem:[%s1] sm:$0xff]
  %v1028 = vld [vmem:[%s1 + $0x8] sm:$0xff]
  %v1029 = vld [vmem:[%s1 + $0x10] sm:$0xff]
  %v1030 = vld [vmem:[%s1 + $0x18] sm:$0xff]
  %v1031 = vld [vmem:[%s1 + $0x20] sm:$0xff]
  %v1032 = vld [vmem:[%s1 + $0x28] sm:$0xff]
  %v1033 = vld [vmem:[%s1 + $0x30] sm:$0xff]
  %v1034 = vld [vmem:[%s1 + $0x38] sm:$0xf]
  %v1036 = vsel %vm203, %v1027, 0
  %v1039 = vsel %vm203, %v1028, 0
  %v1042 = vsel %vm203, %v1029, 0
  %v1045 = vsel %vm203, %v1030, 0
  %v1048 = vsel %vm203, %v1031, 0
  %v1051 = vsel %vm203, %v1032, 0
  %v1054 = vsel %vm203, %v1033, 0
  %v1057 = vsel %vm203, %v1034, 0
  %vm1059 = vcmask 1040384
  %v1061 = vsel %vm1059, %v1022, 0
  %1063 = vmatpush.msra.mxu0 0.0
  %1064 = vmatpush.msra.mxu0 0.0
  %1065 = vmatpush.msra.mxu0 0.0
  %1066 = vmatpush.msra.mxu0 0.0
  %1067 = vmatpush.msra.mxu0 0.0
  %1068 = vmatpush.msra.mxu0 0.0
  %1069 = vmatpush.msra.mxu0 0.0
  %1070 = vmatpush.msra.mxu0 0.0
  %1071 = vmatpush.msra.mxu0 0.0
  %1072 = vmatpush.msra.mxu0 0.0
  %1073 = vmatpush.msra.mxu0 0.0
  %1074 = vmatpush.msra.mxu0 0.0
  %1075 = vmatpush.msra.mxu0 0.0
  %1076 = vmatpush.msra.mxu0 0.0
  %1077 = vmatpush.msra.mxu0 %v1061
  %1078 = vmatpush.msra.mxu0 %v1021
  %1079 = vmatmul.f32.gmra.mxu0 %v1036
  %v1080 = vpop.f32.mrf.mxu0
  %v1081 = vadd.f32 %v1023, %v1080
  %1082 = vmatmul.f32.gmra.mxu0 %v1039
  %v1083 = vpop.f32.mrf.mxu0
  %v1084 = vadd.f32 %v1023, %v1083
  %1085 = vmatmul.f32.gmra.mxu0 %v1042
  %v1086 = vpop.f32.mrf.mxu0
  %v1087 = vadd.f32 %v1023, %v1086
  %1088 = vmatmul.f32.gmra.mxu0 %v1045
  %v1089 = vpop.f32.mrf.mxu0
  %v1090 = vadd.f32 %v1023, %v1089
  %1091 = vmatmul.f32.gmra.mxu0 %v1048
  %v1092 = vpop.f32.mrf.mxu0
  %v1093 = vadd.f32 %v1023, %v1092
  %1094 = vmatmul.f32.gmra.mxu0 %v1051
  %v1095 = vpop.f32.mrf.mxu0
  %v1096 = vadd.f32 %v1023, %v1095
  %1097 = vmatmul.f32.gmra.mxu0 %v1054
  %v1098 = vpop.f32.mrf.mxu0
  %v1099 = vadd.f32 %v1023, %v1098
  %1100 = vmatmul.f32.gmra.mxu0 %v1057
  %v1101 = vpop.f32.mrf.mxu0
  %v1102 = vadd.f32 %v1023, %v1101
  %1103 = vdwg.mxu0
  %v1104 = vadd.f32 %v1024, 0.0
  %v1106 = vsel %vm40, 0.0, 0
  %v1109 = vsel %vm53, %v1020, 0
  %1111 = vmatpush.msra.mxu0 0.0
  %1112 = vmatpush.msra.mxu0 0.0
  %1113 = vmatpush.msra.mxu0 0.0
  %1114 = vmatpush.msra.mxu0 0.0
  %1115 = vmatpush.msra.mxu0 0.0
  %1116 = vmatpush.msra.mxu0 0.0
  %1117 = vmatpush.msra.mxu0 0.0
  %1118 = vmatpush.msra.mxu0 0.0
  %1119 = vmatpush.msra.mxu0 0.0
  %1120 = vmatpush.msra.mxu0 0.0
  %1121 = vmatpush.msra.mxu0 0.0
  %1122 = vmatpush.msra.mxu0 0.0
  %1123 = vmatpush.msra.mxu0 %v1109
  %1124 = vmatpush.msra.mxu0 %v1019
  %1125 = vmatpush.msra.mxu0 %v1018
  %1126 = vmatpush.msra.mxu0 %v1017
  %1127 = vmatmul.f32.gmra.mxu0 %v1106
  %v1128 = vpop.f32.mrf.mxu0
  %v1129 = vadd.f32 %v1026, %v1128
  %1130 = vdwg.mxu0
  %v1131 = vadd.f32 %v1081, %v1104
  %v1132 = vxor.u32 %v1131, 2147483648
  %v1133 = vmul.f32 %v1132, 1.442695
  %v1134 = vpow.pop %v1133
  %v1135 = vadd.f32 %v1134, 1.0
  %v1136 = vrcp.pop %v1135
  %v1137 = vmul.f32 %v1135, %v1136
  %v1138 = vsub.f32 1.0, %v1137
  %v1139 = vmul.f32 %v1136, %v1138
  %v1140 = vadd.f32 %v1136, %v1139
  %vm1141 = vweird.f32 %v1135
  %vm1142 = vweird.f32 %v1136
  %vm1143 = vmor %vm1141, %vm1142
  %v1144 = vsel %vm1143, %v1136, %v1140
  %v1145 = vand.u32 2147483647, %v1135
  %vm1146 = vcmp.eq.f32.partialorder %v1145, 8.507059e+37
  %v1147 = vand.u32 %v1135, 2147483648
  %v1148 = vor.u32 1.1754944e-38, %v1147
  %v1149 = vsel %vm1146, %v1148, %v1144
  %v1150 = vmul.f32 1.0, %v1149
  %1152 = vrot.lane.b32.xlu0 %v1104, 68
  %v1153 = vpop.permute.xlu0 %1152
  %v1155 = vmul.f32 %v1150, %v1153
  %1157 = vrot.lane.b32.xlu0 %v1155, 60
  %v1158 = vpop.permute.xlu0 %1157
  %v1160 = vadd.f32 %v1081, %v1158
  %v1161 = vtanh.pop %v1160
  %v1162 = vsub.f32 1.0, %v1150
  %1164 = vrot.lane.b32.xlu0 %v1161, 98
  %v1165 = vpop.permute.xlu0 %1164
  %v1167 = vmul.f32 %v1162, %v1165
  %v1168 = vmul.f32 %v1150, 0.0
  %v1169 = vadd.f32 %v1167, %v1168
  %1171 = vrot.lane.b32.xlu0 %v1169, 98
  %v1172 = vpop.permute.xlu0 %1171
  %v1173 = vsel %vm40, %v1172, 0
  %v1176 = vsel %vm53, %v1015, 0
  %v1179 = vsel %vm53, %v1016, 0
  %1181 = vmatpush.msra.mxu0 0.0
  %1182 = vmatpush.msra.mxu0 0.0
  %1183 = vmatpush.msra.mxu0 0.0
  %1184 = vmatpush.msra.mxu0 0.0
  %1185 = vmatpush.msra.mxu0 0.0
  %1186 = vmatpush.msra.mxu0 0.0
  %1187 = vmatpush.msra.mxu0 0.0
  %1188 = vmatpush.msra.mxu0 0.0
  %1189 = vmatpush.msra.mxu0 0.0
  %1190 = vmatpush.msra.mxu0 0.0
  %1191 = vmatpush.msra.mxu0 0.0
  %1192 = vmatpush.msra.mxu0 0.0
  %1193 = vmatpush.msra.mxu0 %v1176
  %1194 = vmatpush.msra.mxu0 %v1013
  %1195 = vmatpush.msra.mxu0 %v1011
  %1196 = vmatpush.msra.mxu0 %v1009
  %1197 = vmatmul.f32.gmra.mxu0 %v1173
  %v1198 = vpop.f32.mrf.mxu0
  %v1199 = vadd.f32 0.0, %v1198
  %1200 = vdwg.mxu0
  %1201 = vmatpush.msra.mxu0 0.0
  %1202 = vmatpush.msra.mxu0 0.0
  %1203 = vmatpush.msra.mxu0 0.0
  %1204 = vmatpush.msra.mxu0 0.0
  %1205 = vmatpush.msra.mxu0 0.0
  %1206 = vmatpush.msra.mxu0 0.0
  %1207 = vmatpush.msra.mxu0 0.0
  %1208 = vmatpush.msra.mxu0 0.0
  %1209 = vmatpush.msra.mxu0 0.0
  %1210 = vmatpush.msra.mxu0 0.0
  %1211 = vmatpush.msra.mxu0 0.0
  %1212 = vmatpush.msra.mxu0 0.0
  %1213 = vmatpush.msra.mxu0 %v1179
  %1214 = vmatpush.msra.mxu0 %v1014
  %1215 = vmatpush.msra.mxu0 %v1012
  %1216 = vmatpush.msra.mxu0 %v1010
  %1217 = vmatmul.f32.gmra.mxu0 %v1173
  %v1218 = vpop.f32.mrf.mxu0
  %v1219 = vadd.f32 0.0, %v1218
  %1220 = vdwg.mxu0
  %v1221 = vadd.f32 %v1199, %v1025
  %1223 = vrot.lane.b32.xlu0 %v1024, 90
  %v1224 = vpop.permute.xlu0 %1223
  %v1226 = vadd.f32 %v1199, %v1224
  %v1227 = vadd.f32 %v1219, %v1224
  %v1228 = vadd.f32 %v1221, %v1129
  %v1229 = vxor.u32 %v1228, 2147483648
  %v1230 = vmul.f32 %v1229, 1.442695
  %v1231 = vpow.pop %v1230
  %v1232 = vadd.f32 %v1231, 1.0
  %v1233 = vrcp.pop %v1232
  %v1234 = vmul.f32 %v1232, %v1233
  %v1235 = vsub.f32 1.0, %v1234
  %v1236 = vmul.f32 %v1233, %v1235
  %v1237 = vadd.f32 %v1233, %v1236
  %vm1238 = vweird.f32 %v1232
  %vm1239 = vweird.f32 %v1233
  %vm1240 = vmor %vm1238, %vm1239
  %v1241 = vsel %vm1240, %v1233, %v1237
  %v1242 = vand.u32 2147483647, %v1232
  %vm1243 = vcmp.eq.f32.partialorder %v1242, 8.507059e+37
  %v1244 = vand.u32 %v1232, 2147483648
  %v1245 = vor.u32 1.1754944e-38, %v1244
  %v1246 = vsel %vm1243, %v1245, %v1241
  %v1247 = vmul.f32 1.0, %v1246
  %1249 = vrot.lane.b32.xlu0 %v1129, 68
  %v1250 = vpop.permute.xlu0 %1249
  %v1252 = vmul.f32 %v1247, %v1250
  %1254 = vrot.lane.b32.xlu0 %v1252, 60
  %v1255 = vpop.permute.xlu0 %1254
  %v1257 = vadd.f32 %v1221, %v1255
  %v1258 = vtanh.pop %v1257
  %v1259 = vsub.f32 1.0, %v1247
  %1261 = vrot.lane.b32.xlu0 %v1258, 98
  %v1262 = vpop.permute.xlu0 %1261
  %v1264 = vmul.f32 %v1259, %v1262
  %v1265 = vmul.f32 %v1247, 0.0
  %v1266 = vadd.f32 %v1264, %v1265
  %1268 = vrot.lane.b32.xlu0 %v1266, 98
  %v1269 = vpop.permute.xlu0 %1268
  %v1270 = vsel %vm40, %v1269, 0
  %1272 = vmatpush.msra.mxu0 0.0
  %1273 = vmatpush.msra.mxu0 0.0
  %1274 = vmatpush.msra.mxu0 0.0
  %1275 = vmatpush.msra.mxu0 0.0
  %1276 = vmatpush.msra.mxu0 0.0
  %1277 = vmatpush.msra.mxu0 0.0
  %1278 = vmatpush.msra.mxu0 0.0
  %1279 = vmatpush.msra.mxu0 0.0
  %1280 = vmatpush.msra.mxu0 0.0
  %1281 = vmatpush.msra.mxu0 0.0
  %1282 = vmatpush.msra.mxu0 0.0
  %1283 = vmatpush.msra.mxu0 0.0
  %1284 = vmatpush.msra.mxu0 %v1109
  %1285 = vmatpush.msra.mxu0 %v1019
  %1286 = vmatpush.msra.mxu0 %v1018
  %1287 = vmatpush.msra.mxu0 %v1017
  %1288 = vmatmul.f32.gmra.mxu0 %v1270
  %v1289 = vpop.f32.mrf.mxu0
  %v1290 = vadd.f32 %v1026, %v1289
  %1291 = vdwg.mxu0
  %v1293 = vrot.slane %v1226, 6
  %1294 = vrot.lane.b32.xlu0 %v1293, 38
  %v1295 = vpop.permute.xlu0 %1294
  %v1297 = vadd.f32 %v1081, %v1295
  %v1298 = vxor.u32 %v1297, 2147483648
  %v1299 = vmul.f32 %v1298, 1.442695
  %v1300 = vpow.pop %v1299
  %v1301 = vadd.f32 %v1300, 1.0
  %v1302 = vrcp.pop %v1301
  %v1303 = vmul.f32 %v1301, %v1302
  %v1304 = vsub.f32 1.0, %v1303
  %v1305 = vmul.f32 %v1302, %v1304
  %v1306 = vadd.f32 %v1302, %v1305
  %vm1307 = vweird.f32 %v1301
  %vm1308 = vweird.f32 %v1302
  %vm1309 = vmor %vm1307, %vm1308
  %v1310 = vsel %vm1309, %v1302, %v1306
  %v1311 = vand.u32 2147483647, %v1301
  %vm1312 = vcmp.eq.f32.partialorder %v1311, 8.507059e+37
  %v1313 = vand.u32 %v1301, 2147483648
  %v1314 = vor.u32 1.1754944e-38, %v1313
  %v1315 = vsel %vm1312, %v1314, %v1310
  %v1316 = vmul.f32 1.0, %v1315
  %v1318 = vrot.slane %v1227, 6
  %1319 = vrot.lane.b32.xlu0 %v1318, 38
  %v1320 = vpop.permute.xlu0 %1319
  %vm1321 = vcmask 310272
  %v1322 = vsel %vm1321, %v1295, %v1320
  %v1324 = vadd.f32 %v1081, %v1322
  %v1325 = vxor.u32 %v1324, 2147483648
  %v1326 = vmul.f32 %v1325, 1.442695
  %v1327 = vpow.pop %v1326
  %v1328 = vadd.f32 %v1327, 1.0
  %v1329 = vrcp.pop %v1328
  %v1330 = vmul.f32 %v1328, %v1329
  %v1331 = vsub.f32 1.0, %v1330
  %v1332 = vmul.f32 %v1329, %v1331
  %v1333 = vadd.f32 %v1329, %v1332
  %vm1334 = vweird.f32 %v1328
  %vm1335 = vweird.f32 %v1329
  %vm1336 = vmor %vm1334, %vm1335
  %v1337 = vsel %vm1336, %v1329, %v1333
  %v1338 = vand.u32 2147483647, %v1328
  %vm1339 = vcmp.eq.f32.partialorder %v1338, 8.507059e+37
  %v1340 = vand.u32 %v1328, 2147483648
  %v1341 = vor.u32 1.1754944e-38, %v1340
  %v1342 = vsel %vm1339, %v1341, %v1337
  %v1343 = vmul.f32 1.0, %v1342
  %1344 = vrot.lane.b32.xlu0 %v1318, 106
  %v1345 = vpop.permute.xlu0 %1344
  %v1347 = vmul.f32 %v1316, %v1345
  %1349 = vrot.lane.b32.xlu0 %v1347, 60
  %v1350 = vpop.permute.xlu0 %1349
  %v1352 = vadd.f32 %v1081, %v1350
  %v1353 = vtanh.pop %v1352
  %v1354 = vsub.f32 1.0, %v1343
  %1356 = vrot.lane.b32.xlu0 %v1353, 98
  %v1357 = vpop.permute.xlu0 %1356
  %v1359 = vmul.f32 %v1354, %v1357
  %v1360 = vrot.slane %v1169, 6
  %v1362 = vmul.f32 %v1343, %v1360
  %v1363 = vadd.f32 %v1359, %v1362
  %v1365 = vrot.slane %v1363, 2
  %1366 = vrot.lane.b32.xlu0 %v1365, 98
  %v1367 = vpop.permute.xlu0 %1366
  %v1368 = vsel %vm40, %v1367, 0
  %1370 = vmatpush.msra.mxu0 0.0
  %1371 = vmatpush.msra.mxu0 0.0
  %1372 = vmatpush.msra.mxu0 0.0
  %1373 = vmatpush.msra.mxu0 0.0
  %1374 = vmatpush.msra.mxu0 0.0
  %1375 = vmatpush.msra.mxu0 0.0
  %1376 = vmatpush.msra.mxu0 0.0
  %1377 = vmatpush.msra.mxu0 0.0
  %1378 = vmatpush.msra.mxu0 0.0
  %1379 = vmatpush.msra.mxu0 0.0
  %1380 = vmatpush.msra.mxu0 0.0
  %1381 = vmatpush.msra.mxu0 0.0
  %1382 = vmatpush.msra.mxu0 %v1176
  %1383 = vmatpush.msra.mxu0 %v1013
  %1384 = vmatpush.msra.mxu0 %v1011
  %1385 = vmatpush.msra.mxu0 %v1009
  %1386 = vmatmul.f32.gmra.mxu0 %v1368
  %v1387 = vpop.f32.mrf.mxu0
  %v1388 = vadd.f32 0.0, %v1387
  %1389 = vdwg.mxu0
  %1390 = vmatpush.msra.mxu0 0.0
  %1391 = vmatpush.msra.mxu0 0.0
  %1392 = vmatpush.msra.mxu0 0.0
  %1393 = vmatpush.msra.mxu0 0.0
  %1394 = vmatpush.msra.mxu0 0.0
  %1395 = vmatpush.msra.mxu0 0.0
  %1396 = vmatpush.msra.mxu0 0.0
  %1397 = vmatpush.msra.mxu0 0.0
  %1398 = vmatpush.msra.mxu0 0.0
  %1399 = vmatpush.msra.mxu0 0.0
  %1400 = vmatpush.msra.mxu0 0.0
  %1401 = vmatpush.msra.mxu0 0.0
  %1402 = vmatpush.msra.mxu0 %v1179
  %1403 = vmatpush.msra.mxu0 %v1014
  %1404 = vmatpush.msra.mxu0 %v1012
  %1405 = vmatpush.msra.mxu0 %v1010
  %1406 = vmatmul.f32.gmra.mxu0 %v1368
  %v1407 = vpop.f32.mrf.mxu0
  %v1408 = vadd.f32 0.0, %v1407
  %1409 = vdwg.mxu0
  %v1410 = vadd.f32 %v1388, %v1025
  %v1411 = vadd.f32 %v1388, %v1224
  %v1412 = vadd.f32 %v1408, %v1224
  %v1413 = vadd.f32 %v1410, %v1290
  %v1414 = vxor.u32 %v1413, 2147483648
  %v1415 = vmul.f32 %v1414, 1.442695
  %v1416 = vpow.pop %v1415
  %v1417 = vadd.f32 %v1416, 1.0
  %v1418 = vrcp.pop %v1417
  %v1419 = vmul.f32 %v1417, %v1418
  %v1420 = vsub.f32 1.0, %v1419
  %v1421 = vmul.f32 %v1418, %v1420
  %v1422 = vadd.f32 %v1418, %v1421
  %vm1423 = vweird.f32 %v1417
  %vm1424 = vweird.f32 %v1418
  %vm1425 = vmor %vm1423, %vm1424
  %v1426 = vsel %vm1425, %v1418, %v1422
  %v1427 = vand.u32 2147483647, %v1417
  %vm1428 = vcmp.eq.f32.partialorder %v1427, 8.507059e+37
  %v1429 = vand.u32 %v1417, 2147483648
  %v1430 = vor.u32 1.1754944e-38, %v1429
  %v1431 = vsel %vm1428, %v1430, %v1426
  %v1432 = vmul.f32 1.0, %v1431
  %1434 = vrot.lane.b32.xlu0 %v1290, 68
  %v1435 = vpop.permute.xlu0 %1434
  %v1437 = vmul.f32 %v1432, %v1435
  %1439 = vrot.lane.b32.xlu0 %v1437, 60
  %v1440 = vpop.permute.xlu0 %1439
  %v1442 = vadd.f32 %v1410, %v1440
  %v1443 = vtanh.pop %v1442
  %v1444 = vsub.f32 1.0, %v1432
  %1446 = vrot.lane.b32.xlu0 %v1443, 98
  %v1447 = vpop.permute.xlu0 %1446
  %v1449 = vmul.f32 %v1444, %v1447
  %v1450 = vmul.f32 %v1432, %v1266
  %v1451 = vadd.f32 %v1449, %v1450
  %1453 = vrot.lane.b32.xlu0 %v1451, 98
  %v1454 = vpop.permute.xlu0 %1453
  %v1455 = vsel %vm40, %v1454, 0
  %1457 = vmatpush.msra.mxu0 0.0
  %1458 = vmatpush.msra.mxu0 0.0
  %1459 = vmatpush.msra.mxu0 0.0
  %1460 = vmatpush.msra.mxu0 0.0
  %1461 = vmatpush.msra.mxu0 0.0
  %1462 = vmatpush.msra.mxu0 0.0
  %1463 = vmatpush.msra.mxu0 0.0
  %1464 = vmatpush.msra.mxu0 0.0
  %1465 = vmatpush.msra.mxu0 0.0
  %1466 = vmatpush.msra.mxu0 0.0
  %1467 = vmatpush.msra.mxu0 0.0
  %1468 = vmatpush.msra.mxu0 0.0
  %1469 = vmatpush.msra.mxu0 %v1109
  %1470 = vmatpush.msra.mxu0 %v1019
  %1471 = vmatpush.msra.mxu0 %v1018
  %1472 = vmatpush.msra.mxu0 %v1017
  %1473 = vmatmul.f32.gmra.mxu0 %v1455
  %v1474 = vpop.f32.mrf.mxu0
  %v1475 = vadd.f32 %v1026, %v1474
  %1476 = vdwg.mxu0
  %v1478 = vrot.slane %v1411, 4
  %1479 = vrot.lane.b32.xlu0 %v1478, 38
  %v1480 = vpop.permute.xlu0 %1479
  %v1482 = vadd.f32 %v1081, %v1480
  %v1483 = vxor.u32 %v1482, 2147483648
  %v1484 = vmul.f32 %v1483, 1.442695
  %v1485 = vpow.pop %v1484
  %v1486 = vadd.f32 %v1485, 1.0
  %v1487 = vrcp.pop %v1486
  %v1488 = vmul.f32 %v1486, %v1487
  %v1489 = vsub.f32 1.0, %v1488
  %v1490 = vmul.f32 %v1487, %v1489
  %v1491 = vadd.f32 %v1487, %v1490
  %vm1492 = vweird.f32 %v1486
  %vm1493 = vweird.f32 %v1487
  %vm1494 = vmor %vm1492, %vm1493
  %v1495 = vsel %vm1494, %v1487, %v1491
  %v1496 = vand.u32 2147483647, %v1486
  %vm1497 = vcmp.eq.f32.partialorder %v1496, 8.507059e+37
  %v1498 = vand.u32 %v1486, 2147483648
  %v1499 = vor.u32 1.1754944e-38, %v1498
  %v1500 = vsel %vm1497, %v1499, %v1495
  %v1501 = vmul.f32 1.0, %v1500
  %v1503 = vrot.slane %v1412, 4
  %1504 = vrot.lane.b32.xlu0 %v1503, 38
  %v1505 = vpop.permute.xlu0 %1504
  %v1506 = vsel %vm1321, %v1480, %v1505
  %v1508 = vadd.f32 %v1081, %v1506
  %v1509 = vxor.u32 %v1508, 2147483648
  %v1510 = vmul.f32 %v1509, 1.442695
  %v1511 = vpow.pop %v1510
  %v1512 = vadd.f32 %v1511, 1.0
  %v1513 = vrcp.pop %v1512
  %v1514 = vmul.f32 %v1512, %v1513
  %v1515 = vsub.f32 1.0, %v1514
  %v1516 = vmul.f32 %v1513, %v1515
  %v1517 = vadd.f32 %v1513, %v1516
  %vm1518 = vweird.f32 %v1512
  %vm1519 = vweird.f32 %v1513
  %vm1520 = vmor %vm1518, %vm1519
  %v1521 = vsel %vm1520, %v1513, %v1517
  %v1522 = vand.u32 2147483647, %v1512
  %vm1523 = vcmp.eq.f32.partialorder %v1522, 8.507059e+37
  %v1524 = vand.u32 %v1512, 2147483648
  %v1525 = vor.u32 1.1754944e-38, %v1524
  %v1526 = vsel %vm1523, %v1525, %v1521
  %v1527 = vmul.f32 1.0, %v1526
  %1528 = vrot.lane.b32.xlu0 %v1503, 106
  %v1529 = vpop.permute.xlu0 %1528
  %v1531 = vmul.f32 %v1501, %v1529
  %1533 = vrot.lane.b32.xlu0 %v1531, 60
  %v1534 = vpop.permute.xlu0 %1533
  %v1536 = vadd.f32 %v1081, %v1534
  %v1537 = vtanh.pop %v1536
  %v1538 = vsub.f32 1.0, %v1527
  %1540 = vrot.lane.b32.xlu0 %v1537, 98
  %v1541 = vpop.permute.xlu0 %1540
  %v1543 = vmul.f32 %v1538, %v1541
  %v1544 = vrot.slane %v1363, 6
  %v1546 = vmul.f32 %v1527, %v1544
  %v1547 = vadd.f32 %v1543, %v1546
  %v1549 = vrot.slane %v1547, 4
  %1550 = vrot.lane.b32.xlu0 %v1549, 98
  %v1551 = vpop.permute.xlu0 %1550
  %v1552 = vsel %vm40, %v1551, 0
  %1554 = vmatpush.msra.mxu0 0.0
  %1555 = vmatpush.msra.mxu0 0.0
  %1556 = vmatpush.msra.mxu0 0.0
  %1557 = vmatpush.msra.mxu0 0.0
  %1558 = vmatpush.msra.mxu0 0.0
  %1559 = vmatpush.msra.mxu0 0.0
  %1560 = vmatpush.msra.mxu0 0.0
  %1561 = vmatpush.msra.mxu0 0.0
  %1562 = vmatpush.msra.mxu0 0.0
  %1563 = vmatpush.msra.mxu0 0.0
  %1564 = vmatpush.msra.mxu0 0.0
  %1565 = vmatpush.msra.mxu0 0.0
  %1566 = vmatpush.msra.mxu0 %v1176
  %1567 = vmatpush.msra.mxu0 %v1013
  %1568 = vmatpush.msra.mxu0 %v1011
  %1569 = vmatpush.msra.mxu0 %v1009
  %1570 = vmatmul.f32.gmra.mxu0 %v1552
  %v1571 = vpop.f32.mrf.mxu0
  %v1572 = vadd.f32 0.0, %v1571
  %1573 = vdwg.mxu0
  %1574 = vmatpush.msra.mxu0 0.0
  %1575 = vmatpush.msra.mxu0 0.0
  %1576 = vmatpush.msra.mxu0 0.0
  %1577 = vmatpush.msra.mxu0 0.0
  %1578 = vmatpush.msra.mxu0 0.0
  %1579 = vmatpush.msra.mxu0 0.0
  %1580 = vmatpush.msra.mxu0 0.0
  %1581 = vmatpush.msra.mxu0 0.0
  %1582 = vmatpush.msra.mxu0 0.0
  %1583 = vmatpush.msra.mxu0 0.0
  %1584 = vmatpush.msra.mxu0 0.0
  %1585 = vmatpush.msra.mxu0 0.0
  %1586 = vmatpush.msra.mxu0 %v1179
  %1587 = vmatpush.msra.mxu0 %v1014
  %1588 = vmatpush.msra.mxu0 %v1012
  %1589 = vmatpush.msra.mxu0 %v1010
  %1590 = vmatmul.f32.gmra.mxu0 %v1552
  %v1591 = vpop.f32.mrf.mxu0
  %v1592 = vadd.f32 0.0, %v1591
  %1593 = vdwg.mxu0
  %v1594 = vadd.f32 %v1572, %v1025
  %v1595 = vadd.f32 %v1572, %v1224
  %v1596 = vadd.f32 %v1592, %v1224
  %v1597 = vadd.f32 %v1594, %v1475
  %v1598 = vxor.u32 %v1597, 2147483648
  %v1599 = vmul.f32 %v1598, 1.442695
  %v1600 = vpow.pop %v1599
  %v1601 = vadd.f32 %v1600, 1.0
  %v1602 = vrcp.pop %v1601
  %v1603 = vmul.f32 %v1601, %v1602
  %v1604 = vsub.f32 1.0, %v1603
  %v1605 = vmul.f32 %v1602, %v1604
  %v1606 = vadd.f32 %v1602, %v1605
  %vm1607 = vweird.f32 %v1601
  %vm1608 = vweird.f32 %v1602
  %vm1609 = vmor %vm1607, %vm1608
  %v1610 = vsel %vm1609, %v1602, %v1606
  %v1611 = vand.u32 2147483647, %v1601
  %vm1612 = vcmp.eq.f32.partialorder %v1611, 8.507059e+37
  %v1613 = vand.u32 %v1601, 2147483648
  %v1614 = vor.u32 1.1754944e-38, %v1613
  %v1615 = vsel %vm1612, %v1614, %v1610
  %v1616 = vmul.f32 1.0, %v1615
  %1618 = vrot.lane.b32.xlu0 %v1475, 68
  %v1619 = vpop.permute.xlu0 %1618
  %v1621 = vmul.f32 %v1616, %v1619
  %1623 = vrot.lane.b32.xlu0 %v1621, 60
  %v1624 = vpop.permute.xlu0 %1623
  %v1626 = vadd.f32 %v1594, %v1624
  %v1627 = vtanh.pop %v1626
  %v1628 = vsub.f32 1.0, %v1616
  %1630 = vrot.lane.b32.xlu0 %v1627, 98
  %v1631 = vpop.permute.xlu0 %1630
  %v1633 = vmul.f32 %v1628, %v1631
  %v1634 = vmul.f32 %v1616, %v1451
  %v1635 = vadd.f32 %v1633, %v1634
  %1637 = vrot.lane.b32.xlu0 %v1635, 98
  %v1638 = vpop.permute.xlu0 %1637
  %v1639 = vsel %vm40, %v1638, 0
  %1641 = vmatpush.msra.mxu0 0.0
  %1642 = vmatpush.msra.mxu0 0.0
  %1643 = vmatpush.msra.mxu0 0.0
  %1644 = vmatpush.msra.mxu0 0.0
  %1645 = vmatpush.msra.mxu0 0.0
  %1646 = vmatpush.msra.mxu0 0.0
  %1647 = vmatpush.msra.mxu0 0.0
  %1648 = vmatpush.msra.mxu0 0.0
  %1649 = vmatpush.msra.mxu0 0.0
  %1650 = vmatpush.msra.mxu0 0.0
  %1651 = vmatpush.msra.mxu0 0.0
  %1652 = vmatpush.msra.mxu0 0.0
  %1653 = vmatpush.msra.mxu0 %v1109
  %1654 = vmatpush.msra.mxu0 %v1019
  %1655 = vmatpush.msra.mxu0 %v1018
  %1656 = vmatpush.msra.mxu0 %v1017
  %1657 = vmatmul.f32.gmra.mxu0 %v1639
  %v1658 = vpop.f32.mrf.mxu0
  %v1659 = vadd.f32 %v1026, %v1658
  %1660 = vdwg.mxu0
  %v1662 = vrot.slane %v1595, 2
  %1663 = vrot.lane.b32.xlu0 %v1662, 38
  %v1664 = vpop.permute.xlu0 %1663
  %v1666 = vadd.f32 %v1081, %v1664
  %v1667 = vxor.u32 %v1666, 2147483648
  %v1668 = vmul.f32 %v1667, 1.442695
  %v1669 = vpow.pop %v1668
  %v1670 = vadd.f32 %v1669, 1.0
  %v1671 = vrcp.pop %v1670
  %v1672 = vmul.f32 %v1670, %v1671
  %v1673 = vsub.f32 1.0, %v1672
  %v1674 = vmul.f32 %v1671, %v1673
  %v1675 = vadd.f32 %v1671, %v1674
  %vm1676 = vweird.f32 %v1670
  %vm1677 = vweird.f32 %v1671
  %vm1678 = vmor %vm1676, %vm1677
  %v1679 = vsel %vm1678, %v1671, %v1675
  %v1680 = vand.u32 2147483647, %v1670
  %vm1681 = vcmp.eq.f32.partialorder %v1680, 8.507059e+37
  %v1682 = vand.u32 %v1670, 2147483648
  %v1683 = vor.u32 1.1754944e-38, %v1682
  %v1684 = vsel %vm1681, %v1683, %v1679
  %v1685 = vmul.f32 1.0, %v1684
  %v1687 = vrot.slane %v1596, 2
  %1688 = vrot.lane.b32.xlu0 %v1687, 38
  %v1689 = vpop.permute.xlu0 %1688
  %v1690 = vsel %vm1321, %v1664, %v1689
  %v1692 = vadd.f32 %v1081, %v1690
  %v1693 = vxor.u32 %v1692, 2147483648
  %v1694 = vmul.f32 %v1693, 1.442695
  %v1695 = vpow.pop %v1694
  %v1696 = vadd.f32 %v1695, 1.0
  %v1697 = vrcp.pop %v1696
  %v1698 = vmul.f32 %v1696, %v1697
  %v1699 = vsub.f32 1.0, %v1698
  %v1700 = vmul.f32 %v1697, %v1699
  %v1701 = vadd.f32 %v1697, %v1700
  %vm1702 = vweird.f32 %v1696
  %vm1703 = vweird.f32 %v1697
  %vm1704 = vmor %vm1702, %vm1703
  %v1705 = vsel %vm1704, %v1697, %v1701
  %v1706 = vand.u32 2147483647, %v1696
  %vm1707 = vcmp.eq.f32.partialorder %v1706, 8.507059e+37
  %v1708 = vand.u32 %v1696, 2147483648
  %v1709 = vor.u32 1.1754944e-38, %v1708
  %v1710 = vsel %vm1707, %v1709, %v1705
  %v1711 = vmul.f32 1.0, %v1710
  %1712 = vrot.lane.b32.xlu0 %v1687, 106
  %v1713 = vpop.permute.xlu0 %1712
  %v1715 = vmul.f32 %v1685, %v1713
  %1717 = vrot.lane.b32.xlu0 %v1715, 60
  %v1718 = vpop.permute.xlu0 %1717
  %v1720 = vadd.f32 %v1081, %v1718
  %v1721 = vtanh.pop %v1720
  %v1722 = vsub.f32 1.0, %v1711
  %1724 = vrot.lane.b32.xlu0 %v1721, 98
  %v1725 = vpop.permute.xlu0 %1724
  %v1727 = vmul.f32 %v1722, %v1725
  %v1728 = vrot.slane %v1547, 6
  %v1730 = vmul.f32 %v1711, %v1728
  %v1731 = vadd.f32 %v1727, %v1730
  %v1733 = vrot.slane %v1731, 6
  %1734 = vrot.lane.b32.xlu0 %v1733, 98
  %v1735 = vpop.permute.xlu0 %1734
  %v1736 = vsel %vm40, %v1735, 0
  %1738 = vmatpush.msra.mxu0 0.0
  %1739 = vmatpush.msra.mxu0 0.0
  %1740 = vmatpush.msra.mxu0 0.0
  %1741 = vmatpush.msra.mxu0 0.0
  %1742 = vmatpush.msra.mxu0 0.0
  %1743 = vmatpush.msra.mxu0 0.0
  %1744 = vmatpush.msra.mxu0 0.0
  %1745 = vmatpush.msra.mxu0 0.0
  %1746 = vmatpush.msra.mxu0 0.0
  %1747 = vmatpush.msra.mxu0 0.0
  %1748 = vmatpush.msra.mxu0 0.0
  %1749 = vmatpush.msra.mxu0 0.0
  %1750 = vmatpush.msra.mxu0 %v1176
  %1751 = vmatpush.msra.mxu0 %v1013
  %1752 = vmatpush.msra.mxu0 %v1011
  %1753 = vmatpush.msra.mxu0 %v1009
  %1754 = vmatmul.f32.gmra.mxu0 %v1736
  %v1755 = vpop.f32.mrf.mxu0
  %v1756 = vadd.f32 0.0, %v1755
  %1757 = vdwg.mxu0
  %1758 = vmatpush.msra.mxu0 0.0
  %1759 = vmatpush.msra.mxu0 0.0
  %1760 = vmatpush.msra.mxu0 0.0
  %1761 = vmatpush.msra.mxu0 0.0
  %1762 = vmatpush.msra.mxu0 0.0
  %1763 = vmatpush.msra.mxu0 0.0
  %1764 = vmatpush.msra.mxu0 0.0
  %1765 = vmatpush.msra.mxu0 0.0
  %1766 = vmatpush.msra.mxu0 0.0
  %1767 = vmatpush.msra.mxu0 0.0
  %1768 = vmatpush.msra.mxu0 0.0
  %1769 = vmatpush.msra.mxu0 0.0
  %1770 = vmatpush.msra.mxu0 %v1179
  %1771 = vmatpush.msra.mxu0 %v1014
  %1772 = vmatpush.msra.mxu0 %v1012
  %1773 = vmatpush.msra.mxu0 %v1010
  %1774 = vmatmul.f32.gmra.mxu0 %v1736
  %v1775 = vpop.f32.mrf.mxu0
  %v1776 = vadd.f32 0.0, %v1775
  %1777 = vdwg.mxu0
  %v1778 = vadd.f32 %v1756, %v1025
  %v1779 = vadd.f32 %v1756, %v1224
  %v1780 = vadd.f32 %v1776, %v1224
  %v1781 = vadd.f32 %v1778, %v1659
  %v1782 = vxor.u32 %v1781, 2147483648
  %v1783 = vmul.f32 %v1782, 1.442695
  %v1784 = vpow.pop %v1783
  %v1785 = vadd.f32 %v1784, 1.0
  %v1786 = vrcp.pop %v1785
  %v1787 = vmul.f32 %v1785, %v1786
  %v1788 = vsub.f32 1.0, %v1787
  %v1789 = vmul.f32 %v1786, %v1788
  %v1790 = vadd.f32 %v1786, %v1789
  %vm1791 = vweird.f32 %v1785
  %vm1792 = vweird.f32 %v1786
  %vm1793 = vmor %vm1791, %vm1792
  %v1794 = vsel %vm1793, %v1786, %v1790
  %v1795 = vand.u32 2147483647, %v1785
  %vm1796 = vcmp.eq.f32.partialorder %v1795, 8.507059e+37
  %v1797 = vand.u32 %v1785, 2147483648
  %v1798 = vor.u32 1.1754944e-38, %v1797
  %v1799 = vsel %vm1796, %v1798, %v1794
  %v1800 = vmul.f32 1.0, %v1799
  %1802 = vrot.lane.b32.xlu0 %v1659, 68
  %v1803 = vpop.permute.xlu0 %1802
  %v1805 = vmul.f32 %v1800, %v1803
  %1807 = vrot.lane.b32.xlu0 %v1805, 60
  %v1808 = vpop.permute.xlu0 %1807
  %v1810 = vadd.f32 %v1778, %v1808
  %v1811 = vtanh.pop %v1810
  %v1812 = vsub.f32 1.0, %v1800
  %1814 = vrot.lane.b32.xlu0 %v1811, 98
  %v1815 = vpop.permute.xlu0 %1814
  %v1817 = vmul.f32 %v1812, %v1815
  %v1818 = vmul.f32 %v1800, %v1635
  %v1819 = vadd.f32 %v1817, %v1818
  %1821 = vrot.lane.b32.xlu0 %v1819, 98
  %v1822 = vpop.permute.xlu0 %1821
  %v1823 = vsel %vm40, %v1822, 0
  %1825 = vmatpush.msra.mxu0 0.0
  %1826 = vmatpush.msra.mxu0 0.0
  %1827 = vmatpush.msra.mxu0 0.0
  %1828 = vmatpush.msra.mxu0 0.0
  %1829 = vmatpush.msra.mxu0 0.0
  %1830 = vmatpush.msra.mxu0 0.0
  %1831 = vmatpush.msra.mxu0 0.0
  %1832 = vmatpush.msra.mxu0 0.0
  %1833 = vmatpush.msra.mxu0 0.0
  %1834 = vmatpush.msra.mxu0 0.0
  %1835 = vmatpush.msra.mxu0 0.0
  %1836 = vmatpush.msra.mxu0 0.0
  %1837 = vmatpush.msra.mxu0 %v1109
  %1838 = vmatpush.msra.mxu0 %v1019
  %1839 = vmatpush.msra.mxu0 %v1018
  %1840 = vmatpush.msra.mxu0 %v1017
  %1841 = vmatmul.f32.gmra.mxu0 %v1823
  %v1842 = vpop.f32.mrf.mxu0
  %v1843 = vadd.f32 %v1026, %v1842
  %1844 = vdwg.mxu0
  %1846 = vrot.lane.b32.xlu0 %v1779, 38
  %v1847 = vpop.permute.xlu0 %1846
  %v1849 = vadd.f32 %v1084, %v1847
  %v1850 = vxor.u32 %v1849, 2147483648
  %v1851 = vmul.f32 %v1850, 1.442695
  %v1852 = vpow.pop %v1851
  %v1853 = vadd.f32 %v1852, 1.0
  %v1854 = vrcp.pop %v1853
  %v1855 = vmul.f32 %v1853, %v1854
  %v1856 = vsub.f32 1.0, %v1855
  %v1857 = vmul.f32 %v1854, %v1856
  %v1858 = vadd.f32 %v1854, %v1857
  %vm1859 = vweird.f32 %v1853
  %vm1860 = vweird.f32 %v1854
  %vm1861 = vmor %vm1859, %vm1860
  %v1862 = vsel %vm1861, %v1854, %v1858
  %v1863 = vand.u32 2147483647, %v1853
  %vm1864 = vcmp.eq.f32.partialorder %v1863, 8.507059e+37
  %v1865 = vand.u32 %v1853, 2147483648
  %v1866 = vor.u32 1.1754944e-38, %v1865
  %v1867 = vsel %vm1864, %v1866, %v1862
  %v1868 = vmul.f32 1.0, %v1867
  %1870 = vrot.lane.b32.xlu0 %v1780, 38
  %v1871 = vpop.permute.xlu0 %1870
  %v1872 = vsel %vm1321, %v1847, %v1871
  %v1874 = vadd.f32 %v1084, %v1872
  %v1875 = vxor.u32 %v1874, 2147483648
  %v1876 = vmul.f32 %v1875, 1.442695
  %v1877 = vpow.pop %v1876
  %v1878 = vadd.f32 %v1877, 1.0
  %v1879 = vrcp.pop %v1878
  %v1880 = vmul.f32 %v1878, %v1879
  %v1881 = vsub.f32 1.0, %v1880
  %v1882 = vmul.f32 %v1879, %v1881
  %v1883 = vadd.f32 %v1879, %v1882
  %vm1884 = vweird.f32 %v1878
  %vm1885 = vweird.f32 %v1879
  %vm1886 = vmor %vm1884, %vm1885
  %v1887 = vsel %vm1886, %v1879, %v1883
  %v1888 = vand.u32 2147483647, %v1878
  %vm1889 = vcmp.eq.f32.partialorder %v1888, 8.507059e+37
  %v1890 = vand.u32 %v1878, 2147483648
  %v1891 = vor.u32 1.1754944e-38, %v1890
  %v1892 = vsel %vm1889, %v1891, %v1887
  %v1893 = vmul.f32 1.0, %v1892
  %1894 = vrot.lane.b32.xlu0 %v1780, 106
  %v1895 = vpop.permute.xlu0 %1894
  %v1897 = vmul.f32 %v1868, %v1895
  %1899 = vrot.lane.b32.xlu0 %v1897, 60
  %v1900 = vpop.permute.xlu0 %1899
  %v1902 = vadd.f32 %v1084, %v1900
  %v1903 = vtanh.pop %v1902
  %v1904 = vsub.f32 1.0, %v1893
  %1906 = vrot.lane.b32.xlu0 %v1903, 98
  %v1907 = vpop.permute.xlu0 %1906
  %v1909 = vmul.f32 %v1904, %v1907
  %v1911 = vmul.f32 %v1893, %v1733
  %v1912 = vadd.f32 %v1909, %v1911
  %1914 = vrot.lane.b32.xlu0 %v1912, 98
  %v1915 = vpop.permute.xlu0 %1914
  %v1916 = vsel %vm40, %v1915, 0
  %1918 = vmatpush.msra.mxu0 0.0
  %1919 = vmatpush.msra.mxu0 0.0
  %1920 = vmatpush.msra.mxu0 0.0
  %1921 = vmatpush.msra.mxu0 0.0
  %1922 = vmatpush.msra.mxu0 0.0
  %1923 = vmatpush.msra.mxu0 0.0
  %1924 = vmatpush.msra.mxu0 0.0
  %1925 = vmatpush.msra.mxu0 0.0
  %1926 = vmatpush.msra.mxu0 0.0
  %1927 = vmatpush.msra.mxu0 0.0
  %1928 = vmatpush.msra.mxu0 0.0
  %1929 = vmatpush.msra.mxu0 0.0
  %1930 = vmatpush.msra.mxu0 %v1176
  %1931 = vmatpush.msra.mxu0 %v1013
  %1932 = vmatpush.msra.mxu0 %v1011
  %1933 = vmatpush.msra.mxu0 %v1009
  %1934 = vmatmul.f32.gmra.mxu0 %v1916
  %v1935 = vpop.f32.mrf.mxu0
  %v1936 = vadd.f32 0.0, %v1935
  %1937 = vdwg.mxu0
  %1938 = vmatpush.msra.mxu0 0.0
  %1939 = vmatpush.msra.mxu0 0.0
  %1940 = vmatpush.msra.mxu0 0.0
  %1941 = vmatpush.msra.mxu0 0.0
  %1942 = vmatpush.msra.mxu0 0.0
  %1943 = vmatpush.msra.mxu0 0.0
  %1944 = vmatpush.msra.mxu0 0.0
  %1945 = vmatpush.msra.mxu0 0.0
  %1946 = vmatpush.msra.mxu0 0.0
  %1947 = vmatpush.msra.mxu0 0.0
  %1948 = vmatpush.msra.mxu0 0.0
  %1949 = vmatpush.msra.mxu0 0.0
  %1950 = vmatpush.msra.mxu0 %v1179
  %1951 = vmatpush.msra.mxu0 %v1014
  %1952 = vmatpush.msra.mxu0 %v1012
  %1953 = vmatpush.msra.mxu0 %v1010
  %1954 = vmatmul.f32.gmra.mxu0 %v1916
  %v1955 = vpop.f32.mrf.mxu0
  %v1956 = vadd.f32 0.0, %v1955
  %1957 = vdwg.mxu0
  %v1958 = vadd.f32 %v1936, %v1025
  %v1959 = vadd.f32 %v1936, %v1224
  %v1960 = vadd.f32 %v1956, %v1224
  %v1961 = vadd.f32 %v1958, %v1843
  %v1962 = vxor.u32 %v1961, 2147483648
  %v1963 = vmul.f32 %v1962, 1.442695
  %v1964 = vpow.pop %v1963
  %v1965 = vadd.f32 %v1964, 1.0
  %v1966 = vrcp.pop %v1965
  %v1967 = vmul.f32 %v1965, %v1966
  %v1968 = vsub.f32 1.0, %v1967
  %v1969 = vmul.f32 %v1966, %v1968
  %v1970 = vadd.f32 %v1966, %v1969
  %vm1971 = vweird.f32 %v1965
  %vm1972 = vweird.f32 %v1966
  %vm1973 = vmor %vm1971, %vm1972
  %v1974 = vsel %vm1973, %v1966, %v1970
  %v1975 = vand.u32 2147483647, %v1965
  %vm1976 = vcmp.eq.f32.partialorder %v1975, 8.507059e+37
  %v1977 = vand.u32 %v1965, 2147483648
  %v1978 = vor.u32 1.1754944e-38, %v1977
  %v1979 = vsel %vm1976, %v1978, %v1974
  %v1980 = vmul.f32 1.0, %v1979
  %1982 = vrot.lane.b32.xlu0 %v1843, 68
  %v1983 = vpop.permute.xlu0 %1982
  %v1985 = vmul.f32 %v1980, %v1983
  %1987 = vrot.lane.b32.xlu0 %v1985, 60
  %v1988 = vpop.permute.xlu0 %1987
  %v1990 = vadd.f32 %v1958, %v1988
  %v1991 = vtanh.pop %v1990
  %v1992 = vsub.f32 1.0, %v1980
  %1994 = vrot.lane.b32.xlu0 %v1991, 98
  %v1995 = vpop.permute.xlu0 %1994
  %v1997 = vmul.f32 %v1992, %v1995
  %v1998 = vmul.f32 %v1980, %v1819
  %v1999 = vadd.f32 %v1997, %v1998
  %2001 = vrot.lane.b32.xlu0 %v1999, 98
  %v2002 = vpop.permute.xlu0 %2001
  %v2003 = vsel %vm40, %v2002, 0
  %2005 = vmatpush.msra.mxu0 0.0
  %2006 = vmatpush.msra.mxu0 0.0
  %2007 = vmatpush.msra.mxu0 0.0
  %2008 = vmatpush.msra.mxu0 0.0
  %2009 = vmatpush.msra.mxu0 0.0
  %2010 = vmatpush.msra.mxu0 0.0
  %2011 = vmatpush.msra.mxu0 0.0
  %2012 = vmatpush.msra.mxu0 0.0
  %2013 = vmatpush.msra.mxu0 0.0
  %2014 = vmatpush.msra.mxu0 0.0
  %2015 = vmatpush.msra.mxu0 0.0
  %2016 = vmatpush.msra.mxu0 0.0
  %2017 = vmatpush.msra.mxu0 %v1109
  %2018 = vmatpush.msra.mxu0 %v1019
  %2019 = vmatpush.msra.mxu0 %v1018
  %2020 = vmatpush.msra.mxu0 %v1017
  %2021 = vmatmul.f32.gmra.mxu0 %v2003
  %v2022 = vpop.f32.mrf.mxu0
  %v2023 = vadd.f32 %v1026, %v2022
  %2024 = vdwg.mxu0
  %v2026 = vrot.slane %v1959, 6
  %2027 = vrot.lane.b32.xlu0 %v2026, 38
  %v2028 = vpop.permute.xlu0 %2027
  %v2030 = vadd.f32 %v1084, %v2028
  %v2031 = vxor.u32 %v2030, 2147483648
  %v2032 = vmul.f32 %v2031, 1.442695
  %v2033 = vpow.pop %v2032
  %v2034 = vadd.f32 %v2033, 1.0
  %v2035 = vrcp.pop %v2034
  %v2036 = vmul.f32 %v2034, %v2035
  %v2037 = vsub.f32 1.0, %v2036
  %v2038 = vmul.f32 %v2035, %v2037
  %v2039 = vadd.f32 %v2035, %v2038
  %vm2040 = vweird.f32 %v2034
  %vm2041 = vweird.f32 %v2035
  %vm2042 = vmor %vm2040, %vm2041
  %v2043 = vsel %vm2042, %v2035, %v2039
  %v2044 = vand.u32 2147483647, %v2034
  %vm2045 = vcmp.eq.f32.partialorder %v2044, 8.507059e+37
  %v2046 = vand.u32 %v2034, 2147483648
  %v2047 = vor.u32 1.1754944e-38, %v2046
  %v2048 = vsel %vm2045, %v2047, %v2043
  %v2049 = vmul.f32 1.0, %v2048
  %v2051 = vrot.slane %v1960, 6
  %2052 = vrot.lane.b32.xlu0 %v2051, 38
  %v2053 = vpop.permute.xlu0 %2052
  %v2054 = vsel %vm1321, %v2028, %v2053
  %v2056 = vadd.f32 %v1084, %v2054
  %v2057 = vxor.u32 %v2056, 2147483648
  %v2058 = vmul.f32 %v2057, 1.442695
  %v2059 = vpow.pop %v2058
  %v2060 = vadd.f32 %v2059, 1.0
  %v2061 = vrcp.pop %v2060
  %v2062 = vmul.f32 %v2060, %v2061
  %v2063 = vsub.f32 1.0, %v2062
  %v2064 = vmul.f32 %v2061, %v2063
  %v2065 = vadd.f32 %v2061, %v2064
  %vm2066 = vweird.f32 %v2060
  %vm2067 = vweird.f32 %v2061
  %vm2068 = vmor %vm2066, %vm2067
  %v2069 = vsel %vm2068, %v2061, %v2065
  %v2070 = vand.u32 2147483647, %v2060
  %vm2071 = vcmp.eq.f32.partialorder %v2070, 8.507059e+37
  %v2072 = vand.u32 %v2060, 2147483648
  %v2073 = vor.u32 1.1754944e-38, %v2072
  %v2074 = vsel %vm2071, %v2073, %v2069
  %v2075 = vmul.f32 1.0, %v2074
  %2076 = vrot.lane.b32.xlu0 %v2051, 106
  %v2077 = vpop.permute.xlu0 %2076
  %v2079 = vmul.f32 %v2049, %v2077
  %2081 = vrot.lane.b32.xlu0 %v2079, 60
  %v2082 = vpop.permute.xlu0 %2081
  %v2084 = vadd.f32 %v1084, %v2082
  %v2085 = vtanh.pop %v2084
  %v2086 = vsub.f32 1.0, %v2075
  %2088 = vrot.lane.b32.xlu0 %v2085, 98
  %v2089 = vpop.permute.xlu0 %2088
  %v2091 = vmul.f32 %v2086, %v2089
  %v2092 = vrot.slane %v1912, 6
  %v2094 = vmul.f32 %v2075, %v2092
  %v2095 = vadd.f32 %v2091, %v2094
  %v2097 = vrot.slane %v2095, 2
  %2098 = vrot.lane.b32.xlu0 %v2097, 98
  %v2099 = vpop.permute.xlu0 %2098
  %v2100 = vsel %vm40, %v2099, 0
  %2102 = vmatpush.msra.mxu0 0.0
  %2103 = vmatpush.msra.mxu0 0.0
  %2104 = vmatpush.msra.mxu0 0.0
  %2105 = vmatpush.msra.mxu0 0.0
  %2106 = vmatpush.msra.mxu0 0.0
  %2107 = vmatpush.msra.mxu0 0.0
  %2108 = vmatpush.msra.mxu0 0.0
  %2109 = vmatpush.msra.mxu0 0.0
  %2110 = vmatpush.msra.mxu0 0.0
  %2111 = vmatpush.msra.mxu0 0.0
  %2112 = vmatpush.msra.mxu0 0.0
  %2113 = vmatpush.msra.mxu0 0.0
  %2114 = vmatpush.msra.mxu0 %v1176
  %2115 = vmatpush.msra.mxu0 %v1013
  %2116 = vmatpush.msra.mxu0 %v1011
  %2117 = vmatpush.msra.mxu0 %v1009
  %2118 = vmatmul.f32.gmra.mxu0 %v2100
  %v2119 = vpop.f32.mrf.mxu0
  %v2120 = vadd.f32 0.0, %v2119
  %2121 = vdwg.mxu0
  %2122 = vmatpush.msra.mxu0 0.0
  %2123 = vmatpush.msra.mxu0 0.0
  %2124 = vmatpush.msra.mxu0 0.0
  %2125 = vmatpush.msra.mxu0 0.0
  %2126 = vmatpush.msra.mxu0 0.0
  %2127 = vmatpush.msra.mxu0 0.0
  %2128 = vmatpush.msra.mxu0 0.0
  %2129 = vmatpush.msra.mxu0 0.0
  %2130 = vmatpush.msra.mxu0 0.0
  %2131 = vmatpush.msra.mxu0 0.0
  %2132 = vmatpush.msra.mxu0 0.0
  %2133 = vmatpush.msra.mxu0 0.0
  %2134 = vmatpush.msra.mxu0 %v1179
  %2135 = vmatpush.msra.mxu0 %v1014
  %2136 = vmatpush.msra.mxu0 %v1012
  %2137 = vmatpush.msra.mxu0 %v1010
  %2138 = vmatmul.f32.gmra.mxu0 %v2100
  %v2139 = vpop.f32.mrf.mxu0
  %v2140 = vadd.f32 0.0, %v2139
  %2141 = vdwg.mxu0
  %v2142 = vadd.f32 %v2120, %v1025
  %v2143 = vadd.f32 %v2120, %v1224
  %v2144 = vadd.f32 %v2140, %v1224
  %v2145 = vadd.f32 %v2142, %v2023
  %v2146 = vxor.u32 %v2145, 2147483648
  %v2147 = vmul.f32 %v2146, 1.442695
  %v2148 = vpow.pop %v2147
  %v2149 = vadd.f32 %v2148, 1.0
  %v2150 = vrcp.pop %v2149
  %v2151 = vmul.f32 %v2149, %v2150
  %v2152 = vsub.f32 1.0, %v2151
  %v2153 = vmul.f32 %v2150, %v2152
  %v2154 = vadd.f32 %v2150, %v2153
  %vm2155 = vweird.f32 %v2149
  %vm2156 = vweird.f32 %v2150
  %vm2157 = vmor %vm2155, %vm2156
  %v2158 = vsel %vm2157, %v2150, %v2154
  %v2159 = vand.u32 2147483647, %v2149
  %vm2160 = vcmp.eq.f32.partialorder %v2159, 8.507059e+37
  %v2161 = vand.u32 %v2149, 2147483648
  %v2162 = vor.u32 1.1754944e-38, %v2161
  %v2163 = vsel %vm2160, %v2162, %v2158
  %v2164 = vmul.f32 1.0, %v2163
  %2166 = vrot.lane.b32.xlu0 %v2023, 68
  %v2167 = vpop.permute.xlu0 %2166
  %v2169 = vmul.f32 %v2164, %v2167
  %2171 = vrot.lane.b32.xlu0 %v2169, 60
  %v2172 = vpop.permute.xlu0 %2171
  %v2174 = vadd.f32 %v2142, %v2172
  %v2175 = vtanh.pop %v2174
  %v2176 = vsub.f32 1.0, %v2164
  %2178 = vrot.lane.b32.xlu0 %v2175, 98
  %v2179 = vpop.permute.xlu0 %2178
  %v2181 = vmul.f32 %v2176, %v2179
  %v2182 = vmul.f32 %v2164, %v1999
  %v2183 = vadd.f32 %v2181, %v2182
  %2185 = vrot.lane.b32.xlu0 %v2183, 98
  %v2186 = vpop.permute.xlu0 %2185
  %v2187 = vsel %vm40, %v2186, 0
  %2189 = vmatpush.msra.mxu0 0.0
  %2190 = vmatpush.msra.mxu0 0.0
  %2191 = vmatpush.msra.mxu0 0.0
  %2192 = vmatpush.msra.mxu0 0.0
  %2193 = vmatpush.msra.mxu0 0.0
  %2194 = vmatpush.msra.mxu0 0.0
  %2195 = vmatpush.msra.mxu0 0.0
  %2196 = vmatpush.msra.mxu0 0.0
  %2197 = vmatpush.msra.mxu0 0.0
  %2198 = vmatpush.msra.mxu0 0.0
  %2199 = vmatpush.msra.mxu0 0.0
  %2200 = vmatpush.msra.mxu0 0.0
  %2201 = vmatpush.msra.mxu0 %v1109
  %2202 = vmatpush.msra.mxu0 %v1019
  %2203 = vmatpush.msra.mxu0 %v1018
  %2204 = vmatpush.msra.mxu0 %v1017
  %2205 = vmatmul.f32.gmra.mxu0 %v2187
  %v2206 = vpop.f32.mrf.mxu0
  %v2207 = vadd.f32 %v1026, %v2206
  %2208 = vdwg.mxu0
  %v2210 = vrot.slane %v2143, 4
  %2211 = vrot.lane.b32.xlu0 %v2210, 38
  %v2212 = vpop.permute.xlu0 %2211
  %v2214 = vadd.f32 %v1084, %v2212
  %v2215 = vxor.u32 %v2214, 2147483648
  %v2216 = vmul.f32 %v2215, 1.442695
  %v2217 = vpow.pop %v2216
  %v2218 = vadd.f32 %v2217, 1.0
  %v2219 = vrcp.pop %v2218
  %v2220 = vmul.f32 %v2218, %v2219
  %v2221 = vsub.f32 1.0, %v2220
  %v2222 = vmul.f32 %v2219, %v2221
  %v2223 = vadd.f32 %v2219, %v2222
  %vm2224 = vweird.f32 %v2218
  %vm2225 = vweird.f32 %v2219
  %vm2226 = vmor %vm2224, %vm2225
  %v2227 = vsel %vm2226, %v2219, %v2223
  %v2228 = vand.u32 2147483647, %v2218
  %vm2229 = vcmp.eq.f32.partialorder %v2228, 8.507059e+37
  %v2230 = vand.u32 %v2218, 2147483648
  %v2231 = vor.u32 1.1754944e-38, %v2230
  %v2232 = vsel %vm2229, %v2231, %v2227
  %v2233 = vmul.f32 1.0, %v2232
  %v2235 = vrot.slane %v2144, 4
  %2236 = vrot.lane.b32.xlu0 %v2235, 38
  %v2237 = vpop.permute.xlu0 %2236
  %v2238 = vsel %vm1321, %v2212, %v2237
  %v2240 = vadd.f32 %v1084, %v2238
  %v2241 = vxor.u32 %v2240, 2147483648
  %v2242 = vmul.f32 %v2241, 1.442695
  %v2243 = vpow.pop %v2242
  %v2244 = vadd.f32 %v2243, 1.0
  %v2245 = vrcp.pop %v2244
  %v2246 = vmul.f32 %v2244, %v2245
  %v2247 = vsub.f32 1.0, %v2246
  %v2248 = vmul.f32 %v2245, %v2247
  %v2249 = vadd.f32 %v2245, %v2248
  %vm2250 = vweird.f32 %v2244
  %vm2251 = vweird.f32 %v2245
  %vm2252 = vmor %vm2250, %vm2251
  %v2253 = vsel %vm2252, %v2245, %v2249
  %v2254 = vand.u32 2147483647, %v2244
  %vm2255 = vcmp.eq.f32.partialorder %v2254, 8.507059e+37
  %v2256 = vand.u32 %v2244, 2147483648
  %v2257 = vor.u32 1.1754944e-38, %v2256
  %v2258 = vsel %vm2255, %v2257, %v2253
  %v2259 = vmul.f32 1.0, %v2258
  %2260 = vrot.lane.b32.xlu0 %v2235, 106
  %v2261 = vpop.permute.xlu0 %2260
  %v2263 = vmul.f32 %v2233, %v2261
  %2265 = vrot.lane.b32.xlu0 %v2263, 60
  %v2266 = vpop.permute.xlu0 %2265
  %v2268 = vadd.f32 %v1084, %v2266
  %v2269 = vtanh.pop %v2268
  %v2270 = vsub.f32 1.0, %v2259
  %2272 = vrot.lane.b32.xlu0 %v2269, 98
  %v2273 = vpop.permute.xlu0 %2272
  %v2275 = vmul.f32 %v2270, %v2273
  %v2276 = vrot.slane %v2095, 6
  %v2278 = vmul.f32 %v2259, %v2276
  %v2279 = vadd.f32 %v2275, %v2278
  %v2281 = vrot.slane %v2279, 4
  %2282 = vrot.lane.b32.xlu0 %v2281, 98
  %v2283 = vpop.permute.xlu0 %2282
  %v2284 = vsel %vm40, %v2283, 0
  %2286 = vmatpush.msra.mxu0 0.0
  %2287 = vmatpush.msra.mxu0 0.0
  %2288 = vmatpush.msra.mxu0 0.0
  %2289 = vmatpush.msra.mxu0 0.0
  %2290 = vmatpush.msra.mxu0 0.0
  %2291 = vmatpush.msra.mxu0 0.0
  %2292 = vmatpush.msra.mxu0 0.0
  %2293 = vmatpush.msra.mxu0 0.0
  %2294 = vmatpush.msra.mxu0 0.0
  %2295 = vmatpush.msra.mxu0 0.0
  %2296 = vmatpush.msra.mxu0 0.0
  %2297 = vmatpush.msra.mxu0 0.0
  %2298 = vmatpush.msra.mxu0 %v1176
  %2299 = vmatpush.msra.mxu0 %v1013
  %2300 = vmatpush.msra.mxu0 %v1011
  %2301 = vmatpush.msra.mxu0 %v1009
  %2302 = vmatmul.f32.gmra.mxu0 %v2284
  %v2303 = vpop.f32.mrf.mxu0
  %v2304 = vadd.f32 0.0, %v2303
  %2305 = vdwg.mxu0
  %2306 = vmatpush.msra.mxu0 0.0
  %2307 = vmatpush.msra.mxu0 0.0
  %2308 = vmatpush.msra.mxu0 0.0
  %2309 = vmatpush.msra.mxu0 0.0
  %2310 = vmatpush.msra.mxu0 0.0
  %2311 = vmatpush.msra.mxu0 0.0
  %2312 = vmatpush.msra.mxu0 0.0
  %2313 = vmatpush.msra.mxu0 0.0
  %2314 = vmatpush.msra.mxu0 0.0
  %2315 = vmatpush.msra.mxu0 0.0
  %2316 = vmatpush.msra.mxu0 0.0
  %2317 = vmatpush.msra.mxu0 0.0
  %2318 = vmatpush.msra.mxu0 %v1179
  %2319 = vmatpush.msra.mxu0 %v1014
  %2320 = vmatpush.msra.mxu0 %v1012
  %2321 = vmatpush.msra.mxu0 %v1010
  %2322 = vmatmul.f32.gmra.mxu0 %v2284
  %v2323 = vpop.f32.mrf.mxu0
  %v2324 = vadd.f32 0.0, %v2323
  %2325 = vdwg.mxu0
  %v2326 = vadd.f32 %v2304, %v1025
  %v2327 = vadd.f32 %v2304, %v1224
  %v2328 = vadd.f32 %v2324, %v1224
  %v2329 = vadd.f32 %v2326, %v2207
  %v2330 = vxor.u32 %v2329, 2147483648
  %v2331 = vmul.f32 %v2330, 1.442695
  %v2332 = vpow.pop %v2331
  %v2333 = vadd.f32 %v2332, 1.0
  %v2334 = vrcp.pop %v2333
  %v2335 = vmul.f32 %v2333, %v2334
  %v2336 = vsub.f32 1.0, %v2335
  %v2337 = vmul.f32 %v2334, %v2336
  %v2338 = vadd.f32 %v2334, %v2337
  %vm2339 = vweird.f32 %v2333
  %vm2340 = vweird.f32 %v2334
  %vm2341 = vmor %vm2339, %vm2340
  %v2342 = vsel %vm2341, %v2334, %v2338
  %v2343 = vand.u32 2147483647, %v2333
  %vm2344 = vcmp.eq.f32.partialorder %v2343, 8.507059e+37
  %v2345 = vand.u32 %v2333, 2147483648
  %v2346 = vor.u32 1.1754944e-38, %v2345
  %v2347 = vsel %vm2344, %v2346, %v2342
  %v2348 = vmul.f32 1.0, %v2347
  %2350 = vrot.lane.b32.xlu0 %v2207, 68
  %v2351 = vpop.permute.xlu0 %2350
  %v2353 = vmul.f32 %v2348, %v2351
  %2355 = vrot.lane.b32.xlu0 %v2353, 60
  %v2356 = vpop.permute.xlu0 %2355
  %v2358 = vadd.f32 %v2326, %v2356
  %v2359 = vtanh.pop %v2358
  %v2360 = vsub.f32 1.0, %v2348
  %2362 = vrot.lane.b32.xlu0 %v2359, 98
  %v2363 = vpop.permute.xlu0 %2362
  %v2365 = vmul.f32 %v2360, %v2363
  %v2366 = vmul.f32 %v2348, %v2183
  %v2367 = vadd.f32 %v2365, %v2366
  %2369 = vrot.lane.b32.xlu0 %v2367, 98
  %v2370 = vpop.permute.xlu0 %2369
  %v2371 = vsel %vm40, %v2370, 0
  %2373 = vmatpush.msra.mxu0 0.0
  %2374 = vmatpush.msra.mxu0 0.0
  %2375 = vmatpush.msra.mxu0 0.0
  %2376 = vmatpush.msra.mxu0 0.0
  %2377 = vmatpush.msra.mxu0 0.0
  %2378 = vmatpush.msra.mxu0 0.0
  %2379 = vmatpush.msra.mxu0 0.0
  %2380 = vmatpush.msra.mxu0 0.0
  %2381 = vmatpush.msra.mxu0 0.0
  %2382 = vmatpush.msra.mxu0 0.0
  %2383 = vmatpush.msra.mxu0 0.0
  %2384 = vmatpush.msra.mxu0 0.0
  %2385 = vmatpush.msra.mxu0 %v1109
  %2386 = vmatpush.msra.mxu0 %v1019
  %2387 = vmatpush.msra.mxu0 %v1018
  %2388 = vmatpush.msra.mxu0 %v1017
  %2389 = vmatmul.f32.gmra.mxu0 %v2371
  %v2390 = vpop.f32.mrf.mxu0
  %v2391 = vadd.f32 %v1026, %v2390
  %2392 = vdwg.mxu0
  %v2394 = vrot.slane %v2327, 2
  %2395 = vrot.lane.b32.xlu0 %v2394, 38
  %v2396 = vpop.permute.xlu0 %2395
  %v2398 = vadd.f32 %v1084, %v2396
  %v2399 = vxor.u32 %v2398, 2147483648
  %v2400 = vmul.f32 %v2399, 1.442695
  %v2401 = vpow.pop %v2400
  %v2402 = vadd.f32 %v2401, 1.0
  %v2403 = vrcp.pop %v2402
  %v2404 = vmul.f32 %v2402, %v2403
  %v2405 = vsub.f32 1.0, %v2404
  %v2406 = vmul.f32 %v2403, %v2405
  %v2407 = vadd.f32 %v2403, %v2406
  %vm2408 = vweird.f32 %v2402
  %vm2409 = vweird.f32 %v2403
  %vm2410 = vmor %vm2408, %vm2409
  %v2411 = vsel %vm2410, %v2403, %v2407
  %v2412 = vand.u32 2147483647, %v2402
  %vm2413 = vcmp.eq.f32.partialorder %v2412, 8.507059e+37
  %v2414 = vand.u32 %v2402, 2147483648
  %v2415 = vor.u32 1.1754944e-38, %v2414
  %v2416 = vsel %vm2413, %v2415, %v2411
  %v2417 = vmul.f32 1.0, %v2416
  %v2419 = vrot.slane %v2328, 2
  %2420 = vrot.lane.b32.xlu0 %v2419, 38
  %v2421 = vpop.permute.xlu0 %2420
  %v2422 = vsel %vm1321, %v2396, %v2421
  %v2424 = vadd.f32 %v1084, %v2422
  %v2425 = vxor.u32 %v2424, 2147483648
  %v2426 = vmul.f32 %v2425, 1.442695
  %v2427 = vpow.pop %v2426
  %v2428 = vadd.f32 %v2427, 1.0
  %v2429 = vrcp.pop %v2428
  %v2430 = vmul.f32 %v2428, %v2429
  %v2431 = vsub.f32 1.0, %v2430
  %v2432 = vmul.f32 %v2429, %v2431
  %v2433 = vadd.f32 %v2429, %v2432
  %vm2434 = vweird.f32 %v2428
  %vm2435 = vweird.f32 %v2429
  %vm2436 = vmor %vm2434, %vm2435
  %v2437 = vsel %vm2436, %v2429, %v2433
  %v2438 = vand.u32 2147483647, %v2428
  %vm2439 = vcmp.eq.f32.partialorder %v2438, 8.507059e+37
  %v2440 = vand.u32 %v2428, 2147483648
  %v2441 = vor.u32 1.1754944e-38, %v2440
  %v2442 = vsel %vm2439, %v2441, %v2437
  %v2443 = vmul.f32 1.0, %v2442
  %2444 = vrot.lane.b32.xlu0 %v2419, 106
  %v2445 = vpop.permute.xlu0 %2444
  %v2447 = vmul.f32 %v2417, %v2445
  %2449 = vrot.lane.b32.xlu0 %v2447, 60
  %v2450 = vpop.permute.xlu0 %2449
  %v2452 = vadd.f32 %v1084, %v2450
  %v2453 = vtanh.pop %v2452
  %v2454 = vsub.f32 1.0, %v2443
  %2456 = vrot.lane.b32.xlu0 %v2453, 98
  %v2457 = vpop.permute.xlu0 %2456
  %v2459 = vmul.f32 %v2454, %v2457
  %v2460 = vrot.slane %v2279, 6
  %v2462 = vmul.f32 %v2443, %v2460
  %v2463 = vadd.f32 %v2459, %v2462
  %v2465 = vrot.slane %v2463, 6
  %2466 = vrot.lane.b32.xlu0 %v2465, 98
  %v2467 = vpop.permute.xlu0 %2466
  %v2468 = vsel %vm40, %v2467, 0
  %2470 = vmatpush.msra.mxu0 0.0
  %2471 = vmatpush.msra.mxu0 0.0
  %2472 = vmatpush.msra.mxu0 0.0
  %2473 = vmatpush.msra.mxu0 0.0
  %2474 = vmatpush.msra.mxu0 0.0
  %2475 = vmatpush.msra.mxu0 0.0
  %2476 = vmatpush.msra.mxu0 0.0
  %2477 = vmatpush.msra.mxu0 0.0
  %2478 = vmatpush.msra.mxu0 0.0
  %2479 = vmatpush.msra.mxu0 0.0
  %2480 = vmatpush.msra.mxu0 0.0
  %2481 = vmatpush.msra.mxu0 0.0
  %2482 = vmatpush.msra.mxu0 %v1176
  %2483 = vmatpush.msra.mxu0 %v1013
  %2484 = vmatpush.msra.mxu0 %v1011
  %2485 = vmatpush.msra.mxu0 %v1009
  %2486 = vmatmul.f32.gmra.mxu0 %v2468
  %v2487 = vpop.f32.mrf.mxu0
  %v2488 = vadd.f32 0.0, %v2487
  %2489 = vdwg.mxu0
  %2490 = vmatpush.msra.mxu0 0.0
  %2491 = vmatpush.msra.mxu0 0.0
  %2492 = vmatpush.msra.mxu0 0.0
  %2493 = vmatpush.msra.mxu0 0.0
  %2494 = vmatpush.msra.mxu0 0.0
  %2495 = vmatpush.msra.mxu0 0.0
  %2496 = vmatpush.msra.mxu0 0.0
  %2497 = vmatpush.msra.mxu0 0.0
  %2498 = vmatpush.msra.mxu0 0.0
  %2499 = vmatpush.msra.mxu0 0.0
  %2500 = vmatpush.msra.mxu0 0.0
  %2501 = vmatpush.msra.mxu0 0.0
  %2502 = vmatpush.msra.mxu0 %v1179
  %2503 = vmatpush.msra.mxu0 %v1014
  %2504 = vmatpush.msra.mxu0 %v1012
  %2505 = vmatpush.msra.mxu0 %v1010
  %2506 = vmatmul.f32.gmra.mxu0 %v2468
  %v2507 = vpop.f32.mrf.mxu0
  %v2508 = vadd.f32 0.0, %v2507
  %2509 = vdwg.mxu0
  %v2510 = vadd.f32 %v2488, %v1025
  %v2511 = vadd.f32 %v2488, %v1224
  %v2512 = vadd.f32 %v2508, %v1224
  %v2513 = vadd.f32 %v2510, %v2391
  %v2514 = vxor.u32 %v2513, 2147483648
  %v2515 = vmul.f32 %v2514, 1.442695
  %v2516 = vpow.pop %v2515
  %v2517 = vadd.f32 %v2516, 1.0
  %v2518 = vrcp.pop %v2517
  %v2519 = vmul.f32 %v2517, %v2518
  %v2520 = vsub.f32 1.0, %v2519
  %v2521 = vmul.f32 %v2518, %v2520
  %v2522 = vadd.f32 %v2518, %v2521
  %vm2523 = vweird.f32 %v2517
  %vm2524 = vweird.f32 %v2518
  %vm2525 = vmor %vm2523, %vm2524
  %v2526 = vsel %vm2525, %v2518, %v2522
  %v2527 = vand.u32 2147483647, %v2517
  %vm2528 = vcmp.eq.f32.partialorder %v2527, 8.507059e+37
  %v2529 = vand.u32 %v2517, 2147483648
  %v2530 = vor.u32 1.1754944e-38, %v2529
  %v2531 = vsel %vm2528, %v2530, %v2526
  %v2532 = vmul.f32 1.0, %v2531
  %2534 = vrot.lane.b32.xlu0 %v2391, 68
  %v2535 = vpop.permute.xlu0 %2534
  %v2537 = vmul.f32 %v2532, %v2535
  %2539 = vrot.lane.b32.xlu0 %v2537, 60
  %v2540 = vpop.permute.xlu0 %2539
  %v2542 = vadd.f32 %v2510, %v2540
  %v2543 = vtanh.pop %v2542
  %v2544 = vsub.f32 1.0, %v2532
  %2546 = vrot.lane.b32.xlu0 %v2543, 98
  %v2547 = vpop.permute.xlu0 %2546
  %v2549 = vmul.f32 %v2544, %v2547
  %v2550 = vmul.f32 %v2532, %v2367
  %v2551 = vadd.f32 %v2549, %v2550
  %2553 = vrot.lane.b32.xlu0 %v2551, 98
  %v2554 = vpop.permute.xlu0 %2553
  %v2555 = vsel %vm40, %v2554, 0
  %2557 = vmatpush.msra.mxu0 0.0
  %2558 = vmatpush.msra.mxu0 0.0
  %2559 = vmatpush.msra.mxu0 0.0
  %2560 = vmatpush.msra.mxu0 0.0
  %2561 = vmatpush.msra.mxu0 0.0
  %2562 = vmatpush.msra.mxu0 0.0
  %2563 = vmatpush.msra.mxu0 0.0
  %2564 = vmatpush.msra.mxu0 0.0
  %2565 = vmatpush.msra.mxu0 0.0
  %2566 = vmatpush.msra.mxu0 0.0
  %2567 = vmatpush.msra.mxu0 0.0
  %2568 = vmatpush.msra.mxu0 0.0
  %2569 = vmatpush.msra.mxu0 %v1109
  %2570 = vmatpush.msra.mxu0 %v1019
  %2571 = vmatpush.msra.mxu0 %v1018
  %2572 = vmatpush.msra.mxu0 %v1017
  %2573 = vmatmul.f32.gmra.mxu0 %v2555
  %v2574 = vpop.f32.mrf.mxu0
  %v2575 = vadd.f32 %v1026, %v2574
  %2576 = vdwg.mxu0
  %2578 = vrot.lane.b32.xlu0 %v2511, 38
  %v2579 = vpop.permute.xlu0 %2578
  %v2581 = vadd.f32 %v1087, %v2579
  %v2582 = vxor.u32 %v2581, 2147483648
  %v2583 = vmul.f32 %v2582, 1.442695
  %v2584 = vpow.pop %v2583
  %v2585 = vadd.f32 %v2584, 1.0
  %v2586 = vrcp.pop %v2585
  %v2587 = vmul.f32 %v2585, %v2586
  %v2588 = vsub.f32 1.0, %v2587
  %v2589 = vmul.f32 %v2586, %v2588
  %v2590 = vadd.f32 %v2586, %v2589
  %vm2591 = vweird.f32 %v2585
  %vm2592 = vweird.f32 %v2586
  %vm2593 = vmor %vm2591, %vm2592
  %v2594 = vsel %vm2593, %v2586, %v2590
  %v2595 = vand.u32 2147483647, %v2585
  %vm2596 = vcmp.eq.f32.partialorder %v2595, 8.507059e+37
  %v2597 = vand.u32 %v2585, 2147483648
  %v2598 = vor.u32 1.1754944e-38, %v2597
  %v2599 = vsel %vm2596, %v2598, %v2594
  %v2600 = vmul.f32 1.0, %v2599
  %2602 = vrot.lane.b32.xlu0 %v2512, 38
  %v2603 = vpop.permute.xlu0 %2602
  %v2604 = vsel %vm1321, %v2579, %v2603
  %v2606 = vadd.f32 %v1087, %v2604
  %v2607 = vxor.u32 %v2606, 2147483648
  %v2608 = vmul.f32 %v2607, 1.442695
  %v2609 = vpow.pop %v2608
  %v2610 = vadd.f32 %v2609, 1.0
  %v2611 = vrcp.pop %v2610
  %v2612 = vmul.f32 %v2610, %v2611
  %v2613 = vsub.f32 1.0, %v2612
  %v2614 = vmul.f32 %v2611, %v2613
  %v2615 = vadd.f32 %v2611, %v2614
  %vm2616 = vweird.f32 %v2610
  %vm2617 = vweird.f32 %v2611
  %vm2618 = vmor %vm2616, %vm2617
  %v2619 = vsel %vm2618, %v2611, %v2615
  %v2620 = vand.u32 2147483647, %v2610
  %vm2621 = vcmp.eq.f32.partialorder %v2620, 8.507059e+37
  %v2622 = vand.u32 %v2610, 2147483648
  %v2623 = vor.u32 1.1754944e-38, %v2622
  %v2624 = vsel %vm2621, %v2623, %v2619
  %v2625 = vmul.f32 1.0, %v2624
  %2626 = vrot.lane.b32.xlu0 %v2512, 106
  %v2627 = vpop.permute.xlu0 %2626
  %v2629 = vmul.f32 %v2600, %v2627
  %2631 = vrot.lane.b32.xlu0 %v2629, 60
  %v2632 = vpop.permute.xlu0 %2631
  %v2634 = vadd.f32 %v1087, %v2632
  %v2635 = vtanh.pop %v2634
  %v2636 = vsub.f32 1.0, %v2625
  %2638 = vrot.lane.b32.xlu0 %v2635, 98
  %v2639 = vpop.permute.xlu0 %2638
  %v2641 = vmul.f32 %v2636, %v2639
  %v2643 = vmul.f32 %v2625, %v2465
  %v2644 = vadd.f32 %v2641, %v2643
  %2646 = vrot.lane.b32.xlu0 %v2644, 98
  %v2647 = vpop.permute.xlu0 %2646
  %v2648 = vsel %vm40, %v2647, 0
  %2650 = vmatpush.msra.mxu0 0.0
  %2651 = vmatpush.msra.mxu0 0.0
  %2652 = vmatpush.msra.mxu0 0.0
  %2653 = vmatpush.msra.mxu0 0.0
  %2654 = vmatpush.msra.mxu0 0.0
  %2655 = vmatpush.msra.mxu0 0.0
  %2656 = vmatpush.msra.mxu0 0.0
  %2657 = vmatpush.msra.mxu0 0.0
  %2658 = vmatpush.msra.mxu0 0.0
  %2659 = vmatpush.msra.mxu0 0.0
  %2660 = vmatpush.msra.mxu0 0.0
  %2661 = vmatpush.msra.mxu0 0.0
  %2662 = vmatpush.msra.mxu0 %v1176
  %2663 = vmatpush.msra.mxu0 %v1013
  %2664 = vmatpush.msra.mxu0 %v1011
  %2665 = vmatpush.msra.mxu0 %v1009
  %2666 = vmatmul.f32.gmra.mxu0 %v2648
  %v2667 = vpop.f32.mrf.mxu0
  %v2668 = vadd.f32 0.0, %v2667
  %2669 = vdwg.mxu0
  %2670 = vmatpush.msra.mxu0 0.0
  %2671 = vmatpush.msra.mxu0 0.0
  %2672 = vmatpush.msra.mxu0 0.0
  %2673 = vmatpush.msra.mxu0 0.0
  %2674 = vmatpush.msra.mxu0 0.0
  %2675 = vmatpush.msra.mxu0 0.0
  %2676 = vmatpush.msra.mxu0 0.0
  %2677 = vmatpush.msra.mxu0 0.0
  %2678 = vmatpush.msra.mxu0 0.0
  %2679 = vmatpush.msra.mxu0 0.0
  %2680 = vmatpush.msra.mxu0 0.0
  %2681 = vmatpush.msra.mxu0 0.0
  %2682 = vmatpush.msra.mxu0 %v1179
  %2683 = vmatpush.msra.mxu0 %v1014
  %2684 = vmatpush.msra.mxu0 %v1012
  %2685 = vmatpush.msra.mxu0 %v1010
  %2686 = vmatmul.f32.gmra.mxu0 %v2648
  %v2687 = vpop.f32.mrf.mxu0
  %v2688 = vadd.f32 0.0, %v2687
  %2689 = vdwg.mxu0
  %v2690 = vadd.f32 %v2668, %v1025
  %v2691 = vadd.f32 %v2668, %v1224
  %v2692 = vadd.f32 %v2688, %v1224
  %v2693 = vadd.f32 %v2690, %v2575
  %v2694 = vxor.u32 %v2693, 2147483648
  %v2695 = vmul.f32 %v2694, 1.442695
  %v2696 = vpow.pop %v2695
  %v2697 = vadd.f32 %v2696, 1.0
  %v2698 = vrcp.pop %v2697
  %v2699 = vmul.f32 %v2697, %v2698
  %v2700 = vsub.f32 1.0, %v2699
  %v2701 = vmul.f32 %v2698, %v2700
  %v2702 = vadd.f32 %v2698, %v2701
  %vm2703 = vweird.f32 %v2697
  %vm2704 = vweird.f32 %v2698
  %vm2705 = vmor %vm2703, %vm2704
  %v2706 = vsel %vm2705, %v2698, %v2702
  %v2707 = vand.u32 2147483647, %v2697
  %vm2708 = vcmp.eq.f32.partialorder %v2707, 8.507059e+37
  %v2709 = vand.u32 %v2697, 2147483648
  %v2710 = vor.u32 1.1754944e-38, %v2709
  %v2711 = vsel %vm2708, %v2710, %v2706
  %v2712 = vmul.f32 1.0, %v2711
  %2714 = vrot.lane.b32.xlu0 %v2575, 68
  %v2715 = vpop.permute.xlu0 %2714
  %v2717 = vmul.f32 %v2712, %v2715
  %2719 = vrot.lane.b32.xlu0 %v2717, 60
  %v2720 = vpop.permute.xlu0 %2719
  %v2722 = vadd.f32 %v2690, %v2720
  %v2723 = vtanh.pop %v2722
  %v2724 = vsub.f32 1.0, %v2712
  %2726 = vrot.lane.b32.xlu0 %v2723, 98
  %v2727 = vpop.permute.xlu0 %2726
  %v2729 = vmul.f32 %v2724, %v2727
  %v2730 = vmul.f32 %v2712, %v2551
  %v2731 = vadd.f32 %v2729, %v2730
  %2733 = vrot.lane.b32.xlu0 %v2731, 98
  %v2734 = vpop.permute.xlu0 %2733
  %v2735 = vsel %vm40, %v2734, 0
  %2737 = vmatpush.msra.mxu0 0.0
  %2738 = vmatpush.msra.mxu0 0.0
  %2739 = vmatpush.msra.mxu0 0.0
  %2740 = vmatpush.msra.mxu0 0.0
  %2741 = vmatpush.msra.mxu0 0.0
  %2742 = vmatpush.msra.mxu0 0.0
  %2743 = vmatpush.msra.mxu0 0.0
  %2744 = vmatpush.msra.mxu0 0.0
  %2745 = vmatpush.msra.mxu0 0.0
  %2746 = vmatpush.msra.mxu0 0.0
  %2747 = vmatpush.msra.mxu0 0.0
  %2748 = vmatpush.msra.mxu0 0.0
  %2749 = vmatpush.msra.mxu0 %v1109
  %2750 = vmatpush.msra.mxu0 %v1019
  %2751 = vmatpush.msra.mxu0 %v1018
  %2752 = vmatpush.msra.mxu0 %v1017
  %2753 = vmatmul.f32.gmra.mxu0 %v2735
  %v2754 = vpop.f32.mrf.mxu0
  %v2755 = vadd.f32 %v1026, %v2754
  %2756 = vdwg.mxu0
  %v2758 = vrot.slane %v2691, 6
  %2759 = vrot.lane.b32.xlu0 %v2758, 38
  %v2760 = vpop.permute.xlu0 %2759
  %v2762 = vadd.f32 %v1087, %v2760
  %v2763 = vxor.u32 %v2762, 2147483648
  %v2764 = vmul.f32 %v2763, 1.442695
  %v2765 = vpow.pop %v2764
  %v2766 = vadd.f32 %v2765, 1.0
  %v2767 = vrcp.pop %v2766
  %v2768 = vmul.f32 %v2766, %v2767
  %v2769 = vsub.f32 1.0, %v2768
  %v2770 = vmul.f32 %v2767, %v2769
  %v2771 = vadd.f32 %v2767, %v2770
  %vm2772 = vweird.f32 %v2766
  %vm2773 = vweird.f32 %v2767
  %vm2774 = vmor %vm2772, %vm2773
  %v2775 = vsel %vm2774, %v2767, %v2771
  %v2776 = vand.u32 2147483647, %v2766
  %vm2777 = vcmp.eq.f32.partialorder %v2776, 8.507059e+37
  %v2778 = vand.u32 %v2766, 2147483648
  %v2779 = vor.u32 1.1754944e-38, %v2778
  %v2780 = vsel %vm2777, %v2779, %v2775
  %v2781 = vmul.f32 1.0, %v2780
  %v2783 = vrot.slane %v2692, 6
  %2784 = vrot.lane.b32.xlu0 %v2783, 38
  %v2785 = vpop.permute.xlu0 %2784
  %v2786 = vsel %vm1321, %v2760, %v2785
  %v2788 = vadd.f32 %v1087, %v2786
  %v2789 = vxor.u32 %v2788, 2147483648
  %v2790 = vmul.f32 %v2789, 1.442695
  %v2791 = vpow.pop %v2790
  %v2792 = vadd.f32 %v2791, 1.0
  %v2793 = vrcp.pop %v2792
  %v2794 = vmul.f32 %v2792, %v2793
  %v2795 = vsub.f32 1.0, %v2794
  %v2796 = vmul.f32 %v2793, %v2795
  %v2797 = vadd.f32 %v2793, %v2796
  %vm2798 = vweird.f32 %v2792
  %vm2799 = vweird.f32 %v2793
  %vm2800 = vmor %vm2798, %vm2799
  %v2801 = vsel %vm2800, %v2793, %v2797
  %v2802 = vand.u32 2147483647, %v2792
  %vm2803 = vcmp.eq.f32.partialorder %v2802, 8.507059e+37
  %v2804 = vand.u32 %v2792, 2147483648
  %v2805 = vor.u32 1.1754944e-38, %v2804
  %v2806 = vsel %vm2803, %v2805, %v2801
  %v2807 = vmul.f32 1.0, %v2806
  %2808 = vrot.lane.b32.xlu0 %v2783, 106
  %v2809 = vpop.permute.xlu0 %2808
  %v2811 = vmul.f32 %v2781, %v2809
  %2813 = vrot.lane.b32.xlu0 %v2811, 60
  %v2814 = vpop.permute.xlu0 %2813
  %v2816 = vadd.f32 %v1087, %v2814
  %v2817 = vtanh.pop %v2816
  %v2818 = vsub.f32 1.0, %v2807
  %2820 = vrot.lane.b32.xlu0 %v2817, 98
  %v2821 = vpop.permute.xlu0 %2820
  %v2823 = vmul.f32 %v2818, %v2821
  %v2824 = vrot.slane %v2644, 6
  %v2826 = vmul.f32 %v2807, %v2824
  %v2827 = vadd.f32 %v2823, %v2826
  %v2829 = vrot.slane %v2827, 2
  %2830 = vrot.lane.b32.xlu0 %v2829, 98
  %v2831 = vpop.permute.xlu0 %2830
  %v2832 = vsel %vm40, %v2831, 0
  %2834 = vmatpush.msra.mxu0 0.0
  %2835 = vmatpush.msra.mxu0 0.0
  %2836 = vmatpush.msra.mxu0 0.0
  %2837 = vmatpush.msra.mxu0 0.0
  %2838 = vmatpush.msra.mxu0 0.0
  %2839 = vmatpush.msra.mxu0 0.0
  %2840 = vmatpush.msra.mxu0 0.0
  %2841 = vmatpush.msra.mxu0 0.0
  %2842 = vmatpush.msra.mxu0 0.0
  %2843 = vmatpush.msra.mxu0 0.0
  %2844 = vmatpush.msra.mxu0 0.0
  %2845 = vmatpush.msra.mxu0 0.0
  %2846 = vmatpush.msra.mxu0 %v1176
  %2847 = vmatpush.msra.mxu0 %v1013
  %2848 = vmatpush.msra.mxu0 %v1011
  %2849 = vmatpush.msra.mxu0 %v1009
  %2850 = vmatmul.f32.gmra.mxu0 %v2832
  %v2851 = vpop.f32.mrf.mxu0
  %v2852 = vadd.f32 0.0, %v2851
  %2853 = vdwg.mxu0
  %2854 = vmatpush.msra.mxu0 0.0
  %2855 = vmatpush.msra.mxu0 0.0
  %2856 = vmatpush.msra.mxu0 0.0
  %2857 = vmatpush.msra.mxu0 0.0
  %2858 = vmatpush.msra.mxu0 0.0
  %2859 = vmatpush.msra.mxu0 0.0
  %2860 = vmatpush.msra.mxu0 0.0
  %2861 = vmatpush.msra.mxu0 0.0
  %2862 = vmatpush.msra.mxu0 0.0
  %2863 = vmatpush.msra.mxu0 0.0
  %2864 = vmatpush.msra.mxu0 0.0
  %2865 = vmatpush.msra.mxu0 0.0
  %2866 = vmatpush.msra.mxu0 %v1179
  %2867 = vmatpush.msra.mxu0 %v1014
  %2868 = vmatpush.msra.mxu0 %v1012
  %2869 = vmatpush.msra.mxu0 %v1010
  %2870 = vmatmul.f32.gmra.mxu0 %v2832
  %v2871 = vpop.f32.mrf.mxu0
  %v2872 = vadd.f32 0.0, %v2871
  %2873 = vdwg.mxu0
  %v2874 = vadd.f32 %v2852, %v1025
  %v2875 = vadd.f32 %v2852, %v1224
  %v2876 = vadd.f32 %v2872, %v1224
  %v2877 = vadd.f32 %v2874, %v2755
  %v2878 = vxor.u32 %v2877, 2147483648
  %v2879 = vmul.f32 %v2878, 1.442695
  %v2880 = vpow.pop %v2879
  %v2881 = vadd.f32 %v2880, 1.0
  %v2882 = vrcp.pop %v2881
  %v2883 = vmul.f32 %v2881, %v2882
  %v2884 = vsub.f32 1.0, %v2883
  %v2885 = vmul.f32 %v2882, %v2884
  %v2886 = vadd.f32 %v2882, %v2885
  %vm2887 = vweird.f32 %v2881
  %vm2888 = vweird.f32 %v2882
  %vm2889 = vmor %vm2887, %vm2888
  %v2890 = vsel %vm2889, %v2882, %v2886
  %v2891 = vand.u32 2147483647, %v2881
  %vm2892 = vcmp.eq.f32.partialorder %v2891, 8.507059e+37
  %v2893 = vand.u32 %v2881, 2147483648
  %v2894 = vor.u32 1.1754944e-38, %v2893
  %v2895 = vsel %vm2892, %v2894, %v2890
  %v2896 = vmul.f32 1.0, %v2895
  %2898 = vrot.lane.b32.xlu0 %v2755, 68
  %v2899 = vpop.permute.xlu0 %2898
  %v2901 = vmul.f32 %v2896, %v2899
  %2903 = vrot.lane.b32.xlu0 %v2901, 60
  %v2904 = vpop.permute.xlu0 %2903
  %v2906 = vadd.f32 %v2874, %v2904
  %v2907 = vtanh.pop %v2906
  %v2908 = vsub.f32 1.0, %v2896
  %2910 = vrot.lane.b32.xlu0 %v2907, 98
  %v2911 = vpop.permute.xlu0 %2910
  %v2913 = vmul.f32 %v2908, %v2911
  %v2914 = vmul.f32 %v2896, %v2731
  %v2915 = vadd.f32 %v2913, %v2914
  %2917 = vrot.lane.b32.xlu0 %v2915, 98
  %v2918 = vpop.permute.xlu0 %2917
  %v2919 = vsel %vm40, %v2918, 0
  %2921 = vmatpush.msra.mxu0 0.0
  %2922 = vmatpush.msra.mxu0 0.0
  %2923 = vmatpush.msra.mxu0 0.0
  %2924 = vmatpush.msra.mxu0 0.0
  %2925 = vmatpush.msra.mxu0 0.0
  %2926 = vmatpush.msra.mxu0 0.0
  %2927 = vmatpush.msra.mxu0 0.0
  %2928 = vmatpush.msra.mxu0 0.0
  %2929 = vmatpush.msra.mxu0 0.0
  %2930 = vmatpush.msra.mxu0 0.0
  %2931 = vmatpush.msra.mxu0 0.0
  %2932 = vmatpush.msra.mxu0 0.0
  %2933 = vmatpush.msra.mxu0 %v1109
  %2934 = vmatpush.msra.mxu0 %v1019
  %2935 = vmatpush.msra.mxu0 %v1018
  %2936 = vmatpush.msra.mxu0 %v1017
  %2937 = vmatmul.f32.gmra.mxu0 %v2919
  %v2938 = vpop.f32.mrf.mxu0
  %v2939 = vadd.f32 %v1026, %v2938
  %2940 = vdwg.mxu0
  %v2942 = vrot.slane %v2875, 4
  %2943 = vrot.lane.b32.xlu0 %v2942, 38
  %v2944 = vpop.permute.xlu0 %2943
  %v2946 = vadd.f32 %v1087, %v2944
  %v2947 = vxor.u32 %v2946, 2147483648
  %v2948 = vmul.f32 %v2947, 1.442695
  %v2949 = vpow.pop %v2948
  %v2950 = vadd.f32 %v2949, 1.0
  %v2951 = vrcp.pop %v2950
  %v2952 = vmul.f32 %v2950, %v2951
  %v2953 = vsub.f32 1.0, %v2952
  %v2954 = vmul.f32 %v2951, %v2953
  %v2955 = vadd.f32 %v2951, %v2954
  %vm2956 = vweird.f32 %v2950
  %vm2957 = vweird.f32 %v2951
  %vm2958 = vmor %vm2956, %vm2957
  %v2959 = vsel %vm2958, %v2951, %v2955
  %v2960 = vand.u32 2147483647, %v2950
  %vm2961 = vcmp.eq.f32.partialorder %v2960, 8.507059e+37
  %v2962 = vand.u32 %v2950, 2147483648
  %v2963 = vor.u32 1.1754944e-38, %v2962
  %v2964 = vsel %vm2961, %v2963, %v2959
  %v2965 = vmul.f32 1.0, %v2964
  %v2967 = vrot.slane %v2876, 4
  %2968 = vrot.lane.b32.xlu0 %v2967, 38
  %v2969 = vpop.permute.xlu0 %2968
  %v2970 = vsel %vm1321, %v2944, %v2969
  %v2972 = vadd.f32 %v1087, %v2970
  %v2973 = vxor.u32 %v2972, 2147483648
  %v2974 = vmul.f32 %v2973, 1.442695
  %v2975 = vpow.pop %v2974
  %v2976 = vadd.f32 %v2975, 1.0
  %v2977 = vrcp.pop %v2976
  %v2978 = vmul.f32 %v2976, %v2977
  %v2979 = vsub.f32 1.0, %v2978
  %v2980 = vmul.f32 %v2977, %v2979
  %v2981 = vadd.f32 %v2977, %v2980
  %vm2982 = vweird.f32 %v2976
  %vm2983 = vweird.f32 %v2977
  %vm2984 = vmor %vm2982, %vm2983
  %v2985 = vsel %vm2984, %v2977, %v2981
  %v2986 = vand.u32 2147483647, %v2976
  %vm2987 = vcmp.eq.f32.partialorder %v2986, 8.507059e+37
  %v2988 = vand.u32 %v2976, 2147483648
  %v2989 = vor.u32 1.1754944e-38, %v2988
  %v2990 = vsel %vm2987, %v2989, %v2985
  %v2991 = vmul.f32 1.0, %v2990
  %2992 = vrot.lane.b32.xlu0 %v2967, 106
  %v2993 = vpop.permute.xlu0 %2992
  %v2995 = vmul.f32 %v2965, %v2993
  %2997 = vrot.lane.b32.xlu0 %v2995, 60
  %v2998 = vpop.permute.xlu0 %2997
  %v3000 = vadd.f32 %v1087, %v2998
  %v3001 = vtanh.pop %v3000
  %v3002 = vsub.f32 1.0, %v2991
  %3004 = vrot.lane.b32.xlu0 %v3001, 98
  %v3005 = vpop.permute.xlu0 %3004
  %v3007 = vmul.f32 %v3002, %v3005
  %v3008 = vrot.slane %v2827, 6
  %v3010 = vmul.f32 %v2991, %v3008
  %v3011 = vadd.f32 %v3007, %v3010
  %v3013 = vrot.slane %v3011, 4
  %3014 = vrot.lane.b32.xlu0 %v3013, 98
  %v3015 = vpop.permute.xlu0 %3014
  %v3016 = vsel %vm40, %v3015, 0
  %3018 = vmatpush.msra.mxu0 0.0
  %3019 = vmatpush.msra.mxu0 0.0
  %3020 = vmatpush.msra.mxu0 0.0
  %3021 = vmatpush.msra.mxu0 0.0
  %3022 = vmatpush.msra.mxu0 0.0
  %3023 = vmatpush.msra.mxu0 0.0
  %3024 = vmatpush.msra.mxu0 0.0
  %3025 = vmatpush.msra.mxu0 0.0
  %3026 = vmatpush.msra.mxu0 0.0
  %3027 = vmatpush.msra.mxu0 0.0
  %3028 = vmatpush.msra.mxu0 0.0
  %3029 = vmatpush.msra.mxu0 0.0
  %3030 = vmatpush.msra.mxu0 %v1176
  %3031 = vmatpush.msra.mxu0 %v1013
  %3032 = vmatpush.msra.mxu0 %v1011
  %3033 = vmatpush.msra.mxu0 %v1009
  %3034 = vmatmul.f32.gmra.mxu0 %v3016
  %v3035 = vpop.f32.mrf.mxu0
  %v3036 = vadd.f32 0.0, %v3035
  %3037 = vdwg.mxu0
  %3038 = vmatpush.msra.mxu0 0.0
  %3039 = vmatpush.msra.mxu0 0.0
  %3040 = vmatpush.msra.mxu0 0.0
  %3041 = vmatpush.msra.mxu0 0.0
  %3042 = vmatpush.msra.mxu0 0.0
  %3043 = vmatpush.msra.mxu0 0.0
  %3044 = vmatpush.msra.mxu0 0.0
  %3045 = vmatpush.msra.mxu0 0.0
  %3046 = vmatpush.msra.mxu0 0.0
  %3047 = vmatpush.msra.mxu0 0.0
  %3048 = vmatpush.msra.mxu0 0.0
  %3049 = vmatpush.msra.mxu0 0.0
  %3050 = vmatpush.msra.mxu0 %v1179
  %3051 = vmatpush.msra.mxu0 %v1014
  %3052 = vmatpush.msra.mxu0 %v1012
  %3053 = vmatpush.msra.mxu0 %v1010
  %3054 = vmatmul.f32.gmra.mxu0 %v3016
  %v3055 = vpop.f32.mrf.mxu0
  %v3056 = vadd.f32 0.0, %v3055
  %3057 = vdwg.mxu0
  %v3058 = vadd.f32 %v3036, %v1025
  %v3059 = vadd.f32 %v3036, %v1224
  %v3060 = vadd.f32 %v3056, %v1224
  %v3061 = vadd.f32 %v3058, %v2939
  %v3062 = vxor.u32 %v3061, 2147483648
  %v3063 = vmul.f32 %v3062, 1.442695
  %v3064 = vpow.pop %v3063
  %v3065 = vadd.f32 %v3064, 1.0
  %v3066 = vrcp.pop %v3065
  %v3067 = vmul.f32 %v3065, %v3066
  %v3068 = vsub.f32 1.0, %v3067
  %v3069 = vmul.f32 %v3066, %v3068
  %v3070 = vadd.f32 %v3066, %v3069
  %vm3071 = vweird.f32 %v3065
  %vm3072 = vweird.f32 %v3066
  %vm3073 = vmor %vm3071, %vm3072
  %v3074 = vsel %vm3073, %v3066, %v3070
  %v3075 = vand.u32 2147483647, %v3065
  %vm3076 = vcmp.eq.f32.partialorder %v3075, 8.507059e+37
  %v3077 = vand.u32 %v3065, 2147483648
  %v3078 = vor.u32 1.1754944e-38, %v3077
  %v3079 = vsel %vm3076, %v3078, %v3074
  %v3080 = vmul.f32 1.0, %v3079
  %3082 = vrot.lane.b32.xlu0 %v2939, 68
  %v3083 = vpop.permute.xlu0 %3082
  %v3085 = vmul.f32 %v3080, %v3083
  %3087 = vrot.lane.b32.xlu0 %v3085, 60
  %v3088 = vpop.permute.xlu0 %3087
  %v3090 = vadd.f32 %v3058, %v3088
  %v3091 = vtanh.pop %v3090
  %v3092 = vsub.f32 1.0, %v3080
  %3094 = vrot.lane.b32.xlu0 %v3091, 98
  %v3095 = vpop.permute.xlu0 %3094
  %v3097 = vmul.f32 %v3092, %v3095
  %v3098 = vmul.f32 %v3080, %v2915
  %v3099 = vadd.f32 %v3097, %v3098
  %3101 = vrot.lane.b32.xlu0 %v3099, 98
  %v3102 = vpop.permute.xlu0 %3101
  %v3103 = vsel %vm40, %v3102, 0
  %3105 = vmatpush.msra.mxu0 0.0
  %3106 = vmatpush.msra.mxu0 0.0
  %3107 = vmatpush.msra.mxu0 0.0
  %3108 = vmatpush.msra.mxu0 0.0
  %3109 = vmatpush.msra.mxu0 0.0
  %3110 = vmatpush.msra.mxu0 0.0
  %3111 = vmatpush.msra.mxu0 0.0
  %3112 = vmatpush.msra.mxu0 0.0
  %3113 = vmatpush.msra.mxu0 0.0
  %3114 = vmatpush.msra.mxu0 0.0
  %3115 = vmatpush.msra.mxu0 0.0
  %3116 = vmatpush.msra.mxu0 0.0
  %3117 = vmatpush.msra.mxu0 %v1109
  %3118 = vmatpush.msra.mxu0 %v1019
  %3119 = vmatpush.msra.mxu0 %v1018
  %3120 = vmatpush.msra.mxu0 %v1017
  %3121 = vmatmul.f32.gmra.mxu0 %v3103
  %v3122 = vpop.f32.mrf.mxu0
  %v3123 = vadd.f32 %v1026, %v3122
  %3124 = vdwg.mxu0
  %v3126 = vrot.slane %v3059, 2
  %3127 = vrot.lane.b32.xlu0 %v3126, 38
  %v3128 = vpop.permute.xlu0 %3127
  %v3130 = vadd.f32 %v1087, %v3128
  %v3131 = vxor.u32 %v3130, 2147483648
  %v3132 = vmul.f32 %v3131, 1.442695
  %v3133 = vpow.pop %v3132
  %v3134 = vadd.f32 %v3133, 1.0
  %v3135 = vrcp.pop %v3134
  %v3136 = vmul.f32 %v3134, %v3135
  %v3137 = vsub.f32 1.0, %v3136
  %v3138 = vmul.f32 %v3135, %v3137
  %v3139 = vadd.f32 %v3135, %v3138
  %vm3140 = vweird.f32 %v3134
  %vm3141 = vweird.f32 %v3135
  %vm3142 = vmor %vm3140, %vm3141
  %v3143 = vsel %vm3142, %v3135, %v3139
  %v3144 = vand.u32 2147483647, %v3134
  %vm3145 = vcmp.eq.f32.partialorder %v3144, 8.507059e+37
  %v3146 = vand.u32 %v3134, 2147483648
  %v3147 = vor.u32 1.1754944e-38, %v3146
  %v3148 = vsel %vm3145, %v3147, %v3143
  %v3149 = vmul.f32 1.0, %v3148
  %v3151 = vrot.slane %v3060, 2
  %3152 = vrot.lane.b32.xlu0 %v3151, 38
  %v3153 = vpop.permute.xlu0 %3152
  %v3154 = vsel %vm1321, %v3128, %v3153
  %v3156 = vadd.f32 %v1087, %v3154
  %v3157 = vxor.u32 %v3156, 2147483648
  %v3158 = vmul.f32 %v3157, 1.442695
  %v3159 = vpow.pop %v3158
  %v3160 = vadd.f32 %v3159, 1.0
  %v3161 = vrcp.pop %v3160
  %v3162 = vmul.f32 %v3160, %v3161
  %v3163 = vsub.f32 1.0, %v3162
  %v3164 = vmul.f32 %v3161, %v3163
  %v3165 = vadd.f32 %v3161, %v3164
  %vm3166 = vweird.f32 %v3160
  %vm3167 = vweird.f32 %v3161
  %vm3168 = vmor %vm3166, %vm3167
  %v3169 = vsel %vm3168, %v3161, %v3165
  %v3170 = vand.u32 2147483647, %v3160
  %vm3171 = vcmp.eq.f32.partialorder %v3170, 8.507059e+37
  %v3172 = vand.u32 %v3160, 2147483648
  %v3173 = vor.u32 1.1754944e-38, %v3172
  %v3174 = vsel %vm3171, %v3173, %v3169
  %v3175 = vmul.f32 1.0, %v3174
  %3176 = vrot.lane.b32.xlu0 %v3151, 106
  %v3177 = vpop.permute.xlu0 %3176
  %v3179 = vmul.f32 %v3149, %v3177
  %3181 = vrot.lane.b32.xlu0 %v3179, 60
  %v3182 = vpop.permute.xlu0 %3181
  %v3184 = vadd.f32 %v1087, %v3182
  %v3185 = vtanh.pop %v3184
  %v3186 = vsub.f32 1.0, %v3175
  %3188 = vrot.lane.b32.xlu0 %v3185, 98
  %v3189 = vpop.permute.xlu0 %3188
  %v3191 = vmul.f32 %v3186, %v3189
  %v3192 = vrot.slane %v3011, 6
  %v3194 = vmul.f32 %v3175, %v3192
  %v3195 = vadd.f32 %v3191, %v3194
  %v3197 = vrot.slane %v3195, 6
  %3198 = vrot.lane.b32.xlu0 %v3197, 98
  %v3199 = vpop.permute.xlu0 %3198
  %v3200 = vsel %vm40, %v3199, 0
  %3202 = vmatpush.msra.mxu0 0.0
  %3203 = vmatpush.msra.mxu0 0.0
  %3204 = vmatpush.msra.mxu0 0.0
  %3205 = vmatpush.msra.mxu0 0.0
  %3206 = vmatpush.msra.mxu0 0.0
  %3207 = vmatpush.msra.mxu0 0.0
  %3208 = vmatpush.msra.mxu0 0.0
  %3209 = vmatpush.msra.mxu0 0.0
  %3210 = vmatpush.msra.mxu0 0.0
  %3211 = vmatpush.msra.mxu0 0.0
  %3212 = vmatpush.msra.mxu0 0.0
  %3213 = vmatpush.msra.mxu0 0.0
  %3214 = vmatpush.msra.mxu0 %v1176
  %3215 = vmatpush.msra.mxu0 %v1013
  %3216 = vmatpush.msra.mxu0 %v1011
  %3217 = vmatpush.msra.mxu0 %v1009
  %3218 = vmatmul.f32.gmra.mxu0 %v3200
  %v3219 = vpop.f32.mrf.mxu0
  %v3220 = vadd.f32 0.0, %v3219
  %3221 = vdwg.mxu0
  %3222 = vmatpush.msra.mxu0 0.0
  %3223 = vmatpush.msra.mxu0 0.0
  %3224 = vmatpush.msra.mxu0 0.0
  %3225 = vmatpush.msra.mxu0 0.0
  %3226 = vmatpush.msra.mxu0 0.0
  %3227 = vmatpush.msra.mxu0 0.0
  %3228 = vmatpush.msra.mxu0 0.0
  %3229 = vmatpush.msra.mxu0 0.0
  %3230 = vmatpush.msra.mxu0 0.0
  %3231 = vmatpush.msra.mxu0 0.0
  %3232 = vmatpush.msra.mxu0 0.0
  %3233 = vmatpush.msra.mxu0 0.0
  %3234 = vmatpush.msra.mxu0 %v1179
  %3235 = vmatpush.msra.mxu0 %v1014
  %3236 = vmatpush.msra.mxu0 %v1012
  %3237 = vmatpush.msra.mxu0 %v1010
  %3238 = vmatmul.f32.gmra.mxu0 %v3200
  %v3239 = vpop.f32.mrf.mxu0
  %v3240 = vadd.f32 0.0, %v3239
  %3241 = vdwg.mxu0
  %v3242 = vadd.f32 %v3220, %v1025
  %v3243 = vadd.f32 %v3220, %v1224
  %v3244 = vadd.f32 %v3240, %v1224
  %v3245 = vadd.f32 %v3242, %v3123
  %v3246 = vxor.u32 %v3245, 2147483648
  %v3247 = vmul.f32 %v3246, 1.442695
  %v3248 = vpow.pop %v3247
  %v3249 = vadd.f32 %v3248, 1.0
  %v3250 = vrcp.pop %v3249
  %v3251 = vmul.f32 %v3249, %v3250
  %v3252 = vsub.f32 1.0, %v3251
  %v3253 = vmul.f32 %v3250, %v3252
  %v3254 = vadd.f32 %v3250, %v3253
  %vm3255 = vweird.f32 %v3249
  %vm3256 = vweird.f32 %v3250
  %vm3257 = vmor %vm3255, %vm3256
  %v3258 = vsel %vm3257, %v3250, %v3254
  %v3259 = vand.u32 2147483647, %v3249
  %vm3260 = vcmp.eq.f32.partialorder %v3259, 8.507059e+37
  %v3261 = vand.u32 %v3249, 2147483648
  %v3262 = vor.u32 1.1754944e-38, %v3261
  %v3263 = vsel %vm3260, %v3262, %v3258
  %v3264 = vmul.f32 1.0, %v3263
  %3266 = vrot.lane.b32.xlu0 %v3123, 68
  %v3267 = vpop.permute.xlu0 %3266
  %v3269 = vmul.f32 %v3264, %v3267
  %3271 = vrot.lane.b32.xlu0 %v3269, 60
  %v3272 = vpop.permute.xlu0 %3271
  %v3274 = vadd.f32 %v3242, %v3272
  %v3275 = vtanh.pop %v3274
  %v3276 = vsub.f32 1.0, %v3264
  %3278 = vrot.lane.b32.xlu0 %v3275, 98
  %v3279 = vpop.permute.xlu0 %3278
  %v3281 = vmul.f32 %v3276, %v3279
  %v3282 = vmul.f32 %v3264, %v3099
  %v3283 = vadd.f32 %v3281, %v3282
  %3285 = vrot.lane.b32.xlu0 %v3283, 98
  %v3286 = vpop.permute.xlu0 %3285
  %v3287 = vsel %vm40, %v3286, 0
  %3289 = vmatpush.msra.mxu0 0.0
  %3290 = vmatpush.msra.mxu0 0.0
  %3291 = vmatpush.msra.mxu0 0.0
  %3292 = vmatpush.msra.mxu0 0.0
  %3293 = vmatpush.msra.mxu0 0.0
  %3294 = vmatpush.msra.mxu0 0.0
  %3295 = vmatpush.msra.mxu0 0.0
  %3296 = vmatpush.msra.mxu0 0.0
  %3297 = vmatpush.msra.mxu0 0.0
  %3298 = vmatpush.msra.mxu0 0.0
  %3299 = vmatpush.msra.mxu0 0.0
  %3300 = vmatpush.msra.mxu0 0.0
  %3301 = vmatpush.msra.mxu0 %v1109
  %3302 = vmatpush.msra.mxu0 %v1019
  %3303 = vmatpush.msra.mxu0 %v1018
  %3304 = vmatpush.msra.mxu0 %v1017
  %3305 = vmatmul.f32.gmra.mxu0 %v3287
  %v3306 = vpop.f32.mrf.mxu0
  %v3307 = vadd.f32 %v1026, %v3306
  %3308 = vdwg.mxu0
  %3310 = vrot.lane.b32.xlu0 %v3243, 38
  %v3311 = vpop.permute.xlu0 %3310
  %v3313 = vadd.f32 %v1090, %v3311
  %v3314 = vxor.u32 %v3313, 2147483648
  %v3315 = vmul.f32 %v3314, 1.442695
  %v3316 = vpow.pop %v3315
  %v3317 = vadd.f32 %v3316, 1.0
  %v3318 = vrcp.pop %v3317
  %v3319 = vmul.f32 %v3317, %v3318
  %v3320 = vsub.f32 1.0, %v3319
  %v3321 = vmul.f32 %v3318, %v3320
  %v3322 = vadd.f32 %v3318, %v3321
  %vm3323 = vweird.f32 %v3317
  %vm3324 = vweird.f32 %v3318
  %vm3325 = vmor %vm3323, %vm3324
  %v3326 = vsel %vm3325, %v3318, %v3322
  %v3327 = vand.u32 2147483647, %v3317
  %vm3328 = vcmp.eq.f32.partialorder %v3327, 8.507059e+37
  %v3329 = vand.u32 %v3317, 2147483648
  %v3330 = vor.u32 1.1754944e-38, %v3329
  %v3331 = vsel %vm3328, %v3330, %v3326
  %v3332 = vmul.f32 1.0, %v3331
  %3334 = vrot.lane.b32.xlu0 %v3244, 38
  %v3335 = vpop.permute.xlu0 %3334
  %v3336 = vsel %vm1321, %v3311, %v3335
  %v3338 = vadd.f32 %v1090, %v3336
  %v3339 = vxor.u32 %v3338, 2147483648
  %v3340 = vmul.f32 %v3339, 1.442695
  %v3341 = vpow.pop %v3340
  %v3342 = vadd.f32 %v3341, 1.0
  %v3343 = vrcp.pop %v3342
  %v3344 = vmul.f32 %v3342, %v3343
  %v3345 = vsub.f32 1.0, %v3344
  %v3346 = vmul.f32 %v3343, %v3345
  %v3347 = vadd.f32 %v3343, %v3346
  %vm3348 = vweird.f32 %v3342
  %vm3349 = vweird.f32 %v3343
  %vm3350 = vmor %vm3348, %vm3349
  %v3351 = vsel %vm3350, %v3343, %v3347
  %v3352 = vand.u32 2147483647, %v3342
  %vm3353 = vcmp.eq.f32.partialorder %v3352, 8.507059e+37
  %v3354 = vand.u32 %v3342, 2147483648
  %v3355 = vor.u32 1.1754944e-38, %v3354
  %v3356 = vsel %vm3353, %v3355, %v3351
  %v3357 = vmul.f32 1.0, %v3356
  %3358 = vrot.lane.b32.xlu0 %v3244, 106
  %v3359 = vpop.permute.xlu0 %3358
  %v3361 = vmul.f32 %v3332, %v3359
  %3363 = vrot.lane.b32.xlu0 %v3361, 60
  %v3364 = vpop.permute.xlu0 %3363
  %v3366 = vadd.f32 %v1090, %v3364
  %v3367 = vtanh.pop %v3366
  %v3368 = vsub.f32 1.0, %v3357
  %3370 = vrot.lane.b32.xlu0 %v3367, 98
  %v3371 = vpop.permute.xlu0 %3370
  %v3373 = vmul.f32 %v3368, %v3371
  %v3375 = vmul.f32 %v3357, %v3197
  %v3376 = vadd.f32 %v3373, %v3375
  %3378 = vrot.lane.b32.xlu0 %v3376, 98
  %v3379 = vpop.permute.xlu0 %3378
  %v3380 = vsel %vm40, %v3379, 0
  %3382 = vmatpush.msra.mxu0 0.0
  %3383 = vmatpush.msra.mxu0 0.0
  %3384 = vmatpush.msra.mxu0 0.0
  %3385 = vmatpush.msra.mxu0 0.0
  %3386 = vmatpush.msra.mxu0 0.0
  %3387 = vmatpush.msra.mxu0 0.0
  %3388 = vmatpush.msra.mxu0 0.0
  %3389 = vmatpush.msra.mxu0 0.0
  %3390 = vmatpush.msra.mxu0 0.0
  %3391 = vmatpush.msra.mxu0 0.0
  %3392 = vmatpush.msra.mxu0 0.0
  %3393 = vmatpush.msra.mxu0 0.0
  %3394 = vmatpush.msra.mxu0 %v1176
  %3395 = vmatpush.msra.mxu0 %v1013
  %3396 = vmatpush.msra.mxu0 %v1011
  %3397 = vmatpush.msra.mxu0 %v1009
  %3398 = vmatmul.f32.gmra.mxu0 %v3380
  %v3399 = vpop.f32.mrf.mxu0
  %v3400 = vadd.f32 0.0, %v3399
  %3401 = vdwg.mxu0
  %3402 = vmatpush.msra.mxu0 0.0
  %3403 = vmatpush.msra.mxu0 0.0
  %3404 = vmatpush.msra.mxu0 0.0
  %3405 = vmatpush.msra.mxu0 0.0
  %3406 = vmatpush.msra.mxu0 0.0
  %3407 = vmatpush.msra.mxu0 0.0
  %3408 = vmatpush.msra.mxu0 0.0
  %3409 = vmatpush.msra.mxu0 0.0
  %3410 = vmatpush.msra.mxu0 0.0
  %3411 = vmatpush.msra.mxu0 0.0
  %3412 = vmatpush.msra.mxu0 0.0
  %3413 = vmatpush.msra.mxu0 0.0
  %3414 = vmatpush.msra.mxu0 %v1179
  %3415 = vmatpush.msra.mxu0 %v1014
  %3416 = vmatpush.msra.mxu0 %v1012
  %3417 = vmatpush.msra.mxu0 %v1010
  %3418 = vmatmul.f32.gmra.mxu0 %v3380
  %v3419 = vpop.f32.mrf.mxu0
  %v3420 = vadd.f32 0.0, %v3419
  %3421 = vdwg.mxu0
  %v3422 = vadd.f32 %v3400, %v1025
  %v3423 = vadd.f32 %v3400, %v1224
  %v3424 = vadd.f32 %v3420, %v1224
  %v3425 = vadd.f32 %v3422, %v3307
  %v3426 = vxor.u32 %v3425, 2147483648
  %v3427 = vmul.f32 %v3426, 1.442695
  %v3428 = vpow.pop %v3427
  %v3429 = vadd.f32 %v3428, 1.0
  %v3430 = vrcp.pop %v3429
  %v3431 = vmul.f32 %v3429, %v3430
  %v3432 = vsub.f32 1.0, %v3431
  %v3433 = vmul.f32 %v3430, %v3432
  %v3434 = vadd.f32 %v3430, %v3433
  %vm3435 = vweird.f32 %v3429
  %vm3436 = vweird.f32 %v3430
  %vm3437 = vmor %vm3435, %vm3436
  %v3438 = vsel %vm3437, %v3430, %v3434
  %v3439 = vand.u32 2147483647, %v3429
  %vm3440 = vcmp.eq.f32.partialorder %v3439, 8.507059e+37
  %v3441 = vand.u32 %v3429, 2147483648
  %v3442 = vor.u32 1.1754944e-38, %v3441
  %v3443 = vsel %vm3440, %v3442, %v3438
  %v3444 = vmul.f32 1.0, %v3443
  %3446 = vrot.lane.b32.xlu0 %v3307, 68
  %v3447 = vpop.permute.xlu0 %3446
  %v3449 = vmul.f32 %v3444, %v3447
  %3451 = vrot.lane.b32.xlu0 %v3449, 60
  %v3452 = vpop.permute.xlu0 %3451
  %v3454 = vadd.f32 %v3422, %v3452
  %v3455 = vtanh.pop %v3454
  %v3456 = vsub.f32 1.0, %v3444
  %3458 = vrot.lane.b32.xlu0 %v3455, 98
  %v3459 = vpop.permute.xlu0 %3458
  %v3461 = vmul.f32 %v3456, %v3459
  %v3462 = vmul.f32 %v3444, %v3283
  %v3463 = vadd.f32 %v3461, %v3462
  %3465 = vrot.lane.b32.xlu0 %v3463, 98
  %v3466 = vpop.permute.xlu0 %3465
  %v3467 = vsel %vm40, %v3466, 0
  %3469 = vmatpush.msra.mxu0 0.0
  %3470 = vmatpush.msra.mxu0 0.0
  %3471 = vmatpush.msra.mxu0 0.0
  %3472 = vmatpush.msra.mxu0 0.0
  %3473 = vmatpush.msra.mxu0 0.0
  %3474 = vmatpush.msra.mxu0 0.0
  %3475 = vmatpush.msra.mxu0 0.0
  %3476 = vmatpush.msra.mxu0 0.0
  %3477 = vmatpush.msra.mxu0 0.0
  %3478 = vmatpush.msra.mxu0 0.0
  %3479 = vmatpush.msra.mxu0 0.0
  %3480 = vmatpush.msra.mxu0 0.0
  %3481 = vmatpush.msra.mxu0 %v1109
  %3482 = vmatpush.msra.mxu0 %v1019
  %3483 = vmatpush.msra.mxu0 %v1018
  %3484 = vmatpush.msra.mxu0 %v1017
  %3485 = vmatmul.f32.gmra.mxu0 %v3467
  %v3486 = vpop.f32.mrf.mxu0
  %v3487 = vadd.f32 %v1026, %v3486
  %3488 = vdwg.mxu0
  %v3490 = vrot.slane %v3423, 6
  %3491 = vrot.lane.b32.xlu0 %v3490, 38
  %v3492 = vpop.permute.xlu0 %3491
  %v3494 = vadd.f32 %v1090, %v3492
  %v3495 = vxor.u32 %v3494, 2147483648
  %v3496 = vmul.f32 %v3495, 1.442695
  %v3497 = vpow.pop %v3496
  %v3498 = vadd.f32 %v3497, 1.0
  %v3499 = vrcp.pop %v3498
  %v3500 = vmul.f32 %v3498, %v3499
  %v3501 = vsub.f32 1.0, %v3500
  %v3502 = vmul.f32 %v3499, %v3501
  %v3503 = vadd.f32 %v3499, %v3502
  %vm3504 = vweird.f32 %v3498
  %vm3505 = vweird.f32 %v3499
  %vm3506 = vmor %vm3504, %vm3505
  %v3507 = vsel %vm3506, %v3499, %v3503
  %v3508 = vand.u32 2147483647, %v3498
  %vm3509 = vcmp.eq.f32.partialorder %v3508, 8.507059e+37
  %v3510 = vand.u32 %v3498, 2147483648
  %v3511 = vor.u32 1.1754944e-38, %v3510
  %v3512 = vsel %vm3509, %v3511, %v3507
  %v3513 = vmul.f32 1.0, %v3512
  %v3515 = vrot.slane %v3424, 6
  %3516 = vrot.lane.b32.xlu0 %v3515, 38
  %v3517 = vpop.permute.xlu0 %3516
  %v3518 = vsel %vm1321, %v3492, %v3517
  %v3520 = vadd.f32 %v1090, %v3518
  %v3521 = vxor.u32 %v3520, 2147483648
  %v3522 = vmul.f32 %v3521, 1.442695
  %v3523 = vpow.pop %v3522
  %v3524 = vadd.f32 %v3523, 1.0
  %v3525 = vrcp.pop %v3524
  %v3526 = vmul.f32 %v3524, %v3525
  %v3527 = vsub.f32 1.0, %v3526
  %v3528 = vmul.f32 %v3525, %v3527
  %v3529 = vadd.f32 %v3525, %v3528
  %vm3530 = vweird.f32 %v3524
  %vm3531 = vweird.f32 %v3525
  %vm3532 = vmor %vm3530, %vm3531
  %v3533 = vsel %vm3532, %v3525, %v3529
  %v3534 = vand.u32 2147483647, %v3524
  %vm3535 = vcmp.eq.f32.partialorder %v3534, 8.507059e+37
  %v3536 = vand.u32 %v3524, 2147483648
  %v3537 = vor.u32 1.1754944e-38, %v3536
  %v3538 = vsel %vm3535, %v3537, %v3533
  %v3539 = vmul.f32 1.0, %v3538
  %3540 = vrot.lane.b32.xlu0 %v3515, 106
  %v3541 = vpop.permute.xlu0 %3540
  %v3543 = vmul.f32 %v3513, %v3541
  %3545 = vrot.lane.b32.xlu0 %v3543, 60
  %v3546 = vpop.permute.xlu0 %3545
  %v3548 = vadd.f32 %v1090, %v3546
  %v3549 = vtanh.pop %v3548
  %v3550 = vsub.f32 1.0, %v3539
  %3552 = vrot.lane.b32.xlu0 %v3549, 98
  %v3553 = vpop.permute.xlu0 %3552
  %v3555 = vmul.f32 %v3550, %v3553
  %v3556 = vrot.slane %v3376, 6
  %v3558 = vmul.f32 %v3539, %v3556
  %v3559 = vadd.f32 %v3555, %v3558
  %v3561 = vrot.slane %v3559, 2
  %3562 = vrot.lane.b32.xlu0 %v3561, 98
  %v3563 = vpop.permute.xlu0 %3562
  %v3564 = vsel %vm40, %v3563, 0
  %3566 = vmatpush.msra.mxu0 0.0
  %3567 = vmatpush.msra.mxu0 0.0
  %3568 = vmatpush.msra.mxu0 0.0
  %3569 = vmatpush.msra.mxu0 0.0
  %3570 = vmatpush.msra.mxu0 0.0
  %3571 = vmatpush.msra.mxu0 0.0
  %3572 = vmatpush.msra.mxu0 0.0
  %3573 = vmatpush.msra.mxu0 0.0
  %3574 = vmatpush.msra.mxu0 0.0
  %3575 = vmatpush.msra.mxu0 0.0
  %3576 = vmatpush.msra.mxu0 0.0
  %3577 = vmatpush.msra.mxu0 0.0
  %3578 = vmatpush.msra.mxu0 %v1176
  %3579 = vmatpush.msra.mxu0 %v1013
  %3580 = vmatpush.msra.mxu0 %v1011
  %3581 = vmatpush.msra.mxu0 %v1009
  %3582 = vmatmul.f32.gmra.mxu0 %v3564
  %v3583 = vpop.f32.mrf.mxu0
  %v3584 = vadd.f32 0.0, %v3583
  %3585 = vdwg.mxu0
  %3586 = vmatpush.msra.mxu0 0.0
  %3587 = vmatpush.msra.mxu0 0.0
  %3588 = vmatpush.msra.mxu0 0.0
  %3589 = vmatpush.msra.mxu0 0.0
  %3590 = vmatpush.msra.mxu0 0.0
  %3591 = vmatpush.msra.mxu0 0.0
  %3592 = vmatpush.msra.mxu0 0.0
  %3593 = vmatpush.msra.mxu0 0.0
  %3594 = vmatpush.msra.mxu0 0.0
  %3595 = vmatpush.msra.mxu0 0.0
  %3596 = vmatpush.msra.mxu0 0.0
  %3597 = vmatpush.msra.mxu0 0.0
  %3598 = vmatpush.msra.mxu0 %v1179
  %3599 = vmatpush.msra.mxu0 %v1014
  %3600 = vmatpush.msra.mxu0 %v1012
  %3601 = vmatpush.msra.mxu0 %v1010
  %3602 = vmatmul.f32.gmra.mxu0 %v3564
  %v3603 = vpop.f32.mrf.mxu0
  %v3604 = vadd.f32 0.0, %v3603
  %3605 = vdwg.mxu0
  %v3606 = vadd.f32 %v3584, %v1025
  %v3607 = vadd.f32 %v3584, %v1224
  %v3608 = vadd.f32 %v3604, %v1224
  %v3609 = vadd.f32 %v3606, %v3487
  %v3610 = vxor.u32 %v3609, 2147483648
  %v3611 = vmul.f32 %v3610, 1.442695
  %v3612 = vpow.pop %v3611
  %v3613 = vadd.f32 %v3612, 1.0
  %v3614 = vrcp.pop %v3613
  %v3615 = vmul.f32 %v3613, %v3614
  %v3616 = vsub.f32 1.0, %v3615
  %v3617 = vmul.f32 %v3614, %v3616
  %v3618 = vadd.f32 %v3614, %v3617
  %vm3619 = vweird.f32 %v3613
  %vm3620 = vweird.f32 %v3614
  %vm3621 = vmor %vm3619, %vm3620
  %v3622 = vsel %vm3621, %v3614, %v3618
  %v3623 = vand.u32 2147483647, %v3613
  %vm3624 = vcmp.eq.f32.partialorder %v3623, 8.507059e+37
  %v3625 = vand.u32 %v3613, 2147483648
  %v3626 = vor.u32 1.1754944e-38, %v3625
  %v3627 = vsel %vm3624, %v3626, %v3622
  %v3628 = vmul.f32 1.0, %v3627
  %3630 = vrot.lane.b32.xlu0 %v3487, 68
  %v3631 = vpop.permute.xlu0 %3630
  %v3633 = vmul.f32 %v3628, %v3631
  %3635 = vrot.lane.b32.xlu0 %v3633, 60
  %v3636 = vpop.permute.xlu0 %3635
  %v3638 = vadd.f32 %v3606, %v3636
  %v3639 = vtanh.pop %v3638
  %v3640 = vsub.f32 1.0, %v3628
  %3642 = vrot.lane.b32.xlu0 %v3639, 98
  %v3643 = vpop.permute.xlu0 %3642
  %v3645 = vmul.f32 %v3640, %v3643
  %v3646 = vmul.f32 %v3628, %v3463
  %v3647 = vadd.f32 %v3645, %v3646
  %3649 = vrot.lane.b32.xlu0 %v3647, 98
  %v3650 = vpop.permute.xlu0 %3649
  %v3651 = vsel %vm40, %v3650, 0
  %3653 = vmatpush.msra.mxu0 0.0
  %3654 = vmatpush.msra.mxu0 0.0
  %3655 = vmatpush.msra.mxu0 0.0
  %3656 = vmatpush.msra.mxu0 0.0
  %3657 = vmatpush.msra.mxu0 0.0
  %3658 = vmatpush.msra.mxu0 0.0
  %3659 = vmatpush.msra.mxu0 0.0
  %3660 = vmatpush.msra.mxu0 0.0
  %3661 = vmatpush.msra.mxu0 0.0
  %3662 = vmatpush.msra.mxu0 0.0
  %3663 = vmatpush.msra.mxu0 0.0
  %3664 = vmatpush.msra.mxu0 0.0
  %3665 = vmatpush.msra.mxu0 %v1109
  %3666 = vmatpush.msra.mxu0 %v1019
  %3667 = vmatpush.msra.mxu0 %v1018
  %3668 = vmatpush.msra.mxu0 %v1017
  %3669 = vmatmul.f32.gmra.mxu0 %v3651
  %v3670 = vpop.f32.mrf.mxu0
  %v3671 = vadd.f32 %v1026, %v3670
  %3672 = vdwg.mxu0
  %v3674 = vrot.slane %v3607, 4
  %3675 = vrot.lane.b32.xlu0 %v3674, 38
  %v3676 = vpop.permute.xlu0 %3675
  %v3678 = vadd.f32 %v1090, %v3676
  %v3679 = vxor.u32 %v3678, 2147483648
  %v3680 = vmul.f32 %v3679, 1.442695
  %v3681 = vpow.pop %v3680
  %v3682 = vadd.f32 %v3681, 1.0
  %v3683 = vrcp.pop %v3682
  %v3684 = vmul.f32 %v3682, %v3683
  %v3685 = vsub.f32 1.0, %v3684
  %v3686 = vmul.f32 %v3683, %v3685
  %v3687 = vadd.f32 %v3683, %v3686
  %vm3688 = vweird.f32 %v3682
  %vm3689 = vweird.f32 %v3683
  %vm3690 = vmor %vm3688, %vm3689
  %v3691 = vsel %vm3690, %v3683, %v3687
  %v3692 = vand.u32 2147483647, %v3682
  %vm3693 = vcmp.eq.f32.partialorder %v3692, 8.507059e+37
  %v3694 = vand.u32 %v3682, 2147483648
  %v3695 = vor.u32 1.1754944e-38, %v3694
  %v3696 = vsel %vm3693, %v3695, %v3691
  %v3697 = vmul.f32 1.0, %v3696
  %v3699 = vrot.slane %v3608, 4
  %3700 = vrot.lane.b32.xlu0 %v3699, 38
  %v3701 = vpop.permute.xlu0 %3700
  %v3702 = vsel %vm1321, %v3676, %v3701
  %v3704 = vadd.f32 %v1090, %v3702
  %v3705 = vxor.u32 %v3704, 2147483648
  %v3706 = vmul.f32 %v3705, 1.442695
  %v3707 = vpow.pop %v3706
  %v3708 = vadd.f32 %v3707, 1.0
  %v3709 = vrcp.pop %v3708
  %v3710 = vmul.f32 %v3708, %v3709
  %v3711 = vsub.f32 1.0, %v3710
  %v3712 = vmul.f32 %v3709, %v3711
  %v3713 = vadd.f32 %v3709, %v3712
  %vm3714 = vweird.f32 %v3708
  %vm3715 = vweird.f32 %v3709
  %vm3716 = vmor %vm3714, %vm3715
  %v3717 = vsel %vm3716, %v3709, %v3713
  %v3718 = vand.u32 2147483647, %v3708
  %vm3719 = vcmp.eq.f32.partialorder %v3718, 8.507059e+37
  %v3720 = vand.u32 %v3708, 2147483648
  %v3721 = vor.u32 1.1754944e-38, %v3720
  %v3722 = vsel %vm3719, %v3721, %v3717
  %v3723 = vmul.f32 1.0, %v3722
  %3724 = vrot.lane.b32.xlu0 %v3699, 106
  %v3725 = vpop.permute.xlu0 %3724
  %v3727 = vmul.f32 %v3697, %v3725
  %3729 = vrot.lane.b32.xlu0 %v3727, 60
  %v3730 = vpop.permute.xlu0 %3729
  %v3732 = vadd.f32 %v1090, %v3730
  %v3733 = vtanh.pop %v3732
  %v3734 = vsub.f32 1.0, %v3723
  %3736 = vrot.lane.b32.xlu0 %v3733, 98
  %v3737 = vpop.permute.xlu0 %3736
  %v3739 = vmul.f32 %v3734, %v3737
  %v3740 = vrot.slane %v3559, 6
  %v3742 = vmul.f32 %v3723, %v3740
  %v3743 = vadd.f32 %v3739, %v3742
  %v3745 = vrot.slane %v3743, 4
  %3746 = vrot.lane.b32.xlu0 %v3745, 98
  %v3747 = vpop.permute.xlu0 %3746
  %v3748 = vsel %vm40, %v3747, 0
  %3750 = vmatpush.msra.mxu0 0.0
  %3751 = vmatpush.msra.mxu0 0.0
  %3752 = vmatpush.msra.mxu0 0.0
  %3753 = vmatpush.msra.mxu0 0.0
  %3754 = vmatpush.msra.mxu0 0.0
  %3755 = vmatpush.msra.mxu0 0.0
  %3756 = vmatpush.msra.mxu0 0.0
  %3757 = vmatpush.msra.mxu0 0.0
  %3758 = vmatpush.msra.mxu0 0.0
  %3759 = vmatpush.msra.mxu0 0.0
  %3760 = vmatpush.msra.mxu0 0.0
  %3761 = vmatpush.msra.mxu0 0.0
  %3762 = vmatpush.msra.mxu0 %v1176
  %3763 = vmatpush.msra.mxu0 %v1013
  %3764 = vmatpush.msra.mxu0 %v1011
  %3765 = vmatpush.msra.mxu0 %v1009
  %3766 = vmatmul.f32.gmra.mxu0 %v3748
  %v3767 = vpop.f32.mrf.mxu0
  %v3768 = vadd.f32 0.0, %v3767
  %3769 = vdwg.mxu0
  %3770 = vmatpush.msra.mxu0 0.0
  %3771 = vmatpush.msra.mxu0 0.0
  %3772 = vmatpush.msra.mxu0 0.0
  %3773 = vmatpush.msra.mxu0 0.0
  %3774 = vmatpush.msra.mxu0 0.0
  %3775 = vmatpush.msra.mxu0 0.0
  %3776 = vmatpush.msra.mxu0 0.0
  %3777 = vmatpush.msra.mxu0 0.0
  %3778 = vmatpush.msra.mxu0 0.0
  %3779 = vmatpush.msra.mxu0 0.0
  %3780 = vmatpush.msra.mxu0 0.0
  %3781 = vmatpush.msra.mxu0 0.0
  %3782 = vmatpush.msra.mxu0 %v1179
  %3783 = vmatpush.msra.mxu0 %v1014
  %3784 = vmatpush.msra.mxu0 %v1012
  %3785 = vmatpush.msra.mxu0 %v1010
  %3786 = vmatmul.f32.gmra.mxu0 %v3748
  %v3787 = vpop.f32.mrf.mxu0
  %v3788 = vadd.f32 0.0, %v3787
  %3789 = vdwg.mxu0
  %v3790 = vadd.f32 %v3768, %v1025
  %v3791 = vadd.f32 %v3768, %v1224
  %v3792 = vadd.f32 %v3788, %v1224
  %v3793 = vadd.f32 %v3790, %v3671
  %v3794 = vxor.u32 %v3793, 2147483648
  %v3795 = vmul.f32 %v3794, 1.442695
  %v3796 = vpow.pop %v3795
  %v3797 = vadd.f32 %v3796, 1.0
  %v3798 = vrcp.pop %v3797
  %v3799 = vmul.f32 %v3797, %v3798
  %v3800 = vsub.f32 1.0, %v3799
  %v3801 = vmul.f32 %v3798, %v3800
  %v3802 = vadd.f32 %v3798, %v3801
  %vm3803 = vweird.f32 %v3797
  %vm3804 = vweird.f32 %v3798
  %vm3805 = vmor %vm3803, %vm3804
  %v3806 = vsel %vm3805, %v3798, %v3802
  %v3807 = vand.u32 2147483647, %v3797
  %vm3808 = vcmp.eq.f32.partialorder %v3807, 8.507059e+37
  %v3809 = vand.u32 %v3797, 2147483648
  %v3810 = vor.u32 1.1754944e-38, %v3809
  %v3811 = vsel %vm3808, %v3810, %v3806
  %v3812 = vmul.f32 1.0, %v3811
  %3814 = vrot.lane.b32.xlu0 %v3671, 68
  %v3815 = vpop.permute.xlu0 %3814
  %v3817 = vmul.f32 %v3812, %v3815
  %3819 = vrot.lane.b32.xlu0 %v3817, 60
  %v3820 = vpop.permute.xlu0 %3819
  %v3822 = vadd.f32 %v3790, %v3820
  %v3823 = vtanh.pop %v3822
  %v3824 = vsub.f32 1.0, %v3812
  %3826 = vrot.lane.b32.xlu0 %v3823, 98
  %v3827 = vpop.permute.xlu0 %3826
  %v3829 = vmul.f32 %v3824, %v3827
  %v3830 = vmul.f32 %v3812, %v3647
  %v3831 = vadd.f32 %v3829, %v3830
  %3833 = vrot.lane.b32.xlu0 %v3831, 98
  %v3834 = vpop.permute.xlu0 %3833
  %v3835 = vsel %vm40, %v3834, 0
  %3837 = vmatpush.msra.mxu0 0.0
  %3838 = vmatpush.msra.mxu0 0.0
  %3839 = vmatpush.msra.mxu0 0.0
  %3840 = vmatpush.msra.mxu0 0.0
  %3841 = vmatpush.msra.mxu0 0.0
  %3842 = vmatpush.msra.mxu0 0.0
  %3843 = vmatpush.msra.mxu0 0.0
  %3844 = vmatpush.msra.mxu0 0.0
  %3845 = vmatpush.msra.mxu0 0.0
  %3846 = vmatpush.msra.mxu0 0.0
  %3847 = vmatpush.msra.mxu0 0.0
  %3848 = vmatpush.msra.mxu0 0.0
  %3849 = vmatpush.msra.mxu0 %v1109
  %3850 = vmatpush.msra.mxu0 %v1019
  %3851 = vmatpush.msra.mxu0 %v1018
  %3852 = vmatpush.msra.mxu0 %v1017
  %3853 = vmatmul.f32.gmra.mxu0 %v3835
  %v3854 = vpop.f32.mrf.mxu0
  %v3855 = vadd.f32 %v1026, %v3854
  %3856 = vdwg.mxu0
  %v3858 = vrot.slane %v3791, 2
  %3859 = vrot.lane.b32.xlu0 %v3858, 38
  %v3860 = vpop.permute.xlu0 %3859
  %v3862 = vadd.f32 %v1090, %v3860
  %v3863 = vxor.u32 %v3862, 2147483648
  %v3864 = vmul.f32 %v3863, 1.442695
  %v3865 = vpow.pop %v3864
  %v3866 = vadd.f32 %v3865, 1.0
  %v3867 = vrcp.pop %v3866
  %v3868 = vmul.f32 %v3866, %v3867
  %v3869 = vsub.f32 1.0, %v3868
  %v3870 = vmul.f32 %v3867, %v3869
  %v3871 = vadd.f32 %v3867, %v3870
  %vm3872 = vweird.f32 %v3866
  %vm3873 = vweird.f32 %v3867
  %vm3874 = vmor %vm3872, %vm3873
  %v3875 = vsel %vm3874, %v3867, %v3871
  %v3876 = vand.u32 2147483647, %v3866
  %vm3877 = vcmp.eq.f32.partialorder %v3876, 8.507059e+37
  %v3878 = vand.u32 %v3866, 2147483648
  %v3879 = vor.u32 1.1754944e-38, %v3878
  %v3880 = vsel %vm3877, %v3879, %v3875
  %v3881 = vmul.f32 1.0, %v3880
  %v3883 = vrot.slane %v3792, 2
  %3884 = vrot.lane.b32.xlu0 %v3883, 38
  %v3885 = vpop.permute.xlu0 %3884
  %v3886 = vsel %vm1321, %v3860, %v3885
  %v3888 = vadd.f32 %v1090, %v3886
  %v3889 = vxor.u32 %v3888, 2147483648
  %v3890 = vmul.f32 %v3889, 1.442695
  %v3891 = vpow.pop %v3890
  %v3892 = vadd.f32 %v3891, 1.0
  %v3893 = vrcp.pop %v3892
  %v3894 = vmul.f32 %v3892, %v3893
  %v3895 = vsub.f32 1.0, %v3894
  %v3896 = vmul.f32 %v3893, %v3895
  %v3897 = vadd.f32 %v3893, %v3896
  %vm3898 = vweird.f32 %v3892
  %vm3899 = vweird.f32 %v3893
  %vm3900 = vmor %vm3898, %vm3899
  %v3901 = vsel %vm3900, %v3893, %v3897
  %v3902 = vand.u32 2147483647, %v3892
  %vm3903 = vcmp.eq.f32.partialorder %v3902, 8.507059e+37
  %v3904 = vand.u32 %v3892, 2147483648
  %v3905 = vor.u32 1.1754944e-38, %v3904
  %v3906 = vsel %vm3903, %v3905, %v3901
  %v3907 = vmul.f32 1.0, %v3906
  %3908 = vrot.lane.b32.xlu0 %v3883, 106
  %v3909 = vpop.permute.xlu0 %3908
  %v3911 = vmul.f32 %v3881, %v3909
  %3913 = vrot.lane.b32.xlu0 %v3911, 60
  %v3914 = vpop.permute.xlu0 %3913
  %v3916 = vadd.f32 %v1090, %v3914
  %v3917 = vtanh.pop %v3916
  %v3918 = vsub.f32 1.0, %v3907
  %3920 = vrot.lane.b32.xlu0 %v3917, 98
  %v3921 = vpop.permute.xlu0 %3920
  %v3923 = vmul.f32 %v3918, %v3921
  %v3924 = vrot.slane %v3743, 6
  %v3926 = vmul.f32 %v3907, %v3924
  %v3927 = vadd.f32 %v3923, %v3926
  %v3929 = vrot.slane %v3927, 6
  %3930 = vrot.lane.b32.xlu0 %v3929, 98
  %v3931 = vpop.permute.xlu0 %3930
  %v3932 = vsel %vm40, %v3931, 0
  %3934 = vmatpush.msra.mxu0 0.0
  %3935 = vmatpush.msra.mxu0 0.0
  %3936 = vmatpush.msra.mxu0 0.0
  %3937 = vmatpush.msra.mxu0 0.0
  %3938 = vmatpush.msra.mxu0 0.0
  %3939 = vmatpush.msra.mxu0 0.0
  %3940 = vmatpush.msra.mxu0 0.0
  %3941 = vmatpush.msra.mxu0 0.0
  %3942 = vmatpush.msra.mxu0 0.0
  %3943 = vmatpush.msra.mxu0 0.0
  %3944 = vmatpush.msra.mxu0 0.0
  %3945 = vmatpush.msra.mxu0 0.0
  %3946 = vmatpush.msra.mxu0 %v1176
  %3947 = vmatpush.msra.mxu0 %v1013
  %3948 = vmatpush.msra.mxu0 %v1011
  %3949 = vmatpush.msra.mxu0 %v1009
  %3950 = vmatmul.f32.gmra.mxu0 %v3932
  %v3951 = vpop.f32.mrf.mxu0
  %v3952 = vadd.f32 0.0, %v3951
  %3953 = vdwg.mxu0
  %3954 = vmatpush.msra.mxu0 0.0
  %3955 = vmatpush.msra.mxu0 0.0
  %3956 = vmatpush.msra.mxu0 0.0
  %3957 = vmatpush.msra.mxu0 0.0
  %3958 = vmatpush.msra.mxu0 0.0
  %3959 = vmatpush.msra.mxu0 0.0
  %3960 = vmatpush.msra.mxu0 0.0
  %3961 = vmatpush.msra.mxu0 0.0
  %3962 = vmatpush.msra.mxu0 0.0
  %3963 = vmatpush.msra.mxu0 0.0
  %3964 = vmatpush.msra.mxu0 0.0
  %3965 = vmatpush.msra.mxu0 0.0
  %3966 = vmatpush.msra.mxu0 %v1179
  %3967 = vmatpush.msra.mxu0 %v1014
  %3968 = vmatpush.msra.mxu0 %v1012
  %3969 = vmatpush.msra.mxu0 %v1010
  %3970 = vmatmul.f32.gmra.mxu0 %v3932
  %v3971 = vpop.f32.mrf.mxu0
  %v3972 = vadd.f32 0.0, %v3971
  %3973 = vdwg.mxu0
  %v3974 = vadd.f32 %v3952, %v1025
  %v3975 = vadd.f32 %v3952, %v1224
  %v3976 = vadd.f32 %v3972, %v1224
  %v3977 = vadd.f32 %v3974, %v3855
  %v3978 = vxor.u32 %v3977, 2147483648
  %v3979 = vmul.f32 %v3978, 1.442695
  %v3980 = vpow.pop %v3979
  %v3981 = vadd.f32 %v3980, 1.0
  %v3982 = vrcp.pop %v3981
  %v3983 = vmul.f32 %v3981, %v3982
  %v3984 = vsub.f32 1.0, %v3983
  %v3985 = vmul.f32 %v3982, %v3984
  %v3986 = vadd.f32 %v3982, %v3985
  %vm3987 = vweird.f32 %v3981
  %vm3988 = vweird.f32 %v3982
  %vm3989 = vmor %vm3987, %vm3988
  %v3990 = vsel %vm3989, %v3982, %v3986
  %v3991 = vand.u32 2147483647, %v3981
  %vm3992 = vcmp.eq.f32.partialorder %v3991, 8.507059e+37
  %v3993 = vand.u32 %v3981, 2147483648
  %v3994 = vor.u32 1.1754944e-38, %v3993
  %v3995 = vsel %vm3992, %v3994, %v3990
  %v3996 = vmul.f32 1.0, %v3995
  %3998 = vrot.lane.b32.xlu0 %v3855, 68
  %v3999 = vpop.permute.xlu0 %3998
  %v4001 = vmul.f32 %v3996, %v3999
  %4003 = vrot.lane.b32.xlu0 %v4001, 60
  %v4004 = vpop.permute.xlu0 %4003
  %v4006 = vadd.f32 %v3974, %v4004
  %v4007 = vtanh.pop %v4006
  %v4008 = vsub.f32 1.0, %v3996
  %4010 = vrot.lane.b32.xlu0 %v4007, 98
  %v4011 = vpop.permute.xlu0 %4010
  %v4013 = vmul.f32 %v4008, %v4011
  %v4014 = vmul.f32 %v3996, %v3831
  %v4015 = vadd.f32 %v4013, %v4014
  %4017 = vrot.lane.b32.xlu0 %v4015, 98
  %v4018 = vpop.permute.xlu0 %4017
  %v4019 = vsel %vm40, %v4018, 0
  %4021 = vmatpush.msra.mxu0 0.0
  %4022 = vmatpush.msra.mxu0 0.0
  %4023 = vmatpush.msra.mxu0 0.0
  %4024 = vmatpush.msra.mxu0 0.0
  %4025 = vmatpush.msra.mxu0 0.0
  %4026 = vmatpush.msra.mxu0 0.0
  %4027 = vmatpush.msra.mxu0 0.0
  %4028 = vmatpush.msra.mxu0 0.0
  %4029 = vmatpush.msra.mxu0 0.0
  %4030 = vmatpush.msra.mxu0 0.0
  %4031 = vmatpush.msra.mxu0 0.0
  %4032 = vmatpush.msra.mxu0 0.0
  %4033 = vmatpush.msra.mxu0 %v1109
  %4034 = vmatpush.msra.mxu0 %v1019
  %4035 = vmatpush.msra.mxu0 %v1018
  %4036 = vmatpush.msra.mxu0 %v1017
  %4037 = vmatmul.f32.gmra.mxu0 %v4019
  %v4038 = vpop.f32.mrf.mxu0
  %v4039 = vadd.f32 %v1026, %v4038
  %4040 = vdwg.mxu0
  %4042 = vrot.lane.b32.xlu0 %v3975, 38
  %v4043 = vpop.permute.xlu0 %4042
  %v4045 = vadd.f32 %v1093, %v4043
  %v4046 = vxor.u32 %v4045, 2147483648
  %v4047 = vmul.f32 %v4046, 1.442695
  %v4048 = vpow.pop %v4047
  %v4049 = vadd.f32 %v4048, 1.0
  %v4050 = vrcp.pop %v4049
  %v4051 = vmul.f32 %v4049, %v4050
  %v4052 = vsub.f32 1.0, %v4051
  %v4053 = vmul.f32 %v4050, %v4052
  %v4054 = vadd.f32 %v4050, %v4053
  %vm4055 = vweird.f32 %v4049
  %vm4056 = vweird.f32 %v4050
  %vm4057 = vmor %vm4055, %vm4056
  %v4058 = vsel %vm4057, %v4050, %v4054
  %v4059 = vand.u32 2147483647, %v4049
  %vm4060 = vcmp.eq.f32.partialorder %v4059, 8.507059e+37
  %v4061 = vand.u32 %v4049, 2147483648
  %v4062 = vor.u32 1.1754944e-38, %v4061
  %v4063 = vsel %vm4060, %v4062, %v4058
  %v4064 = vmul.f32 1.0, %v4063
  %4066 = vrot.lane.b32.xlu0 %v3976, 38
  %v4067 = vpop.permute.xlu0 %4066
  %v4068 = vsel %vm1321, %v4043, %v4067
  %v4070 = vadd.f32 %v1093, %v4068
  %v4071 = vxor.u32 %v4070, 2147483648
  %v4072 = vmul.f32 %v4071, 1.442695
  %v4073 = vpow.pop %v4072
  %v4074 = vadd.f32 %v4073, 1.0
  %v4075 = vrcp.pop %v4074
  %v4076 = vmul.f32 %v4074, %v4075
  %v4077 = vsub.f32 1.0, %v4076
  %v4078 = vmul.f32 %v4075, %v4077
  %v4079 = vadd.f32 %v4075, %v4078
  %vm4080 = vweird.f32 %v4074
  %vm4081 = vweird.f32 %v4075
  %vm4082 = vmor %vm4080, %vm4081
  %v4083 = vsel %vm4082, %v4075, %v4079
  %v4084 = vand.u32 2147483647, %v4074
  %vm4085 = vcmp.eq.f32.partialorder %v4084, 8.507059e+37
  %v4086 = vand.u32 %v4074, 2147483648
  %v4087 = vor.u32 1.1754944e-38, %v4086
  %v4088 = vsel %vm4085, %v4087, %v4083
  %v4089 = vmul.f32 1.0, %v4088
  %4090 = vrot.lane.b32.xlu0 %v3976, 106
  %v4091 = vpop.permute.xlu0 %4090
  %v4093 = vmul.f32 %v4064, %v4091
  %4095 = vrot.lane.b32.xlu0 %v4093, 60
  %v4096 = vpop.permute.xlu0 %4095
  %v4098 = vadd.f32 %v1093, %v4096
  %v4099 = vtanh.pop %v4098
  %v4100 = vsub.f32 1.0, %v4089
  %4102 = vrot.lane.b32.xlu0 %v4099, 98
  %v4103 = vpop.permute.xlu0 %4102
  %v4105 = vmul.f32 %v4100, %v4103
  %v4107 = vmul.f32 %v4089, %v3929
  %v4108 = vadd.f32 %v4105, %v4107
  %4110 = vrot.lane.b32.xlu0 %v4108, 98
  %v4111 = vpop.permute.xlu0 %4110
  %v4112 = vsel %vm40, %v4111, 0
  %4114 = vmatpush.msra.mxu0 0.0
  %4115 = vmatpush.msra.mxu0 0.0
  %4116 = vmatpush.msra.mxu0 0.0
  %4117 = vmatpush.msra.mxu0 0.0
  %4118 = vmatpush.msra.mxu0 0.0
  %4119 = vmatpush.msra.mxu0 0.0
  %4120 = vmatpush.msra.mxu0 0.0
  %4121 = vmatpush.msra.mxu0 0.0
  %4122 = vmatpush.msra.mxu0 0.0
  %4123 = vmatpush.msra.mxu0 0.0
  %4124 = vmatpush.msra.mxu0 0.0
  %4125 = vmatpush.msra.mxu0 0.0
  %4126 = vmatpush.msra.mxu0 %v1176
  %4127 = vmatpush.msra.mxu0 %v1013
  %4128 = vmatpush.msra.mxu0 %v1011
  %4129 = vmatpush.msra.mxu0 %v1009
  %4130 = vmatmul.f32.gmra.mxu0 %v4112
  %v4131 = vpop.f32.mrf.mxu0
  %v4132 = vadd.f32 0.0, %v4131
  %4133 = vdwg.mxu0
  %4134 = vmatpush.msra.mxu0 0.0
  %4135 = vmatpush.msra.mxu0 0.0
  %4136 = vmatpush.msra.mxu0 0.0
  %4137 = vmatpush.msra.mxu0 0.0
  %4138 = vmatpush.msra.mxu0 0.0
  %4139 = vmatpush.msra.mxu0 0.0
  %4140 = vmatpush.msra.mxu0 0.0
  %4141 = vmatpush.msra.mxu0 0.0
  %4142 = vmatpush.msra.mxu0 0.0
  %4143 = vmatpush.msra.mxu0 0.0
  %4144 = vmatpush.msra.mxu0 0.0
  %4145 = vmatpush.msra.mxu0 0.0
  %4146 = vmatpush.msra.mxu0 %v1179
  %4147 = vmatpush.msra.mxu0 %v1014
  %4148 = vmatpush.msra.mxu0 %v1012
  %4149 = vmatpush.msra.mxu0 %v1010
  %4150 = vmatmul.f32.gmra.mxu0 %v4112
  %v4151 = vpop.f32.mrf.mxu0
  %v4152 = vadd.f32 0.0, %v4151
  %4153 = vdwg.mxu0
  %v4154 = vadd.f32 %v4132, %v1025
  %v4155 = vadd.f32 %v4132, %v1224
  %v4156 = vadd.f32 %v4152, %v1224
  %v4157 = vadd.f32 %v4154, %v4039
  %v4158 = vxor.u32 %v4157, 2147483648
  %v4159 = vmul.f32 %v4158, 1.442695
  %v4160 = vpow.pop %v4159
  %v4161 = vadd.f32 %v4160, 1.0
  %v4162 = vrcp.pop %v4161
  %v4163 = vmul.f32 %v4161, %v4162
  %v4164 = vsub.f32 1.0, %v4163
  %v4165 = vmul.f32 %v4162, %v4164
  %v4166 = vadd.f32 %v4162, %v4165
  %vm4167 = vweird.f32 %v4161
  %vm4168 = vweird.f32 %v4162
  %vm4169 = vmor %vm4167, %vm4168
  %v4170 = vsel %vm4169, %v4162, %v4166
  %v4171 = vand.u32 2147483647, %v4161
  %vm4172 = vcmp.eq.f32.partialorder %v4171, 8.507059e+37
  %v4173 = vand.u32 %v4161, 2147483648
  %v4174 = vor.u32 1.1754944e-38, %v4173
  %v4175 = vsel %vm4172, %v4174, %v4170
  %v4176 = vmul.f32 1.0, %v4175
  %4178 = vrot.lane.b32.xlu0 %v4039, 68
  %v4179 = vpop.permute.xlu0 %4178
  %v4181 = vmul.f32 %v4176, %v4179
  %4183 = vrot.lane.b32.xlu0 %v4181, 60
  %v4184 = vpop.permute.xlu0 %4183
  %v4186 = vadd.f32 %v4154, %v4184
  %v4187 = vtanh.pop %v4186
  %v4188 = vsub.f32 1.0, %v4176
  %4190 = vrot.lane.b32.xlu0 %v4187, 98
  %v4191 = vpop.permute.xlu0 %4190
  %v4193 = vmul.f32 %v4188, %v4191
  %v4194 = vmul.f32 %v4176, %v4015
  %v4195 = vadd.f32 %v4193, %v4194
  %4197 = vrot.lane.b32.xlu0 %v4195, 98
  %v4198 = vpop.permute.xlu0 %4197
  %v4199 = vsel %vm40, %v4198, 0
  %4201 = vmatpush.msra.mxu0 0.0
  %4202 = vmatpush.msra.mxu0 0.0
  %4203 = vmatpush.msra.mxu0 0.0
  %4204 = vmatpush.msra.mxu0 0.0
  %4205 = vmatpush.msra.mxu0 0.0
  %4206 = vmatpush.msra.mxu0 0.0
  %4207 = vmatpush.msra.mxu0 0.0
  %4208 = vmatpush.msra.mxu0 0.0
  %4209 = vmatpush.msra.mxu0 0.0
  %4210 = vmatpush.msra.mxu0 0.0
  %4211 = vmatpush.msra.mxu0 0.0
  %4212 = vmatpush.msra.mxu0 0.0
  %4213 = vmatpush.msra.mxu0 %v1109
  %4214 = vmatpush.msra.mxu0 %v1019
  %4215 = vmatpush.msra.mxu0 %v1018
  %4216 = vmatpush.msra.mxu0 %v1017
  %4217 = vmatmul.f32.gmra.mxu0 %v4199
  %v4218 = vpop.f32.mrf.mxu0
  %v4219 = vadd.f32 %v1026, %v4218
  %4220 = vdwg.mxu0
  %v4222 = vrot.slane %v4155, 6
  %4223 = vrot.lane.b32.xlu0 %v4222, 38
  %v4224 = vpop.permute.xlu0 %4223
  %v4226 = vadd.f32 %v1093, %v4224
  %v4227 = vxor.u32 %v4226, 2147483648
  %v4228 = vmul.f32 %v4227, 1.442695
  %v4229 = vpow.pop %v4228
  %v4230 = vadd.f32 %v4229, 1.0
  %v4231 = vrcp.pop %v4230
  %v4232 = vmul.f32 %v4230, %v4231
  %v4233 = vsub.f32 1.0, %v4232
  %v4234 = vmul.f32 %v4231, %v4233
  %v4235 = vadd.f32 %v4231, %v4234
  %vm4236 = vweird.f32 %v4230
  %vm4237 = vweird.f32 %v4231
  %vm4238 = vmor %vm4236, %vm4237
  %v4239 = vsel %vm4238, %v4231, %v4235
  %v4240 = vand.u32 2147483647, %v4230
  %vm4241 = vcmp.eq.f32.partialorder %v4240, 8.507059e+37
  %v4242 = vand.u32 %v4230, 2147483648
  %v4243 = vor.u32 1.1754944e-38, %v4242
  %v4244 = vsel %vm4241, %v4243, %v4239
  %v4245 = vmul.f32 1.0, %v4244
  %v4247 = vrot.slane %v4156, 6
  %4248 = vrot.lane.b32.xlu0 %v4247, 38
  %v4249 = vpop.permute.xlu0 %4248
  %v4250 = vsel %vm1321, %v4224, %v4249
  %v4252 = vadd.f32 %v1093, %v4250
  %v4253 = vxor.u32 %v4252, 2147483648
  %v4254 = vmul.f32 %v4253, 1.442695
  %v4255 = vpow.pop %v4254
  %v4256 = vadd.f32 %v4255, 1.0
  %v4257 = vrcp.pop %v4256
  %v4258 = vmul.f32 %v4256, %v4257
  %v4259 = vsub.f32 1.0, %v4258
  %v4260 = vmul.f32 %v4257, %v4259
  %v4261 = vadd.f32 %v4257, %v4260
  %vm4262 = vweird.f32 %v4256
  %vm4263 = vweird.f32 %v4257
  %vm4264 = vmor %vm4262, %vm4263
  %v4265 = vsel %vm4264, %v4257, %v4261
  %v4266 = vand.u32 2147483647, %v4256
  %vm4267 = vcmp.eq.f32.partialorder %v4266, 8.507059e+37
  %v4268 = vand.u32 %v4256, 2147483648
  %v4269 = vor.u32 1.1754944e-38, %v4268
  %v4270 = vsel %vm4267, %v4269, %v4265
  %v4271 = vmul.f32 1.0, %v4270
  %4272 = vrot.lane.b32.xlu0 %v4247, 106
  %v4273 = vpop.permute.xlu0 %4272
  %v4275 = vmul.f32 %v4245, %v4273
  %4277 = vrot.lane.b32.xlu0 %v4275, 60
  %v4278 = vpop.permute.xlu0 %4277
  %v4280 = vadd.f32 %v1093, %v4278
  %v4281 = vtanh.pop %v4280
  %v4282 = vsub.f32 1.0, %v4271
  %4284 = vrot.lane.b32.xlu0 %v4281, 98
  %v4285 = vpop.permute.xlu0 %4284
  %v4287 = vmul.f32 %v4282, %v4285
  %v4288 = vrot.slane %v4108, 6
  %v4290 = vmul.f32 %v4271, %v4288
  %v4291 = vadd.f32 %v4287, %v4290
  %v4293 = vrot.slane %v4291, 2
  %4294 = vrot.lane.b32.xlu0 %v4293, 98
  %v4295 = vpop.permute.xlu0 %4294
  %v4296 = vsel %vm40, %v4295, 0
  %4298 = vmatpush.msra.mxu0 0.0
  %4299 = vmatpush.msra.mxu0 0.0
  %4300 = vmatpush.msra.mxu0 0.0
  %4301 = vmatpush.msra.mxu0 0.0
  %4302 = vmatpush.msra.mxu0 0.0
  %4303 = vmatpush.msra.mxu0 0.0
  %4304 = vmatpush.msra.mxu0 0.0
  %4305 = vmatpush.msra.mxu0 0.0
  %4306 = vmatpush.msra.mxu0 0.0
  %4307 = vmatpush.msra.mxu0 0.0
  %4308 = vmatpush.msra.mxu0 0.0
  %4309 = vmatpush.msra.mxu0 0.0
  %4310 = vmatpush.msra.mxu0 %v1176
  %4311 = vmatpush.msra.mxu0 %v1013
  %4312 = vmatpush.msra.mxu0 %v1011
  %4313 = vmatpush.msra.mxu0 %v1009
  %4314 = vmatmul.f32.gmra.mxu0 %v4296
  %v4315 = vpop.f32.mrf.mxu0
  %v4316 = vadd.f32 0.0, %v4315
  %4317 = vdwg.mxu0
  %4318 = vmatpush.msra.mxu0 0.0
  %4319 = vmatpush.msra.mxu0 0.0
  %4320 = vmatpush.msra.mxu0 0.0
  %4321 = vmatpush.msra.mxu0 0.0
  %4322 = vmatpush.msra.mxu0 0.0
  %4323 = vmatpush.msra.mxu0 0.0
  %4324 = vmatpush.msra.mxu0 0.0
  %4325 = vmatpush.msra.mxu0 0.0
  %4326 = vmatpush.msra.mxu0 0.0
  %4327 = vmatpush.msra.mxu0 0.0
  %4328 = vmatpush.msra.mxu0 0.0
  %4329 = vmatpush.msra.mxu0 0.0
  %4330 = vmatpush.msra.mxu0 %v1179
  %4331 = vmatpush.msra.mxu0 %v1014
  %4332 = vmatpush.msra.mxu0 %v1012
  %4333 = vmatpush.msra.mxu0 %v1010
  %4334 = vmatmul.f32.gmra.mxu0 %v4296
  %v4335 = vpop.f32.mrf.mxu0
  %v4336 = vadd.f32 0.0, %v4335
  %4337 = vdwg.mxu0
  %v4338 = vadd.f32 %v4316, %v1025
  %v4339 = vadd.f32 %v4316, %v1224
  %v4340 = vadd.f32 %v4336, %v1224
  %v4341 = vadd.f32 %v4338, %v4219
  %v4342 = vxor.u32 %v4341, 2147483648
  %v4343 = vmul.f32 %v4342, 1.442695
  %v4344 = vpow.pop %v4343
  %v4345 = vadd.f32 %v4344, 1.0
  %v4346 = vrcp.pop %v4345
  %v4347 = vmul.f32 %v4345, %v4346
  %v4348 = vsub.f32 1.0, %v4347
  %v4349 = vmul.f32 %v4346, %v4348
  %v4350 = vadd.f32 %v4346, %v4349
  %vm4351 = vweird.f32 %v4345
  %vm4352 = vweird.f32 %v4346
  %vm4353 = vmor %vm4351, %vm4352
  %v4354 = vsel %vm4353, %v4346, %v4350
  %v4355 = vand.u32 2147483647, %v4345
  %vm4356 = vcmp.eq.f32.partialorder %v4355, 8.507059e+37
  %v4357 = vand.u32 %v4345, 2147483648
  %v4358 = vor.u32 1.1754944e-38, %v4357
  %v4359 = vsel %vm4356, %v4358, %v4354
  %v4360 = vmul.f32 1.0, %v4359
  %4362 = vrot.lane.b32.xlu0 %v4219, 68
  %v4363 = vpop.permute.xlu0 %4362
  %v4365 = vmul.f32 %v4360, %v4363
  %4367 = vrot.lane.b32.xlu0 %v4365, 60
  %v4368 = vpop.permute.xlu0 %4367
  %v4370 = vadd.f32 %v4338, %v4368
  %v4371 = vtanh.pop %v4370
  %v4372 = vsub.f32 1.0, %v4360
  %4374 = vrot.lane.b32.xlu0 %v4371, 98
  %v4375 = vpop.permute.xlu0 %4374
  %v4377 = vmul.f32 %v4372, %v4375
  %v4378 = vmul.f32 %v4360, %v4195
  %v4379 = vadd.f32 %v4377, %v4378
  %4381 = vrot.lane.b32.xlu0 %v4379, 98
  %v4382 = vpop.permute.xlu0 %4381
  %v4383 = vsel %vm40, %v4382, 0
  %4385 = vmatpush.msra.mxu0 0.0
  %4386 = vmatpush.msra.mxu0 0.0
  %4387 = vmatpush.msra.mxu0 0.0
  %4388 = vmatpush.msra.mxu0 0.0
  %4389 = vmatpush.msra.mxu0 0.0
  %4390 = vmatpush.msra.mxu0 0.0
  %4391 = vmatpush.msra.mxu0 0.0
  %4392 = vmatpush.msra.mxu0 0.0
  %4393 = vmatpush.msra.mxu0 0.0
  %4394 = vmatpush.msra.mxu0 0.0
  %4395 = vmatpush.msra.mxu0 0.0
  %4396 = vmatpush.msra.mxu0 0.0
  %4397 = vmatpush.msra.mxu0 %v1109
  %4398 = vmatpush.msra.mxu0 %v1019
  %4399 = vmatpush.msra.mxu0 %v1018
  %4400 = vmatpush.msra.mxu0 %v1017
  %4401 = vmatmul.f32.gmra.mxu0 %v4383
  %v4402 = vpop.f32.mrf.mxu0
  %v4403 = vadd.f32 %v1026, %v4402
  %4404 = vdwg.mxu0
  %v4406 = vrot.slane %v4339, 4
  %4407 = vrot.lane.b32.xlu0 %v4406, 38
  %v4408 = vpop.permute.xlu0 %4407
  %v4410 = vadd.f32 %v1093, %v4408
  %v4411 = vxor.u32 %v4410, 2147483648
  %v4412 = vmul.f32 %v4411, 1.442695
  %v4413 = vpow.pop %v4412
  %v4414 = vadd.f32 %v4413, 1.0
  %v4415 = vrcp.pop %v4414
  %v4416 = vmul.f32 %v4414, %v4415
  %v4417 = vsub.f32 1.0, %v4416
  %v4418 = vmul.f32 %v4415, %v4417
  %v4419 = vadd.f32 %v4415, %v4418
  %vm4420 = vweird.f32 %v4414
  %vm4421 = vweird.f32 %v4415
  %vm4422 = vmor %vm4420, %vm4421
  %v4423 = vsel %vm4422, %v4415, %v4419
  %v4424 = vand.u32 2147483647, %v4414
  %vm4425 = vcmp.eq.f32.partialorder %v4424, 8.507059e+37
  %v4426 = vand.u32 %v4414, 2147483648
  %v4427 = vor.u32 1.1754944e-38, %v4426
  %v4428 = vsel %vm4425, %v4427, %v4423
  %v4429 = vmul.f32 1.0, %v4428
  %v4431 = vrot.slane %v4340, 4
  %4432 = vrot.lane.b32.xlu0 %v4431, 38
  %v4433 = vpop.permute.xlu0 %4432
  %v4434 = vsel %vm1321, %v4408, %v4433
  %v4436 = vadd.f32 %v1093, %v4434
  %v4437 = vxor.u32 %v4436, 2147483648
  %v4438 = vmul.f32 %v4437, 1.442695
  %v4439 = vpow.pop %v4438
  %v4440 = vadd.f32 %v4439, 1.0
  %v4441 = vrcp.pop %v4440
  %v4442 = vmul.f32 %v4440, %v4441
  %v4443 = vsub.f32 1.0, %v4442
  %v4444 = vmul.f32 %v4441, %v4443
  %v4445 = vadd.f32 %v4441, %v4444
  %vm4446 = vweird.f32 %v4440
  %vm4447 = vweird.f32 %v4441
  %vm4448 = vmor %vm4446, %vm4447
  %v4449 = vsel %vm4448, %v4441, %v4445
  %v4450 = vand.u32 2147483647, %v4440
  %vm4451 = vcmp.eq.f32.partialorder %v4450, 8.507059e+37
  %v4452 = vand.u32 %v4440, 2147483648
  %v4453 = vor.u32 1.1754944e-38, %v4452
  %v4454 = vsel %vm4451, %v4453, %v4449
  %v4455 = vmul.f32 1.0, %v4454
  %4456 = vrot.lane.b32.xlu0 %v4431, 106
  %v4457 = vpop.permute.xlu0 %4456
  %v4459 = vmul.f32 %v4429, %v4457
  %4461 = vrot.lane.b32.xlu0 %v4459, 60
  %v4462 = vpop.permute.xlu0 %4461
  %v4464 = vadd.f32 %v1093, %v4462
  %v4465 = vtanh.pop %v4464
  %v4466 = vsub.f32 1.0, %v4455
  %4468 = vrot.lane.b32.xlu0 %v4465, 98
  %v4469 = vpop.permute.xlu0 %4468
  %v4471 = vmul.f32 %v4466, %v4469
  %v4472 = vrot.slane %v4291, 6
  %v4474 = vmul.f32 %v4455, %v4472
  %v4475 = vadd.f32 %v4471, %v4474
  %v4477 = vrot.slane %v4475, 4
  %4478 = vrot.lane.b32.xlu0 %v4477, 98
  %v4479 = vpop.permute.xlu0 %4478
  %v4480 = vsel %vm40, %v4479, 0
  %4482 = vmatpush.msra.mxu0 0.0
  %4483 = vmatpush.msra.mxu0 0.0
  %4484 = vmatpush.msra.mxu0 0.0
  %4485 = vmatpush.msra.mxu0 0.0
  %4486 = vmatpush.msra.mxu0 0.0
  %4487 = vmatpush.msra.mxu0 0.0
  %4488 = vmatpush.msra.mxu0 0.0
  %4489 = vmatpush.msra.mxu0 0.0
  %4490 = vmatpush.msra.mxu0 0.0
  %4491 = vmatpush.msra.mxu0 0.0
  %4492 = vmatpush.msra.mxu0 0.0
  %4493 = vmatpush.msra.mxu0 0.0
  %4494 = vmatpush.msra.mxu0 %v1176
  %4495 = vmatpush.msra.mxu0 %v1013
  %4496 = vmatpush.msra.mxu0 %v1011
  %4497 = vmatpush.msra.mxu0 %v1009
  %4498 = vmatmul.f32.gmra.mxu0 %v4480
  %v4499 = vpop.f32.mrf.mxu0
  %v4500 = vadd.f32 0.0, %v4499
  %4501 = vdwg.mxu0
  %4502 = vmatpush.msra.mxu0 0.0
  %4503 = vmatpush.msra.mxu0 0.0
  %4504 = vmatpush.msra.mxu0 0.0
  %4505 = vmatpush.msra.mxu0 0.0
  %4506 = vmatpush.msra.mxu0 0.0
  %4507 = vmatpush.msra.mxu0 0.0
  %4508 = vmatpush.msra.mxu0 0.0
  %4509 = vmatpush.msra.mxu0 0.0
  %4510 = vmatpush.msra.mxu0 0.0
  %4511 = vmatpush.msra.mxu0 0.0
  %4512 = vmatpush.msra.mxu0 0.0
  %4513 = vmatpush.msra.mxu0 0.0
  %4514 = vmatpush.msra.mxu0 %v1179
  %4515 = vmatpush.msra.mxu0 %v1014
  %4516 = vmatpush.msra.mxu0 %v1012
  %4517 = vmatpush.msra.mxu0 %v1010
  %4518 = vmatmul.f32.gmra.mxu0 %v4480
  %v4519 = vpop.f32.mrf.mxu0
  %v4520 = vadd.f32 0.0, %v4519
  %4521 = vdwg.mxu0
  %v4522 = vadd.f32 %v4500, %v1025
  %v4523 = vadd.f32 %v4500, %v1224
  %v4524 = vadd.f32 %v4520, %v1224
  %v4525 = vadd.f32 %v4522, %v4403
  %v4526 = vxor.u32 %v4525, 2147483648
  %v4527 = vmul.f32 %v4526, 1.442695
  %v4528 = vpow.pop %v4527
  %v4529 = vadd.f32 %v4528, 1.0
  %v4530 = vrcp.pop %v4529
  %v4531 = vmul.f32 %v4529, %v4530
  %v4532 = vsub.f32 1.0, %v4531
  %v4533 = vmul.f32 %v4530, %v4532
  %v4534 = vadd.f32 %v4530, %v4533
  %vm4535 = vweird.f32 %v4529
  %vm4536 = vweird.f32 %v4530
  %vm4537 = vmor %vm4535, %vm4536
  %v4538 = vsel %vm4537, %v4530, %v4534
  %v4539 = vand.u32 2147483647, %v4529
  %vm4540 = vcmp.eq.f32.partialorder %v4539, 8.507059e+37
  %v4541 = vand.u32 %v4529, 2147483648
  %v4542 = vor.u32 1.1754944e-38, %v4541
  %v4543 = vsel %vm4540, %v4542, %v4538
  %v4544 = vmul.f32 1.0, %v4543
  %4546 = vrot.lane.b32.xlu0 %v4403, 68
  %v4547 = vpop.permute.xlu0 %4546
  %v4549 = vmul.f32 %v4544, %v4547
  %4551 = vrot.lane.b32.xlu0 %v4549, 60
  %v4552 = vpop.permute.xlu0 %4551
  %v4554 = vadd.f32 %v4522, %v4552
  %v4555 = vtanh.pop %v4554
  %v4556 = vsub.f32 1.0, %v4544
  %4558 = vrot.lane.b32.xlu0 %v4555, 98
  %v4559 = vpop.permute.xlu0 %4558
  %v4561 = vmul.f32 %v4556, %v4559
  %v4562 = vmul.f32 %v4544, %v4379
  %v4563 = vadd.f32 %v4561, %v4562
  %4565 = vrot.lane.b32.xlu0 %v4563, 98
  %v4566 = vpop.permute.xlu0 %4565
  %v4567 = vsel %vm40, %v4566, 0
  %4569 = vmatpush.msra.mxu0 0.0
  %4570 = vmatpush.msra.mxu0 0.0
  %4571 = vmatpush.msra.mxu0 0.0
  %4572 = vmatpush.msra.mxu0 0.0
  %4573 = vmatpush.msra.mxu0 0.0
  %4574 = vmatpush.msra.mxu0 0.0
  %4575 = vmatpush.msra.mxu0 0.0
  %4576 = vmatpush.msra.mxu0 0.0
  %4577 = vmatpush.msra.mxu0 0.0
  %4578 = vmatpush.msra.mxu0 0.0
  %4579 = vmatpush.msra.mxu0 0.0
  %4580 = vmatpush.msra.mxu0 0.0
  %4581 = vmatpush.msra.mxu0 %v1109
  %4582 = vmatpush.msra.mxu0 %v1019
  %4583 = vmatpush.msra.mxu0 %v1018
  %4584 = vmatpush.msra.mxu0 %v1017
  %4585 = vmatmul.f32.gmra.mxu0 %v4567
  %v4586 = vpop.f32.mrf.mxu0
  %v4587 = vadd.f32 %v1026, %v4586
  %4588 = vdwg.mxu0
  %v4590 = vrot.slane %v4523, 2
  %4591 = vrot.lane.b32.xlu0 %v4590, 38
  %v4592 = vpop.permute.xlu0 %4591
  %v4594 = vadd.f32 %v1093, %v4592
  %v4595 = vxor.u32 %v4594, 2147483648
  %v4596 = vmul.f32 %v4595, 1.442695
  %v4597 = vpow.pop %v4596
  %v4598 = vadd.f32 %v4597, 1.0
  %v4599 = vrcp.pop %v4598
  %v4600 = vmul.f32 %v4598, %v4599
  %v4601 = vsub.f32 1.0, %v4600
  %v4602 = vmul.f32 %v4599, %v4601
  %v4603 = vadd.f32 %v4599, %v4602
  %vm4604 = vweird.f32 %v4598
  %vm4605 = vweird.f32 %v4599
  %vm4606 = vmor %vm4604, %vm4605
  %v4607 = vsel %vm4606, %v4599, %v4603
  %v4608 = vand.u32 2147483647, %v4598
  %vm4609 = vcmp.eq.f32.partialorder %v4608, 8.507059e+37
  %v4610 = vand.u32 %v4598, 2147483648
  %v4611 = vor.u32 1.1754944e-38, %v4610
  %v4612 = vsel %vm4609, %v4611, %v4607
  %v4613 = vmul.f32 1.0, %v4612
  %v4615 = vrot.slane %v4524, 2
  %4616 = vrot.lane.b32.xlu0 %v4615, 38
  %v4617 = vpop.permute.xlu0 %4616
  %v4618 = vsel %vm1321, %v4592, %v4617
  %v4620 = vadd.f32 %v1093, %v4618
  %v4621 = vxor.u32 %v4620, 2147483648
  %v4622 = vmul.f32 %v4621, 1.442695
  %v4623 = vpow.pop %v4622
  %v4624 = vadd.f32 %v4623, 1.0
  %v4625 = vrcp.pop %v4624
  %v4626 = vmul.f32 %v4624, %v4625
  %v4627 = vsub.f32 1.0, %v4626
  %v4628 = vmul.f32 %v4625, %v4627
  %v4629 = vadd.f32 %v4625, %v4628
  %vm4630 = vweird.f32 %v4624
  %vm4631 = vweird.f32 %v4625
  %vm4632 = vmor %vm4630, %vm4631
  %v4633 = vsel %vm4632, %v4625, %v4629
  %v4634 = vand.u32 2147483647, %v4624
  %vm4635 = vcmp.eq.f32.partialorder %v4634, 8.507059e+37
  %v4636 = vand.u32 %v4624, 2147483648
  %v4637 = vor.u32 1.1754944e-38, %v4636
  %v4638 = vsel %vm4635, %v4637, %v4633
  %v4639 = vmul.f32 1.0, %v4638
  %4640 = vrot.lane.b32.xlu0 %v4615, 106
  %v4641 = vpop.permute.xlu0 %4640
  %v4643 = vmul.f32 %v4613, %v4641
  %4645 = vrot.lane.b32.xlu0 %v4643, 60
  %v4646 = vpop.permute.xlu0 %4645
  %v4648 = vadd.f32 %v1093, %v4646
  %v4649 = vtanh.pop %v4648
  %v4650 = vsub.f32 1.0, %v4639
  %4652 = vrot.lane.b32.xlu0 %v4649, 98
  %v4653 = vpop.permute.xlu0 %4652
  %v4655 = vmul.f32 %v4650, %v4653
  %v4656 = vrot.slane %v4475, 6
  %v4658 = vmul.f32 %v4639, %v4656
  %v4659 = vadd.f32 %v4655, %v4658
  %v4661 = vrot.slane %v4659, 6
  %4662 = vrot.lane.b32.xlu0 %v4661, 98
  %v4663 = vpop.permute.xlu0 %4662
  %v4664 = vsel %vm40, %v4663, 0
  %4666 = vmatpush.msra.mxu0 0.0
  %4667 = vmatpush.msra.mxu0 0.0
  %4668 = vmatpush.msra.mxu0 0.0
  %4669 = vmatpush.msra.mxu0 0.0
  %4670 = vmatpush.msra.mxu0 0.0
  %4671 = vmatpush.msra.mxu0 0.0
  %4672 = vmatpush.msra.mxu0 0.0
  %4673 = vmatpush.msra.mxu0 0.0
  %4674 = vmatpush.msra.mxu0 0.0
  %4675 = vmatpush.msra.mxu0 0.0
  %4676 = vmatpush.msra.mxu0 0.0
  %4677 = vmatpush.msra.mxu0 0.0
  %4678 = vmatpush.msra.mxu0 %v1176
  %4679 = vmatpush.msra.mxu0 %v1013
  %4680 = vmatpush.msra.mxu0 %v1011
  %4681 = vmatpush.msra.mxu0 %v1009
  %4682 = vmatmul.f32.gmra.mxu0 %v4664
  %v4683 = vpop.f32.mrf.mxu0
  %v4684 = vadd.f32 0.0, %v4683
  %4685 = vdwg.mxu0
  %4686 = vmatpush.msra.mxu0 0.0
  %4687 = vmatpush.msra.mxu0 0.0
  %4688 = vmatpush.msra.mxu0 0.0
  %4689 = vmatpush.msra.mxu0 0.0
  %4690 = vmatpush.msra.mxu0 0.0
  %4691 = vmatpush.msra.mxu0 0.0
  %4692 = vmatpush.msra.mxu0 0.0
  %4693 = vmatpush.msra.mxu0 0.0
  %4694 = vmatpush.msra.mxu0 0.0
  %4695 = vmatpush.msra.mxu0 0.0
  %4696 = vmatpush.msra.mxu0 0.0
  %4697 = vmatpush.msra.mxu0 0.0
  %4698 = vmatpush.msra.mxu0 %v1179
  %4699 = vmatpush.msra.mxu0 %v1014
  %4700 = vmatpush.msra.mxu0 %v1012
  %4701 = vmatpush.msra.mxu0 %v1010
  %4702 = vmatmul.f32.gmra.mxu0 %v4664
  %v4703 = vpop.f32.mrf.mxu0
  %v4704 = vadd.f32 0.0, %v4703
  %4705 = vdwg.mxu0
  %v4706 = vadd.f32 %v4684, %v1025
  %v4707 = vadd.f32 %v4684, %v1224
  %v4708 = vadd.f32 %v4704, %v1224
  %v4709 = vadd.f32 %v4706, %v4587
  %v4710 = vxor.u32 %v4709, 2147483648
  %v4711 = vmul.f32 %v4710, 1.442695
  %v4712 = vpow.pop %v4711
  %v4713 = vadd.f32 %v4712, 1.0
  %v4714 = vrcp.pop %v4713
  %v4715 = vmul.f32 %v4713, %v4714
  %v4716 = vsub.f32 1.0, %v4715
  %v4717 = vmul.f32 %v4714, %v4716
  %v4718 = vadd.f32 %v4714, %v4717
  %vm4719 = vweird.f32 %v4713
  %vm4720 = vweird.f32 %v4714
  %vm4721 = vmor %vm4719, %vm4720
  %v4722 = vsel %vm4721, %v4714, %v4718
  %v4723 = vand.u32 2147483647, %v4713
  %vm4724 = vcmp.eq.f32.partialorder %v4723, 8.507059e+37
  %v4725 = vand.u32 %v4713, 2147483648
  %v4726 = vor.u32 1.1754944e-38, %v4725
  %v4727 = vsel %vm4724, %v4726, %v4722
  %v4728 = vmul.f32 1.0, %v4727
  %4730 = vrot.lane.b32.xlu0 %v4587, 68
  %v4731 = vpop.permute.xlu0 %4730
  %v4733 = vmul.f32 %v4728, %v4731
  %4735 = vrot.lane.b32.xlu0 %v4733, 60
  %v4736 = vpop.permute.xlu0 %4735
  %v4738 = vadd.f32 %v4706, %v4736
  %v4739 = vtanh.pop %v4738
  %v4740 = vsub.f32 1.0, %v4728
  %4742 = vrot.lane.b32.xlu0 %v4739, 98
  %v4743 = vpop.permute.xlu0 %4742
  %v4745 = vmul.f32 %v4740, %v4743
  %v4746 = vmul.f32 %v4728, %v4563
  %v4747 = vadd.f32 %v4745, %v4746
  %4749 = vrot.lane.b32.xlu0 %v4747, 98
  %v4750 = vpop.permute.xlu0 %4749
  %v4751 = vsel %vm40, %v4750, 0
  %4753 = vmatpush.msra.mxu0 0.0
  %4754 = vmatpush.msra.mxu0 0.0
  %4755 = vmatpush.msra.mxu0 0.0
  %4756 = vmatpush.msra.mxu0 0.0
  %4757 = vmatpush.msra.mxu0 0.0
  %4758 = vmatpush.msra.mxu0 0.0
  %4759 = vmatpush.msra.mxu0 0.0
  %4760 = vmatpush.msra.mxu0 0.0
  %4761 = vmatpush.msra.mxu0 0.0
  %4762 = vmatpush.msra.mxu0 0.0
  %4763 = vmatpush.msra.mxu0 0.0
  %4764 = vmatpush.msra.mxu0 0.0
  %4765 = vmatpush.msra.mxu0 %v1109
  %4766 = vmatpush.msra.mxu0 %v1019
  %4767 = vmatpush.msra.mxu0 %v1018
  %4768 = vmatpush.msra.mxu0 %v1017
  %4769 = vmatmul.f32.gmra.mxu0 %v4751
  %v4770 = vpop.f32.mrf.mxu0
  %v4771 = vadd.f32 %v1026, %v4770
  %4772 = vdwg.mxu0
  %4774 = vrot.lane.b32.xlu0 %v4707, 38
  %v4775 = vpop.permute.xlu0 %4774
  %v4777 = vadd.f32 %v1096, %v4775
  %v4778 = vxor.u32 %v4777, 2147483648
  %v4779 = vmul.f32 %v4778, 1.442695
  %v4780 = vpow.pop %v4779
  %v4781 = vadd.f32 %v4780, 1.0
  %v4782 = vrcp.pop %v4781
  %v4783 = vmul.f32 %v4781, %v4782
  %v4784 = vsub.f32 1.0, %v4783
  %v4785 = vmul.f32 %v4782, %v4784
  %v4786 = vadd.f32 %v4782, %v4785
  %vm4787 = vweird.f32 %v4781
  %vm4788 = vweird.f32 %v4782
  %vm4789 = vmor %vm4787, %vm4788
  %v4790 = vsel %vm4789, %v4782, %v4786
  %v4791 = vand.u32 2147483647, %v4781
  %vm4792 = vcmp.eq.f32.partialorder %v4791, 8.507059e+37
  %v4793 = vand.u32 %v4781, 2147483648
  %v4794 = vor.u32 1.1754944e-38, %v4793
  %v4795 = vsel %vm4792, %v4794, %v4790
  %v4796 = vmul.f32 1.0, %v4795
  %4798 = vrot.lane.b32.xlu0 %v4708, 38
  %v4799 = vpop.permute.xlu0 %4798
  %v4800 = vsel %vm1321, %v4775, %v4799
  %v4802 = vadd.f32 %v1096, %v4800
  %v4803 = vxor.u32 %v4802, 2147483648
  %v4804 = vmul.f32 %v4803, 1.442695
  %v4805 = vpow.pop %v4804
  %v4806 = vadd.f32 %v4805, 1.0
  %v4807 = vrcp.pop %v4806
  %v4808 = vmul.f32 %v4806, %v4807
  %v4809 = vsub.f32 1.0, %v4808
  %v4810 = vmul.f32 %v4807, %v4809
  %v4811 = vadd.f32 %v4807, %v4810
  %vm4812 = vweird.f32 %v4806
  %vm4813 = vweird.f32 %v4807
  %vm4814 = vmor %vm4812, %vm4813
  %v4815 = vsel %vm4814, %v4807, %v4811
  %v4816 = vand.u32 2147483647, %v4806
  %vm4817 = vcmp.eq.f32.partialorder %v4816, 8.507059e+37
  %v4818 = vand.u32 %v4806, 2147483648
  %v4819 = vor.u32 1.1754944e-38, %v4818
  %v4820 = vsel %vm4817, %v4819, %v4815
  %v4821 = vmul.f32 1.0, %v4820
  %4822 = vrot.lane.b32.xlu0 %v4708, 106
  %v4823 = vpop.permute.xlu0 %4822
  %v4825 = vmul.f32 %v4796, %v4823
  %4827 = vrot.lane.b32.xlu0 %v4825, 60
  %v4828 = vpop.permute.xlu0 %4827
  %v4830 = vadd.f32 %v1096, %v4828
  %v4831 = vtanh.pop %v4830
  %v4832 = vsub.f32 1.0, %v4821
  %4834 = vrot.lane.b32.xlu0 %v4831, 98
  %v4835 = vpop.permute.xlu0 %4834
  %v4837 = vmul.f32 %v4832, %v4835
  %v4839 = vmul.f32 %v4821, %v4661
  %v4840 = vadd.f32 %v4837, %v4839
  %4842 = vrot.lane.b32.xlu0 %v4840, 98
  %v4843 = vpop.permute.xlu0 %4842
  %v4844 = vsel %vm40, %v4843, 0
  %4846 = vmatpush.msra.mxu0 0.0
  %4847 = vmatpush.msra.mxu0 0.0
  %4848 = vmatpush.msra.mxu0 0.0
  %4849 = vmatpush.msra.mxu0 0.0
  %4850 = vmatpush.msra.mxu0 0.0
  %4851 = vmatpush.msra.mxu0 0.0
  %4852 = vmatpush.msra.mxu0 0.0
  %4853 = vmatpush.msra.mxu0 0.0
  %4854 = vmatpush.msra.mxu0 0.0
  %4855 = vmatpush.msra.mxu0 0.0
  %4856 = vmatpush.msra.mxu0 0.0
  %4857 = vmatpush.msra.mxu0 0.0
  %4858 = vmatpush.msra.mxu0 %v1176
  %4859 = vmatpush.msra.mxu0 %v1013
  %4860 = vmatpush.msra.mxu0 %v1011
  %4861 = vmatpush.msra.mxu0 %v1009
  %4862 = vmatmul.f32.gmra.mxu0 %v4844
  %v4863 = vpop.f32.mrf.mxu0
  %v4864 = vadd.f32 0.0, %v4863
  %4865 = vdwg.mxu0
  %4866 = vmatpush.msra.mxu0 0.0
  %4867 = vmatpush.msra.mxu0 0.0
  %4868 = vmatpush.msra.mxu0 0.0
  %4869 = vmatpush.msra.mxu0 0.0
  %4870 = vmatpush.msra.mxu0 0.0
  %4871 = vmatpush.msra.mxu0 0.0
  %4872 = vmatpush.msra.mxu0 0.0
  %4873 = vmatpush.msra.mxu0 0.0
  %4874 = vmatpush.msra.mxu0 0.0
  %4875 = vmatpush.msra.mxu0 0.0
  %4876 = vmatpush.msra.mxu0 0.0
  %4877 = vmatpush.msra.mxu0 0.0
  %4878 = vmatpush.msra.mxu0 %v1179
  %4879 = vmatpush.msra.mxu0 %v1014
  %4880 = vmatpush.msra.mxu0 %v1012
  %4881 = vmatpush.msra.mxu0 %v1010
  %4882 = vmatmul.f32.gmra.mxu0 %v4844
  %v4883 = vpop.f32.mrf.mxu0
  %v4884 = vadd.f32 0.0, %v4883
  %4885 = vdwg.mxu0
  %v4886 = vadd.f32 %v4864, %v1025
  %v4887 = vadd.f32 %v4864, %v1224
  %v4888 = vadd.f32 %v4884, %v1224
  %v4889 = vadd.f32 %v4886, %v4771
  %v4890 = vxor.u32 %v4889, 2147483648
  %v4891 = vmul.f32 %v4890, 1.442695
  %v4892 = vpow.pop %v4891
  %v4893 = vadd.f32 %v4892, 1.0
  %v4894 = vrcp.pop %v4893
  %v4895 = vmul.f32 %v4893, %v4894
  %v4896 = vsub.f32 1.0, %v4895
  %v4897 = vmul.f32 %v4894, %v4896
  %v4898 = vadd.f32 %v4894, %v4897
  %vm4899 = vweird.f32 %v4893
  %vm4900 = vweird.f32 %v4894
  %vm4901 = vmor %vm4899, %vm4900
  %v4902 = vsel %vm4901, %v4894, %v4898
  %v4903 = vand.u32 2147483647, %v4893
  %vm4904 = vcmp.eq.f32.partialorder %v4903, 8.507059e+37
  %v4905 = vand.u32 %v4893, 2147483648
  %v4906 = vor.u32 1.1754944e-38, %v4905
  %v4907 = vsel %vm4904, %v4906, %v4902
  %v4908 = vmul.f32 1.0, %v4907
  %4910 = vrot.lane.b32.xlu0 %v4771, 68
  %v4911 = vpop.permute.xlu0 %4910
  %v4913 = vmul.f32 %v4908, %v4911
  %4915 = vrot.lane.b32.xlu0 %v4913, 60
  %v4916 = vpop.permute.xlu0 %4915
  %v4918 = vadd.f32 %v4886, %v4916
  %v4919 = vtanh.pop %v4918
  %v4920 = vsub.f32 1.0, %v4908
  %4922 = vrot.lane.b32.xlu0 %v4919, 98
  %v4923 = vpop.permute.xlu0 %4922
  %v4925 = vmul.f32 %v4920, %v4923
  %v4926 = vmul.f32 %v4908, %v4747
  %v4927 = vadd.f32 %v4925, %v4926
  %4929 = vrot.lane.b32.xlu0 %v4927, 98
  %v4930 = vpop.permute.xlu0 %4929
  %v4931 = vsel %vm40, %v4930, 0
  %4933 = vmatpush.msra.mxu0 0.0
  %4934 = vmatpush.msra.mxu0 0.0
  %4935 = vmatpush.msra.mxu0 0.0
  %4936 = vmatpush.msra.mxu0 0.0
  %4937 = vmatpush.msra.mxu0 0.0
  %4938 = vmatpush.msra.mxu0 0.0
  %4939 = vmatpush.msra.mxu0 0.0
  %4940 = vmatpush.msra.mxu0 0.0
  %4941 = vmatpush.msra.mxu0 0.0
  %4942 = vmatpush.msra.mxu0 0.0
  %4943 = vmatpush.msra.mxu0 0.0
  %4944 = vmatpush.msra.mxu0 0.0
  %4945 = vmatpush.msra.mxu0 %v1109
  %4946 = vmatpush.msra.mxu0 %v1019
  %4947 = vmatpush.msra.mxu0 %v1018
  %4948 = vmatpush.msra.mxu0 %v1017
  %4949 = vmatmul.f32.gmra.mxu0 %v4931
  %v4950 = vpop.f32.mrf.mxu0
  %v4951 = vadd.f32 %v1026, %v4950
  %4952 = vdwg.mxu0
  %v4954 = vrot.slane %v4887, 6
  %4955 = vrot.lane.b32.xlu0 %v4954, 38
  %v4956 = vpop.permute.xlu0 %4955
  %v4958 = vadd.f32 %v1096, %v4956
  %v4959 = vxor.u32 %v4958, 2147483648
  %v4960 = vmul.f32 %v4959, 1.442695
  %v4961 = vpow.pop %v4960
  %v4962 = vadd.f32 %v4961, 1.0
  %v4963 = vrcp.pop %v4962
  %v4964 = vmul.f32 %v4962, %v4963
  %v4965 = vsub.f32 1.0, %v4964
  %v4966 = vmul.f32 %v4963, %v4965
  %v4967 = vadd.f32 %v4963, %v4966
  %vm4968 = vweird.f32 %v4962
  %vm4969 = vweird.f32 %v4963
  %vm4970 = vmor %vm4968, %vm4969
  %v4971 = vsel %vm4970, %v4963, %v4967
  %v4972 = vand.u32 2147483647, %v4962
  %vm4973 = vcmp.eq.f32.partialorder %v4972, 8.507059e+37
  %v4974 = vand.u32 %v4962, 2147483648
  %v4975 = vor.u32 1.1754944e-38, %v4974
  %v4976 = vsel %vm4973, %v4975, %v4971
  %v4977 = vmul.f32 1.0, %v4976
  %v4979 = vrot.slane %v4888, 6
  %4980 = vrot.lane.b32.xlu0 %v4979, 38
  %v4981 = vpop.permute.xlu0 %4980
  %v4982 = vsel %vm1321, %v4956, %v4981
  %v4984 = vadd.f32 %v1096, %v4982
  %v4985 = vxor.u32 %v4984, 2147483648
  %v4986 = vmul.f32 %v4985, 1.442695
  %v4987 = vpow.pop %v4986
  %v4988 = vadd.f32 %v4987, 1.0
  %v4989 = vrcp.pop %v4988
  %v4990 = vmul.f32 %v4988, %v4989
  %v4991 = vsub.f32 1.0, %v4990
  %v4992 = vmul.f32 %v4989, %v4991
  %v4993 = vadd.f32 %v4989, %v4992
  %vm4994 = vweird.f32 %v4988
  %vm4995 = vweird.f32 %v4989
  %vm4996 = vmor %vm4994, %vm4995
  %v4997 = vsel %vm4996, %v4989, %v4993
  %v4998 = vand.u32 2147483647, %v4988
  %vm4999 = vcmp.eq.f32.partialorder %v4998, 8.507059e+37
  %v5000 = vand.u32 %v4988, 2147483648
  %v5001 = vor.u32 1.1754944e-38, %v5000
  %v5002 = vsel %vm4999, %v5001, %v4997
  %v5003 = vmul.f32 1.0, %v5002
  %5004 = vrot.lane.b32.xlu0 %v4979, 106
  %v5005 = vpop.permute.xlu0 %5004
  %v5007 = vmul.f32 %v4977, %v5005
  %5009 = vrot.lane.b32.xlu0 %v5007, 60
  %v5010 = vpop.permute.xlu0 %5009
  %v5012 = vadd.f32 %v1096, %v5010
  %v5013 = vtanh.pop %v5012
  %v5014 = vsub.f32 1.0, %v5003
  %5016 = vrot.lane.b32.xlu0 %v5013, 98
  %v5017 = vpop.permute.xlu0 %5016
  %v5019 = vmul.f32 %v5014, %v5017
  %v5020 = vrot.slane %v4840, 6
  %v5022 = vmul.f32 %v5003, %v5020
  %v5023 = vadd.f32 %v5019, %v5022
  %v5025 = vrot.slane %v5023, 2
  %5026 = vrot.lane.b32.xlu0 %v5025, 98
  %v5027 = vpop.permute.xlu0 %5026
  %v5028 = vsel %vm40, %v5027, 0
  %5030 = vmatpush.msra.mxu0 0.0
  %5031 = vmatpush.msra.mxu0 0.0
  %5032 = vmatpush.msra.mxu0 0.0
  %5033 = vmatpush.msra.mxu0 0.0
  %5034 = vmatpush.msra.mxu0 0.0
  %5035 = vmatpush.msra.mxu0 0.0
  %5036 = vmatpush.msra.mxu0 0.0
  %5037 = vmatpush.msra.mxu0 0.0
  %5038 = vmatpush.msra.mxu0 0.0
  %5039 = vmatpush.msra.mxu0 0.0
  %5040 = vmatpush.msra.mxu0 0.0
  %5041 = vmatpush.msra.mxu0 0.0
  %5042 = vmatpush.msra.mxu0 %v1176
  %5043 = vmatpush.msra.mxu0 %v1013
  %5044 = vmatpush.msra.mxu0 %v1011
  %5045 = vmatpush.msra.mxu0 %v1009
  %5046 = vmatmul.f32.gmra.mxu0 %v5028
  %v5047 = vpop.f32.mrf.mxu0
  %v5048 = vadd.f32 0.0, %v5047
  %5049 = vdwg.mxu0
  %5050 = vmatpush.msra.mxu0 0.0
  %5051 = vmatpush.msra.mxu0 0.0
  %5052 = vmatpush.msra.mxu0 0.0
  %5053 = vmatpush.msra.mxu0 0.0
  %5054 = vmatpush.msra.mxu0 0.0
  %5055 = vmatpush.msra.mxu0 0.0
  %5056 = vmatpush.msra.mxu0 0.0
  %5057 = vmatpush.msra.mxu0 0.0
  %5058 = vmatpush.msra.mxu0 0.0
  %5059 = vmatpush.msra.mxu0 0.0
  %5060 = vmatpush.msra.mxu0 0.0
  %5061 = vmatpush.msra.mxu0 0.0
  %5062 = vmatpush.msra.mxu0 %v1179
  %5063 = vmatpush.msra.mxu0 %v1014
  %5064 = vmatpush.msra.mxu0 %v1012
  %5065 = vmatpush.msra.mxu0 %v1010
  %5066 = vmatmul.f32.gmra.mxu0 %v5028
  %v5067 = vpop.f32.mrf.mxu0
  %v5068 = vadd.f32 0.0, %v5067
  %5069 = vdwg.mxu0
  %v5070 = vadd.f32 %v5048, %v1025
  %v5071 = vadd.f32 %v5048, %v1224
  %v5072 = vadd.f32 %v5068, %v1224
  %v5073 = vadd.f32 %v5070, %v4951
  %v5074 = vxor.u32 %v5073, 2147483648
  %v5075 = vmul.f32 %v5074, 1.442695
  %v5076 = vpow.pop %v5075
  %v5077 = vadd.f32 %v5076, 1.0
  %v5078 = vrcp.pop %v5077
  %v5079 = vmul.f32 %v5077, %v5078
  %v5080 = vsub.f32 1.0, %v5079
  %v5081 = vmul.f32 %v5078, %v5080
  %v5082 = vadd.f32 %v5078, %v5081
  %vm5083 = vweird.f32 %v5077
  %vm5084 = vweird.f32 %v5078
  %vm5085 = vmor %vm5083, %vm5084
  %v5086 = vsel %vm5085, %v5078, %v5082
  %v5087 = vand.u32 2147483647, %v5077
  %vm5088 = vcmp.eq.f32.partialorder %v5087, 8.507059e+37
  %v5089 = vand.u32 %v5077, 2147483648
  %v5090 = vor.u32 1.1754944e-38, %v5089
  %v5091 = vsel %vm5088, %v5090, %v5086
  %v5092 = vmul.f32 1.0, %v5091
  %5094 = vrot.lane.b32.xlu0 %v4951, 68
  %v5095 = vpop.permute.xlu0 %5094
  %v5097 = vmul.f32 %v5092, %v5095
  %5099 = vrot.lane.b32.xlu0 %v5097, 60
  %v5100 = vpop.permute.xlu0 %5099
  %v5102 = vadd.f32 %v5070, %v5100
  %v5103 = vtanh.pop %v5102
  %v5104 = vsub.f32 1.0, %v5092
  %5106 = vrot.lane.b32.xlu0 %v5103, 98
  %v5107 = vpop.permute.xlu0 %5106
  %v5109 = vmul.f32 %v5104, %v5107
  %v5110 = vmul.f32 %v5092, %v4927
  %v5111 = vadd.f32 %v5109, %v5110
  %5113 = vrot.lane.b32.xlu0 %v5111, 98
  %v5114 = vpop.permute.xlu0 %5113
  %v5115 = vsel %vm40, %v5114, 0
  %5117 = vmatpush.msra.mxu0 0.0
  %5118 = vmatpush.msra.mxu0 0.0
  %5119 = vmatpush.msra.mxu0 0.0
  %5120 = vmatpush.msra.mxu0 0.0
  %5121 = vmatpush.msra.mxu0 0.0
  %5122 = vmatpush.msra.mxu0 0.0
  %5123 = vmatpush.msra.mxu0 0.0
  %5124 = vmatpush.msra.mxu0 0.0
  %5125 = vmatpush.msra.mxu0 0.0
  %5126 = vmatpush.msra.mxu0 0.0
  %5127 = vmatpush.msra.mxu0 0.0
  %5128 = vmatpush.msra.mxu0 0.0
  %5129 = vmatpush.msra.mxu0 %v1109
  %5130 = vmatpush.msra.mxu0 %v1019
  %5131 = vmatpush.msra.mxu0 %v1018
  %5132 = vmatpush.msra.mxu0 %v1017
  %5133 = vmatmul.f32.gmra.mxu0 %v5115
  %v5134 = vpop.f32.mrf.mxu0
  %v5135 = vadd.f32 %v1026, %v5134
  %5136 = vdwg.mxu0
  %v5138 = vrot.slane %v5071, 4
  %5139 = vrot.lane.b32.xlu0 %v5138, 38
  %v5140 = vpop.permute.xlu0 %5139
  %v5142 = vadd.f32 %v1096, %v5140
  %v5143 = vxor.u32 %v5142, 2147483648
  %v5144 = vmul.f32 %v5143, 1.442695
  %v5145 = vpow.pop %v5144
  %v5146 = vadd.f32 %v5145, 1.0
  %v5147 = vrcp.pop %v5146
  %v5148 = vmul.f32 %v5146, %v5147
  %v5149 = vsub.f32 1.0, %v5148
  %v5150 = vmul.f32 %v5147, %v5149
  %v5151 = vadd.f32 %v5147, %v5150
  %vm5152 = vweird.f32 %v5146
  %vm5153 = vweird.f32 %v5147
  %vm5154 = vmor %vm5152, %vm5153
  %v5155 = vsel %vm5154, %v5147, %v5151
  %v5156 = vand.u32 2147483647, %v5146
  %vm5157 = vcmp.eq.f32.partialorder %v5156, 8.507059e+37
  %v5158 = vand.u32 %v5146, 2147483648
  %v5159 = vor.u32 1.1754944e-38, %v5158
  %v5160 = vsel %vm5157, %v5159, %v5155
  %v5161 = vmul.f32 1.0, %v5160
  %v5163 = vrot.slane %v5072, 4
  %5164 = vrot.lane.b32.xlu0 %v5163, 38
  %v5165 = vpop.permute.xlu0 %5164
  %v5166 = vsel %vm1321, %v5140, %v5165
  %v5168 = vadd.f32 %v1096, %v5166
  %v5169 = vxor.u32 %v5168, 2147483648
  %v5170 = vmul.f32 %v5169, 1.442695
  %v5171 = vpow.pop %v5170
  %v5172 = vadd.f32 %v5171, 1.0
  %v5173 = vrcp.pop %v5172
  %v5174 = vmul.f32 %v5172, %v5173
  %v5175 = vsub.f32 1.0, %v5174
  %v5176 = vmul.f32 %v5173, %v5175
  %v5177 = vadd.f32 %v5173, %v5176
  %vm5178 = vweird.f32 %v5172
  %vm5179 = vweird.f32 %v5173
  %vm5180 = vmor %vm5178, %vm5179
  %v5181 = vsel %vm5180, %v5173, %v5177
  %v5182 = vand.u32 2147483647, %v5172
  %vm5183 = vcmp.eq.f32.partialorder %v5182, 8.507059e+37
  %v5184 = vand.u32 %v5172, 2147483648
  %v5185 = vor.u32 1.1754944e-38, %v5184
  %v5186 = vsel %vm5183, %v5185, %v5181
  %v5187 = vmul.f32 1.0, %v5186
  %5188 = vrot.lane.b32.xlu0 %v5163, 106
  %v5189 = vpop.permute.xlu0 %5188
  %v5191 = vmul.f32 %v5161, %v5189
  %5193 = vrot.lane.b32.xlu0 %v5191, 60
  %v5194 = vpop.permute.xlu0 %5193
  %v5196 = vadd.f32 %v1096, %v5194
  %v5197 = vtanh.pop %v5196
  %v5198 = vsub.f32 1.0, %v5187
  %5200 = vrot.lane.b32.xlu0 %v5197, 98
  %v5201 = vpop.permute.xlu0 %5200
  %v5203 = vmul.f32 %v5198, %v5201
  %v5204 = vrot.slane %v5023, 6
  %v5206 = vmul.f32 %v5187, %v5204
  %v5207 = vadd.f32 %v5203, %v5206
  %v5209 = vrot.slane %v5207, 4
  %5210 = vrot.lane.b32.xlu0 %v5209, 98
  %v5211 = vpop.permute.xlu0 %5210
  %v5212 = vsel %vm40, %v5211, 0
  %5214 = vmatpush.msra.mxu0 0.0
  %5215 = vmatpush.msra.mxu0 0.0
  %5216 = vmatpush.msra.mxu0 0.0
  %5217 = vmatpush.msra.mxu0 0.0
  %5218 = vmatpush.msra.mxu0 0.0
  %5219 = vmatpush.msra.mxu0 0.0
  %5220 = vmatpush.msra.mxu0 0.0
  %5221 = vmatpush.msra.mxu0 0.0
  %5222 = vmatpush.msra.mxu0 0.0
  %5223 = vmatpush.msra.mxu0 0.0
  %5224 = vmatpush.msra.mxu0 0.0
  %5225 = vmatpush.msra.mxu0 0.0
  %5226 = vmatpush.msra.mxu0 %v1176
  %5227 = vmatpush.msra.mxu0 %v1013
  %5228 = vmatpush.msra.mxu0 %v1011
  %5229 = vmatpush.msra.mxu0 %v1009
  %5230 = vmatmul.f32.gmra.mxu0 %v5212
  %v5231 = vpop.f32.mrf.mxu0
  %v5232 = vadd.f32 0.0, %v5231
  %5233 = vdwg.mxu0
  %5234 = vmatpush.msra.mxu0 0.0
  %5235 = vmatpush.msra.mxu0 0.0
  %5236 = vmatpush.msra.mxu0 0.0
  %5237 = vmatpush.msra.mxu0 0.0
  %5238 = vmatpush.msra.mxu0 0.0
  %5239 = vmatpush.msra.mxu0 0.0
  %5240 = vmatpush.msra.mxu0 0.0
  %5241 = vmatpush.msra.mxu0 0.0
  %5242 = vmatpush.msra.mxu0 0.0
  %5243 = vmatpush.msra.mxu0 0.0
  %5244 = vmatpush.msra.mxu0 0.0
  %5245 = vmatpush.msra.mxu0 0.0
  %5246 = vmatpush.msra.mxu0 %v1179
  %5247 = vmatpush.msra.mxu0 %v1014
  %5248 = vmatpush.msra.mxu0 %v1012
  %5249 = vmatpush.msra.mxu0 %v1010
  %5250 = vmatmul.f32.gmra.mxu0 %v5212
  %v5251 = vpop.f32.mrf.mxu0
  %v5252 = vadd.f32 0.0, %v5251
  %5253 = vdwg.mxu0
  %v5254 = vadd.f32 %v5232, %v1025
  %v5255 = vadd.f32 %v5232, %v1224
  %v5256 = vadd.f32 %v5252, %v1224
  %v5257 = vadd.f32 %v5254, %v5135
  %v5258 = vxor.u32 %v5257, 2147483648
  %v5259 = vmul.f32 %v5258, 1.442695
  %v5260 = vpow.pop %v5259
  %v5261 = vadd.f32 %v5260, 1.0
  %v5262 = vrcp.pop %v5261
  %v5263 = vmul.f32 %v5261, %v5262
  %v5264 = vsub.f32 1.0, %v5263
  %v5265 = vmul.f32 %v5262, %v5264
  %v5266 = vadd.f32 %v5262, %v5265
  %vm5267 = vweird.f32 %v5261
  %vm5268 = vweird.f32 %v5262
  %vm5269 = vmor %vm5267, %vm5268
  %v5270 = vsel %vm5269, %v5262, %v5266
  %v5271 = vand.u32 2147483647, %v5261
  %vm5272 = vcmp.eq.f32.partialorder %v5271, 8.507059e+37
  %v5273 = vand.u32 %v5261, 2147483648
  %v5274 = vor.u32 1.1754944e-38, %v5273
  %v5275 = vsel %vm5272, %v5274, %v5270
  %v5276 = vmul.f32 1.0, %v5275
  %5278 = vrot.lane.b32.xlu0 %v5135, 68
  %v5279 = vpop.permute.xlu0 %5278
  %v5281 = vmul.f32 %v5276, %v5279
  %5283 = vrot.lane.b32.xlu0 %v5281, 60
  %v5284 = vpop.permute.xlu0 %5283
  %v5286 = vadd.f32 %v5254, %v5284
  %v5287 = vtanh.pop %v5286
  %v5288 = vsub.f32 1.0, %v5276
  %5290 = vrot.lane.b32.xlu0 %v5287, 98
  %v5291 = vpop.permute.xlu0 %5290
  %v5293 = vmul.f32 %v5288, %v5291
  %v5294 = vmul.f32 %v5276, %v5111
  %v5295 = vadd.f32 %v5293, %v5294
  %5297 = vrot.lane.b32.xlu0 %v5295, 98
  %v5298 = vpop.permute.xlu0 %5297
  %v5299 = vsel %vm40, %v5298, 0
  %5301 = vmatpush.msra.mxu0 0.0
  %5302 = vmatpush.msra.mxu0 0.0
  %5303 = vmatpush.msra.mxu0 0.0
  %5304 = vmatpush.msra.mxu0 0.0
  %5305 = vmatpush.msra.mxu0 0.0
  %5306 = vmatpush.msra.mxu0 0.0
  %5307 = vmatpush.msra.mxu0 0.0
  %5308 = vmatpush.msra.mxu0 0.0
  %5309 = vmatpush.msra.mxu0 0.0
  %5310 = vmatpush.msra.mxu0 0.0
  %5311 = vmatpush.msra.mxu0 0.0
  %5312 = vmatpush.msra.mxu0 0.0
  %5313 = vmatpush.msra.mxu0 %v1109
  %5314 = vmatpush.msra.mxu0 %v1019
  %5315 = vmatpush.msra.mxu0 %v1018
  %5316 = vmatpush.msra.mxu0 %v1017
  %5317 = vmatmul.f32.gmra.mxu0 %v5299
  %v5318 = vpop.f32.mrf.mxu0
  %v5319 = vadd.f32 %v1026, %v5318
  %5320 = vdwg.mxu0
  %v5322 = vrot.slane %v5255, 2
  %5323 = vrot.lane.b32.xlu0 %v5322, 38
  %v5324 = vpop.permute.xlu0 %5323
  %v5326 = vadd.f32 %v1096, %v5324
  %v5327 = vxor.u32 %v5326, 2147483648
  %v5328 = vmul.f32 %v5327, 1.442695
  %v5329 = vpow.pop %v5328
  %v5330 = vadd.f32 %v5329, 1.0
  %v5331 = vrcp.pop %v5330
  %v5332 = vmul.f32 %v5330, %v5331
  %v5333 = vsub.f32 1.0, %v5332
  %v5334 = vmul.f32 %v5331, %v5333
  %v5335 = vadd.f32 %v5331, %v5334
  %vm5336 = vweird.f32 %v5330
  %vm5337 = vweird.f32 %v5331
  %vm5338 = vmor %vm5336, %vm5337
  %v5339 = vsel %vm5338, %v5331, %v5335
  %v5340 = vand.u32 2147483647, %v5330
  %vm5341 = vcmp.eq.f32.partialorder %v5340, 8.507059e+37
  %v5342 = vand.u32 %v5330, 2147483648
  %v5343 = vor.u32 1.1754944e-38, %v5342
  %v5344 = vsel %vm5341, %v5343, %v5339
  %v5345 = vmul.f32 1.0, %v5344
  %v5347 = vrot.slane %v5256, 2
  %5348 = vrot.lane.b32.xlu0 %v5347, 38
  %v5349 = vpop.permute.xlu0 %5348
  %v5350 = vsel %vm1321, %v5324, %v5349
  %v5352 = vadd.f32 %v1096, %v5350
  %v5353 = vxor.u32 %v5352, 2147483648
  %v5354 = vmul.f32 %v5353, 1.442695
  %v5355 = vpow.pop %v5354
  %v5356 = vadd.f32 %v5355, 1.0
  %v5357 = vrcp.pop %v5356
  %v5358 = vmul.f32 %v5356, %v5357
  %v5359 = vsub.f32 1.0, %v5358
  %v5360 = vmul.f32 %v5357, %v5359
  %v5361 = vadd.f32 %v5357, %v5360
  %vm5362 = vweird.f32 %v5356
  %vm5363 = vweird.f32 %v5357
  %vm5364 = vmor %vm5362, %vm5363
  %v5365 = vsel %vm5364, %v5357, %v5361
  %v5366 = vand.u32 2147483647, %v5356
  %vm5367 = vcmp.eq.f32.partialorder %v5366, 8.507059e+37
  %v5368 = vand.u32 %v5356, 2147483648
  %v5369 = vor.u32 1.1754944e-38, %v5368
  %v5370 = vsel %vm5367, %v5369, %v5365
  %v5371 = vmul.f32 1.0, %v5370
  %5372 = vrot.lane.b32.xlu0 %v5347, 106
  %v5373 = vpop.permute.xlu0 %5372
  %v5375 = vmul.f32 %v5345, %v5373
  %5377 = vrot.lane.b32.xlu0 %v5375, 60
  %v5378 = vpop.permute.xlu0 %5377
  %v5380 = vadd.f32 %v1096, %v5378
  %v5381 = vtanh.pop %v5380
  %v5382 = vsub.f32 1.0, %v5371
  %5384 = vrot.lane.b32.xlu0 %v5381, 98
  %v5385 = vpop.permute.xlu0 %5384
  %v5387 = vmul.f32 %v5382, %v5385
  %v5388 = vrot.slane %v5207, 6
  %v5390 = vmul.f32 %v5371, %v5388
  %v5391 = vadd.f32 %v5387, %v5390
  %v5393 = vrot.slane %v5391, 6
  %5394 = vrot.lane.b32.xlu0 %v5393, 98
  %v5395 = vpop.permute.xlu0 %5394
  %v5396 = vsel %vm40, %v5395, 0
  %5398 = vmatpush.msra.mxu0 0.0
  %5399 = vmatpush.msra.mxu0 0.0
  %5400 = vmatpush.msra.mxu0 0.0
  %5401 = vmatpush.msra.mxu0 0.0
  %5402 = vmatpush.msra.mxu0 0.0
  %5403 = vmatpush.msra.mxu0 0.0
  %5404 = vmatpush.msra.mxu0 0.0
  %5405 = vmatpush.msra.mxu0 0.0
  %5406 = vmatpush.msra.mxu0 0.0
  %5407 = vmatpush.msra.mxu0 0.0
  %5408 = vmatpush.msra.mxu0 0.0
  %5409 = vmatpush.msra.mxu0 0.0
  %5410 = vmatpush.msra.mxu0 %v1176
  %5411 = vmatpush.msra.mxu0 %v1013
  %5412 = vmatpush.msra.mxu0 %v1011
  %5413 = vmatpush.msra.mxu0 %v1009
  %5414 = vmatmul.f32.gmra.mxu0 %v5396
  %v5415 = vpop.f32.mrf.mxu0
  %v5416 = vadd.f32 0.0, %v5415
  %5417 = vdwg.mxu0
  %5418 = vmatpush.msra.mxu0 0.0
  %5419 = vmatpush.msra.mxu0 0.0
  %5420 = vmatpush.msra.mxu0 0.0
  %5421 = vmatpush.msra.mxu0 0.0
  %5422 = vmatpush.msra.mxu0 0.0
  %5423 = vmatpush.msra.mxu0 0.0
  %5424 = vmatpush.msra.mxu0 0.0
  %5425 = vmatpush.msra.mxu0 0.0
  %5426 = vmatpush.msra.mxu0 0.0
  %5427 = vmatpush.msra.mxu0 0.0
  %5428 = vmatpush.msra.mxu0 0.0
  %5429 = vmatpush.msra.mxu0 0.0
  %5430 = vmatpush.msra.mxu0 %v1179
  %5431 = vmatpush.msra.mxu0 %v1014
  %5432 = vmatpush.msra.mxu0 %v1012
  %5433 = vmatpush.msra.mxu0 %v1010
  %5434 = vmatmul.f32.gmra.mxu0 %v5396
  %v5435 = vpop.f32.mrf.mxu0
  %v5436 = vadd.f32 0.0, %v5435
  %5437 = vdwg.mxu0
  %v5438 = vadd.f32 %v5416, %v1025
  %v5439 = vadd.f32 %v5416, %v1224
  %v5440 = vadd.f32 %v5436, %v1224
  %v5441 = vadd.f32 %v5438, %v5319
  %v5442 = vxor.u32 %v5441, 2147483648
  %v5443 = vmul.f32 %v5442, 1.442695
  %v5444 = vpow.pop %v5443
  %v5445 = vadd.f32 %v5444, 1.0
  %v5446 = vrcp.pop %v5445
  %v5447 = vmul.f32 %v5445, %v5446
  %v5448 = vsub.f32 1.0, %v5447
  %v5449 = vmul.f32 %v5446, %v5448
  %v5450 = vadd.f32 %v5446, %v5449
  %vm5451 = vweird.f32 %v5445
  %vm5452 = vweird.f32 %v5446
  %vm5453 = vmor %vm5451, %vm5452
  %v5454 = vsel %vm5453, %v5446, %v5450
  %v5455 = vand.u32 2147483647, %v5445
  %vm5456 = vcmp.eq.f32.partialorder %v5455, 8.507059e+37
  %v5457 = vand.u32 %v5445, 2147483648
  %v5458 = vor.u32 1.1754944e-38, %v5457
  %v5459 = vsel %vm5456, %v5458, %v5454
  %v5460 = vmul.f32 1.0, %v5459
  %5462 = vrot.lane.b32.xlu0 %v5319, 68
  %v5463 = vpop.permute.xlu0 %5462
  %v5465 = vmul.f32 %v5460, %v5463
  %5467 = vrot.lane.b32.xlu0 %v5465, 60
  %v5468 = vpop.permute.xlu0 %5467
  %v5470 = vadd.f32 %v5438, %v5468
  %v5471 = vtanh.pop %v5470
  %v5472 = vsub.f32 1.0, %v5460
  %5474 = vrot.lane.b32.xlu0 %v5471, 98
  %v5475 = vpop.permute.xlu0 %5474
  %v5477 = vmul.f32 %v5472, %v5475
  %v5478 = vmul.f32 %v5460, %v5295
  %v5479 = vadd.f32 %v5477, %v5478
  %5481 = vrot.lane.b32.xlu0 %v5479, 98
  %v5482 = vpop.permute.xlu0 %5481
  %v5483 = vsel %vm40, %v5482, 0
  %5485 = vmatpush.msra.mxu0 0.0
  %5486 = vmatpush.msra.mxu0 0.0
  %5487 = vmatpush.msra.mxu0 0.0
  %5488 = vmatpush.msra.mxu0 0.0
  %5489 = vmatpush.msra.mxu0 0.0
  %5490 = vmatpush.msra.mxu0 0.0
  %5491 = vmatpush.msra.mxu0 0.0
  %5492 = vmatpush.msra.mxu0 0.0
  %5493 = vmatpush.msra.mxu0 0.0
  %5494 = vmatpush.msra.mxu0 0.0
  %5495 = vmatpush.msra.mxu0 0.0
  %5496 = vmatpush.msra.mxu0 0.0
  %5497 = vmatpush.msra.mxu0 %v1109
  %5498 = vmatpush.msra.mxu0 %v1019
  %5499 = vmatpush.msra.mxu0 %v1018
  %5500 = vmatpush.msra.mxu0 %v1017
  %5501 = vmatmul.f32.gmra.mxu0 %v5483
  %v5502 = vpop.f32.mrf.mxu0
  %v5503 = vadd.f32 %v1026, %v5502
  %5504 = vdwg.mxu0
  %5506 = vrot.lane.b32.xlu0 %v5439, 38
  %v5507 = vpop.permute.xlu0 %5506
  %v5509 = vadd.f32 %v1099, %v5507
  %v5510 = vxor.u32 %v5509, 2147483648
  %v5511 = vmul.f32 %v5510, 1.442695
  %v5512 = vpow.pop %v5511
  %v5513 = vadd.f32 %v5512, 1.0
  %v5514 = vrcp.pop %v5513
  %v5515 = vmul.f32 %v5513, %v5514
  %v5516 = vsub.f32 1.0, %v5515
  %v5517 = vmul.f32 %v5514, %v5516
  %v5518 = vadd.f32 %v5514, %v5517
  %vm5519 = vweird.f32 %v5513
  %vm5520 = vweird.f32 %v5514
  %vm5521 = vmor %vm5519, %vm5520
  %v5522 = vsel %vm5521, %v5514, %v5518
  %v5523 = vand.u32 2147483647, %v5513
  %vm5524 = vcmp.eq.f32.partialorder %v5523, 8.507059e+37
  %v5525 = vand.u32 %v5513, 2147483648
  %v5526 = vor.u32 1.1754944e-38, %v5525
  %v5527 = vsel %vm5524, %v5526, %v5522
  %v5528 = vmul.f32 1.0, %v5527
  %5530 = vrot.lane.b32.xlu0 %v5440, 38
  %v5531 = vpop.permute.xlu0 %5530
  %v5532 = vsel %vm1321, %v5507, %v5531
  %v5534 = vadd.f32 %v1099, %v5532
  %v5535 = vxor.u32 %v5534, 2147483648
  %v5536 = vmul.f32 %v5535, 1.442695
  %v5537 = vpow.pop %v5536
  %v5538 = vadd.f32 %v5537, 1.0
  %v5539 = vrcp.pop %v5538
  %v5540 = vmul.f32 %v5538, %v5539
  %v5541 = vsub.f32 1.0, %v5540
  %v5542 = vmul.f32 %v5539, %v5541
  %v5543 = vadd.f32 %v5539, %v5542
  %vm5544 = vweird.f32 %v5538
  %vm5545 = vweird.f32 %v5539
  %vm5546 = vmor %vm5544, %vm5545
  %v5547 = vsel %vm5546, %v5539, %v5543
  %v5548 = vand.u32 2147483647, %v5538
  %vm5549 = vcmp.eq.f32.partialorder %v5548, 8.507059e+37
  %v5550 = vand.u32 %v5538, 2147483648
  %v5551 = vor.u32 1.1754944e-38, %v5550
  %v5552 = vsel %vm5549, %v5551, %v5547
  %v5553 = vmul.f32 1.0, %v5552
  %5554 = vrot.lane.b32.xlu0 %v5440, 106
  %v5555 = vpop.permute.xlu0 %5554
  %v5557 = vmul.f32 %v5528, %v5555
  %5559 = vrot.lane.b32.xlu0 %v5557, 60
  %v5560 = vpop.permute.xlu0 %5559
  %v5562 = vadd.f32 %v1099, %v5560
  %v5563 = vtanh.pop %v5562
  %v5564 = vsub.f32 1.0, %v5553
  %5566 = vrot.lane.b32.xlu0 %v5563, 98
  %v5567 = vpop.permute.xlu0 %5566
  %v5569 = vmul.f32 %v5564, %v5567
  %v5571 = vmul.f32 %v5553, %v5393
  %v5572 = vadd.f32 %v5569, %v5571
  %5574 = vrot.lane.b32.xlu0 %v5572, 98
  %v5575 = vpop.permute.xlu0 %5574
  %v5576 = vsel %vm40, %v5575, 0
  %5578 = vmatpush.msra.mxu0 0.0
  %5579 = vmatpush.msra.mxu0 0.0
  %5580 = vmatpush.msra.mxu0 0.0
  %5581 = vmatpush.msra.mxu0 0.0
  %5582 = vmatpush.msra.mxu0 0.0
  %5583 = vmatpush.msra.mxu0 0.0
  %5584 = vmatpush.msra.mxu0 0.0
  %5585 = vmatpush.msra.mxu0 0.0
  %5586 = vmatpush.msra.mxu0 0.0
  %5587 = vmatpush.msra.mxu0 0.0
  %5588 = vmatpush.msra.mxu0 0.0
  %5589 = vmatpush.msra.mxu0 0.0
  %5590 = vmatpush.msra.mxu0 %v1176
  %5591 = vmatpush.msra.mxu0 %v1013
  %5592 = vmatpush.msra.mxu0 %v1011
  %5593 = vmatpush.msra.mxu0 %v1009
  %5594 = vmatmul.f32.gmra.mxu0 %v5576
  %v5595 = vpop.f32.mrf.mxu0
  %v5596 = vadd.f32 0.0, %v5595
  %5597 = vdwg.mxu0
  %5598 = vmatpush.msra.mxu0 0.0
  %5599 = vmatpush.msra.mxu0 0.0
  %5600 = vmatpush.msra.mxu0 0.0
  %5601 = vmatpush.msra.mxu0 0.0
  %5602 = vmatpush.msra.mxu0 0.0
  %5603 = vmatpush.msra.mxu0 0.0
  %5604 = vmatpush.msra.mxu0 0.0
  %5605 = vmatpush.msra.mxu0 0.0
  %5606 = vmatpush.msra.mxu0 0.0
  %5607 = vmatpush.msra.mxu0 0.0
  %5608 = vmatpush.msra.mxu0 0.0
  %5609 = vmatpush.msra.mxu0 0.0
  %5610 = vmatpush.msra.mxu0 %v1179
  %5611 = vmatpush.msra.mxu0 %v1014
  %5612 = vmatpush.msra.mxu0 %v1012
  %5613 = vmatpush.msra.mxu0 %v1010
  %5614 = vmatmul.f32.gmra.mxu0 %v5576
  %v5615 = vpop.f32.mrf.mxu0
  %v5616 = vadd.f32 0.0, %v5615
  %5617 = vdwg.mxu0
  %v5618 = vadd.f32 %v5596, %v1025
  %v5619 = vadd.f32 %v5596, %v1224
  %v5620 = vadd.f32 %v5616, %v1224
  %v5621 = vadd.f32 %v5618, %v5503
  %v5622 = vxor.u32 %v5621, 2147483648
  %v5623 = vmul.f32 %v5622, 1.442695
  %v5624 = vpow.pop %v5623
  %v5625 = vadd.f32 %v5624, 1.0
  %v5626 = vrcp.pop %v5625
  %v5627 = vmul.f32 %v5625, %v5626
  %v5628 = vsub.f32 1.0, %v5627
  %v5629 = vmul.f32 %v5626, %v5628
  %v5630 = vadd.f32 %v5626, %v5629
  %vm5631 = vweird.f32 %v5625
  %vm5632 = vweird.f32 %v5626
  %vm5633 = vmor %vm5631, %vm5632
  %v5634 = vsel %vm5633, %v5626, %v5630
  %v5635 = vand.u32 2147483647, %v5625
  %vm5636 = vcmp.eq.f32.partialorder %v5635, 8.507059e+37
  %v5637 = vand.u32 %v5625, 2147483648
  %v5638 = vor.u32 1.1754944e-38, %v5637
  %v5639 = vsel %vm5636, %v5638, %v5634
  %v5640 = vmul.f32 1.0, %v5639
  %5642 = vrot.lane.b32.xlu0 %v5503, 68
  %v5643 = vpop.permute.xlu0 %5642
  %v5645 = vmul.f32 %v5640, %v5643
  %5647 = vrot.lane.b32.xlu0 %v5645, 60
  %v5648 = vpop.permute.xlu0 %5647
  %v5650 = vadd.f32 %v5618, %v5648
  %v5651 = vtanh.pop %v5650
  %v5652 = vsub.f32 1.0, %v5640
  %5654 = vrot.lane.b32.xlu0 %v5651, 98
  %v5655 = vpop.permute.xlu0 %5654
  %v5657 = vmul.f32 %v5652, %v5655
  %v5658 = vmul.f32 %v5640, %v5479
  %v5659 = vadd.f32 %v5657, %v5658
  %5661 = vrot.lane.b32.xlu0 %v5659, 98
  %v5662 = vpop.permute.xlu0 %5661
  %v5663 = vsel %vm40, %v5662, 0
  %5665 = vmatpush.msra.mxu0 0.0
  %5666 = vmatpush.msra.mxu0 0.0
  %5667 = vmatpush.msra.mxu0 0.0
  %5668 = vmatpush.msra.mxu0 0.0
  %5669 = vmatpush.msra.mxu0 0.0
  %5670 = vmatpush.msra.mxu0 0.0
  %5671 = vmatpush.msra.mxu0 0.0
  %5672 = vmatpush.msra.mxu0 0.0
  %5673 = vmatpush.msra.mxu0 0.0
  %5674 = vmatpush.msra.mxu0 0.0
  %5675 = vmatpush.msra.mxu0 0.0
  %5676 = vmatpush.msra.mxu0 0.0
  %5677 = vmatpush.msra.mxu0 %v1109
  %5678 = vmatpush.msra.mxu0 %v1019
  %5679 = vmatpush.msra.mxu0 %v1018
  %5680 = vmatpush.msra.mxu0 %v1017
  %5681 = vmatmul.f32.gmra.mxu0 %v5663
  %v5682 = vpop.f32.mrf.mxu0
  %v5683 = vadd.f32 %v1026, %v5682
  %5684 = vdwg.mxu0
  %v5686 = vrot.slane %v5619, 6
  %5687 = vrot.lane.b32.xlu0 %v5686, 38
  %v5688 = vpop.permute.xlu0 %5687
  %v5690 = vadd.f32 %v1099, %v5688
  %v5691 = vxor.u32 %v5690, 2147483648
  %v5692 = vmul.f32 %v5691, 1.442695
  %v5693 = vpow.pop %v5692
  %v5694 = vadd.f32 %v5693, 1.0
  %v5695 = vrcp.pop %v5694
  %v5696 = vmul.f32 %v5694, %v5695
  %v5697 = vsub.f32 1.0, %v5696
  %v5698 = vmul.f32 %v5695, %v5697
  %v5699 = vadd.f32 %v5695, %v5698
  %vm5700 = vweird.f32 %v5694
  %vm5701 = vweird.f32 %v5695
  %vm5702 = vmor %vm5700, %vm5701
  %v5703 = vsel %vm5702, %v5695, %v5699
  %v5704 = vand.u32 2147483647, %v5694
  %vm5705 = vcmp.eq.f32.partialorder %v5704, 8.507059e+37
  %v5706 = vand.u32 %v5694, 2147483648
  %v5707 = vor.u32 1.1754944e-38, %v5706
  %v5708 = vsel %vm5705, %v5707, %v5703
  %v5709 = vmul.f32 1.0, %v5708
  %v5711 = vrot.slane %v5620, 6
  %5712 = vrot.lane.b32.xlu0 %v5711, 38
  %v5713 = vpop.permute.xlu0 %5712
  %v5714 = vsel %vm1321, %v5688, %v5713
  %v5716 = vadd.f32 %v1099, %v5714
  %v5717 = vxor.u32 %v5716, 2147483648
  %v5718 = vmul.f32 %v5717, 1.442695
  %v5719 = vpow.pop %v5718
  %v5720 = vadd.f32 %v5719, 1.0
  %v5721 = vrcp.pop %v5720
  %v5722 = vmul.f32 %v5720, %v5721
  %v5723 = vsub.f32 1.0, %v5722
  %v5724 = vmul.f32 %v5721, %v5723
  %v5725 = vadd.f32 %v5721, %v5724
  %vm5726 = vweird.f32 %v5720
  %vm5727 = vweird.f32 %v5721
  %vm5728 = vmor %vm5726, %vm5727
  %v5729 = vsel %vm5728, %v5721, %v5725
  %v5730 = vand.u32 2147483647, %v5720
  %vm5731 = vcmp.eq.f32.partialorder %v5730, 8.507059e+37
  %v5732 = vand.u32 %v5720, 2147483648
  %v5733 = vor.u32 1.1754944e-38, %v5732
  %v5734 = vsel %vm5731, %v5733, %v5729
  %v5735 = vmul.f32 1.0, %v5734
  %5736 = vrot.lane.b32.xlu0 %v5711, 106
  %v5737 = vpop.permute.xlu0 %5736
  %v5739 = vmul.f32 %v5709, %v5737
  %5741 = vrot.lane.b32.xlu0 %v5739, 60
  %v5742 = vpop.permute.xlu0 %5741
  %v5744 = vadd.f32 %v1099, %v5742
  %v5745 = vtanh.pop %v5744
  %v5746 = vsub.f32 1.0, %v5735
  %5748 = vrot.lane.b32.xlu0 %v5745, 98
  %v5749 = vpop.permute.xlu0 %5748
  %v5751 = vmul.f32 %v5746, %v5749
  %v5752 = vrot.slane %v5572, 6
  %v5754 = vmul.f32 %v5735, %v5752
  %v5755 = vadd.f32 %v5751, %v5754
  %v5757 = vrot.slane %v5755, 2
  %5758 = vrot.lane.b32.xlu0 %v5757, 98
  %v5759 = vpop.permute.xlu0 %5758
  %v5760 = vsel %vm40, %v5759, 0
  %5762 = vmatpush.msra.mxu0 0.0
  %5763 = vmatpush.msra.mxu0 0.0
  %5764 = vmatpush.msra.mxu0 0.0
  %5765 = vmatpush.msra.mxu0 0.0
  %5766 = vmatpush.msra.mxu0 0.0
  %5767 = vmatpush.msra.mxu0 0.0
  %5768 = vmatpush.msra.mxu0 0.0
  %5769 = vmatpush.msra.mxu0 0.0
  %5770 = vmatpush.msra.mxu0 0.0
  %5771 = vmatpush.msra.mxu0 0.0
  %5772 = vmatpush.msra.mxu0 0.0
  %5773 = vmatpush.msra.mxu0 0.0
  %5774 = vmatpush.msra.mxu0 %v1176
  %5775 = vmatpush.msra.mxu0 %v1013
  %5776 = vmatpush.msra.mxu0 %v1011
  %5777 = vmatpush.msra.mxu0 %v1009
  %5778 = vmatmul.f32.gmra.mxu0 %v5760
  %v5779 = vpop.f32.mrf.mxu0
  %v5780 = vadd.f32 0.0, %v5779
  %5781 = vdwg.mxu0
  %5782 = vmatpush.msra.mxu0 0.0
  %5783 = vmatpush.msra.mxu0 0.0
  %5784 = vmatpush.msra.mxu0 0.0
  %5785 = vmatpush.msra.mxu0 0.0
  %5786 = vmatpush.msra.mxu0 0.0
  %5787 = vmatpush.msra.mxu0 0.0
  %5788 = vmatpush.msra.mxu0 0.0
  %5789 = vmatpush.msra.mxu0 0.0
  %5790 = vmatpush.msra.mxu0 0.0
  %5791 = vmatpush.msra.mxu0 0.0
  %5792 = vmatpush.msra.mxu0 0.0
  %5793 = vmatpush.msra.mxu0 0.0
  %5794 = vmatpush.msra.mxu0 %v1179
  %5795 = vmatpush.msra.mxu0 %v1014
  %5796 = vmatpush.msra.mxu0 %v1012
  %5797 = vmatpush.msra.mxu0 %v1010
  %5798 = vmatmul.f32.gmra.mxu0 %v5760
  %v5799 = vpop.f32.mrf.mxu0
  %v5800 = vadd.f32 0.0, %v5799
  %5801 = vdwg.mxu0
  %v5802 = vadd.f32 %v5780, %v1025
  %v5803 = vadd.f32 %v5780, %v1224
  %v5804 = vadd.f32 %v5800, %v1224
  %v5805 = vadd.f32 %v5802, %v5683
  %v5806 = vxor.u32 %v5805, 2147483648
  %v5807 = vmul.f32 %v5806, 1.442695
  %v5808 = vpow.pop %v5807
  %v5809 = vadd.f32 %v5808, 1.0
  %v5810 = vrcp.pop %v5809
  %v5811 = vmul.f32 %v5809, %v5810
  %v5812 = vsub.f32 1.0, %v5811
  %v5813 = vmul.f32 %v5810, %v5812
  %v5814 = vadd.f32 %v5810, %v5813
  %vm5815 = vweird.f32 %v5809
  %vm5816 = vweird.f32 %v5810
  %vm5817 = vmor %vm5815, %vm5816
  %v5818 = vsel %vm5817, %v5810, %v5814
  %v5819 = vand.u32 2147483647, %v5809
  %vm5820 = vcmp.eq.f32.partialorder %v5819, 8.507059e+37
  %v5821 = vand.u32 %v5809, 2147483648
  %v5822 = vor.u32 1.1754944e-38, %v5821
  %v5823 = vsel %vm5820, %v5822, %v5818
  %v5824 = vmul.f32 1.0, %v5823
  %5826 = vrot.lane.b32.xlu0 %v5683, 68
  %v5827 = vpop.permute.xlu0 %5826
  %v5829 = vmul.f32 %v5824, %v5827
  %5831 = vrot.lane.b32.xlu0 %v5829, 60
  %v5832 = vpop.permute.xlu0 %5831
  %v5834 = vadd.f32 %v5802, %v5832
  %v5835 = vtanh.pop %v5834
  %v5836 = vsub.f32 1.0, %v5824
  %5838 = vrot.lane.b32.xlu0 %v5835, 98
  %v5839 = vpop.permute.xlu0 %5838
  %v5841 = vmul.f32 %v5836, %v5839
  %v5842 = vmul.f32 %v5824, %v5659
  %v5843 = vadd.f32 %v5841, %v5842
  %5845 = vrot.lane.b32.xlu0 %v5843, 98
  %v5846 = vpop.permute.xlu0 %5845
  %v5847 = vsel %vm40, %v5846, 0
  %5849 = vmatpush.msra.mxu0 0.0
  %5850 = vmatpush.msra.mxu0 0.0
  %5851 = vmatpush.msra.mxu0 0.0
  %5852 = vmatpush.msra.mxu0 0.0
  %5853 = vmatpush.msra.mxu0 0.0
  %5854 = vmatpush.msra.mxu0 0.0
  %5855 = vmatpush.msra.mxu0 0.0
  %5856 = vmatpush.msra.mxu0 0.0
  %5857 = vmatpush.msra.mxu0 0.0
  %5858 = vmatpush.msra.mxu0 0.0
  %5859 = vmatpush.msra.mxu0 0.0
  %5860 = vmatpush.msra.mxu0 0.0
  %5861 = vmatpush.msra.mxu0 %v1109
  %5862 = vmatpush.msra.mxu0 %v1019
  %5863 = vmatpush.msra.mxu0 %v1018
  %5864 = vmatpush.msra.mxu0 %v1017
  %5865 = vmatmul.f32.gmra.mxu0 %v5847
  %v5866 = vpop.f32.mrf.mxu0
  %v5867 = vadd.f32 %v1026, %v5866
  %5868 = vdwg.mxu0
  %v5870 = vrot.slane %v5803, 4
  %5871 = vrot.lane.b32.xlu0 %v5870, 38
  %v5872 = vpop.permute.xlu0 %5871
  %v5874 = vadd.f32 %v1099, %v5872
  %v5875 = vxor.u32 %v5874, 2147483648
  %v5876 = vmul.f32 %v5875, 1.442695
  %v5877 = vpow.pop %v5876
  %v5878 = vadd.f32 %v5877, 1.0
  %v5879 = vrcp.pop %v5878
  %v5880 = vmul.f32 %v5878, %v5879
  %v5881 = vsub.f32 1.0, %v5880
  %v5882 = vmul.f32 %v5879, %v5881
  %v5883 = vadd.f32 %v5879, %v5882
  %vm5884 = vweird.f32 %v5878
  %vm5885 = vweird.f32 %v5879
  %vm5886 = vmor %vm5884, %vm5885
  %v5887 = vsel %vm5886, %v5879, %v5883
  %v5888 = vand.u32 2147483647, %v5878
  %vm5889 = vcmp.eq.f32.partialorder %v5888, 8.507059e+37
  %v5890 = vand.u32 %v5878, 2147483648
  %v5891 = vor.u32 1.1754944e-38, %v5890
  %v5892 = vsel %vm5889, %v5891, %v5887
  %v5893 = vmul.f32 1.0, %v5892
  %v5895 = vrot.slane %v5804, 4
  %5896 = vrot.lane.b32.xlu0 %v5895, 38
  %v5897 = vpop.permute.xlu0 %5896
  %v5898 = vsel %vm1321, %v5872, %v5897
  %v5900 = vadd.f32 %v1099, %v5898
  %v5901 = vxor.u32 %v5900, 2147483648
  %v5902 = vmul.f32 %v5901, 1.442695
  %v5903 = vpow.pop %v5902
  %v5904 = vadd.f32 %v5903, 1.0
  %v5905 = vrcp.pop %v5904
  %v5906 = vmul.f32 %v5904, %v5905
  %v5907 = vsub.f32 1.0, %v5906
  %v5908 = vmul.f32 %v5905, %v5907
  %v5909 = vadd.f32 %v5905, %v5908
  %vm5910 = vweird.f32 %v5904
  %vm5911 = vweird.f32 %v5905
  %vm5912 = vmor %vm5910, %vm5911
  %v5913 = vsel %vm5912, %v5905, %v5909
  %v5914 = vand.u32 2147483647, %v5904
  %vm5915 = vcmp.eq.f32.partialorder %v5914, 8.507059e+37
  %v5916 = vand.u32 %v5904, 2147483648
  %v5917 = vor.u32 1.1754944e-38, %v5916
  %v5918 = vsel %vm5915, %v5917, %v5913
  %v5919 = vmul.f32 1.0, %v5918
  %5920 = vrot.lane.b32.xlu0 %v5895, 106
  %v5921 = vpop.permute.xlu0 %5920
  %v5923 = vmul.f32 %v5893, %v5921
  %5925 = vrot.lane.b32.xlu0 %v5923, 60
  %v5926 = vpop.permute.xlu0 %5925
  %v5928 = vadd.f32 %v1099, %v5926
  %v5929 = vtanh.pop %v5928
  %v5930 = vsub.f32 1.0, %v5919
  %5932 = vrot.lane.b32.xlu0 %v5929, 98
  %v5933 = vpop.permute.xlu0 %5932
  %v5935 = vmul.f32 %v5930, %v5933
  %v5936 = vrot.slane %v5755, 6
  %v5938 = vmul.f32 %v5919, %v5936
  %v5939 = vadd.f32 %v5935, %v5938
  %v5941 = vrot.slane %v5939, 4
  %5942 = vrot.lane.b32.xlu0 %v5941, 98
  %v5943 = vpop.permute.xlu0 %5942
  %v5944 = vsel %vm40, %v5943, 0
  %5946 = vmatpush.msra.mxu0 0.0
  %5947 = vmatpush.msra.mxu0 0.0
  %5948 = vmatpush.msra.mxu0 0.0
  %5949 = vmatpush.msra.mxu0 0.0
  %5950 = vmatpush.msra.mxu0 0.0
  %5951 = vmatpush.msra.mxu0 0.0
  %5952 = vmatpush.msra.mxu0 0.0
  %5953 = vmatpush.msra.mxu0 0.0
  %5954 = vmatpush.msra.mxu0 0.0
  %5955 = vmatpush.msra.mxu0 0.0
  %5956 = vmatpush.msra.mxu0 0.0
  %5957 = vmatpush.msra.mxu0 0.0
  %5958 = vmatpush.msra.mxu0 %v1176
  %5959 = vmatpush.msra.mxu0 %v1013
  %5960 = vmatpush.msra.mxu0 %v1011
  %5961 = vmatpush.msra.mxu0 %v1009
  %5962 = vmatmul.f32.gmra.mxu0 %v5944
  %v5963 = vpop.f32.mrf.mxu0
  %v5964 = vadd.f32 0.0, %v5963
  %5965 = vdwg.mxu0
  %5966 = vmatpush.msra.mxu0 0.0
  %5967 = vmatpush.msra.mxu0 0.0
  %5968 = vmatpush.msra.mxu0 0.0
  %5969 = vmatpush.msra.mxu0 0.0
  %5970 = vmatpush.msra.mxu0 0.0
  %5971 = vmatpush.msra.mxu0 0.0
  %5972 = vmatpush.msra.mxu0 0.0
  %5973 = vmatpush.msra.mxu0 0.0
  %5974 = vmatpush.msra.mxu0 0.0
  %5975 = vmatpush.msra.mxu0 0.0
  %5976 = vmatpush.msra.mxu0 0.0
  %5977 = vmatpush.msra.mxu0 0.0
  %5978 = vmatpush.msra.mxu0 %v1179
  %5979 = vmatpush.msra.mxu0 %v1014
  %5980 = vmatpush.msra.mxu0 %v1012
  %5981 = vmatpush.msra.mxu0 %v1010
  %5982 = vmatmul.f32.gmra.mxu0 %v5944
  %v5983 = vpop.f32.mrf.mxu0
  %v5984 = vadd.f32 0.0, %v5983
  %5985 = vdwg.mxu0
  %v5986 = vadd.f32 %v5964, %v1025
  %v5987 = vadd.f32 %v5964, %v1224
  %v5988 = vadd.f32 %v5984, %v1224
  %v5989 = vadd.f32 %v5986, %v5867
  %v5990 = vxor.u32 %v5989, 2147483648
  %v5991 = vmul.f32 %v5990, 1.442695
  %v5992 = vpow.pop %v5991
  %v5993 = vadd.f32 %v5992, 1.0
  %v5994 = vrcp.pop %v5993
  %v5995 = vmul.f32 %v5993, %v5994
  %v5996 = vsub.f32 1.0, %v5995
  %v5997 = vmul.f32 %v5994, %v5996
  %v5998 = vadd.f32 %v5994, %v5997
  %vm5999 = vweird.f32 %v5993
  %vm6000 = vweird.f32 %v5994
  %vm6001 = vmor %vm5999, %vm6000
  %v6002 = vsel %vm6001, %v5994, %v5998
  %v6003 = vand.u32 2147483647, %v5993
  %vm6004 = vcmp.eq.f32.partialorder %v6003, 8.507059e+37
  %v6005 = vand.u32 %v5993, 2147483648
  %v6006 = vor.u32 1.1754944e-38, %v6005
  %v6007 = vsel %vm6004, %v6006, %v6002
  %v6008 = vmul.f32 1.0, %v6007
  %6010 = vrot.lane.b32.xlu0 %v5867, 68
  %v6011 = vpop.permute.xlu0 %6010
  %v6013 = vmul.f32 %v6008, %v6011
  %6015 = vrot.lane.b32.xlu0 %v6013, 60
  %v6016 = vpop.permute.xlu0 %6015
  %v6018 = vadd.f32 %v5986, %v6016
  %v6019 = vtanh.pop %v6018
  %v6020 = vsub.f32 1.0, %v6008
  %6022 = vrot.lane.b32.xlu0 %v6019, 98
  %v6023 = vpop.permute.xlu0 %6022
  %v6025 = vmul.f32 %v6020, %v6023
  %v6026 = vmul.f32 %v6008, %v5843
  %v6027 = vadd.f32 %v6025, %v6026
  %6029 = vrot.lane.b32.xlu0 %v6027, 98
  %v6030 = vpop.permute.xlu0 %6029
  %v6031 = vsel %vm40, %v6030, 0
  %6033 = vmatpush.msra.mxu0 0.0
  %6034 = vmatpush.msra.mxu0 0.0
  %6035 = vmatpush.msra.mxu0 0.0
  %6036 = vmatpush.msra.mxu0 0.0
  %6037 = vmatpush.msra.mxu0 0.0
  %6038 = vmatpush.msra.mxu0 0.0
  %6039 = vmatpush.msra.mxu0 0.0
  %6040 = vmatpush.msra.mxu0 0.0
  %6041 = vmatpush.msra.mxu0 0.0
  %6042 = vmatpush.msra.mxu0 0.0
  %6043 = vmatpush.msra.mxu0 0.0
  %6044 = vmatpush.msra.mxu0 0.0
  %6045 = vmatpush.msra.mxu0 %v1109
  %6046 = vmatpush.msra.mxu0 %v1019
  %6047 = vmatpush.msra.mxu0 %v1018
  %6048 = vmatpush.msra.mxu0 %v1017
  %6049 = vmatmul.f32.gmra.mxu0 %v6031
  %v6050 = vpop.f32.mrf.mxu0
  %v6051 = vadd.f32 %v1026, %v6050
  %6052 = vdwg.mxu0
  %v6054 = vrot.slane %v5987, 2
  %6055 = vrot.lane.b32.xlu0 %v6054, 38
  %v6056 = vpop.permute.xlu0 %6055
  %v6058 = vadd.f32 %v1099, %v6056
  %v6059 = vxor.u32 %v6058, 2147483648
  %v6060 = vmul.f32 %v6059, 1.442695
  %v6061 = vpow.pop %v6060
  %v6062 = vadd.f32 %v6061, 1.0
  %v6063 = vrcp.pop %v6062
  %v6064 = vmul.f32 %v6062, %v6063
  %v6065 = vsub.f32 1.0, %v6064
  %v6066 = vmul.f32 %v6063, %v6065
  %v6067 = vadd.f32 %v6063, %v6066
  %vm6068 = vweird.f32 %v6062
  %vm6069 = vweird.f32 %v6063
  %vm6070 = vmor %vm6068, %vm6069
  %v6071 = vsel %vm6070, %v6063, %v6067
  %v6072 = vand.u32 2147483647, %v6062
  %vm6073 = vcmp.eq.f32.partialorder %v6072, 8.507059e+37
  %v6074 = vand.u32 %v6062, 2147483648
  %v6075 = vor.u32 1.1754944e-38, %v6074
  %v6076 = vsel %vm6073, %v6075, %v6071
  %v6077 = vmul.f32 1.0, %v6076
  %v6079 = vrot.slane %v5988, 2
  %6080 = vrot.lane.b32.xlu0 %v6079, 38
  %v6081 = vpop.permute.xlu0 %6080
  %v6082 = vsel %vm1321, %v6056, %v6081
  %v6084 = vadd.f32 %v1099, %v6082
  %v6085 = vxor.u32 %v6084, 2147483648
  %v6086 = vmul.f32 %v6085, 1.442695
  %v6087 = vpow.pop %v6086
  %v6088 = vadd.f32 %v6087, 1.0
  %v6089 = vrcp.pop %v6088
  %v6090 = vmul.f32 %v6088, %v6089
  %v6091 = vsub.f32 1.0, %v6090
  %v6092 = vmul.f32 %v6089, %v6091
  %v6093 = vadd.f32 %v6089, %v6092
  %vm6094 = vweird.f32 %v6088
  %vm6095 = vweird.f32 %v6089
  %vm6096 = vmor %vm6094, %vm6095
  %v6097 = vsel %vm6096, %v6089, %v6093
  %v6098 = vand.u32 2147483647, %v6088
  %vm6099 = vcmp.eq.f32.partialorder %v6098, 8.507059e+37
  %v6100 = vand.u32 %v6088, 2147483648
  %v6101 = vor.u32 1.1754944e-38, %v6100
  %v6102 = vsel %vm6099, %v6101, %v6097
  %v6103 = vmul.f32 1.0, %v6102
  %6104 = vrot.lane.b32.xlu0 %v6079, 106
  %v6105 = vpop.permute.xlu0 %6104
  %v6107 = vmul.f32 %v6077, %v6105
  %6109 = vrot.lane.b32.xlu0 %v6107, 60
  %v6110 = vpop.permute.xlu0 %6109
  %v6112 = vadd.f32 %v1099, %v6110
  %v6113 = vtanh.pop %v6112
  %v6114 = vsub.f32 1.0, %v6103
  %6116 = vrot.lane.b32.xlu0 %v6113, 98
  %v6117 = vpop.permute.xlu0 %6116
  %v6119 = vmul.f32 %v6114, %v6117
  %v6120 = vrot.slane %v5939, 6
  %v6122 = vmul.f32 %v6103, %v6120
  %v6123 = vadd.f32 %v6119, %v6122
  %v6125 = vrot.slane %v6123, 6
  %6126 = vrot.lane.b32.xlu0 %v6125, 98
  %v6127 = vpop.permute.xlu0 %6126
  %v6128 = vsel %vm40, %v6127, 0
  %6130 = vmatpush.msra.mxu0 0.0
  %6131 = vmatpush.msra.mxu0 0.0
  %6132 = vmatpush.msra.mxu0 0.0
  %6133 = vmatpush.msra.mxu0 0.0
  %6134 = vmatpush.msra.mxu0 0.0
  %6135 = vmatpush.msra.mxu0 0.0
  %6136 = vmatpush.msra.mxu0 0.0
  %6137 = vmatpush.msra.mxu0 0.0
  %6138 = vmatpush.msra.mxu0 0.0
  %6139 = vmatpush.msra.mxu0 0.0
  %6140 = vmatpush.msra.mxu0 0.0
  %6141 = vmatpush.msra.mxu0 0.0
  %6142 = vmatpush.msra.mxu0 %v1176
  %6143 = vmatpush.msra.mxu0 %v1013
  %6144 = vmatpush.msra.mxu0 %v1011
  %6145 = vmatpush.msra.mxu0 %v1009
  %6146 = vmatmul.f32.gmra.mxu0 %v6128
  %v6147 = vpop.f32.mrf.mxu0
  %v6148 = vadd.f32 0.0, %v6147
  %6149 = vdwg.mxu0
  %6150 = vmatpush.msra.mxu0 0.0
  %6151 = vmatpush.msra.mxu0 0.0
  %6152 = vmatpush.msra.mxu0 0.0
  %6153 = vmatpush.msra.mxu0 0.0
  %6154 = vmatpush.msra.mxu0 0.0
  %6155 = vmatpush.msra.mxu0 0.0
  %6156 = vmatpush.msra.mxu0 0.0
  %6157 = vmatpush.msra.mxu0 0.0
  %6158 = vmatpush.msra.mxu0 0.0
  %6159 = vmatpush.msra.mxu0 0.0
  %6160 = vmatpush.msra.mxu0 0.0
  %6161 = vmatpush.msra.mxu0 0.0
  %6162 = vmatpush.msra.mxu0 %v1179
  %6163 = vmatpush.msra.mxu0 %v1014
  %6164 = vmatpush.msra.mxu0 %v1012
  %6165 = vmatpush.msra.mxu0 %v1010
  %6166 = vmatmul.f32.gmra.mxu0 %v6128
  %v6167 = vpop.f32.mrf.mxu0
  %v6168 = vadd.f32 0.0, %v6167
  %6169 = vdwg.mxu0
  %v6170 = vadd.f32 %v6148, %v1025
  %v6171 = vadd.f32 %v6148, %v1224
  %v6172 = vadd.f32 %v6168, %v1224
  %v6173 = vadd.f32 %v6170, %v6051
  %v6174 = vxor.u32 %v6173, 2147483648
  %v6175 = vmul.f32 %v6174, 1.442695
  %v6176 = vpow.pop %v6175
  %v6177 = vadd.f32 %v6176, 1.0
  %v6178 = vrcp.pop %v6177
  %v6179 = vmul.f32 %v6177, %v6178
  %v6180 = vsub.f32 1.0, %v6179
  %v6181 = vmul.f32 %v6178, %v6180
  %v6182 = vadd.f32 %v6178, %v6181
  %vm6183 = vweird.f32 %v6177
  %vm6184 = vweird.f32 %v6178
  %vm6185 = vmor %vm6183, %vm6184
  %v6186 = vsel %vm6185, %v6178, %v6182
  %v6187 = vand.u32 2147483647, %v6177
  %vm6188 = vcmp.eq.f32.partialorder %v6187, 8.507059e+37
  %v6189 = vand.u32 %v6177, 2147483648
  %v6190 = vor.u32 1.1754944e-38, %v6189
  %v6191 = vsel %vm6188, %v6190, %v6186
  %v6192 = vmul.f32 1.0, %v6191
  %6194 = vrot.lane.b32.xlu0 %v6051, 68
  %v6195 = vpop.permute.xlu0 %6194
  %v6197 = vmul.f32 %v6192, %v6195
  %6199 = vrot.lane.b32.xlu0 %v6197, 60
  %v6200 = vpop.permute.xlu0 %6199
  %v6202 = vadd.f32 %v6170, %v6200
  %v6203 = vtanh.pop %v6202
  %v6204 = vsub.f32 1.0, %v6192
  %6206 = vrot.lane.b32.xlu0 %v6203, 98
  %v6207 = vpop.permute.xlu0 %6206
  %v6209 = vmul.f32 %v6204, %v6207
  %v6210 = vmul.f32 %v6192, %v6027
  %v6211 = vadd.f32 %v6209, %v6210
  %6213 = vrot.lane.b32.xlu0 %v6211, 98
  %v6214 = vpop.permute.xlu0 %6213
  %v6215 = vsel %vm40, %v6214, 0
  %6217 = vmatpush.msra.mxu0 0.0
  %6218 = vmatpush.msra.mxu0 0.0
  %6219 = vmatpush.msra.mxu0 0.0
  %6220 = vmatpush.msra.mxu0 0.0
  %6221 = vmatpush.msra.mxu0 0.0
  %6222 = vmatpush.msra.mxu0 0.0
  %6223 = vmatpush.msra.mxu0 0.0
  %6224 = vmatpush.msra.mxu0 0.0
  %6225 = vmatpush.msra.mxu0 0.0
  %6226 = vmatpush.msra.mxu0 0.0
  %6227 = vmatpush.msra.mxu0 0.0
  %6228 = vmatpush.msra.mxu0 0.0
  %6229 = vmatpush.msra.mxu0 %v1109
  %6230 = vmatpush.msra.mxu0 %v1019
  %6231 = vmatpush.msra.mxu0 %v1018
  %6232 = vmatpush.msra.mxu0 %v1017
  %6233 = vmatmul.f32.gmra.mxu0 %v6215
  %v6234 = vpop.f32.mrf.mxu0
  %v6235 = vadd.f32 %v1026, %v6234
  %6236 = vdwg.mxu0
  %6238 = vrot.lane.b32.xlu0 %v6171, 38
  %v6239 = vpop.permute.xlu0 %6238
  %v6241 = vadd.f32 %v1102, %v6239
  %v6242 = vxor.u32 %v6241, 2147483648
  %v6243 = vmul.f32 %v6242, 1.442695
  %v6244 = vpow.pop %v6243
  %v6245 = vadd.f32 %v6244, 1.0
  %v6246 = vrcp.pop %v6245
  %v6247 = vmul.f32 %v6245, %v6246
  %v6248 = vsub.f32 1.0, %v6247
  %v6249 = vmul.f32 %v6246, %v6248
  %v6250 = vadd.f32 %v6246, %v6249
  %vm6251 = vweird.f32 %v6245
  %vm6252 = vweird.f32 %v6246
  %vm6253 = vmor %vm6251, %vm6252
  %v6254 = vsel %vm6253, %v6246, %v6250
  %v6255 = vand.u32 2147483647, %v6245
  %vm6256 = vcmp.eq.f32.partialorder %v6255, 8.507059e+37
  %v6257 = vand.u32 %v6245, 2147483648
  %v6258 = vor.u32 1.1754944e-38, %v6257
  %v6259 = vsel %vm6256, %v6258, %v6254
  %v6260 = vmul.f32 1.0, %v6259
  %6262 = vrot.lane.b32.xlu0 %v6172, 38
  %v6263 = vpop.permute.xlu0 %6262
  %v6264 = vsel %vm1321, %v6239, %v6263
  %v6266 = vadd.f32 %v1102, %v6264
  %v6267 = vxor.u32 %v6266, 2147483648
  %v6268 = vmul.f32 %v6267, 1.442695
  %v6269 = vpow.pop %v6268
  %v6270 = vadd.f32 %v6269, 1.0
  %v6271 = vrcp.pop %v6270
  %v6272 = vmul.f32 %v6270, %v6271
  %v6273 = vsub.f32 1.0, %v6272
  %v6274 = vmul.f32 %v6271, %v6273
  %v6275 = vadd.f32 %v6271, %v6274
  %vm6276 = vweird.f32 %v6270
  %vm6277 = vweird.f32 %v6271
  %vm6278 = vmor %vm6276, %vm6277
  %v6279 = vsel %vm6278, %v6271, %v6275
  %v6280 = vand.u32 2147483647, %v6270
  %vm6281 = vcmp.eq.f32.partialorder %v6280, 8.507059e+37
  %v6282 = vand.u32 %v6270, 2147483648
  %v6283 = vor.u32 1.1754944e-38, %v6282
  %v6284 = vsel %vm6281, %v6283, %v6279
  %v6285 = vmul.f32 1.0, %v6284
  %6286 = vrot.lane.b32.xlu0 %v6172, 106
  %v6287 = vpop.permute.xlu0 %6286
  %v6289 = vmul.f32 %v6260, %v6287
  %6291 = vrot.lane.b32.xlu0 %v6289, 60
  %v6292 = vpop.permute.xlu0 %6291
  %v6294 = vadd.f32 %v1102, %v6292
  %v6295 = vtanh.pop %v6294
  %v6296 = vsub.f32 1.0, %v6285
  %6298 = vrot.lane.b32.xlu0 %v6295, 98
  %v6299 = vpop.permute.xlu0 %6298
  %v6301 = vmul.f32 %v6296, %v6299
  %v6303 = vmul.f32 %v6285, %v6125
  %v6304 = vadd.f32 %v6301, %v6303
  %6306 = vrot.lane.b32.xlu0 %v6304, 98
  %v6307 = vpop.permute.xlu0 %6306
  %v6308 = vsel %vm40, %v6307, 0
  %6310 = vmatpush.msra.mxu0 0.0
  %6311 = vmatpush.msra.mxu0 0.0
  %6312 = vmatpush.msra.mxu0 0.0
  %6313 = vmatpush.msra.mxu0 0.0
  %6314 = vmatpush.msra.mxu0 0.0
  %6315 = vmatpush.msra.mxu0 0.0
  %6316 = vmatpush.msra.mxu0 0.0
  %6317 = vmatpush.msra.mxu0 0.0
  %6318 = vmatpush.msra.mxu0 0.0
  %6319 = vmatpush.msra.mxu0 0.0
  %6320 = vmatpush.msra.mxu0 0.0
  %6321 = vmatpush.msra.mxu0 0.0
  %6322 = vmatpush.msra.mxu0 %v1176
  %6323 = vmatpush.msra.mxu0 %v1013
  %6324 = vmatpush.msra.mxu0 %v1011
  %6325 = vmatpush.msra.mxu0 %v1009
  %6326 = vmatmul.f32.gmra.mxu0 %v6308
  %v6327 = vpop.f32.mrf.mxu0
  %v6328 = vadd.f32 0.0, %v6327
  %6329 = vdwg.mxu0
  %6330 = vmatpush.msra.mxu0 0.0
  %6331 = vmatpush.msra.mxu0 0.0
  %6332 = vmatpush.msra.mxu0 0.0
  %6333 = vmatpush.msra.mxu0 0.0
  %6334 = vmatpush.msra.mxu0 0.0
  %6335 = vmatpush.msra.mxu0 0.0
  %6336 = vmatpush.msra.mxu0 0.0
  %6337 = vmatpush.msra.mxu0 0.0
  %6338 = vmatpush.msra.mxu0 0.0
  %6339 = vmatpush.msra.mxu0 0.0
  %6340 = vmatpush.msra.mxu0 0.0
  %6341 = vmatpush.msra.mxu0 0.0
  %6342 = vmatpush.msra.mxu0 %v1179
  %6343 = vmatpush.msra.mxu0 %v1014
  %6344 = vmatpush.msra.mxu0 %v1012
  %6345 = vmatpush.msra.mxu0 %v1010
  %6346 = vmatmul.f32.gmra.mxu0 %v6308
  %v6347 = vpop.f32.mrf.mxu0
  %v6348 = vadd.f32 0.0, %v6347
  %6349 = vdwg.mxu0
  %v6350 = vadd.f32 %v6328, %v1025
  %v6351 = vadd.f32 %v6328, %v1224
  %v6352 = vadd.f32 %v6348, %v1224
  %v6353 = vadd.f32 %v6350, %v6235
  %v6354 = vxor.u32 %v6353, 2147483648
  %v6355 = vmul.f32 %v6354, 1.442695
  %v6356 = vpow.pop %v6355
  %v6357 = vadd.f32 %v6356, 1.0
  %v6358 = vrcp.pop %v6357
  %v6359 = vmul.f32 %v6357, %v6358
  %v6360 = vsub.f32 1.0, %v6359
  %v6361 = vmul.f32 %v6358, %v6360
  %v6362 = vadd.f32 %v6358, %v6361
  %vm6363 = vweird.f32 %v6357
  %vm6364 = vweird.f32 %v6358
  %vm6365 = vmor %vm6363, %vm6364
  %v6366 = vsel %vm6365, %v6358, %v6362
  %v6367 = vand.u32 2147483647, %v6357
  %vm6368 = vcmp.eq.f32.partialorder %v6367, 8.507059e+37
  %v6369 = vand.u32 %v6357, 2147483648
  %v6370 = vor.u32 1.1754944e-38, %v6369
  %v6371 = vsel %vm6368, %v6370, %v6366
  %v6372 = vmul.f32 1.0, %v6371
  %6374 = vrot.lane.b32.xlu0 %v6235, 68
  %v6375 = vpop.permute.xlu0 %6374
  %v6377 = vmul.f32 %v6372, %v6375
  %6379 = vrot.lane.b32.xlu0 %v6377, 60
  %v6380 = vpop.permute.xlu0 %6379
  %v6382 = vadd.f32 %v6350, %v6380
  %v6383 = vtanh.pop %v6382
  %v6384 = vsub.f32 1.0, %v6372
  %6386 = vrot.lane.b32.xlu0 %v6383, 98
  %v6387 = vpop.permute.xlu0 %6386
  %v6389 = vmul.f32 %v6384, %v6387
  %v6390 = vmul.f32 %v6372, %v6211
  %v6391 = vadd.f32 %v6389, %v6390
  %6393 = vrot.lane.b32.xlu0 %v6391, 98
  %v6394 = vpop.permute.xlu0 %6393
  %v6395 = vsel %vm40, %v6394, 0
  %6397 = vmatpush.msra.mxu0 0.0
  %6398 = vmatpush.msra.mxu0 0.0
  %6399 = vmatpush.msra.mxu0 0.0
  %6400 = vmatpush.msra.mxu0 0.0
  %6401 = vmatpush.msra.mxu0 0.0
  %6402 = vmatpush.msra.mxu0 0.0
  %6403 = vmatpush.msra.mxu0 0.0
  %6404 = vmatpush.msra.mxu0 0.0
  %6405 = vmatpush.msra.mxu0 0.0
  %6406 = vmatpush.msra.mxu0 0.0
  %6407 = vmatpush.msra.mxu0 0.0
  %6408 = vmatpush.msra.mxu0 0.0
  %6409 = vmatpush.msra.mxu0 %v1109
  %6410 = vmatpush.msra.mxu0 %v1019
  %6411 = vmatpush.msra.mxu0 %v1018
  %6412 = vmatpush.msra.mxu0 %v1017
  %6413 = vmatmul.f32.gmra.mxu0 %v6395
  %v6414 = vpop.f32.mrf.mxu0
  %v6415 = vadd.f32 %v1026, %v6414
  %6416 = vdwg.mxu0
  %v6418 = vrot.slane %v6351, 6
  %6419 = vrot.lane.b32.xlu0 %v6418, 38
  %v6420 = vpop.permute.xlu0 %6419
  %v6422 = vadd.f32 %v1102, %v6420
  %v6423 = vxor.u32 %v6422, 2147483648
  %v6424 = vmul.f32 %v6423, 1.442695
  %v6425 = vpow.pop %v6424
  %v6426 = vadd.f32 %v6425, 1.0
  %v6427 = vrcp.pop %v6426
  %v6428 = vmul.f32 %v6426, %v6427
  %v6429 = vsub.f32 1.0, %v6428
  %v6430 = vmul.f32 %v6427, %v6429
  %v6431 = vadd.f32 %v6427, %v6430
  %vm6432 = vweird.f32 %v6426
  %vm6433 = vweird.f32 %v6427
  %vm6434 = vmor %vm6432, %vm6433
  %v6435 = vsel %vm6434, %v6427, %v6431
  %v6436 = vand.u32 2147483647, %v6426
  %vm6437 = vcmp.eq.f32.partialorder %v6436, 8.507059e+37
  %v6438 = vand.u32 %v6426, 2147483648
  %v6439 = vor.u32 1.1754944e-38, %v6438
  %v6440 = vsel %vm6437, %v6439, %v6435
  %v6441 = vmul.f32 1.0, %v6440
  %v6443 = vrot.slane %v6352, 6
  %6444 = vrot.lane.b32.xlu0 %v6443, 38
  %v6445 = vpop.permute.xlu0 %6444
  %v6446 = vsel %vm1321, %v6420, %v6445
  %v6448 = vadd.f32 %v1102, %v6446
  %v6449 = vxor.u32 %v6448, 2147483648
  %v6450 = vmul.f32 %v6449, 1.442695
  %v6451 = vpow.pop %v6450
  %v6452 = vadd.f32 %v6451, 1.0
  %v6453 = vrcp.pop %v6452
  %v6454 = vmul.f32 %v6452, %v6453
  %v6455 = vsub.f32 1.0, %v6454
  %v6456 = vmul.f32 %v6453, %v6455
  %v6457 = vadd.f32 %v6453, %v6456
  %vm6458 = vweird.f32 %v6452
  %vm6459 = vweird.f32 %v6453
  %vm6460 = vmor %vm6458, %vm6459
  %v6461 = vsel %vm6460, %v6453, %v6457
  %v6462 = vand.u32 2147483647, %v6452
  %vm6463 = vcmp.eq.f32.partialorder %v6462, 8.507059e+37
  %v6464 = vand.u32 %v6452, 2147483648
  %v6465 = vor.u32 1.1754944e-38, %v6464
  %v6466 = vsel %vm6463, %v6465, %v6461
  %v6467 = vmul.f32 1.0, %v6466
  %6468 = vrot.lane.b32.xlu0 %v6443, 106
  %v6469 = vpop.permute.xlu0 %6468
  %v6471 = vmul.f32 %v6441, %v6469
  %6473 = vrot.lane.b32.xlu0 %v6471, 60
  %v6474 = vpop.permute.xlu0 %6473
  %v6476 = vadd.f32 %v1102, %v6474
  %v6477 = vtanh.pop %v6476
  %v6478 = vsub.f32 1.0, %v6467
  %6480 = vrot.lane.b32.xlu0 %v6477, 98
  %v6481 = vpop.permute.xlu0 %6480
  %v6483 = vmul.f32 %v6478, %v6481
  %v6484 = vrot.slane %v6304, 6
  %v6486 = vmul.f32 %v6467, %v6484
  %v6487 = vadd.f32 %v6483, %v6486
  %v6489 = vrot.slane %v6487, 2
  %6490 = vrot.lane.b32.xlu0 %v6489, 98
  %v6491 = vpop.permute.xlu0 %6490
  %v6492 = vsel %vm40, %v6491, 0
  %6494 = vmatpush.msra.mxu0 0.0
  %6495 = vmatpush.msra.mxu0 0.0
  %6496 = vmatpush.msra.mxu0 0.0
  %6497 = vmatpush.msra.mxu0 0.0
  %6498 = vmatpush.msra.mxu0 0.0
  %6499 = vmatpush.msra.mxu0 0.0
  %6500 = vmatpush.msra.mxu0 0.0
  %6501 = vmatpush.msra.mxu0 0.0
  %6502 = vmatpush.msra.mxu0 0.0
  %6503 = vmatpush.msra.mxu0 0.0
  %6504 = vmatpush.msra.mxu0 0.0
  %6505 = vmatpush.msra.mxu0 0.0
  %6506 = vmatpush.msra.mxu0 %v1176
  %6507 = vmatpush.msra.mxu0 %v1013
  %6508 = vmatpush.msra.mxu0 %v1011
  %6509 = vmatpush.msra.mxu0 %v1009
  %6510 = vmatmul.f32.gmra.mxu0 %v6492
  %v6511 = vpop.f32.mrf.mxu0
  %v6512 = vadd.f32 0.0, %v6511
  %6513 = vdwg.mxu0
  %v6514 = vadd.f32 %v6512, %v1025
  %v6515 = vadd.f32 %v6514, %v6415
  %v6516 = vxor.u32 %v6515, 2147483648
  %v6517 = vmul.f32 %v6516, 1.442695
  %v6518 = vpow.pop %v6517
  %v6519 = vadd.f32 %v6518, 1.0
  %v6520 = vrcp.pop %v6519
  %v6521 = vmul.f32 %v6519, %v6520
  %v6522 = vsub.f32 1.0, %v6521
  %v6523 = vmul.f32 %v6520, %v6522
  %v6524 = vadd.f32 %v6520, %v6523
  %vm6525 = vweird.f32 %v6519
  %vm6526 = vweird.f32 %v6520
  %vm6527 = vmor %vm6525, %vm6526
  %v6528 = vsel %vm6527, %v6520, %v6524
  %v6529 = vand.u32 2147483647, %v6519
  %vm6530 = vcmp.eq.f32.partialorder %v6529, 8.507059e+37
  %v6531 = vand.u32 %v6519, 2147483648
  %v6532 = vor.u32 1.1754944e-38, %v6531
  %v6533 = vsel %vm6530, %v6532, %v6528
  %v6534 = vmul.f32 1.0, %v6533
  %6536 = vrot.lane.b32.xlu0 %v6415, 68
  %v6537 = vpop.permute.xlu0 %6536
  %v6539 = vmul.f32 %v6534, %v6537
  %6541 = vrot.lane.b32.xlu0 %v6539, 60
  %v6542 = vpop.permute.xlu0 %6541
  %v6544 = vadd.f32 %v6514, %v6542
  %v6545 = vtanh.pop %v6544
  %v6546 = vsub.f32 1.0, %v6534
  %6548 = vrot.lane.b32.xlu0 %v6545, 98
  %v6549 = vpop.permute.xlu0 %6548
  %v6551 = vmul.f32 %v6546, %v6549
  %v6552 = vmul.f32 %v6534, %v6391
  %v6553 = vadd.f32 %v6551, %v6552
  %6555 = vrot.lane.b32.xlu0 %v6553, 38
  %v6556 = vpop.permute.xlu0 %6555
  %vm6558 = vcmask 796192
  %6559 = vst.msk [vmem:[#allocation4 + $0x4] sm:$0x3] %vm6558, %v6556
  %s6560 = scalar_lea.vmem %s8, 4
  %v6561 = vld [vmem:[%s6560] ss:$8 sm:$0x7]
  %s6562 = scalar_lea.vmem %s8, 5
  %v6563 = vld [vmem:[%s6562] ss:$8 sm:$0x7]
  %v6564 = vld [vmem:[#allocation4] sm:$0x3f]
  %v6566 = vperm.slane %v6561, 0
  %v6567 = vperm.slane %v6561, 1
  %v6568 = vperm.slane %v6561, 2
  %v6569 = vrot.slane %v6567, 6
  %v6570 = vrot.slane %v6568, 4
  %v6571 = vsel %vm149, %v6566, %v6569
  %vm6572 = vcmask 1043456
  %v6573 = vsel %vm6572, %v6571, %v6570
  %v6575 = vmul.f32 %v6564, %v6573
  %v6577 = vperm.slane %v6563, 0
  %v6578 = vperm.slane %v6563, 1
  %v6579 = vperm.slane %v6563, 2
  %v6580 = vrot.slane %v6578, 6
  %v6581 = vrot.slane %v6579, 4
  %v6582 = vsel %vm149, %v6577, %v6580
  %v6583 = vsel %vm6572, %v6582, %v6581
  %v6585 = vadd.f32 %v6575, %v6583
  %v6586 = vld [vmem:[%s8 + $0x6] ss:$0 sm:$0xff]
  %v6587 = vld [vmem:[%s8 + $0x7] ss:$0 sm:$0xff]
  %v6588 = vld [vmem:[%s8 + $0x18] ss:$0 sm:$0xff]
  %v6589 = vld [vmem:[%s7] sm:$0xff]
  %v6590 = vld [vmem:[%s7 + $0x8] sm:$0xff]
  %v6591 = vld [vmem:[%s7 + $0x10] sm:$0xff]
  %v6592 = vld [vmem:[%s7 + $0x18] sm:$0xff]
  %v6593 = vld [vmem:[%s7 + $0x20] sm:$0xff]
  %v6594 = vld [vmem:[%s7 + $0x28] sm:$0xff]
  %v6595 = vld [vmem:[%s7 + $0x30] sm:$0xff]
  %v6596 = vld [vmem:[%s7 + $0x38] sm:$0xff]
  %v6597 = vld [vmem:[%s7 + $0x40] sm:$0xff]
  %v6598 = vld [vmem:[%s7 + $0x48] sm:$0xff]
  %v6599 = vld [vmem:[%s7 + $0x50] sm:$0xff]
  %v6600 = vld [vmem:[%s7 + $0x58] sm:$0xff]
  %v6601 = vld [vmem:[%s7 + $0x60] sm:$0xff]
  %v6602 = vld [vmem:[%s7 + $0x68] sm:$0xff]
  %v6603 = vld [vmem:[%s7 + $0x70] sm:$0xff]
  %v6604 = vld [vmem:[%s7 + $0x78] sm:$0xff]
  %v6605 = vld [vmem:[%s7 + $0x80] sm:$0xff]
  %v6606 = vld [vmem:[%s7 + $0x88] sm:$0xff]
  %v6607 = vld [vmem:[%s7 + $0x90] sm:$0xff]
  %v6608 = vld [vmem:[%s7 + $0x98] sm:$0xff]
  %v6609 = vld [vmem:[%s7 + $0xa0] sm:$0xff]
  %v6610 = vld [vmem:[%s7 + $0xa8] sm:$0xff]
  %v6611 = vld [vmem:[%s7 + $0xb0] sm:$0xff]
  %v6612 = vld [vmem:[%s7 + $0xb8] sm:$0xff]
  %v6613 = vld [vmem:[%s7 + $0xc0] sm:$0xff]
  %v6614 = vld [vmem:[%s7 + $0xc8] sm:$0xff]
  %v6615 = vld [vmem:[%s7 + $0xd0] sm:$0xff]
  %v6616 = vld [vmem:[%s7 + $0xd8] sm:$0xff]
  %v6617 = vld [vmem:[%s7 + $0xe0] sm:$0xff]
  %v6618 = vld [vmem:[%s7 + $0xe8] sm:$0xff]
  %v6619 = vld [vmem:[%s7 + $0xf0] sm:$0xff]
  %v6620 = vld [vmem:[%s7 + $0xf8] sm:$0xff]
  %v6621 = vld [vmem:[%s7 + $0x100] sm:$0xff]
  %v6622 = vld [vmem:[%s7 + $0x108] sm:$0xff]
  %v6623 = vld [vmem:[%s7 + $0x110] sm:$0xff]
  %v6624 = vld [vmem:[%s7 + $0x118] sm:$0xff]
  %v6625 = vld [vmem:[%s7 + $0x120] sm:$0xff]
  %v6626 = vld [vmem:[%s7 + $0x128] sm:$0xff]
  %v6627 = vld [vmem:[%s7 + $0x130] sm:$0xff]
  %v6628 = vld [vmem:[%s7 + $0x138] sm:$0xff]
  %v6629 = vld [vmem:[%s7 + $0x140] sm:$0xff]
  %v6630 = vld [vmem:[%s7 + $0x148] sm:$0xff]
  %v6631 = vld [vmem:[%s7 + $0x150] sm:$0xff]
  %v6632 = vld [vmem:[%s7 + $0x158] sm:$0xff]
  %v6633 = vld [vmem:[%s7 + $0x160] sm:$0x3]
  %6635 = vst [vmem:[#allocation1] ss:$4 sm:$0xff] %v6585
  %v6636 = vld.sshfl [vmem:[#allocation1] sm:$0xff pattern:$0x73625140]
  %v6637 = vld.sshfl [vmem:[#allocation1 + $0x8] sm:$0xff pattern:$0x73625140]
  %v6638 = vld.sshfl [vmem:[#allocation1 + $0x10] sm:$0xff pattern:$0x73625140]
  %vm6641 = vcmask 801792
  %v6642 = vsel %vm6641, %v6638, 0
  %v6645 = vsel %vm149, %v6633, 0
  %6647 = vmatpush.msra.mxu0 %v6604
  %6648 = vmatpush.msra.mxu0 %v6603
  %6649 = vmatpush.msra.mxu0 %v6602
  %6650 = vmatpush.msra.mxu0 %v6601
  %6651 = vmatpush.msra.mxu0 %v6600
  %6652 = vmatpush.msra.mxu0 %v6599
  %6653 = vmatpush.msra.mxu0 %v6598
  %6654 = vmatpush.msra.mxu0 %v6597
  %6655 = vmatpush.msra.mxu0 %v6596
  %6656 = vmatpush.msra.mxu0 %v6595
  %6657 = vmatpush.msra.mxu0 %v6594
  %6658 = vmatpush.msra.mxu0 %v6593
  %6659 = vmatpush.msra.mxu0 %v6592
  %6660 = vmatpush.msra.mxu0 %v6591
  %6661 = vmatpush.msra.mxu0 %v6590
  %6662 = vmatpush.msra.mxu0 %v6589
  %6663 = vmatmul.f32.gmra.mxu0 %v6636
  %v6664 = vpop.f32.mrf.mxu0
  %v6665 = vadd.f32 %v6586, %v6664
  %6666 = vdwg.mxu0
  %6667 = vmatpush.msra.mxu0 %v6620
  %6668 = vmatpush.msra.mxu0 %v6619
  %6669 = vmatpush.msra.mxu0 %v6618
  %6670 = vmatpush.msra.mxu0 %v6617
  %6671 = vmatpush.msra.mxu0 %v6616
  %6672 = vmatpush.msra.mxu0 %v6615
  %6673 = vmatpush.msra.mxu0 %v6614
  %6674 = vmatpush.msra.mxu0 %v6613
  %6675 = vmatpush.msra.mxu0 %v6612
  %6676 = vmatpush.msra.mxu0 %v6611
  %6677 = vmatpush.msra.mxu0 %v6610
  %6678 = vmatpush.msra.mxu0 %v6609
  %6679 = vmatpush.msra.mxu0 %v6608
  %6680 = vmatpush.msra.mxu0 %v6607
  %6681 = vmatpush.msra.mxu0 %v6606
  %6682 = vmatpush.msra.mxu0 %v6605
  %6683 = vmatmul.f32.gmra.mxu0 %v6637
  %v6684 = vpop.f32.mrf.mxu0
  %v6685 = vadd.f32 %v6665, %v6684
  %6686 = vdwg.mxu0
  %6687 = vmatpush.msra.mxu0 0.0
  %6688 = vmatpush.msra.mxu0 0.0
  %6689 = vmatpush.msra.mxu0 0.0
  %6690 = vmatpush.msra.mxu0 %v6645
  %6691 = vmatpush.msra.mxu0 %v6632
  %6692 = vmatpush.msra.mxu0 %v6631
  %6693 = vmatpush.msra.mxu0 %v6630
  %6694 = vmatpush.msra.mxu0 %v6629
  %6695 = vmatpush.msra.mxu0 %v6628
  %6696 = vmatpush.msra.mxu0 %v6627
  %6697 = vmatpush.msra.mxu0 %v6626
  %6698 = vmatpush.msra.mxu0 %v6625
  %6699 = vmatpush.msra.mxu0 %v6624
  %6700 = vmatpush.msra.mxu0 %v6623
  %6701 = vmatpush.msra.mxu0 %v6622
  %6702 = vmatpush.msra.mxu0 %v6621
  %6703 = vmatmul.f32.gmra.mxu0 %v6642
  %v6704 = vpop.f32.mrf.mxu0
  %v6705 = vadd.f32 %v6685, %v6704
  %6706 = vdwg.mxu0
  %v6707 = vmax.f32 %v6705, 0.0
  %v6708 = vmul.f32 %v6707, %v6587
  %vm6709 = vcmask 254976
  %v6710 = vsel %vm6709, %v6708, 0.0
  %6711 = vadd.xlane.f32.xlu0 %v6710
  %v6712 = vpop.xlane.xlu0 %6711
  %v6713 = vadd.f32 %v6712, %v6588
  %vm6714 = vcmask 1024
  %6715 = vst.msk [vmem:[%s9] sm:$0x3] %vm6714, %v6713
  // Predicated region
  $region38: #{alphanet_forward.1} parent=0 // pred_check
    _
  $region39: #{alphanet_forward.1} parent=0 // pred_check_branch
    %6717 = sbr.rel (0) target = $region41
  $region40: #{alphanet_forward.1} parent=0 // pred_region
    _
  $region41: #{alphanet_forward.1} parent=0 // pred_fallthru
    _
  // Predicated region
  $region42: #{alphanet_forward.1} parent=0 // pred_check
    _
  $region43: #{alphanet_forward.1} parent=0 // pred_check_branch
    %6719 = sbr.rel (0) target = $region45
  $region44: #{alphanet_forward.1} parent=0 // pred_region
    _
  $region45: #{alphanet_forward.1} parent=0 // pred_fallthru
    _

</llo_original>
